<compile_context>
chip_gen: v6e
topology: v6e:2x2x1
jax: 0.10.0
libtpu: 0.0.40
codegen_flags: <defaults>
</compile_context>

<pallas_src>
import numpy as np

import jax
import jax.numpy as jnp
from jax.experimental import pallas as pl
from jax.experimental.pallas import tpu as pltpu

_VMEM_LIMIT = 32 * 1024 * 1024


# ----------------------------- in-kernel helpers ----------------------------

def _rowconv(lhs_rows, w_ref):
    """sum_di lhs_rows[di] @ w_ref[di], bf16 operands, f32 MXU accumulation."""
    acc = jnp.dot(lhs_rows[0], w_ref[0], preferred_element_type=jnp.float32)
    for di in range(1, len(lhs_rows)):
        acc = acc + jnp.dot(lhs_rows[di], w_ref[di],
                            preferred_element_type=jnp.float32)
    return acc


def _zero_pad_rows(pad_ref):
    """Zero the top and bottom halo rows of the (H+2, W*C) scratch."""
    h = pad_ref.shape[0] - 2
    z = jnp.zeros((1, pad_ref.shape[1]), pad_ref.dtype)
    pad_ref[0:1, :] = z
    pad_ref[h + 1:h + 2, :] = z


def _basic_block(x_val, w1_ref, s1_ref, w2_ref, s2_ref, pad_ref):
    """Stride-1 BasicBlock fully in VMEM: conv1+bn1+relu -> conv2+bn2 (+x) -> relu.

    x_val   : (H, W*C) bf16 activation (lane-dense flattened rows)
    w*_ref  : (3, W*C, W*C) bf16 row-Toeplitz weights (BN scale folded)
    s*_ref  : (1, W*C) f32 BN shift tiled across W
    pad_ref : (H+2, W*C) bf16 scratch; halo rows must already be zero.
    """
    h = x_val.shape[0]
    # conv1 + bn1 + relu
    pad_ref[1:h + 1, :] = x_val
    acc = _rowconv([pad_ref[di:di + h, :] for di in range(3)], w1_ref)
    acc = jnp.maximum(acc + s1_ref[...], 0.0)
    # conv2 + bn2 + residual + relu
    pad_ref[1:h + 1, :] = acc.astype(jnp.bfloat16)
    acc2 = _rowconv([pad_ref[di:di + h, :] for di in range(3)], w2_ref)
    acc2 = acc2 + s2_ref[...] + x_val.astype(jnp.float32)
    return jnp.maximum(acc2, 0.0).astype(jnp.bfloat16)


# ------------------------------- Pallas kernels ------------------------------

def _stem_kernel(xde_ref, w_ref, s_ref, o_ref):
    """7x7/stride-2 stem conv + folded BN + ReLU.

    xde_ref : (1, 2, Hp/2, W*Cin) bf16; [0, p, r, :] = row-padded input row 2r+p
    w_ref   : (7, W*Cin, Wo*Cout) bf16 row-Toeplitz weights
    o_ref   : (1, Ho, Wo*Cout) bf16 (lane-dense)
    """
    kh = w_ref.shape[0]
    ho = o_ref.shape[1]
    lhs = [xde_ref[0, di % 2, (di // 2):(di // 2) + ho, :] for di in range(kh)]
    acc = _rowconv(lhs, w_ref)
    o_ref[0] = jnp.maximum(acc + s_ref[...], 0.0).astype(o_ref.dtype)


def _stage_identity_kernel(x_ref, w11, s11, w12, s12, w21, s21, w22, s22,
                           o_ref, pad_ref):
    """Two stride-1 BasicBlocks fused in one call (ResNet layer1)."""
    _zero_pad_rows(pad_ref)
    y = _basic_block(x_ref[0], w11, s11, w12, s12, pad_ref)
    y = _basic_block(y, w21, s21, w22, s22, pad_ref)
    o_ref[0] = y


def _stage_down_kernel(xde_ref, w11, s11, w12, s12, wd, sd,
                       w21, s21, w22, s22, o_ref, pad_ref):
    """Downsample BasicBlock + identity BasicBlock fused (ResNet layer2/3/4).

    xde_ref : (1, 2, (Hin+2)/2, Win*Cin) bf16 de-interleaved row-padded input
    w11     : (3, Win*Cin, Wo*Cout) 3x3/s2 conv1 Toeplitz;  wd: 1x1/s2 downsample
    pad_ref : (Ho+2, Wo*Cout) bf16 scratch reused by all stride-1 convs.
    """
    ho = o_ref.shape[1]
    _zero_pad_rows(pad_ref)
    # block 1 / conv1: 3x3 stride-2 (height stride via even/odd de-interleave)
    lhs = [xde_ref[0, di % 2, (di // 2):(di // 2) + ho, :] for di in range(3)]
    acc = jnp.maximum(_rowconv(lhs, w11) + s11[...], 0.0)
    # block 1 / identity: 1x1 stride-2 conv + BN (kept in f32, no requant)
    ident = jnp.dot(xde_ref[0, 1, 0:ho, :], wd[...],
                    preferred_element_type=jnp.float32) + sd[...]
    # block 1 / conv2 + bn2 + identity + relu
    pad_ref[1:ho + 1, :] = acc.astype(jnp.bfloat16)
    acc2 = _rowconv([pad_ref[di:di + ho, :] for di in range(3)], w12)
    y = jnp.maximum(acc2 + s12[...] + ident, 0.0).astype(jnp.bfloat16)
    # block 2: stride-1 BasicBlock
    y = _basic_block(y, w21, s21, w22, s22, pad_ref)
    o_ref[0] = y


def _head_kernel(x_ref, w_ref, b_ref, ft_ref, logits_ref):
    """Fused global average pool + fully-connected layer (per image)."""
    ft = jnp.mean(x_ref[0].astype(jnp.float32), axis=0, keepdims=True)   # (1, C)
    ft_ref[0] = ft
    logits_ref[0] = jnp.dot(ft.astype(jnp.bfloat16), w_ref[...],
                            preferred_element_type=jnp.float32) + b_ref[...]


# ------------------------------ Pallas wrappers ------------------------------

def _cparams():
    return pltpu.CompilerParams(dimension_semantics=("parallel",),
                                vmem_limit_bytes=_VMEM_LIMIT)


def _const_spec(a):
    z = (0,) * a.ndim
    return pl.BlockSpec(a.shape, lambda i, _z=z: _z)


def _deinterleave_rows(x_flat, pad):
    """(N, H, W*C) -> (N, 2, (H+2*pad)//2, W*C); [n, p, r, :] = padded row 2r+p."""
    n, h, wc = x_flat.shape
    hp = h + 2 * pad
    assert hp % 2 == 0
    xp = jnp.pad(x_flat, ((0, 0), (pad, pad), (0, 0)))
    return xp.reshape(n, hp // 2, 2, wc).transpose(0, 2, 1, 3)


def run_stem(xde, st):
    n = xde.shape[0]
    ho, wo, cout = st["Ho"], st["Wo"], st["Cout"]
    wc = wo * cout
    return pl.pallas_call(
        _stem_kernel,
        out_shape=jax.ShapeDtypeStruct((n, ho, wc), jnp.bfloat16),
        grid=(n,),
        in_specs=[pl.BlockSpec((1,) + xde.shape[1:], lambda i: (i, 0, 0, 0)),
                  _const_spec(st["w"]), _const_spec(st["s"])],
        out_specs=pl.BlockSpec((1, ho, wc), lambda i: (i, 0, 0)),
        compiler_params=_cparams(),
    )(xde, st["w"], st["s"])


def run_stage_identity(x_flat, b1, b2):
    n, h, wc = x_flat.shape
    args = (x_flat, b1["w1"], b1["s1"], b1["w2"], b1["s2"],
            b2["w1"], b2["s1"], b2["w2"], b2["s2"])
    return pl.pallas_call(
        _stage_identity_kernel,
        out_shape=jax.ShapeDtypeStruct((n, h, wc), jnp.bfloat16),
        grid=(n,),
        in_specs=[pl.BlockSpec((1, h, wc), lambda i: (i, 0, 0))]
                 + [_const_spec(a) for a in args[1:]],
        out_specs=pl.BlockSpec((1, h, wc), lambda i: (i, 0, 0)),
        scratch_shapes=[pltpu.VMEM((h + 2, wc), jnp.bfloat16)],
        compiler_params=_cparams(),
    )(*args)


def run_stage_down(x_flat, b1, b2):
    n = x_flat.shape[0]
    ho, cout = b1["Ho"], b1["Cout"]
    wc_out = ho * cout                       # square spatial: Wo == Ho
    xde = _deinterleave_rows(x_flat, pad=1)
    args = (xde, b1["w1"], b1["s1"], b1["w2"], b1["s2"], b1["wd"], b1["sd"],
            b2["w1"], b2["s1"], b2["w2"], b2["s2"])
    return pl.pallas_call(
        _stage_down_kernel,
        out_shape=jax.ShapeDtypeStruct((n, ho, wc_out), jnp.bfloat16),
        grid=(n,),
        in_specs=[pl.BlockSpec((1,) + xde.shape[1:], lambda i: (i, 0, 0, 0))]
                 + [_const_spec(a) for a in args[1:]],
        out_specs=pl.BlockSpec((1, ho, wc_out), lambda i: (i, 0, 0)),
        scratch_shapes=[pltpu.VMEM((ho + 2, wc_out), jnp.bfloat16)],
        compiler_params=_cparams(),
    )(*args)


def run_head(x_flat, fc_w, fc_b, c):
    n, h, wc = x_flat.shape
    w = wc // c
    ncls = fc_w.shape[1]
    xr = x_flat.reshape(n, h * w, c)
    ft3, logits3 = pl.pallas_call(
        _head_kernel,
        out_shape=(jax.ShapeDtypeStruct((n, 1, c), jnp.float32),
                   jax.ShapeDtypeStruct((n, 1, ncls), jnp.float32)),
        grid=(n,),
        in_specs=[pl.BlockSpec((1, h * w, c), lambda i: (i, 0, 0)),
                  _const_spec(fc_w), _const_spec(fc_b)],
        out_specs=(pl.BlockSpec((1, 1, c), lambda i: (i, 0, 0)),
                   pl.BlockSpec((1, 1, ncls), lambda i: (i, 0, 0))),
        compiler_params=_cparams(),
    )(xr, fc_w, fc_b)
    return ft3.reshape(n, c), logits3.reshape(n, ncls)


# ------------------------------- XLA glue ------------------------------------

def maxpool_3x3_s2(x):
    """3x3/s2/p1 max pool as an elementwise maximum tree (NHWC, no patch blowup)."""
    n, h, w, c = x.shape
    k, s, p = 3, 2, 1
    ho = (h + 2 * p - k) // s + 1
    wo = (w + 2 * p - k) // s + 1
    xp = jnp.pad(x, ((0, 0), (p, p), (p, p), (0, 0)), constant_values=-jnp.inf)
    out = None
    for i in range(k):
        for j in range(k):
            v = xp[:, i:i + s * (ho - 1) + 1:s, j:j + s * (wo - 1) + 1:s, :]
            out = v if out is None else jnp.maximum(out, v)
    return out


# -------------------------- parameter preparation ----------------------------

def _np32(x):
    return np.asarray(jax.device_get(x), np.float32)


def _fold_bn_np(w_hwio, scale):
    return _np32(w_hwio) * _np32(scale).reshape(1, 1, 1, -1)


def _row_toeplitz(w_khkwio, w_in, w_out, *, stride, pad):
    """Fold kernel-width + output-width + width-padding into per-kernel-row GEMMs.

    Returns (KH, W_in*Cin, W_out*Cout) so that
      out_row(i) = sum_di padded_in_row(i*stride + di) @ T[di]
    where rows are the lane-dense [w, c] flattening.  Out-of-range taps (the
    width zero padding) are simply dropped (structural zeros)."""
    kh, kw, cin, cout = w_khkwio.shape
    t = np.zeros((kh, w_in * cin, w_out * cout), np.float32)
    for j in range(w_out):
        for dj in range(kw):
            col = stride * j + dj - pad
            if 0 <= col < w_in:
                t[:, col * cin:(col + 1) * cin, j * cout:(j + 1) * cout] = \
                    w_khkwio[:, dj]
    return t


def _tile_shift(shift, w_out):
    return jnp.asarray(np.tile(_np32(shift), w_out).reshape(1, -1), jnp.float32)


def prepare_params(params, *, in_hw=64):
    """Fold BN into the conv weights and build row-Toeplitz GEMM weights (once,
    eagerly) so the jitted forward does no per-call weight rearrangement."""
    stem_w = _fold_bn_np(params["conv1_w"], params["bn1"][0])      # (7,7,3,8)
    kh = stem_w.shape[0]
    cout = stem_w.shape[3]
    so = (in_hw + 2 * 3 - kh) // 2 + 1
    prep = {"stem": dict(
        w=jnp.asarray(_row_toeplitz(stem_w, in_hw, so, stride=2, pad=3),
                      jnp.bfloat16),
        s=_tile_shift(params["bn1"][1], so),
        Ho=so, Wo=so, Cout=cout, pad=3)}

    hw = so // 2                                                   # after maxpool
    stages = []
    for blocks in params["stages"]:
        pblocks = []
        for blk in blocks:
            stride = blk["stride"]
            cin = blk["conv1_w"].shape[2]
            cout = blk["conv1_w"].shape[3]
            wi = hw
            wo = wi // stride
            w1 = _fold_bn_np(blk["conv1_w"], blk["bn1"][0])
            w2 = _fold_bn_np(blk["conv2_w"], blk["bn2"][0])
            d = dict(
                w1=jnp.asarray(_row_toeplitz(w1, wi, wo, stride=stride, pad=1),
                               jnp.bfloat16),
                s1=_tile_shift(blk["bn1"][1], wo),
                w2=jnp.asarray(_row_toeplitz(w2, wo, wo, stride=1, pad=1),
                               jnp.bfloat16),
                s2=_tile_shift(blk["bn2"][1], wo),
            )
            if "down_w" in blk:
                wd = _fold_bn_np(blk["down_w"], blk["down_bn"][0])
                d.update(kind="down", Cin=cin, Cout=cout, Hin=wi, Ho=wo,
                         wd=jnp.asarray(
                             _row_toeplitz(wd, wi, wo, stride=stride, pad=0)[0],
                             jnp.bfloat16),
                         sd=_tile_shift(blk["down_bn"][1], wo))
            else:
                d.update(kind="id", H=wi, C=cout)
            hw = wo
            pblocks.append(d)
        stages.append(pblocks)
    prep["stages"] = stages
    prep["fc_w"] = jnp.asarray(params["fc_w"], jnp.bfloat16)
    prep["fc_b"] = jnp.asarray(params["fc_b"], jnp.float32).reshape(1, -1)
    return prep


# ------------------------- parameter initialization --------------------------

def _make_conv(key, kh, kw, cin, cout):
    fan_in = kh * kw * cin
    return jax.random.normal(key, (kh, kw, cin, cout), jnp.float32) * (2.0 / fan_in) ** 0.5


def _make_bn(key, c, eps=1e-5):
    k1, k2, k3, k4 = jax.random.split(key, 4)
    gamma = 1.0 + 0.1 * jax.random.normal(k1, (c,), jnp.float32)
    beta = 0.1 * jax.random.normal(k2, (c,), jnp.float32)
    mean = 0.1 * jax.random.normal(k3, (c,), jnp.float32)
    var = 1.0 + 0.1 * jax.random.uniform(k4, (c,), jnp.float32)
    scale = gamma / jnp.sqrt(var + eps)
    shift = beta - mean * scale
    return scale, shift


def init_params(key, *, in_ch=3, base=8, num_classes=10):
    keys = iter(jax.random.split(key, 128))
    params = {
        "conv1_w": _make_conv(next(keys), 7, 7, in_ch, base),
        "bn1": _make_bn(next(keys), base),
    }
    stages = []
    cin = base
    for cout, stride, nblocks in zip([base, 2 * base, 4 * base, 8 * base],
                                     [1, 2, 2, 2], [2, 2, 2, 2]):
        blocks = []
        for bi in range(nblocks):
            s = stride if bi == 0 else 1
            blk = {
                "stride": s,
                "conv1_w": _make_conv(next(keys), 3, 3, cin, cout),
                "bn1": _make_bn(next(keys), cout),
                "conv2_w": _make_conv(next(keys), 3, 3, cout, cout),
                "bn2": _make_bn(next(keys), cout),
            }
            if s != 1 or cin != cout:
                blk["down_w"] = _make_conv(next(keys), 1, 1, cin, cout)
                blk["down_bn"] = _make_bn(next(keys), cout)
            blocks.append(blk)
            cin = cout
        stages.append(blocks)
    params["stages"] = stages
    params["fc_w"] = jax.random.normal(next(keys), (8 * base, num_classes),
                                       jnp.float32) * (1.0 / (8 * base)) ** 0.5
    params["fc_b"] = 0.01 * jax.random.normal(next(keys), (num_classes,), jnp.float32)
    return params


# ------------------------------- forward pass --------------------------------

def feat_resnet_forward(prep, x_nchw):
    """Returns ([ft_full, ft], logits) matching FeatResNet.forward."""
    x = jnp.transpose(x_nchw, (0, 2, 3, 1)).astype(jnp.bfloat16)    # NCHW -> NHWC
    n, h, w, cin = x.shape

    # stem: 7x7/s2/p3 conv + bn + relu (fused row-GEMM kernel)
    st = prep["stem"]
    xde = _deinterleave_rows(x.reshape(n, h, w * cin), pad=st["pad"])
    y = run_stem(xde, st)                                           # (N, 32, 256)

    # 3x3/s2/p1 maxpool (XLA maximum tree), back to lane-dense flattened rows
    y = maxpool_3x3_s2(y.reshape(n, st["Ho"], st["Wo"], st["Cout"]))
    hc, wc_, cc = y.shape[1:]
    y = y.reshape(n, hc, wc_ * cc)                                  # (N, 16, 128)

    # layer1: two identity blocks fused; layer2..4: down + identity fused
    b1, b2 = prep["stages"][0]
    y = run_stage_identity(y, b1, b2)
    for b1, b2 in prep["stages"][1:]:
        y = run_stage_down(y, b1, b2)

    cf = prep["stages"][-1][-1]["C"]
    hf = y.shape[1]
    wf = y.shape[2] // cf
    ft_full = jnp.transpose(y.reshape(n, hf, wf, cf),
                            (0, 3, 1, 2)).astype(jnp.float32)       # NCHW like torch
    ft, logits = run_head(y, prep["fc_w"], prep["fc_b"], cf)
    return [ft_full, ft], logits


# ----------------------------- pure-JAX reference ----------------------------

def _conv_bn_ref(x_bf16, w_hwio, scale, shift, *, stride, padding, relu):
    w_f = (w_hwio * scale.reshape(1, 1, 1, -1)).astype(jnp.bfloat16)
    y = jax.lax.conv_general_dilated(
        x_bf16, w_f, window_strides=(stride, stride),
        padding=[(padding, padding), (padding, padding)],
        dimension_numbers=("NHWC", "HWIO", "NHWC"),
        preferred_element_type=jnp.float32)
    y = y + shift.reshape(1, 1, 1, -1)
    if relu:
        y = jnp.maximum(y, 0.0)
    return y


def reference_forward(params, x_nchw):
    x = jnp.transpose(x_nchw, (0, 2, 3, 1)).astype(jnp.bfloat16)
    y = _conv_bn_ref(x, params["conv1_w"], *params["bn1"], stride=2, padding=3,
                     relu=True).astype(jnp.bfloat16)
    y = maxpool_3x3_s2(y)
    for blocks in params["stages"]:
        for blk in blocks:
            s = blk["stride"]
            if "down_w" in blk:
                ident = _conv_bn_ref(y, blk["down_w"], *blk["down_bn"],
                                     stride=s, padding=0, relu=False)
            else:
                ident = y.astype(jnp.float32)
            h1 = _conv_bn_ref(y, blk["conv1_w"], *blk["bn1"], stride=s, padding=1,
                              relu=True).astype(jnp.bfloat16)
            h2 = _conv_bn_ref(h1, blk["conv2_w"], *blk["bn2"], stride=1, padding=1,
                              relu=False)
            y = jnp.maximum(h2 + ident, 0.0).astype(jnp.bfloat16)
    ft_full = jnp.transpose(y, (0, 3, 1, 2)).astype(jnp.float32)
    ft = jnp.mean(y.astype(jnp.float32), axis=(1, 2))
    logits = jnp.dot(ft.astype(jnp.bfloat16), params["fc_w"].astype(jnp.bfloat16),
                     preferred_element_type=jnp.float32) + params["fc_b"]
    return [ft_full, ft], logits


# ----------------------------------- main -------------------------------------

def _assert_close(a, b, name, tol=2e-2):
    # bf16 operands / bf16 activation carry on both paths; compare against the
    # tensor's overall scale (accumulation-order differences only).
    scale = jnp.maximum(jnp.max(jnp.abs(b)), 1.0)
    err = float(jnp.max(jnp.abs(a.astype(jnp.float32) - b.astype(jnp.float32))) / scale)
    assert err < tol, f"{name}: relative-to-max error {err:.4f} >= {tol}"


if __name__ == "__main__":
    key = jax.random.PRNGKey(0)
    pkey, xkey = jax.random.split(key)
    params = init_params(pkey, in_ch=3, base=8, num_classes=10)
    prep = prepare_params(params, in_hw=64)

    # small input consistent with a ResNet forward: N=2, C=3, H=W=64
    x = jax.random.normal(xkey, (2, 3, 64, 64), dtype=jnp.float32)

    fwd = jax.jit(lambda inp: feat_resnet_forward(prep, inp))
    (ft_full, ft), logits = fwd(x)
    jax.block_until_ready((ft_full, ft, logits))

    assert ft_full.shape == (2, 64, 2, 2)
    assert ft.shape == (2, 64)
    assert logits.shape == (2, 10)

    (rft_full, rft), rlogits = reference_forward(params, x)
    _assert_close(ft_full, rft_full, "ft_full")
    _assert_close(ft, rft, "ft")
    _assert_close(logits, rlogits, "logits")

    print("KERNEL_OK")
</pallas_src>

<mosaic_0001>
module attributes {stable_mosaic.version = 11 : i64} {
  func.func @_stem_kernel(%arg0: i32, %arg1: memref<1x2x35x192xbf16, #tpu.memory_space<vmem>>, %arg2: memref<7x192x256xbf16, #tpu.memory_space<vmem>>, %arg3: memref<1x256xf32, #tpu.memory_space<vmem>>, %arg4: memref<1x32x256xbf16, #tpu.memory_space<vmem>>) attributes {dimension_semantics = [#tpu.dimension_semantics<parallel>], iteration_bounds = array<i64: 2>, scalar_prefetch = 0 : i64, scratch_operands = 0 : i64, tpu.core_type = #tpu.core_type<tc>, window_params = [{transform_indices = @transform_0, window_bounds = array<i64: 1, 2, 35, 192>}, {pipeline_mode = #tpu.pipeline_mode<synchronous>, transform_indices = @transform_1, window_bounds = array<i64: 7, 192, 256>}, {pipeline_mode = #tpu.pipeline_mode<synchronous>, transform_indices = @transform_2, window_bounds = array<i64: 1, 256>}, {transform_indices = @transform_3, window_bounds = array<i64: 1, 32, 256>}]} {
    %c0 = arith.constant 0 : index
    %c0_0 = arith.constant 0 : index
    %c0_1 = arith.constant 0 : index
    %c0_2 = arith.constant 0 : index
    %0 = vector.load %arg1[%c0, %c0_0, %c0_1, %c0_2] : memref<1x2x35x192xbf16, #tpu.memory_space<vmem>>, vector<1x1x32x192xbf16>
    %1 = vector.shape_cast %0 : vector<1x1x32x192xbf16> to vector<32x192xbf16>
    %c0_3 = arith.constant 0 : index
    %c1 = arith.constant 1 : index
    %c0_4 = arith.constant 0 : index
    %c0_5 = arith.constant 0 : index
    %2 = vector.load %arg1[%c0_3, %c1, %c0_4, %c0_5] : memref<1x2x35x192xbf16, #tpu.memory_space<vmem>>, vector<1x1x32x192xbf16>
    %3 = vector.shape_cast %2 : vector<1x1x32x192xbf16> to vector<32x192xbf16>
    %c0_6 = arith.constant 0 : index
    %c0_7 = arith.constant 0 : index
    %c1_8 = arith.constant 1 : index
    %c0_9 = arith.constant 0 : index
    %4 = vector.load %arg1[%c0_6, %c0_7, %c1_8, %c0_9] : memref<1x2x35x192xbf16, #tpu.memory_space<vmem>>, vector<1x1x32x192xbf16>
    %5 = vector.shape_cast %4 : vector<1x1x32x192xbf16> to vector<32x192xbf16>
    %c0_10 = arith.constant 0 : index
    %c1_11 = arith.constant 1 : index
    %c1_12 = arith.constant 1 : index
    %c0_13 = arith.constant 0 : index
    %6 = vector.load %arg1[%c0_10, %c1_11, %c1_12, %c0_13] : memref<1x2x35x192xbf16, #tpu.memory_space<vmem>>, vector<1x1x32x192xbf16>
    %7 = vector.shape_cast %6 : vector<1x1x32x192xbf16> to vector<32x192xbf16>
    %c0_14 = arith.constant 0 : index
    %c0_15 = arith.constant 0 : index
    %c2 = arith.constant 2 : index
    %c0_16 = arith.constant 0 : index
    %8 = vector.load %arg1[%c0_14, %c0_15, %c2, %c0_16] : memref<1x2x35x192xbf16, #tpu.memory_space<vmem>>, vector<1x1x32x192xbf16>
    %9 = vector.shape_cast %8 : vector<1x1x32x192xbf16> to vector<32x192xbf16>
    %c0_17 = arith.constant 0 : index
    %c1_18 = arith.constant 1 : index
    %c2_19 = arith.constant 2 : index
    %c0_20 = arith.constant 0 : index
    %10 = vector.load %arg1[%c0_17, %c1_18, %c2_19, %c0_20] : memref<1x2x35x192xbf16, #tpu.memory_space<vmem>>, vector<1x1x32x192xbf16>
    %11 = vector.shape_cast %10 : vector<1x1x32x192xbf16> to vector<32x192xbf16>
    %c0_21 = arith.constant 0 : index
    %c0_22 = arith.constant 0 : index
    %c3 = arith.constant 3 : index
    %c0_23 = arith.constant 0 : index
    %12 = vector.load %arg1[%c0_21, %c0_22, %c3, %c0_23] : memref<1x2x35x192xbf16, #tpu.memory_space<vmem>>, vector<1x1x32x192xbf16>
    %13 = vector.shape_cast %12 : vector<1x1x32x192xbf16> to vector<32x192xbf16>
    %c0_24 = arith.constant 0 : index
    %c0_25 = arith.constant 0 : index
    %c0_26 = arith.constant 0 : index
    %14 = vector.load %arg2[%c0_24, %c0_25, %c0_26] : memref<7x192x256xbf16, #tpu.memory_space<vmem>>, vector<1x192x256xbf16>
    %15 = vector.shape_cast %14 : vector<1x192x256xbf16> to vector<192x256xbf16>
    %cst = arith.constant dense<0.000000e+00> : vector<32x256xf32>
    %16 = tpu.matmul %1, %15, %cst {dimension_numbers = #tpu.dot_dimension_numbers<[1], [0], [0], [1], [0, 0, 1, 1], [], []>} : vector<32x192xbf16>, vector<192x256xbf16>, vector<32x256xf32> -> vector<32x256xf32>
    %c1_27 = arith.constant 1 : index
    %c0_28 = arith.constant 0 : index
    %c0_29 = arith.constant 0 : index
    %17 = vector.load %arg2[%c1_27, %c0_28, %c0_29] : memref<7x192x256xbf16, #tpu.memory_space<vmem>>, vector<1x192x256xbf16>
    %18 = vector.shape_cast %17 : vector<1x192x256xbf16> to vector<192x256xbf16>
    %cst_30 = arith.constant dense<0.000000e+00> : vector<32x256xf32>
    %19 = tpu.matmul %3, %18, %cst_30 {dimension_numbers = #tpu.dot_dimension_numbers<[1], [0], [0], [1], [0, 0, 1, 1], [], []>} : vector<32x192xbf16>, vector<192x256xbf16>, vector<32x256xf32> -> vector<32x256xf32>
    %20 = arith.addf %16, %19 : vector<32x256xf32>
    %c2_31 = arith.constant 2 : index
    %c0_32 = arith.constant 0 : index
    %c0_33 = arith.constant 0 : index
    %21 = vector.load %arg2[%c2_31, %c0_32, %c0_33] : memref<7x192x256xbf16, #tpu.memory_space<vmem>>, vector<1x192x256xbf16>
    %22 = vector.shape_cast %21 : vector<1x192x256xbf16> to vector<192x256xbf16>
    %cst_34 = arith.constant dense<0.000000e+00> : vector<32x256xf32>
    %23 = tpu.matmul %5, %22, %cst_34 {dimension_numbers = #tpu.dot_dimension_numbers<[1], [0], [0], [1], [0, 0, 1, 1], [], []>} : vector<32x192xbf16>, vector<192x256xbf16>, vector<32x256xf32> -> vector<32x256xf32>
    %24 = arith.addf %20, %23 : vector<32x256xf32>
    %c3_35 = arith.constant 3 : index
    %c0_36 = arith.constant 0 : index
    %c0_37 = arith.constant 0 : index
    %25 = vector.load %arg2[%c3_35, %c0_36, %c0_37] : memref<7x192x256xbf16, #tpu.memory_space<vmem>>, vector<1x192x256xbf16>
    %26 = vector.shape_cast %25 : vector<1x192x256xbf16> to vector<192x256xbf16>
    %cst_38 = arith.constant dense<0.000000e+00> : vector<32x256xf32>
    %27 = tpu.matmul %7, %26, %cst_38 {dimension_numbers = #tpu.dot_dimension_numbers<[1], [0], [0], [1], [0, 0, 1, 1], [], []>} : vector<32x192xbf16>, vector<192x256xbf16>, vector<32x256xf32> -> vector<32x256xf32>
    %28 = arith.addf %24, %27 : vector<32x256xf32>
    %c4 = arith.constant 4 : index
    %c0_39 = arith.constant 0 : index
    %c0_40 = arith.constant 0 : index
    %29 = vector.load %arg2[%c4, %c0_39, %c0_40] : memref<7x192x256xbf16, #tpu.memory_space<vmem>>, vector<1x192x256xbf16>
    %30 = vector.shape_cast %29 : vector<1x192x256xbf16> to vector<192x256xbf16>
    %cst_41 = arith.constant dense<0.000000e+00> : vector<32x256xf32>
    %31 = tpu.matmul %9, %30, %cst_41 {dimension_numbers = #tpu.dot_dimension_numbers<[1], [0], [0], [1], [0, 0, 1, 1], [], []>} : vector<32x192xbf16>, vector<192x256xbf16>, vector<32x256xf32> -> vector<32x256xf32>
    %32 = arith.addf %28, %31 : vector<32x256xf32>
    %c5 = arith.constant 5 : index
    %c0_42 = arith.constant 0 : index
    %c0_43 = arith.constant 0 : index
    %33 = vector.load %arg2[%c5, %c0_42, %c0_43] : memref<7x192x256xbf16, #tpu.memory_space<vmem>>, vector<1x192x256xbf16>
    %34 = vector.shape_cast %33 : vector<1x192x256xbf16> to vector<192x256xbf16>
    %cst_44 = arith.constant dense<0.000000e+00> : vector<32x256xf32>
    %35 = tpu.matmul %11, %34, %cst_44 {dimension_numbers = #tpu.dot_dimension_numbers<[1], [0], [0], [1], [0, 0, 1, 1], [], []>} : vector<32x192xbf16>, vector<192x256xbf16>, vector<32x256xf32> -> vector<32x256xf32>
    %36 = arith.addf %32, %35 : vector<32x256xf32>
    %c6 = arith.constant 6 : index
    %c0_45 = arith.constant 0 : index
    %c0_46 = arith.constant 0 : index
    %37 = vector.load %arg2[%c6, %c0_45, %c0_46] : memref<7x192x256xbf16, #tpu.memory_space<vmem>>, vector<1x192x256xbf16>
    %38 = vector.shape_cast %37 : vector<1x192x256xbf16> to vector<192x256xbf16>
    %cst_47 = arith.constant dense<0.000000e+00> : vector<32x256xf32>
    %39 = tpu.matmul %13, %38, %cst_47 {dimension_numbers = #tpu.dot_dimension_numbers<[1], [0], [0], [1], [0, 0, 1, 1], [], []>} : vector<32x192xbf16>, vector<192x256xbf16>, vector<32x256xf32> -> vector<32x256xf32>
    %40 = arith.addf %36, %39 : vector<32x256xf32>
    %c0_48 = arith.constant 0 : index
    %c0_49 = arith.constant 0 : index
    %41 = vector.load %arg3[%c0_48, %c0_49] : memref<1x256xf32, #tpu.memory_space<vmem>>, vector<1x256xf32>
    %42 = vector.broadcast %41 : vector<1x256xf32> to vector<32x256xf32>
    %43 = arith.addf %40, %42 : vector<32x256xf32>
    %cst_50 = arith.constant 0.000000e+00 : f32
    %44 = vector.broadcast %cst_50 : f32 to vector<32x256xf32>
    %45 = arith.maximumf %43, %44 : vector<32x256xf32>
    %46 = arith.truncf %45 : vector<32x256xf32> to vector<32x256xbf16>
    %c0_51 = arith.constant 0 : index
    %c0_52 = arith.constant 0 : index
    %c0_53 = arith.constant 0 : index
    %47 = vector.load %arg4[%c0_51, %c0_52, %c0_53] : memref<1x32x256xbf16, #tpu.memory_space<vmem>>, vector<1x32x256xbf16>
    %48 = vector.shape_cast %47 : vector<1x32x256xbf16> to vector<32x256xbf16>
    %49 = vector.shape_cast %46 : vector<32x256xbf16> to vector<1x32x256xbf16>
    tpu.vector_store %arg4[%c0_51, %c0_52, %c0_53], %49 {strides = array<i32>} : memref<1x32x256xbf16, #tpu.memory_space<vmem>>, vector<1x32x256xbf16>,
    return
  }
  func.func @transform_0(%arg0: i32) -> (i32, i32, i32, i32) {
    %c0_i32 = arith.constant 0 : i32
    %c0_i32_0 = arith.constant 0 : i32
    %c0_i32_1 = arith.constant 0 : i32
    %c0_i32_2 = arith.constant 0 : i32
    return %arg0, %c0_i32, %c0_i32_0, %c0_i32_1 : i32, i32, i32, i32
  }
  func.func @transform_1(%arg0: i32) -> (i32, i32, i32) {
    %c0_i32 = arith.constant 0 : i32
    %c0_i32_0 = arith.constant 0 : i32
    %c0_i32_1 = arith.constant 0 : i32
    %c0_i32_2 = arith.constant 0 : i32
    return %c0_i32, %c0_i32_0, %c0_i32_1 : i32, i32, i32
  }
  func.func @transform_2(%arg0: i32) -> (i32, i32) {
    %c0_i32 = arith.constant 0 : i32
    %c0_i32_0 = arith.constant 0 : i32
    %c0_i32_1 = arith.constant 0 : i32
    return %c0_i32, %c0_i32_0 : i32, i32
  }
  func.func @transform_3(%arg0: i32) -> (i32, i32, i32) {
    %c0_i32 = arith.constant 0 : i32
    %c0_i32_0 = arith.constant 0 : i32
    %c0_i32_1 = arith.constant 0 : i32
    return %arg0, %c0_i32, %c0_i32_0 : i32, i32, i32
  }
}

module attributes {stable_mosaic.version = 11 : i64} {
  func.func @_stage_identity_kernel(%arg0: i32, %arg1: memref<1x16x128xbf16, #tpu.memory_space<vmem>>, %arg2: memref<3x128x128xbf16, #tpu.memory_space<vmem>>, %arg3: memref<1x128xf32, #tpu.memory_space<vmem>>, %arg4: memref<3x128x128xbf16, #tpu.memory_space<vmem>>, %arg5: memref<1x128xf32, #tpu.memory_space<vmem>>, %arg6: memref<3x128x128xbf16, #tpu.memory_space<vmem>>, %arg7: memref<1x128xf32, #tpu.memory_space<vmem>>, %arg8: memref<3x128x128xbf16, #tpu.memory_space<vmem>>, %arg9: memref<1x128xf32, #tpu.memory_space<vmem>>, %arg10: memref<1x16x128xbf16, #tpu.memory_space<vmem>>, %arg11: memref<18x128xbf16, #tpu.memory_space<vmem>>) attributes {dimension_semantics = [#tpu.dimension_semantics<parallel>], iteration_bounds = array<i64: 2>, scalar_prefetch = 0 : i64, scratch_operands = 1 : i64, tpu.core_type = #tpu.core_type<tc>, window_params = [{transform_indices = @transform_0, window_bounds = array<i64: 1, 16, 128>}, {pipeline_mode = #tpu.pipeline_mode<synchronous>, transform_indices = @transform_1, window_bounds = array<i64: 3, 128, 128>}, {pipeline_mode = #tpu.pipeline_mode<synchronous>, transform_indices = @transform_2, window_bounds = array<i64: 1, 128>}, {pipeline_mode = #tpu.pipeline_mode<synchronous>, transform_indices = @transform_3, window_bounds = array<i64: 3, 128, 128>}, {pipeline_mode = #tpu.pipeline_mode<synchronous>, transform_indices = @transform_4, window_bounds = array<i64: 1, 128>}, {pipeline_mode = #tpu.pipeline_mode<synchronous>, transform_indices = @transform_5, window_bounds = array<i64: 3, 128, 128>}, {pipeline_mode = #tpu.pipeline_mode<synchronous>, transform_indices = @transform_6, window_bounds = array<i64: 1, 128>}, {pipeline_mode = #tpu.pipeline_mode<synchronous>, transform_indices = @transform_7, window_bounds = array<i64: 3, 128, 128>}, {pipeline_mode = #tpu.pipeline_mode<synchronous>, transform_indices = @transform_8, window_bounds = array<i64: 1, 128>}, {transform_indices = @transform_9, window_bounds = array<i64: 1, 16, 128>}]} {
    %cst = arith.constant 0.000000e+00 : bf16
    %0 = vector.broadcast %cst : bf16 to vector<1x128xbf16>
    %c0 = arith.constant 0 : index
    %c0_0 = arith.constant 0 : index
    %1 = vector.load %arg11[%c0, %c0_0] : memref<18x128xbf16, #tpu.memory_space<vmem>>, vector<1x128xbf16>
    tpu.vector_store %arg11[%c0, %c0_0], %0 {strides = array<i32>} : memref<18x128xbf16, #tpu.memory_space<vmem>>, vector<1x128xbf16>,
    %c17 = arith.constant 17 : index
    %c0_1 = arith.constant 0 : index
    %2 = vector.load %arg11[%c17, %c0_1] : memref<18x128xbf16, #tpu.memory_space<vmem>>, vector<1x128xbf16>
    tpu.vector_store %arg11[%c17, %c0_1], %0 {strides = array<i32>} : memref<18x128xbf16, #tpu.memory_space<vmem>>, vector<1x128xbf16>,
    %c0_2 = arith.constant 0 : index
    %c0_3 = arith.constant 0 : index
    %c0_4 = arith.constant 0 : index
    %3 = vector.load %arg1[%c0_2, %c0_3, %c0_4] : memref<1x16x128xbf16, #tpu.memory_space<vmem>>, vector<1x16x128xbf16>
    %4 = vector.shape_cast %3 : vector<1x16x128xbf16> to vector<16x128xbf16>
    %c1 = arith.constant 1 : index
    %c0_5 = arith.constant 0 : index
    %5 = vector.load %arg11[%c1, %c0_5] : memref<18x128xbf16, #tpu.memory_space<vmem>>, vector<16x128xbf16>
    tpu.vector_store %arg11[%c1, %c0_5], %4 {strides = array<i32>} : memref<18x128xbf16, #tpu.memory_space<vmem>>, vector<16x128xbf16>,
    %c0_6 = arith.constant 0 : index
    %c0_7 = arith.constant 0 : index
    %6 = vector.load %arg11[%c0_6, %c0_7] : memref<18x128xbf16, #tpu.memory_space<vmem>>, vector<16x128xbf16>
    %c1_8 = arith.constant 1 : index
    %c0_9 = arith.constant 0 : index
    %7 = vector.load %arg11[%c1_8, %c0_9] : memref<18x128xbf16, #tpu.memory_space<vmem>>, vector<16x128xbf16>
    %c2 = arith.constant 2 : index
    %c0_10 = arith.constant 0 : index
    %8 = vector.load %arg11[%c2, %c0_10] : memref<18x128xbf16, #tpu.memory_space<vmem>>, vector<16x128xbf16>
    %c0_11 = arith.constant 0 : index
    %c0_12 = arith.constant 0 : index
    %c0_13 = arith.constant 0 : index
    %9 = vector.load %arg2[%c0_11, %c0_12, %c0_13] : memref<3x128x128xbf16, #tpu.memory_space<vmem>>, vector<1x128x128xbf16>
    %10 = vector.shape_cast %9 : vector<1x128x128xbf16> to vector<128x128xbf16>
    %cst_14 = arith.constant dense<0.000000e+00> : vector<16x128xf32>
    %11 = tpu.matmul %6, %10, %cst_14 {dimension_numbers = #tpu.dot_dimension_numbers<[1], [0], [0], [1], [0, 0, 1, 1], [], []>} : vector<16x128xbf16>, vector<128x128xbf16>, vector<16x128xf32> -> vector<16x128xf32>
    %c1_15 = arith.constant 1 : index
    %c0_16 = arith.constant 0 : index
    %c0_17 = arith.constant 0 : index
    %12 = vector.load %arg2[%c1_15, %c0_16, %c0_17] : memref<3x128x128xbf16, #tpu.memory_space<vmem>>, vector<1x128x128xbf16>
    %13 = vector.shape_cast %12 : vector<1x128x128xbf16> to vector<128x128xbf16>
    %cst_18 = arith.constant dense<0.000000e+00> : vector<16x128xf32>
    %14 = tpu.matmul %7, %13, %cst_18 {dimension_numbers = #tpu.dot_dimension_numbers<[1], [0], [0], [1], [0, 0, 1, 1], [], []>} : vector<16x128xbf16>, vector<128x128xbf16>, vector<16x128xf32> -> vector<16x128xf32>
    %15 = arith.addf %11, %14 : vector<16x128xf32>
    %c2_19 = arith.constant 2 : index
    %c0_20 = arith.constant 0 : index
    %c0_21 = arith.constant 0 : index
    %16 = vector.load %arg2[%c2_19, %c0_20, %c0_21] : memref<3x128x128xbf16, #tpu.memory_space<vmem>>, vector<1x128x128xbf16>
    %17 = vector.shape_cast %16 : vector<1x128x128xbf16> to vector<128x128xbf16>
    %cst_22 = arith.constant dense<0.000000e+00> : vector<16x128xf32>
    %18 = tpu.matmul %8, %17, %cst_22 {dimension_numbers = #tpu.dot_dimension_numbers<[1], [0], [0], [1], [0, 0, 1, 1], [], []>} : vector<16x128xbf16>, vector<128x128xbf16>, vector<16x128xf32> -> vector<16x128xf32>
    %19 = arith.addf %15, %18 : vector<16x128xf32>
    %c0_23 = arith.constant 0 : index
    %c0_24 = arith.constant 0 : index
    %20 = vector.load %arg3[%c0_23, %c0_24] : memref<1x128xf32, #tpu.memory_space<vmem>>, vector<1x128xf32>
    %21 = vector.broadcast %20 : vector<1x128xf32> to vector<16x128xf32>
    %22 = arith.addf %19, %21 : vector<16x128xf32>
    %cst_25 = arith.constant 0.000000e+00 : f32
    %23 = vector.broadcast %cst_25 : f32 to vector<16x128xf32>
    %24 = arith.maximumf %22, %23 : vector<16x128xf32>
    %25 = arith.truncf %24 : vector<16x128xf32> to vector<16x128xbf16>
    %c1_26 = arith.constant 1 : index
    %c0_27 = arith.constant 0 : index
    %26 = vector.load %arg11[%c1_26, %c0_27] : memref<18x128xbf16, #tpu.memory_space<vmem>>, vector<16x128xbf16>
    tpu.vector_store %arg11[%c1_26, %c0_27], %25 {strides = array<i32>} : memref<18x128xbf16, #tpu.memory_space<vmem>>, vector<16x128xbf16>,
    %c0_28 = arith.constant 0 : index
    %c0_29 = arith.constant 0 : index
    %27 = vector.load %arg11[%c0_28, %c0_29] : memref<18x128xbf16, #tpu.memory_space<vmem>>, vector<16x128xbf16>
    %c1_30 = arith.constant 1 : index
    %c0_31 = arith.constant 0 : index
    %28 = vector.load %arg11[%c1_30, %c0_31] : memref<18x128xbf16, #tpu.memory_space<vmem>>, vector<16x128xbf16>
    %c2_32 = arith.constant 2 : index
    %c0_33 = arith.constant 0 : index
    %29 = vector.load %arg11[%c2_32, %c0_33] : memref<18x128xbf16, #tpu.memory_space<vmem>>, vector<16x128xbf16>
    %c0_34 = arith.constant 0 : index
    %c0_35 = arith.constant 0 : index
    %c0_36 = arith.constant 0 : index
    %30 = vector.load %arg4[%c0_34, %c0_35, %c0_36] : memref<3x128x128xbf16, #tpu.memory_space<vmem>>, vector<1x128x128xbf16>
    %31 = vector.shape_cast %30 : vector<1x128x128xbf16> to vector<128x128xbf16>
    %cst_37 = arith.constant dense<0.000000e+00> : vector<16x128xf32>
    %32 = tpu.matmul %27, %31, %cst_37 {dimension_numbers = #tpu.dot_dimension_numbers<[1], [0], [0], [1], [0, 0, 1, 1], [], []>} : vector<16x128xbf16>, vector<128x128xbf16>, vector<16x128xf32> -> vector<16x128xf32>
    %c1_38 = arith.constant 1 : index
    %c0_39 = arith.constant 0 : index
    %c0_40 = arith.constant 0 : index
    %33 = vector.load %arg4[%c1_38, %c0_39, %c0_40] : memref<3x128x128xbf16, #tpu.memory_space<vmem>>, vector<1x128x128xbf16>
    %34 = vector.shape_cast %33 : vector<1x128x128xbf16> to vector<128x128xbf16>
    %cst_41 = arith.constant dense<0.000000e+00> : vector<16x128xf32>
    %35 = tpu.matmul %28, %34, %cst_41 {dimension_numbers = #tpu.dot_dimension_numbers<[1], [0], [0], [1], [0, 0, 1, 1], [], []>} : vector<16x128xbf16>, vector<128x128xbf16>, vector<16x128xf32> -> vector<16x128xf32>
    %36 = arith.addf %32, %35 : vector<16x128xf32>
    %c2_42 = arith.constant 2 : index
    %c0_43 = arith.constant 0 : index
    %c0_44 = arith.constant 0 : index
    %37 = vector.load %arg4[%c2_42, %c0_43, %c0_44] : memref<3x128x128xbf16, #tpu.memory_space<vmem>>, vector<1x128x128xbf16>
    %38 = vector.shape_cast %37 : vector<1x128x128xbf16> to vector<128x128xbf16>
    %cst_45 = arith.constant dense<0.000000e+00> : vector<16x128xf32>
    %39 = tpu.matmul %29, %38, %cst_45 {dimension_numbers = #tpu.dot_dimension_numbers<[1], [0], [0], [1], [0, 0, 1, 1], [], []>} : vector<16x128xbf16>, vector<128x128xbf16>, vector<16x128xf32> -> vector<16x128xf32>
    %40 = arith.addf %36, %39 : vector<16x128xf32>
    %c0_46 = arith.constant 0 : index
    %c0_47 = arith.constant 0 : index
    %41 = vector.load %arg5[%c0_46, %c0_47] : memref<1x128xf32, #tpu.memory_space<vmem>>, vector<1x128xf32>
    %42 = vector.broadcast %41 : vector<1x128xf32> to vector<16x128xf32>
    %43 = arith.addf %40, %42 : vector<16x128xf32>
    %44 = arith.extf %4 : vector<16x128xbf16> to vector<16x128xf32>
    %45 = arith.addf %43, %44 : vector<16x128xf32>
    %cst_48 = arith.constant 0.000000e+00 : f32
    %46 = vector.broadcast %cst_48 : f32 to vector<16x128xf32>
    %47 = arith.maximumf %45, %46 : vector<16x128xf32>
    %48 = arith.truncf %47 : vector<16x128xf32> to vector<16x128xbf16>
    %c1_49 = arith.constant 1 : index
    %c0_50 = arith.constant 0 : index
    %49 = vector.load %arg11[%c1_49, %c0_50] : memref<18x128xbf16, #tpu.memory_space<vmem>>, vector<16x128xbf16>
    tpu.vector_store %arg11[%c1_49, %c0_50], %48 {strides = array<i32>} : memref<18x128xbf16, #tpu.memory_space<vmem>>, vector<16x128xbf16>,
    %c0_51 = arith.constant 0 : index
    %c0_52 = arith.constant 0 : index
    %50 = vector.load %arg11[%c0_51, %c0_52] : memref<18x128xbf16, #tpu.memory_space<vmem>>, vector<16x128xbf16>
    %c1_53 = arith.constant 1 : index
    %c0_54 = arith.constant 0 : index
    %51 = vector.load %arg11[%c1_53, %c0_54] : memref<18x128xbf16, #tpu.memory_space<vmem>>, vector<16x128xbf16>
    %c2_55 = arith.constant 2 : index
    %c0_56 = arith.constant 0 : index
    %52 = vector.load %arg11[%c2_55, %c0_56] : memref<18x128xbf16, #tpu.memory_space<vmem>>, vector<16x128xbf16>
    %c0_57 = arith.constant 0 : index
    %c0_58 = arith.constant 0 : index
    %c0_59 = arith.constant 0 : index
    %53 = vector.load %arg6[%c0_57, %c0_58, %c0_59] : memref<3x128x128xbf16, #tpu.memory_space<vmem>>, vector<1x128x128xbf16>
    %54 = vector.shape_cast %53 : vector<1x128x128xbf16> to vector<128x128xbf16>
    %cst_60 = arith.constant dense<0.000000e+00> : vector<16x128xf32>
    %55 = tpu.matmul %50, %54, %cst_60 {dimension_numbers = #tpu.dot_dimension_numbers<[1], [0], [0], [1], [0, 0, 1, 1], [], []>} : vector<16x128xbf16>, vector<128x128xbf16>, vector<16x128xf32> -> vector<16x128xf32>
    %c1_61 = arith.constant 1 : index
    %c0_62 = arith.constant 0 : index
    %c0_63 = arith.constant 0 : index
    %56 = vector.load %arg6[%c1_61, %c0_62, %c0_63] : memref<3x128x128xbf16, #tpu.memory_space<vmem>>, vector<1x128x128xbf16>
    %57 = vector.shape_cast %56 : vector<1x128x128xbf16> to vector<128x128xbf16>
    %cst_64 = arith.constant dense<0.000000e+00> : vector<16x128xf32>
    %58 = tpu.matmul %51, %57, %cst_64 {dimension_numbers = #tpu.dot_dimension_numbers<[1], [0], [0], [1], [0, 0, 1, 1], [], []>} : vector<16x128xbf16>, vector<128x128xbf16>, vector<16x128xf32> -> vector<16x128xf32>
    %59 = arith.addf %55, %58 : vector<16x128xf32>
    %c2_65 = arith.constant 2 : index
    %c0_66 = arith.constant 0 : index
    %c0_67 = arith.constant 0 : index
    %60 = vector.load %arg6[%c2_65, %c0_66, %c0_67] : memref<3x128x128xbf16, #tpu.memory_space<vmem>>, vector<1x128x128xbf16>
    %61 = vector.shape_cast %60 : vector<1x128x128xbf16> to vector<128x128xbf16>
    %cst_68 = arith.constant dense<0.000000e+00> : vector<16x128xf32>
    %62 = tpu.matmul %52, %61, %cst_68 {dimension_numbers = #tpu.dot_dimension_numbers<[1], [0], [0], [1], [0, 0, 1, 1], [], []>} : vector<16x128xbf16>, vector<128x128xbf16>, vector<16x128xf32> -> vector<16x128xf32>
    %63 = arith.addf %59, %62 : vector<16x128xf32>
    %c0_69 = arith.constant 0 : index
    %c0_70 = arith.constant 0 : index
    %64 = vector.load %arg7[%c0_69, %c0_70] : memref<1x128xf32, #tpu.memory_space<vmem>>, vector<1x128xf32>
    %65 = vector.broadcast %64 : vector<1x128xf32> to vector<16x128xf32>
    %66 = arith.addf %63, %65 : vector<16x128xf32>
    %cst_71 = arith.constant 0.000000e+00 : f32
    %67 = vector.broadcast %cst_71 : f32 to vector<16x128xf32>
    %68 = arith.maximumf %66, %67 : vector<16x128xf32>
    %69 = arith.truncf %68 : vector<16x128xf32> to vector<16x128xbf16>
    %c1_72 = arith.constant 1 : index
    %c0_73 = arith.constant 0 : index
    %70 = vector.load %arg11[%c1_72, %c0_73] : memref<18x128xbf16, #tpu.memory_space<vmem>>, vector<16x128xbf16>
    tpu.vector_store %arg11[%c1_72, %c0_73], %69 {strides = array<i32>} : memref<18x128xbf16, #tpu.memory_space<vmem>>, vector<16x128xbf16>,
    %c0_74 = arith.constant 0 : index
    %c0_75 = arith.constant 0 : index
    %71 = vector.load %arg11[%c0_74, %c0_75] : memref<18x128xbf16, #tpu.memory_space<vmem>>, vector<16x128xbf16>
    %c1_76 = arith.constant 1 : index
    %c0_77 = arith.constant 0 : index
    %72 = vector.load %arg11[%c1_76, %c0_77] : memref<18x128xbf16, #tpu.memory_space<vmem>>, vector<16x128xbf16>
    %c2_78 = arith.constant 2 : index
    %c0_79 = arith.constant 0 : index
    %73 = vector.load %arg11[%c2_78, %c0_79] : memref<18x128xbf16, #tpu.memory_space<vmem>>, vector<16x128xbf16>
    %c0_80 = arith.constant 0 : index
    %c0_81 = arith.constant 0 : index
    %c0_82 = arith.constant 0 : index
    %74 = vector.load %arg8[%c0_80, %c0_81, %c0_82] : memref<3x128x128xbf16, #tpu.memory_space<vmem>>, vector<1x128x128xbf16>
    %75 = vector.shape_cast %74 : vector<1x128x128xbf16> to vector<128x128xbf16>
    %cst_83 = arith.constant dense<0.000000e+00> : vector<16x128xf32>
    %76 = tpu.matmul %71, %75, %cst_83 {dimension_numbers = #tpu.dot_dimension_numbers<[1], [0], [0], [1], [0, 0, 1, 1], [], []>} : vector<16x128xbf16>, vector<128x128xbf16>, vector<16x128xf32> -> vector<16x128xf32>
    %c1_84 = arith.constant 1 : index
    %c0_85 = arith.constant 0 : index
    %c0_86 = arith.constant 0 : index
    %77 = vector.load %arg8[%c1_84, %c0_85, %c0_86] : memref<3x128x128xbf16, #tpu.memory_space<vmem>>, vector<1x128x128xbf16>
    %78 = vector.shape_cast %77 : vector<1x128x128xbf16> to vector<128x128xbf16>
    %cst_87 = arith.constant dense<0.000000e+00> : vector<16x128xf32>
    %79 = tpu.matmul %72, %78, %cst_87 {dimension_numbers = #tpu.dot_dimension_numbers<[1], [0], [0], [1], [0, 0, 1, 1], [], []>} : vector<16x128xbf16>, vector<128x128xbf16>, vector<16x128xf32> -> vector<16x128xf32>
    %80 = arith.addf %76, %79 : vector<16x128xf32>
    %c2_88 = arith.constant 2 : index
    %c0_89 = arith.constant 0 : index
    %c0_90 = arith.constant 0 : index
    %81 = vector.load %arg8[%c2_88, %c0_89, %c0_90] : memref<3x128x128xbf16, #tpu.memory_space<vmem>>, vector<1x128x128xbf16>
    %82 = vector.shape_cast %81 : vector<1x128x128xbf16> to vector<128x128xbf16>
    %cst_91 = arith.constant dense<0.000000e+00> : vector<16x128xf32>
    %83 = tpu.matmul %73, %82, %cst_91 {dimension_numbers = #tpu.dot_dimension_numbers<[1], [0], [0], [1], [0, 0, 1, 1], [], []>} : vector<16x128xbf16>, vector<128x128xbf16>, vector<16x128xf32> -> vector<16x128xf32>
    %84 = arith.addf %80, %83 : vector<16x128xf32>
    %c0_92 = arith.constant 0 : index
    %c0_93 = arith.constant 0 : index
    %85 = vector.load %arg9[%c0_92, %c0_93] : memref<1x128xf32, #tpu.memory_space<vmem>>, vector<1x128xf32>
    %86 = vector.broadcast %85 : vector<1x128xf32> to vector<16x128xf32>
    %87 = arith.addf %84, %86 : vector<16x128xf32>
    %88 = arith.extf %48 : vector<16x128xbf16> to vector<16x128xf32>
    %89 = arith.addf %87, %88 : vector<16x128xf32>
    %cst_94 = arith.constant 0.000000e+00 : f32
    %90 = vector.broadcast %cst_94 : f32 to vector<16x128xf32>
    %91 = arith.maximumf %89, %90 : vector<16x128xf32>
    %92 = arith.truncf %91 : vector<16x128xf32> to vector<16x128xbf16>
    %c0_95 = arith.constant 0 : index
    %c0_96 = arith.constant 0 : index
    %c0_97 = arith.constant 0 : index
    %93 = vector.load %arg10[%c0_95, %c0_96, %c0_97] : memref<1x16x128xbf16, #tpu.memory_space<vmem>>, vector<1x16x128xbf16>
    %94 = vector.shape_cast %93 : vector<1x16x128xbf16> to vector<16x128xbf16>
    %95 = vector.shape_cast %92 : vector<16x128xbf16> to vector<1x16x128xbf16>
    tpu.vector_store %arg10[%c0_95, %c0_96, %c0_97], %95 {strides = array<i32>} : memref<1x16x128xbf16, #tpu.memory_space<vmem>>, vector<1x16x128xbf16>,
    return
  }
  func.func @transform_0(%arg0: i32) -> (i32, i32, i32) {
    %c0_i32 = arith.constant 0 : i32
    %c0_i32_0 = arith.constant 0 : i32
    %c0_i32_1 = arith.constant 0 : i32
    return %arg0, %c0_i32, %c0_i32_0 : i32, i32, i32
  }
  func.func @transform_1(%arg0: i32) -> (i32, i32, i32) {
    %c0_i32 = arith.constant 0 : i32
    %c0_i32_0 = arith.constant 0 : i32
    %c0_i32_1 = arith.constant 0 : i32
    %c0_i32_2 = arith.constant 0 : i32
    return %c0_i32, %c0_i32_0, %c0_i32_1 : i32, i32, i32
  }
  func.func @transform_2(%arg0: i32) -> (i32, i32) {
    %c0_i32 = arith.constant 0 : i32
    %c0_i32_0 = arith.constant 0 : i32
    %c0_i32_1 = arith.constant 0 : i32
    return %c0_i32, %c0_i32_0 : i32, i32
  }
  func.func @transform_3(%arg0: i32) -> (i32, i32, i32) {
    %c0_i32 = arith.constant 0 : i32
    %c0_i32_0 = arith.constant 0 : i32
    %c0_i32_1 = arith.constant 0 : i32
    %c0_i32_2 = arith.constant 0 : i32
    return %c0_i32, %c0_i32_0, %c0_i32_1 : i32, i32, i32
  }
  func.func @transform_4(%arg0: i32) -> (i32, i32) {
    %c0_i32 = arith.constant 0 : i32
    %c0_i32_0 = arith.constant 0 : i32
    %c0_i32_1 = arith.constant 0 : i32
    return %c0_i32, %c0_i32_0 : i32, i32
  }
  func.func @transform_5(%arg0: i32) -> (i32, i32, i32) {
    %c0_i32 = arith.constant 0 : i32
    %c0_i32_0 = arith.constant 0 : i32
    %c0_i32_1 = arith.constant 0 : i32
    %c0_i32_2 = arith.constant 0 : i32
    return %c0_i32, %c0_i32_0, %c0_i32_1 : i32, i32, i32
  }
  func.func @transform_6(%arg0: i32) -> (i32, i32) {
    %c0_i32 = arith.constant 0 : i32
    %c0_i32_0 = arith.constant 0 : i32
    %c0_i32_1 = arith.constant 0 : i32
    return %c0_i32, %c0_i32_0 : i32, i32
  }
  func.func @transform_7(%arg0: i32) -> (i32, i32, i32) {
    %c0_i32 = arith.constant 0 : i32
    %c0_i32_0 = arith.constant 0 : i32
    %c0_i32_1 = arith.constant 0 : i32
    %c0_i32_2 = arith.constant 0 : i32
    return %c0_i32, %c0_i32_0, %c0_i32_1 : i32, i32, i32
  }
  func.func @transform_8(%arg0: i32) -> (i32, i32) {
    %c0_i32 = arith.constant 0 : i32
    %c0_i32_0 = arith.constant 0 : i32
    %c0_i32_1 = arith.constant 0 : i32
    return %c0_i32, %c0_i32_0 : i32, i32
  }
  func.func @transform_9(%arg0: i32) -> (i32, i32, i32) {
    %c0_i32 = arith.constant 0 : i32
    %c0_i32_0 = arith.constant 0 : i32
    %c0_i32_1 = arith.constant 0 : i32
    return %arg0, %c0_i32, %c0_i32_0 : i32, i32, i32
  }
}

module attributes {stable_mosaic.version = 11 : i64} {
  func.func @_stage_down_kernel(%arg0: i32, %arg1: memref<1x2x9x128xbf16, #tpu.memory_space<vmem>>, %arg2: memref<3x128x128xbf16, #tpu.memory_space<vmem>>, %arg3: memref<1x128xf32, #tpu.memory_space<vmem>>, %arg4: memref<3x128x128xbf16, #tpu.memory_space<vmem>>, %arg5: memref<1x128xf32, #tpu.memory_space<vmem>>, %arg6: memref<128x128xbf16, #tpu.memory_space<vmem>>, %arg7: memref<1x128xf32, #tpu.memory_space<vmem>>, %arg8: memref<3x128x128xbf16, #tpu.memory_space<vmem>>, %arg9: memref<1x128xf32, #tpu.memory_space<vmem>>, %arg10: memref<3x128x128xbf16, #tpu.memory_space<vmem>>, %arg11: memref<1x128xf32, #tpu.memory_space<vmem>>, %arg12: memref<1x8x128xbf16, #tpu.memory_space<vmem>>, %arg13: memref<10x128xbf16, #tpu.memory_space<vmem>>) attributes {dimension_semantics = [#tpu.dimension_semantics<parallel>], iteration_bounds = array<i64: 2>, scalar_prefetch = 0 : i64, scratch_operands = 1 : i64, tpu.core_type = #tpu.core_type<tc>, window_params = [{transform_indices = @transform_0, window_bounds = array<i64: 1, 2, 9, 128>}, {pipeline_mode = #tpu.pipeline_mode<synchronous>, transform_indices = @transform_1, window_bounds = array<i64: 3, 128, 128>}, {pipeline_mode = #tpu.pipeline_mode<synchronous>, transform_indices = @transform_2, window_bounds = array<i64: 1, 128>}, {pipeline_mode = #tpu.pipeline_mode<synchronous>, transform_indices = @transform_3, window_bounds = array<i64: 3, 128, 128>}, {pipeline_mode = #tpu.pipeline_mode<synchronous>, transform_indices = @transform_4, window_bounds = array<i64: 1, 128>}, {pipeline_mode = #tpu.pipeline_mode<synchronous>, transform_indices = @transform_5, window_bounds = array<i64: 128, 128>}, {pipeline_mode = #tpu.pipeline_mode<synchronous>, transform_indices = @transform_6, window_bounds = array<i64: 1, 128>}, {pipeline_mode = #tpu.pipeline_mode<synchronous>, transform_indices = @transform_7, window_bounds = array<i64: 3, 128, 128>}, {pipeline_mode = #tpu.pipeline_mode<synchronous>, transform_indices = @transform_8, window_bounds = array<i64: 1, 128>}, {pipeline_mode = #tpu.pipeline_mode<synchronous>, transform_indices = @transform_9, window_bounds = array<i64: 3, 128, 128>}, {pipeline_mode = #tpu.pipeline_mode<synchronous>, transform_indices = @transform_10, window_bounds = array<i64: 1, 128>}, {transform_indices = @transform_11, window_bounds = array<i64: 1, 8, 128>}]} {
    %cst = arith.constant 0.000000e+00 : bf16
    %0 = vector.broadcast %cst : bf16 to vector<1x128xbf16>
    %c0 = arith.constant 0 : index
    %c0_0 = arith.constant 0 : index
    %1 = vector.load %arg13[%c0, %c0_0] : memref<10x128xbf16, #tpu.memory_space<vmem>>, vector<1x128xbf16>
    tpu.vector_store %arg13[%c0, %c0_0], %0 {strides = array<i32>} : memref<10x128xbf16, #tpu.memory_space<vmem>>, vector<1x128xbf16>,
    %c9 = arith.constant 9 : index
    %c0_1 = arith.constant 0 : index
    %2 = vector.load %arg13[%c9, %c0_1] : memref<10x128xbf16, #tpu.memory_space<vmem>>, vector<1x128xbf16>
    tpu.vector_store %arg13[%c9, %c0_1], %0 {strides = array<i32>} : memref<10x128xbf16, #tpu.memory_space<vmem>>, vector<1x128xbf16>,
    %c0_2 = arith.constant 0 : index
    %c0_3 = arith.constant 0 : index
    %c0_4 = arith.constant 0 : index
    %c0_5 = arith.constant 0 : index
    %3 = vector.load %arg1[%c0_2, %c0_3, %c0_4, %c0_5] : memref<1x2x9x128xbf16, #tpu.memory_space<vmem>>, vector<1x1x8x128xbf16>
    %4 = vector.shape_cast %3 : vector<1x1x8x128xbf16> to vector<8x128xbf16>
    %c0_6 = arith.constant 0 : index
    %c1 = arith.constant 1 : index
    %c0_7 = arith.constant 0 : index
    %c0_8 = arith.constant 0 : index
    %5 = vector.load %arg1[%c0_6, %c1, %c0_7, %c0_8] : memref<1x2x9x128xbf16, #tpu.memory_space<vmem>>, vector<1x1x8x128xbf16>
    %6 = vector.shape_cast %5 : vector<1x1x8x128xbf16> to vector<8x128xbf16>
    %c0_9 = arith.constant 0 : index
    %c0_10 = arith.constant 0 : index
    %c1_11 = arith.constant 1 : index
    %c0_12 = arith.constant 0 : index
    %7 = vector.load %arg1[%c0_9, %c0_10, %c1_11, %c0_12] : memref<1x2x9x128xbf16, #tpu.memory_space<vmem>>, vector<1x1x8x128xbf16>
    %8 = vector.shape_cast %7 : vector<1x1x8x128xbf16> to vector<8x128xbf16>
    %c0_13 = arith.constant 0 : index
    %c0_14 = arith.constant 0 : index
    %c0_15 = arith.constant 0 : index
    %9 = vector.load %arg2[%c0_13, %c0_14, %c0_15] : memref<3x128x128xbf16, #tpu.memory_space<vmem>>, vector<1x128x128xbf16>
    %10 = vector.shape_cast %9 : vector<1x128x128xbf16> to vector<128x128xbf16>
    %cst_16 = arith.constant dense<0.000000e+00> : vector<8x128xf32>
    %11 = tpu.matmul %4, %10, %cst_16 {dimension_numbers = #tpu.dot_dimension_numbers<[1], [0], [0], [1], [0, 0, 1, 1], [], []>} : vector<8x128xbf16>, vector<128x128xbf16>, vector<8x128xf32> -> vector<8x128xf32>
    %c1_17 = arith.constant 1 : index
    %c0_18 = arith.constant 0 : index
    %c0_19 = arith.constant 0 : index
    %12 = vector.load %arg2[%c1_17, %c0_18, %c0_19] : memref<3x128x128xbf16, #tpu.memory_space<vmem>>, vector<1x128x128xbf16>
    %13 = vector.shape_cast %12 : vector<1x128x128xbf16> to vector<128x128xbf16>
    %cst_20 = arith.constant dense<0.000000e+00> : vector<8x128xf32>
    %14 = tpu.matmul %6, %13, %cst_20 {dimension_numbers = #tpu.dot_dimension_numbers<[1], [0], [0], [1], [0, 0, 1, 1], [], []>} : vector<8x128xbf16>, vector<128x128xbf16>, vector<8x128xf32> -> vector<8x128xf32>
    %15 = arith.addf %11, %14 : vector<8x128xf32>
    %c2 = arith.constant 2 : index
    %c0_21 = arith.constant 0 : index
    %c0_22 = arith.constant 0 : index
    %16 = vector.load %arg2[%c2, %c0_21, %c0_22] : memref<3x128x128xbf16, #tpu.memory_space<vmem>>, vector<1x128x128xbf16>
    %17 = vector.shape_cast %16 : vector<1x128x128xbf16> to vector<128x128xbf16>
    %cst_23 = arith.constant dense<0.000000e+00> : vector<8x128xf32>
    %18 = tpu.matmul %8, %17, %cst_23 {dimension_numbers = #tpu.dot_dimension_numbers<[1], [0], [0], [1], [0, 0, 1, 1], [], []>} : vector<8x128xbf16>, vector<128x128xbf16>, vector<8x128xf32> -> vector<8x128xf32>
    %19 = arith.addf %15, %18 : vector<8x128xf32>
    %c0_24 = arith.constant 0 : index
    %c0_25 = arith.constant 0 : index
    %20 = vector.load %arg3[%c0_24, %c0_25] : memref<1x128xf32, #tpu.memory_space<vmem>>, vector<1x128xf32>
    %21 = vector.broadcast %20 : vector<1x128xf32> to vector<8x128xf32>
    %22 = arith.addf %19, %21 : vector<8x128xf32>
    %cst_26 = arith.constant 0.000000e+00 : f32
    %23 = vector.broadcast %cst_26 : f32 to vector<8x128xf32>
    %24 = arith.maximumf %22, %23 : vector<8x128xf32>
    %c0_27 = arith.constant 0 : index
    %c1_28 = arith.constant 1 : index
    %c0_29 = arith.constant 0 : index
    %c0_30 = arith.constant 0 : index
    %25 = vector.load %arg1[%c0_27, %c1_28, %c0_29, %c0_30] : memref<1x2x9x128xbf16, #tpu.memory_space<vmem>>, vector<1x1x8x128xbf16>
    %26 = vector.shape_cast %25 : vector<1x1x8x128xbf16> to vector<8x128xbf16>
    %c0_31 = arith.constant 0 : index
    %c0_32 = arith.constant 0 : index
    %27 = vector.load %arg6[%c0_31, %c0_32] : memref<128x128xbf16, #tpu.memory_space<vmem>>, vector<128x128xbf16>
    %cst_33 = arith.constant dense<0.000000e+00> : vector<8x128xf32>
    %28 = tpu.matmul %26, %27, %cst_33 {dimension_numbers = #tpu.dot_dimension_numbers<[1], [0], [0], [1], [0, 0, 1, 1], [], []>} : vector<8x128xbf16>, vector<128x128xbf16>, vector<8x128xf32> -> vector<8x128xf32>
    %c0_34 = arith.constant 0 : index
    %c0_35 = arith.constant 0 : index
    %29 = vector.load %arg7[%c0_34, %c0_35] : memref<1x128xf32, #tpu.memory_space<vmem>>, vector<1x128xf32>
    %30 = vector.broadcast %29 : vector<1x128xf32> to vector<8x128xf32>
    %31 = arith.addf %28, %30 : vector<8x128xf32>
    %32 = arith.truncf %24 : vector<8x128xf32> to vector<8x128xbf16>
    %c1_36 = arith.constant 1 : index
    %c0_37 = arith.constant 0 : index
    %33 = vector.load %arg13[%c1_36, %c0_37] : memref<10x128xbf16, #tpu.memory_space<vmem>>, vector<8x128xbf16>
    tpu.vector_store %arg13[%c1_36, %c0_37], %32 {strides = array<i32>} : memref<10x128xbf16, #tpu.memory_space<vmem>>, vector<8x128xbf16>,
    %c0_38 = arith.constant 0 : index
    %c0_39 = arith.constant 0 : index
    %34 = vector.load %arg13[%c0_38, %c0_39] : memref<10x128xbf16, #tpu.memory_space<vmem>>, vector<8x128xbf16>
    %c1_40 = arith.constant 1 : index
    %c0_41 = arith.constant 0 : index
    %35 = vector.load %arg13[%c1_40, %c0_41] : memref<10x128xbf16, #tpu.memory_space<vmem>>, vector<8x128xbf16>
    %c2_42 = arith.constant 2 : index
    %c0_43 = arith.constant 0 : index
    %36 = vector.load %arg13[%c2_42, %c0_43] : memref<10x128xbf16, #tpu.memory_space<vmem>>, vector<8x128xbf16>
    %c0_44 = arith.constant 0 : index
    %c0_45 = arith.constant 0 : index
    %c0_46 = arith.constant 0 : index
    %37 = vector.load %arg4[%c0_44, %c0_45, %c0_46] : memref<3x128x128xbf16, #tpu.memory_space<vmem>>, vector<1x128x128xbf16>
    %38 = vector.shape_cast %37 : vector<1x128x128xbf16> to vector<128x128xbf16>
    %cst_47 = arith.constant dense<0.000000e+00> : vector<8x128xf32>
    %39 = tpu.matmul %34, %38, %cst_47 {dimension_numbers = #tpu.dot_dimension_numbers<[1], [0], [0], [1], [0, 0, 1, 1], [], []>} : vector<8x128xbf16>, vector<128x128xbf16>, vector<8x128xf32> -> vector<8x128xf32>
    %c1_48 = arith.constant 1 : index
    %c0_49 = arith.constant 0 : index
    %c0_50 = arith.constant 0 : index
    %40 = vector.load %arg4[%c1_48, %c0_49, %c0_50] : memref<3x128x128xbf16, #tpu.memory_space<vmem>>, vector<1x128x128xbf16>
    %41 = vector.shape_cast %40 : vector<1x128x128xbf16> to vector<128x128xbf16>
    %cst_51 = arith.constant dense<0.000000e+00> : vector<8x128xf32>
    %42 = tpu.matmul %35, %41, %cst_51 {dimension_numbers = #tpu.dot_dimension_numbers<[1], [0], [0], [1], [0, 0, 1, 1], [], []>} : vector<8x128xbf16>, vector<128x128xbf16>, vector<8x128xf32> -> vector<8x128xf32>
    %43 = arith.addf %39, %42 : vector<8x128xf32>
    %c2_52 = arith.constant 2 : index
    %c0_53 = arith.constant 0 : index
    %c0_54 = arith.constant 0 : index
    %44 = vector.load %arg4[%c2_52, %c0_53, %c0_54] : memref<3x128x128xbf16, #tpu.memory_space<vmem>>, vector<1x128x128xbf16>
    %45 = vector.shape_cast %44 : vector<1x128x128xbf16> to vector<128x128xbf16>
    %cst_55 = arith.constant dense<0.000000e+00> : vector<8x128xf32>
    %46 = tpu.matmul %36, %45, %cst_55 {dimension_numbers = #tpu.dot_dimension_numbers<[1], [0], [0], [1], [0, 0, 1, 1], [], []>} : vector<8x128xbf16>, vector<128x128xbf16>, vector<8x128xf32> -> vector<8x128xf32>
    %47 = arith.addf %43, %46 : vector<8x128xf32>
    %c0_56 = arith.constant 0 : index
    %c0_57 = arith.constant 0 : index
    %48 = vector.load %arg5[%c0_56, %c0_57] : memref<1x128xf32, #tpu.memory_space<vmem>>, vector<1x128xf32>
    %49 = vector.broadcast %48 : vector<1x128xf32> to vector<8x128xf32>
    %50 = arith.addf %47, %49 : vector<8x128xf32>
    %51 = arith.addf %50, %31 : vector<8x128xf32>
    %cst_58 = arith.constant 0.000000e+00 : f32
    %52 = vector.broadcast %cst_58 : f32 to vector<8x128xf32>
    %53 = arith.maximumf %51, %52 : vector<8x128xf32>
    %54 = arith.truncf %53 : vector<8x128xf32> to vector<8x128xbf16>
    %c1_59 = arith.constant 1 : index
    %c0_60 = arith.constant 0 : index
    %55 = vector.load %arg13[%c1_59, %c0_60] : memref<10x128xbf16, #tpu.memory_space<vmem>>, vector<8x128xbf16>
    tpu.vector_store %arg13[%c1_59, %c0_60], %54 {strides = array<i32>} : memref<10x128xbf16, #tpu.memory_space<vmem>>, vector<8x128xbf16>,
    %c0_61 = arith.constant 0 : index
    %c0_62 = arith.constant 0 : index
    %56 = vector.load %arg13[%c0_61, %c0_62] : memref<10x128xbf16, #tpu.memory_space<vmem>>, vector<8x128xbf16>
    %c1_63 = arith.constant 1 : index
    %c0_64 = arith.constant 0 : index
    %57 = vector.load %arg13[%c1_63, %c0_64] : memref<10x128xbf16, #tpu.memory_space<vmem>>, vector<8x128xbf16>
    %c2_65 = arith.constant 2 : index
    %c0_66 = arith.constant 0 : index
    %58 = vector.load %arg13[%c2_65, %c0_66] : memref<10x128xbf16, #tpu.memory_space<vmem>>, vector<8x128xbf16>
    %c0_67 = arith.constant 0 : index
    %c0_68 = arith.constant 0 : index
    %c0_69 = arith.constant 0 : index
    %59 = vector.load %arg8[%c0_67, %c0_68, %c0_69] : memref<3x128x128xbf16, #tpu.memory_space<vmem>>, vector<1x128x128xbf16>
    %60 = vector.shape_cast %59 : vector<1x128x128xbf16> to vector<128x128xbf16>
    %cst_70 = arith.constant dense<0.000000e+00> : vector<8x128xf32>
    %61 = tpu.matmul %56, %60, %cst_70 {dimension_numbers = #tpu.dot_dimension_numbers<[1], [0], [0], [1], [0, 0, 1, 1], [], []>} : vector<8x128xbf16>, vector<128x128xbf16>, vector<8x128xf32> -> vector<8x128xf32>
    %c1_71 = arith.constant 1 : index
    %c0_72 = arith.constant 0 : index
    %c0_73 = arith.constant 0 : index
    %62 = vector.load %arg8[%c1_71, %c0_72, %c0_73] : memref<3x128x128xbf16, #tpu.memory_space<vmem>>, vector<1x128x128xbf16>
    %63 = vector.shape_cast %62 : vector<1x128x128xbf16> to vector<128x128xbf16>
    %cst_74 = arith.constant dense<0.000000e+00> : vector<8x128xf32>
    %64 = tpu.matmul %57, %63, %cst_74 {dimension_numbers = #tpu.dot_dimension_numbers<[1], [0], [0], [1], [0, 0, 1, 1], [], []>} : vector<8x128xbf16>, vector<128x128xbf16>, vector<8x128xf32> -> vector<8x128xf32>
    %65 = arith.addf %61, %64 : vector<8x128xf32>
    %c2_75 = arith.constant 2 : index
    %c0_76 = arith.constant 0 : index
    %c0_77 = arith.constant 0 : index
    %66 = vector.load %arg8[%c2_75, %c0_76, %c0_77] : memref<3x128x128xbf16, #tpu.memory_space<vmem>>, vector<1x128x128xbf16>
    %67 = vector.shape_cast %66 : vector<1x128x128xbf16> to vector<128x128xbf16>
    %cst_78 = arith.constant dense<0.000000e+00> : vector<8x128xf32>
    %68 = tpu.matmul %58, %67, %cst_78 {dimension_numbers = #tpu.dot_dimension_numbers<[1], [0], [0], [1], [0, 0, 1, 1], [], []>} : vector<8x128xbf16>, vector<128x128xbf16>, vector<8x128xf32> -> vector<8x128xf32>
    %69 = arith.addf %65, %68 : vector<8x128xf32>
    %c0_79 = arith.constant 0 : index
    %c0_80 = arith.constant 0 : index
    %70 = vector.load %arg9[%c0_79, %c0_80] : memref<1x128xf32, #tpu.memory_space<vmem>>, vector<1x128xf32>
    %71 = vector.broadcast %70 : vector<1x128xf32> to vector<8x128xf32>
    %72 = arith.addf %69, %71 : vector<8x128xf32>
    %cst_81 = arith.constant 0.000000e+00 : f32
    %73 = vector.broadcast %cst_81 : f32 to vector<8x128xf32>
    %74 = arith.maximumf %72, %73 : vector<8x128xf32>
    %75 = arith.truncf %74 : vector<8x128xf32> to vector<8x128xbf16>
    %c1_82 = arith.constant 1 : index
    %c0_83 = arith.constant 0 : index
    %76 = vector.load %arg13[%c1_82, %c0_83] : memref<10x128xbf16, #tpu.memory_space<vmem>>, vector<8x128xbf16>
    tpu.vector_store %arg13[%c1_82, %c0_83], %75 {strides = array<i32>} : memref<10x128xbf16, #tpu.memory_space<vmem>>, vector<8x128xbf16>,
    %c0_84 = arith.constant 0 : index
    %c0_85 = arith.constant 0 : index
    %77 = vector.load %arg13[%c0_84, %c0_85] : memref<10x128xbf16, #tpu.memory_space<vmem>>, vector<8x128xbf16>
    %c1_86 = arith.constant 1 : index
    %c0_87 = arith.constant 0 : index
    %78 = vector.load %arg13[%c1_86, %c0_87] : memref<10x128xbf16, #tpu.memory_space<vmem>>, vector<8x128xbf16>
    %c2_88 = arith.constant 2 : index
    %c0_89 = arith.constant 0 : index
    %79 = vector.load %arg13[%c2_88, %c0_89] : memref<10x128xbf16, #tpu.memory_space<vmem>>, vector<8x128xbf16>
    %c0_90 = arith.constant 0 : index
    %c0_91 = arith.constant 0 : index
    %c0_92 = arith.constant 0 : index
    %80 = vector.load %arg10[%c0_90, %c0_91, %c0_92] : memref<3x128x128xbf16, #tpu.memory_space<vmem>>, vector<1x128x128xbf16>
    %81 = vector.shape_cast %80 : vector<1x128x128xbf16> to vector<128x128xbf16>
    %cst_93 = arith.constant dense<0.000000e+00> : vector<8x128xf32>
    %82 = tpu.matmul %77, %81, %cst_93 {dimension_numbers = #tpu.dot_dimension_numbers<[1], [0], [0], [1], [0, 0, 1, 1], [], []>} : vector<8x128xbf16>, vector<128x128xbf16>, vector<8x128xf32> -> vector<8x128xf32>
    %c1_94 = arith.constant 1 : index
    %c0_95 = arith.constant 0 : index
    %c0_96 = arith.constant 0 : index
    %83 = vector.load %arg10[%c1_94, %c0_95, %c0_96] : memref<3x128x128xbf16, #tpu.memory_space<vmem>>, vector<1x128x128xbf16>
    %84 = vector.shape_cast %83 : vector<1x128x128xbf16> to vector<128x128xbf16>
    %cst_97 = arith.constant dense<0.000000e+00> : vector<8x128xf32>
    %85 = tpu.matmul %78, %84, %cst_97 {dimension_numbers = #tpu.dot_dimension_numbers<[1], [0], [0], [1], [0, 0, 1, 1], [], []>} : vector<8x128xbf16>, vector<128x128xbf16>, vector<8x128xf32> -> vector<8x128xf32>
    %86 = arith.addf %82, %85 : vector<8x128xf32>
    %c2_98 = arith.constant 2 : index
    %c0_99 = arith.constant 0 : index
    %c0_100 = arith.constant 0 : index
    %87 = vector.load %arg10[%c2_98, %c0_99, %c0_100] : memref<3x128x128xbf16, #tpu.memory_space<vmem>>, vector<1x128x128xbf16>
    %88 = vector.shape_cast %87 : vector<1x128x128xbf16> to vector<128x128xbf16>
    %cst_101 = arith.constant dense<0.000000e+00> : vector<8x128xf32>
    %89 = tpu.matmul %79, %88, %cst_101 {dimension_numbers = #tpu.dot_dimension_numbers<[1], [0], [0], [1], [0, 0, 1, 1], [], []>} : vector<8x128xbf16>, vector<128x128xbf16>, vector<8x128xf32> -> vector<8x128xf32>
    %90 = arith.addf %86, %89 : vector<8x128xf32>
    %c0_102 = arith.constant 0 : index
    %c0_103 = arith.constant 0 : index
    %91 = vector.load %arg11[%c0_102, %c0_103] : memref<1x128xf32, #tpu.memory_space<vmem>>, vector<1x128xf32>
    %92 = vector.broadcast %91 : vector<1x128xf32> to vector<8x128xf32>
    %93 = arith.addf %90, %92 : vector<8x128xf32>
    %94 = arith.extf %54 : vector<8x128xbf16> to vector<8x128xf32>
    %95 = arith.addf %93, %94 : vector<8x128xf32>
    %cst_104 = arith.constant 0.000000e+00 : f32
    %96 = vector.broadcast %cst_104 : f32 to vector<8x128xf32>
    %97 = arith.maximumf %95, %96 : vector<8x128xf32>
    %98 = arith.truncf %97 : vector<8x128xf32> to vector<8x128xbf16>
    %c0_105 = arith.constant 0 : index
    %c0_106 = arith.constant 0 : index
    %c0_107 = arith.constant 0 : index
    %99 = vector.load %arg12[%c0_105, %c0_106, %c0_107] : memref<1x8x128xbf16, #tpu.memory_space<vmem>>, vector<1x8x128xbf16>
    %100 = vector.shape_cast %99 : vector<1x8x128xbf16> to vector<8x128xbf16>
    %101 = vector.shape_cast %98 : vector<8x128xbf16> to vector<1x8x128xbf16>
    tpu.vector_store %arg12[%c0_105, %c0_106, %c0_107], %101 {strides = array<i32>} : memref<1x8x128xbf16, #tpu.memory_space<vmem>>, vector<1x8x128xbf16>,
    return
  }
  func.func @transform_0(%arg0: i32) -> (i32, i32, i32, i32) {
    %c0_i32 = arith.constant 0 : i32
    %c0_i32_0 = arith.constant 0 : i32
    %c0_i32_1 = arith.constant 0 : i32
    %c0_i32_2 = arith.constant 0 : i32
    return %arg0, %c0_i32, %c0_i32_0, %c0_i32_1 : i32, i32, i32, i32
  }
  func.func @transform_1(%arg0: i32) -> (i32, i32, i32) {
    %c0_i32 = arith.constant 0 : i32
    %c0_i32_0 = arith.constant 0 : i32
    %c0_i32_1 = arith.constant 0 : i32
    %c0_i32_2 = arith.constant 0 : i32
    return %c0_i32, %c0_i32_0, %c0_i32_1 : i32, i32, i32
  }
  func.func @transform_2(%arg0: i32) -> (i32, i32) {
    %c0_i32 = arith.constant 0 : i32
    %c0_i32_0 = arith.constant 0 : i32
    %c0_i32_1 = arith.constant 0 : i32
    return %c0_i32, %c0_i32_0 : i32, i32
  }
  func.func @transform_3(%arg0: i32) -> (i32, i32, i32) {
    %c0_i32 = arith.constant 0 : i32
    %c0_i32_0 = arith.constant 0 : i32
    %c0_i32_1 = arith.constant 0 : i32
    %c0_i32_2 = arith.constant 0 : i32
    return %c0_i32, %c0_i32_0, %c0_i32_1 : i32, i32, i32
  }
  func.func @transform_4(%arg0: i32) -> (i32, i32) {
    %c0_i32 = arith.constant 0 : i32
    %c0_i32_0 = arith.constant 0 : i32
    %c0_i32_1 = arith.constant 0 : i32
    return %c0_i32, %c0_i32_0 : i32, i32
  }
  func.func @transform_5(%arg0: i32) -> (i32, i32) {
    %c0_i32 = arith.constant 0 : i32
    %c0_i32_0 = arith.constant 0 : i32
    %c0_i32_1 = arith.constant 0 : i32
    return %c0_i32, %c0_i32_0 : i32, i32
  }
  func.func @transform_6(%arg0: i32) -> (i32, i32) {
    %c0_i32 = arith.constant 0 : i32
    %c0_i32_0 = arith.constant 0 : i32
    %c0_i32_1 = arith.constant 0 : i32
    return %c0_i32, %c0_i32_0 : i32, i32
  }
  func.func @transform_7(%arg0: i32) -> (i32, i32, i32) {
    %c0_i32 = arith.constant 0 : i32
    %c0_i32_0 = arith.constant 0 : i32
    %c0_i32_1 = arith.constant 0 : i32
    %c0_i32_2 = arith.constant 0 : i32
    return %c0_i32, %c0_i32_0, %c0_i32_1 : i32, i32, i32
  }
  func.func @transform_8(%arg0: i32) -> (i32, i32) {
    %c0_i32 = arith.constant 0 : i32
    %c0_i32_0 = arith.constant 0 : i32
    %c0_i32_1 = arith.constant 0 : i32
    return %c0_i32, %c0_i32_0 : i32, i32
  }
  func.func @transform_9(%arg0: i32) -> (i32, i32, i32) {
    %c0_i32 = arith.constant 0 : i32
    %c0_i32_0 = arith.constant 0 : i32
    %c0_i32_1 = arith.constant 0 : i32
    %c0_i32_2 = arith.constant 0 : i32
    return %c0_i32, %c0_i32_0, %c0_i32_1 : i32, i32, i32
  }
  func.func @transform_10(%arg0: i32) -> (i32, i32) {
    %c0_i32 = arith.constant 0 : i32
    %c0_i32_0 = arith.constant 0 : i32
    %c0_i32_1 = arith.constant 0 : i32
    return %c0_i32, %c0_i32_0 : i32, i32
  }
  func.func @transform_11(%arg0: i32) -> (i32, i32, i32) {
    %c0_i32 = arith.constant 0 : i32
    %c0_i32_0 = arith.constant 0 : i32
    %c0_i32_1 = arith.constant 0 : i32
    return %arg0, %c0_i32, %c0_i32_0 : i32, i32, i32
  }
}

module attributes {stable_mosaic.version = 11 : i64} {
  func.func @_stage_down_kernel(%arg0: i32, %arg1: memref<1x2x5x128xbf16, #tpu.memory_space<vmem>>, %arg2: memref<3x128x128xbf16, #tpu.memory_space<vmem>>, %arg3: memref<1x128xf32, #tpu.memory_space<vmem>>, %arg4: memref<3x128x128xbf16, #tpu.memory_space<vmem>>, %arg5: memref<1x128xf32, #tpu.memory_space<vmem>>, %arg6: memref<128x128xbf16, #tpu.memory_space<vmem>>, %arg7: memref<1x128xf32, #tpu.memory_space<vmem>>, %arg8: memref<3x128x128xbf16, #tpu.memory_space<vmem>>, %arg9: memref<1x128xf32, #tpu.memory_space<vmem>>, %arg10: memref<3x128x128xbf16, #tpu.memory_space<vmem>>, %arg11: memref<1x128xf32, #tpu.memory_space<vmem>>, %arg12: memref<1x4x128xbf16, #tpu.memory_space<vmem>>, %arg13: memref<6x128xbf16, #tpu.memory_space<vmem>>) attributes {dimension_semantics = [#tpu.dimension_semantics<parallel>], iteration_bounds = array<i64: 2>, scalar_prefetch = 0 : i64, scratch_operands = 1 : i64, tpu.core_type = #tpu.core_type<tc>, window_params = [{transform_indices = @transform_0, window_bounds = array<i64: 1, 2, 5, 128>}, {pipeline_mode = #tpu.pipeline_mode<synchronous>, transform_indices = @transform_1, window_bounds = array<i64: 3, 128, 128>}, {pipeline_mode = #tpu.pipeline_mode<synchronous>, transform_indices = @transform_2, window_bounds = array<i64: 1, 128>}, {pipeline_mode = #tpu.pipeline_mode<synchronous>, transform_indices = @transform_3, window_bounds = array<i64: 3, 128, 128>}, {pipeline_mode = #tpu.pipeline_mode<synchronous>, transform_indices = @transform_4, window_bounds = array<i64: 1, 128>}, {pipeline_mode = #tpu.pipeline_mode<synchronous>, transform_indices = @transform_5, window_bounds = array<i64: 128, 128>}, {pipeline_mode = #tpu.pipeline_mode<synchronous>, transform_indices = @transform_6, window_bounds = array<i64: 1, 128>}, {pipeline_mode = #tpu.pipeline_mode<synchronous>, transform_indices = @transform_7, window_bounds = array<i64: 3, 128, 128>}, {pipeline_mode = #tpu.pipeline_mode<synchronous>, transform_indices = @transform_8, window_bounds = array<i64: 1, 128>}, {pipeline_mode = #tpu.pipeline_mode<synchronous>, transform_indices = @transform_9, window_bounds = array<i64: 3, 128, 128>}, {pipeline_mode = #tpu.pipeline_mode<synchronous>, transform_indices = @transform_10, window_bounds = array<i64: 1, 128>}, {transform_indices = @transform_11, window_bounds = array<i64: 1, 4, 128>}]} {
    %cst = arith.constant 0.000000e+00 : bf16
    %0 = vector.broadcast %cst : bf16 to vector<1x128xbf16>
    %c0 = arith.constant 0 : index
    %c0_0 = arith.constant 0 : index
    %1 = vector.load %arg13[%c0, %c0_0] : memref<6x128xbf16, #tpu.memory_space<vmem>>, vector<1x128xbf16>
    tpu.vector_store %arg13[%c0, %c0_0], %0 {strides = array<i32>} : memref<6x128xbf16, #tpu.memory_space<vmem>>, vector<1x128xbf16>,
    %c5 = arith.constant 5 : index
    %c0_1 = arith.constant 0 : index
    %2 = vector.load %arg13[%c5, %c0_1] : memref<6x128xbf16, #tpu.memory_space<vmem>>, vector<1x128xbf16>
    tpu.vector_store %arg13[%c5, %c0_1], %0 {strides = array<i32>} : memref<6x128xbf16, #tpu.memory_space<vmem>>, vector<1x128xbf16>,
    %c0_2 = arith.constant 0 : index
    %c0_3 = arith.constant 0 : index
    %c0_4 = arith.constant 0 : index
    %c0_5 = arith.constant 0 : index
    %3 = vector.load %arg1[%c0_2, %c0_3, %c0_4, %c0_5] : memref<1x2x5x128xbf16, #tpu.memory_space<vmem>>, vector<1x1x4x128xbf16>
    %4 = vector.shape_cast %3 : vector<1x1x4x128xbf16> to vector<4x128xbf16>
    %c0_6 = arith.constant 0 : index
    %c1 = arith.constant 1 : index
    %c0_7 = arith.constant 0 : index
    %c0_8 = arith.constant 0 : index
    %5 = vector.load %arg1[%c0_6, %c1, %c0_7, %c0_8] : memref<1x2x5x128xbf16, #tpu.memory_space<vmem>>, vector<1x1x4x128xbf16>
    %6 = vector.shape_cast %5 : vector<1x1x4x128xbf16> to vector<4x128xbf16>
    %c0_9 = arith.constant 0 : index
    %c0_10 = arith.constant 0 : index
    %c1_11 = arith.constant 1 : index
    %c0_12 = arith.constant 0 : index
    %7 = vector.load %arg1[%c0_9, %c0_10, %c1_11, %c0_12] : memref<1x2x5x128xbf16, #tpu.memory_space<vmem>>, vector<1x1x4x128xbf16>
    %8 = vector.shape_cast %7 : vector<1x1x4x128xbf16> to vector<4x128xbf16>
    %c0_13 = arith.constant 0 : index
    %c0_14 = arith.constant 0 : index
    %c0_15 = arith.constant 0 : index
    %9 = vector.load %arg2[%c0_13, %c0_14, %c0_15] : memref<3x128x128xbf16, #tpu.memory_space<vmem>>, vector<1x128x128xbf16>
    %10 = vector.shape_cast %9 : vector<1x128x128xbf16> to vector<128x128xbf16>
    %cst_16 = arith.constant dense<0.000000e+00> : vector<4x128xf32>
    %11 = tpu.matmul %4, %10, %cst_16 {dimension_numbers = #tpu.dot_dimension_numbers<[1], [0], [0], [1], [0, 0, 1, 1], [], []>} : vector<4x128xbf16>, vector<128x128xbf16>, vector<4x128xf32> -> vector<4x128xf32>
    %c1_17 = arith.constant 1 : index
    %c0_18 = arith.constant 0 : index
    %c0_19 = arith.constant 0 : index
    %12 = vector.load %arg2[%c1_17, %c0_18, %c0_19] : memref<3x128x128xbf16, #tpu.memory_space<vmem>>, vector<1x128x128xbf16>
    %13 = vector.shape_cast %12 : vector<1x128x128xbf16> to vector<128x128xbf16>
    %cst_20 = arith.constant dense<0.000000e+00> : vector<4x128xf32>
    %14 = tpu.matmul %6, %13, %cst_20 {dimension_numbers = #tpu.dot_dimension_numbers<[1], [0], [0], [1], [0, 0, 1, 1], [], []>} : vector<4x128xbf16>, vector<128x128xbf16>, vector<4x128xf32> -> vector<4x128xf32>
    %15 = arith.addf %11, %14 : vector<4x128xf32>
    %c2 = arith.constant 2 : index
    %c0_21 = arith.constant 0 : index
    %c0_22 = arith.constant 0 : index
    %16 = vector.load %arg2[%c2, %c0_21, %c0_22] : memref<3x128x128xbf16, #tpu.memory_space<vmem>>, vector<1x128x128xbf16>
    %17 = vector.shape_cast %16 : vector<1x128x128xbf16> to vector<128x128xbf16>
    %cst_23 = arith.constant dense<0.000000e+00> : vector<4x128xf32>
    %18 = tpu.matmul %8, %17, %cst_23 {dimension_numbers = #tpu.dot_dimension_numbers<[1], [0], [0], [1], [0, 0, 1, 1], [], []>} : vector<4x128xbf16>, vector<128x128xbf16>, vector<4x128xf32> -> vector<4x128xf32>
    %19 = arith.addf %15, %18 : vector<4x128xf32>
    %c0_24 = arith.constant 0 : index
    %c0_25 = arith.constant 0 : index
    %20 = vector.load %arg3[%c0_24, %c0_25] : memref<1x128xf32, #tpu.memory_space<vmem>>, vector<1x128xf32>
    %21 = vector.broadcast %20 : vector<1x128xf32> to vector<4x128xf32>
    %22 = arith.addf %19, %21 : vector<4x128xf32>
    %cst_26 = arith.constant 0.000000e+00 : f32
    %23 = vector.broadcast %cst_26 : f32 to vector<4x128xf32>
    %24 = arith.maximumf %22, %23 : vector<4x128xf32>
    %c0_27 = arith.constant 0 : index
    %c1_28 = arith.constant 1 : index
    %c0_29 = arith.constant 0 : index
    %c0_30 = arith.constant 0 : index
    %25 = vector.load %arg1[%c0_27, %c1_28, %c0_29, %c0_30] : memref<1x2x5x128xbf16, #tpu.memory_space<vmem>>, vector<1x1x4x128xbf16>
    %26 = vector.shape_cast %25 : vector<1x1x4x128xbf16> to vector<4x128xbf16>
    %c0_31 = arith.constant 0 : index
    %c0_32 = arith.constant 0 : index
    %27 = vector.load %arg6[%c0_31, %c0_32] : memref<128x128xbf16, #tpu.memory_space<vmem>>, vector<128x128xbf16>
    %cst_33 = arith.constant dense<0.000000e+00> : vector<4x128xf32>
    %28 = tpu.matmul %26, %27, %cst_33 {dimension_numbers = #tpu.dot_dimension_numbers<[1], [0], [0], [1], [0, 0, 1, 1], [], []>} : vector<4x128xbf16>, vector<128x128xbf16>, vector<4x128xf32> -> vector<4x128xf32>
    %c0_34 = arith.constant 0 : index
    %c0_35 = arith.constant 0 : index
    %29 = vector.load %arg7[%c0_34, %c0_35] : memref<1x128xf32, #tpu.memory_space<vmem>>, vector<1x128xf32>
    %30 = vector.broadcast %29 : vector<1x128xf32> to vector<4x128xf32>
    %31 = arith.addf %28, %30 : vector<4x128xf32>
    %32 = arith.truncf %24 : vector<4x128xf32> to vector<4x128xbf16>
    %c1_36 = arith.constant 1 : index
    %c0_37 = arith.constant 0 : index
    %33 = vector.load %arg13[%c1_36, %c0_37] : memref<6x128xbf16, #tpu.memory_space<vmem>>, vector<4x128xbf16>
    tpu.vector_store %arg13[%c1_36, %c0_37], %32 {strides = array<i32>} : memref<6x128xbf16, #tpu.memory_space<vmem>>, vector<4x128xbf16>,
    %c0_38 = arith.constant 0 : index
    %c0_39 = arith.constant 0 : index
    %34 = vector.load %arg13[%c0_38, %c0_39] : memref<6x128xbf16, #tpu.memory_space<vmem>>, vector<4x128xbf16>
    %c1_40 = arith.constant 1 : index
    %c0_41 = arith.constant 0 : index
    %35 = vector.load %arg13[%c1_40, %c0_41] : memref<6x128xbf16, #tpu.memory_space<vmem>>, vector<4x128xbf16>
    %c2_42 = arith.constant 2 : index
    %c0_43 = arith.constant 0 : index
    %36 = vector.load %arg13[%c2_42, %c0_43] : memref<6x128xbf16, #tpu.memory_space<vmem>>, vector<4x128xbf16>
    %c0_44 = arith.constant 0 : index
    %c0_45 = arith.constant 0 : index
    %c0_46 = arith.constant 0 : index
    %37 = vector.load %arg4[%c0_44, %c0_45, %c0_46] : memref<3x128x128xbf16, #tpu.memory_space<vmem>>, vector<1x128x128xbf16>
    %38 = vector.shape_cast %37 : vector<1x128x128xbf16> to vector<128x128xbf16>
    %cst_47 = arith.constant dense<0.000000e+00> : vector<4x128xf32>
    %39 = tpu.matmul %34, %38, %cst_47 {dimension_numbers = #tpu.dot_dimension_numbers<[1], [0], [0], [1], [0, 0, 1, 1], [], []>} : vector<4x128xbf16>, vector<128x128xbf16>, vector<4x128xf32> -> vector<4x128xf32>
    %c1_48 = arith.constant 1 : index
    %c0_49 = arith.constant 0 : index
    %c0_50 = arith.constant 0 : index
    %40 = vector.load %arg4[%c1_48, %c0_49, %c0_50] : memref<3x128x128xbf16, #tpu.memory_space<vmem>>, vector<1x128x128xbf16>
    %41 = vector.shape_cast %40 : vector<1x128x128xbf16> to vector<128x128xbf16>
    %cst_51 = arith.constant dense<0.000000e+00> : vector<4x128xf32>
    %42 = tpu.matmul %35, %41, %cst_51 {dimension_numbers = #tpu.dot_dimension_numbers<[1], [0], [0], [1], [0, 0, 1, 1], [], []>} : vector<4x128xbf16>, vector<128x128xbf16>, vector<4x128xf32> -> vector<4x128xf32>
    %43 = arith.addf %39, %42 : vector<4x128xf32>
    %c2_52 = arith.constant 2 : index
    %c0_53 = arith.constant 0 : index
    %c0_54 = arith.constant 0 : index
    %44 = vector.load %arg4[%c2_52, %c0_53, %c0_54] : memref<3x128x128xbf16, #tpu.memory_space<vmem>>, vector<1x128x128xbf16>
    %45 = vector.shape_cast %44 : vector<1x128x128xbf16> to vector<128x128xbf16>
    %cst_55 = arith.constant dense<0.000000e+00> : vector<4x128xf32>
    %46 = tpu.matmul %36, %45, %cst_55 {dimension_numbers = #tpu.dot_dimension_numbers<[1], [0], [0], [1], [0, 0, 1, 1], [], []>} : vector<4x128xbf16>, vector<128x128xbf16>, vector<4x128xf32> -> vector<4x128xf32>
    %47 = arith.addf %43, %46 : vector<4x128xf32>
    %c0_56 = arith.constant 0 : index
    %c0_57 = arith.constant 0 : index
    %48 = vector.load %arg5[%c0_56, %c0_57] : memref<1x128xf32, #tpu.memory_space<vmem>>, vector<1x128xf32>
    %49 = vector.broadcast %48 : vector<1x128xf32> to vector<4x128xf32>
    %50 = arith.addf %47, %49 : vector<4x128xf32>
    %51 = arith.addf %50, %31 : vector<4x128xf32>
    %cst_58 = arith.constant 0.000000e+00 : f32
    %52 = vector.broadcast %cst_58 : f32 to vector<4x128xf32>
    %53 = arith.maximumf %51, %52 : vector<4x128xf32>
    %54 = arith.truncf %53 : vector<4x128xf32> to vector<4x128xbf16>
    %c1_59 = arith.constant 1 : index
    %c0_60 = arith.constant 0 : index
    %55 = vector.load %arg13[%c1_59, %c0_60] : memref<6x128xbf16, #tpu.memory_space<vmem>>, vector<4x128xbf16>
    tpu.vector_store %arg13[%c1_59, %c0_60], %54 {strides = array<i32>} : memref<6x128xbf16, #tpu.memory_space<vmem>>, vector<4x128xbf16>,
    %c0_61 = arith.constant 0 : index
    %c0_62 = arith.constant 0 : index
    %56 = vector.load %arg13[%c0_61, %c0_62] : memref<6x128xbf16, #tpu.memory_space<vmem>>, vector<4x128xbf16>
    %c1_63 = arith.constant 1 : index
    %c0_64 = arith.constant 0 : index
    %57 = vector.load %arg13[%c1_63, %c0_64] : memref<6x128xbf16, #tpu.memory_space<vmem>>, vector<4x128xbf16>
    %c2_65 = arith.constant 2 : index
    %c0_66 = arith.constant 0 : index
    %58 = vector.load %arg13[%c2_65, %c0_66] : memref<6x128xbf16, #tpu.memory_space<vmem>>, vector<4x128xbf16>
    %c0_67 = arith.constant 0 : index
    %c0_68 = arith.constant 0 : index
    %c0_69 = arith.constant 0 : index
    %59 = vector.load %arg8[%c0_67, %c0_68, %c0_69] : memref<3x128x128xbf16, #tpu.memory_space<vmem>>, vector<1x128x128xbf16>
    %60 = vector.shape_cast %59 : vector<1x128x128xbf16> to vector<128x128xbf16>
    %cst_70 = arith.constant dense<0.000000e+00> : vector<4x128xf32>
    %61 = tpu.matmul %56, %60, %cst_70 {dimension_numbers = #tpu.dot_dimension_numbers<[1], [0], [0], [1], [0, 0, 1, 1], [], []>} : vector<4x128xbf16>, vector<128x128xbf16>, vector<4x128xf32> -> vector<4x128xf32>
    %c1_71 = arith.constant 1 : index
    %c0_72 = arith.constant 0 : index
    %c0_73 = arith.constant 0 : index
    %62 = vector.load %arg8[%c1_71, %c0_72, %c0_73] : memref<3x128x128xbf16, #tpu.memory_space<vmem>>, vector<1x128x128xbf16>
    %63 = vector.shape_cast %62 : vector<1x128x128xbf16> to vector<128x128xbf16>
    %cst_74 = arith.constant dense<0.000000e+00> : vector<4x128xf32>
    %64 = tpu.matmul %57, %63, %cst_74 {dimension_numbers = #tpu.dot_dimension_numbers<[1], [0], [0], [1], [0, 0, 1, 1], [], []>} : vector<4x128xbf16>, vector<128x128xbf16>, vector<4x128xf32> -> vector<4x128xf32>
    %65 = arith.addf %61, %64 : vector<4x128xf32>
    %c2_75 = arith.constant 2 : index
    %c0_76 = arith.constant 0 : index
    %c0_77 = arith.constant 0 : index
    %66 = vector.load %arg8[%c2_75, %c0_76, %c0_77] : memref<3x128x128xbf16, #tpu.memory_space<vmem>>, vector<1x128x128xbf16>
    %67 = vector.shape_cast %66 : vector<1x128x128xbf16> to vector<128x128xbf16>
    %cst_78 = arith.constant dense<0.000000e+00> : vector<4x128xf32>
    %68 = tpu.matmul %58, %67, %cst_78 {dimension_numbers = #tpu.dot_dimension_numbers<[1], [0], [0], [1], [0, 0, 1, 1], [], []>} : vector<4x128xbf16>, vector<128x128xbf16>, vector<4x128xf32> -> vector<4x128xf32>
    %69 = arith.addf %65, %68 : vector<4x128xf32>
    %c0_79 = arith.constant 0 : index
    %c0_80 = arith.constant 0 : index
    %70 = vector.load %arg9[%c0_79, %c0_80] : memref<1x128xf32, #tpu.memory_space<vmem>>, vector<1x128xf32>
    %71 = vector.broadcast %70 : vector<1x128xf32> to vector<4x128xf32>
    %72 = arith.addf %69, %71 : vector<4x128xf32>
    %cst_81 = arith.constant 0.000000e+00 : f32
    %73 = vector.broadcast %cst_81 : f32 to vector<4x128xf32>
    %74 = arith.maximumf %72, %73 : vector<4x128xf32>
    %75 = arith.truncf %74 : vector<4x128xf32> to vector<4x128xbf16>
    %c1_82 = arith.constant 1 : index
    %c0_83 = arith.constant 0 : index
    %76 = vector.load %arg13[%c1_82, %c0_83] : memref<6x128xbf16, #tpu.memory_space<vmem>>, vector<4x128xbf16>
    tpu.vector_store %arg13[%c1_82, %c0_83], %75 {strides = array<i32>} : memref<6x128xbf16, #tpu.memory_space<vmem>>, vector<4x128xbf16>,
    %c0_84 = arith.constant 0 : index
    %c0_85 = arith.constant 0 : index
    %77 = vector.load %arg13[%c0_84, %c0_85] : memref<6x128xbf16, #tpu.memory_space<vmem>>, vector<4x128xbf16>
    %c1_86 = arith.constant 1 : index
    %c0_87 = arith.constant 0 : index
    %78 = vector.load %arg13[%c1_86, %c0_87] : memref<6x128xbf16, #tpu.memory_space<vmem>>, vector<4x128xbf16>
    %c2_88 = arith.constant 2 : index
    %c0_89 = arith.constant 0 : index
    %79 = vector.load %arg13[%c2_88, %c0_89] : memref<6x128xbf16, #tpu.memory_space<vmem>>, vector<4x128xbf16>
    %c0_90 = arith.constant 0 : index
    %c0_91 = arith.constant 0 : index
    %c0_92 = arith.constant 0 : index
    %80 = vector.load %arg10[%c0_90, %c0_91, %c0_92] : memref<3x128x128xbf16, #tpu.memory_space<vmem>>, vector<1x128x128xbf16>
    %81 = vector.shape_cast %80 : vector<1x128x128xbf16> to vector<128x128xbf16>
    %cst_93 = arith.constant dense<0.000000e+00> : vector<4x128xf32>
    %82 = tpu.matmul %77, %81, %cst_93 {dimension_numbers = #tpu.dot_dimension_numbers<[1], [0], [0], [1], [0, 0, 1, 1], [], []>} : vector<4x128xbf16>, vector<128x128xbf16>, vector<4x128xf32> -> vector<4x128xf32>
    %c1_94 = arith.constant 1 : index
    %c0_95 = arith.constant 0 : index
    %c0_96 = arith.constant 0 : index
    %83 = vector.load %arg10[%c1_94, %c0_95, %c0_96] : memref<3x128x128xbf16, #tpu.memory_space<vmem>>, vector<1x128x128xbf16>
    %84 = vector.shape_cast %83 : vector<1x128x128xbf16> to vector<128x128xbf16>
    %cst_97 = arith.constant dense<0.000000e+00> : vector<4x128xf32>
    %85 = tpu.matmul %78, %84, %cst_97 {dimension_numbers = #tpu.dot_dimension_numbers<[1], [0], [0], [1], [0, 0, 1, 1], [], []>} : vector<4x128xbf16>, vector<128x128xbf16>, vector<4x128xf32> -> vector<4x128xf32>
    %86 = arith.addf %82, %85 : vector<4x128xf32>
    %c2_98 = arith.constant 2 : index
    %c0_99 = arith.constant 0 : index
    %c0_100 = arith.constant 0 : index
    %87 = vector.load %arg10[%c2_98, %c0_99, %c0_100] : memref<3x128x128xbf16, #tpu.memory_space<vmem>>, vector<1x128x128xbf16>
    %88 = vector.shape_cast %87 : vector<1x128x128xbf16> to vector<128x128xbf16>
    %cst_101 = arith.constant dense<0.000000e+00> : vector<4x128xf32>
    %89 = tpu.matmul %79, %88, %cst_101 {dimension_numbers = #tpu.dot_dimension_numbers<[1], [0], [0], [1], [0, 0, 1, 1], [], []>} : vector<4x128xbf16>, vector<128x128xbf16>, vector<4x128xf32> -> vector<4x128xf32>
    %90 = arith.addf %86, %89 : vector<4x128xf32>
    %c0_102 = arith.constant 0 : index
    %c0_103 = arith.constant 0 : index
    %91 = vector.load %arg11[%c0_102, %c0_103] : memref<1x128xf32, #tpu.memory_space<vmem>>, vector<1x128xf32>
    %92 = vector.broadcast %91 : vector<1x128xf32> to vector<4x128xf32>
    %93 = arith.addf %90, %92 : vector<4x128xf32>
    %94 = arith.extf %54 : vector<4x128xbf16> to vector<4x128xf32>
    %95 = arith.addf %93, %94 : vector<4x128xf32>
    %cst_104 = arith.constant 0.000000e+00 : f32
    %96 = vector.broadcast %cst_104 : f32 to vector<4x128xf32>
    %97 = arith.maximumf %95, %96 : vector<4x128xf32>
    %98 = arith.truncf %97 : vector<4x128xf32> to vector<4x128xbf16>
    %c0_105 = arith.constant 0 : index
    %c0_106 = arith.constant 0 : index
    %c0_107 = arith.constant 0 : index
    %99 = vector.load %arg12[%c0_105, %c0_106, %c0_107] : memref<1x4x128xbf16, #tpu.memory_space<vmem>>, vector<1x4x128xbf16>
    %100 = vector.shape_cast %99 : vector<1x4x128xbf16> to vector<4x128xbf16>
    %101 = vector.shape_cast %98 : vector<4x128xbf16> to vector<1x4x128xbf16>
    tpu.vector_store %arg12[%c0_105, %c0_106, %c0_107], %101 {strides = array<i32>} : memref<1x4x128xbf16, #tpu.memory_space<vmem>>, vector<1x4x128xbf16>,
    return
  }
  func.func @transform_0(%arg0: i32) -> (i32, i32, i32, i32) {
    %c0_i32 = arith.constant 0 : i32
    %c0_i32_0 = arith.constant 0 : i32
    %c0_i32_1 = arith.constant 0 : i32
    %c0_i32_2 = arith.constant 0 : i32
    return %arg0, %c0_i32, %c0_i32_0, %c0_i32_1 : i32, i32, i32, i32
  }
  func.func @transform_1(%arg0: i32) -> (i32, i32, i32) {
    %c0_i32 = arith.constant 0 : i32
    %c0_i32_0 = arith.constant 0 : i32
    %c0_i32_1 = arith.constant 0 : i32
    %c0_i32_2 = arith.constant 0 : i32
    return %c0_i32, %c0_i32_0, %c0_i32_1 : i32, i32, i32
  }
  func.func @transform_2(%arg0: i32) -> (i32, i32) {
    %c0_i32 = arith.constant 0 : i32
    %c0_i32_0 = arith.constant 0 : i32
    %c0_i32_1 = arith.constant 0 : i32
    return %c0_i32, %c0_i32_0 : i32, i32
  }
  func.func @transform_3(%arg0: i32) -> (i32, i32, i32) {
    %c0_i32 = arith.constant 0 : i32
    %c0_i32_0 = arith.constant 0 : i32
    %c0_i32_1 = arith.constant 0 : i32
    %c0_i32_2 = arith.constant 0 : i32
    return %c0_i32, %c0_i32_0, %c0_i32_1 : i32, i32, i32
  }
  func.func @transform_4(%arg0: i32) -> (i32, i32) {
    %c0_i32 = arith.constant 0 : i32
    %c0_i32_0 = arith.constant 0 : i32
    %c0_i32_1 = arith.constant 0 : i32
    return %c0_i32, %c0_i32_0 : i32, i32
  }
  func.func @transform_5(%arg0: i32) -> (i32, i32) {
    %c0_i32 = arith.constant 0 : i32
    %c0_i32_0 = arith.constant 0 : i32
    %c0_i32_1 = arith.constant 0 : i32
    return %c0_i32, %c0_i32_0 : i32, i32
  }
  func.func @transform_6(%arg0: i32) -> (i32, i32) {
    %c0_i32 = arith.constant 0 : i32
    %c0_i32_0 = arith.constant 0 : i32
    %c0_i32_1 = arith.constant 0 : i32
    return %c0_i32, %c0_i32_0 : i32, i32
  }
  func.func @transform_7(%arg0: i32) -> (i32, i32, i32) {
    %c0_i32 = arith.constant 0 : i32
    %c0_i32_0 = arith.constant 0 : i32
    %c0_i32_1 = arith.constant 0 : i32
    %c0_i32_2 = arith.constant 0 : i32
    return %c0_i32, %c0_i32_0, %c0_i32_1 : i32, i32, i32
  }
  func.func @transform_8(%arg0: i32) -> (i32, i32) {
    %c0_i32 = arith.constant 0 : i32
    %c0_i32_0 = arith.constant 0 : i32
    %c0_i32_1 = arith.constant 0 : i32
    return %c0_i32, %c0_i32_0 : i32, i32
  }
  func.func @transform_9(%arg0: i32) -> (i32, i32, i32) {
    %c0_i32 = arith.constant 0 : i32
    %c0_i32_0 = arith.constant 0 : i32
    %c0_i32_1 = arith.constant 0 : i32
    %c0_i32_2 = arith.constant 0 : i32
    return %c0_i32, %c0_i32_0, %c0_i32_1 : i32, i32, i32
  }
  func.func @transform_10(%arg0: i32) -> (i32, i32) {
    %c0_i32 = arith.constant 0 : i32
    %c0_i32_0 = arith.constant 0 : i32
    %c0_i32_1 = arith.constant 0 : i32
    return %c0_i32, %c0_i32_0 : i32, i32
  }
  func.func @transform_11(%arg0: i32) -> (i32, i32, i32) {
    %c0_i32 = arith.constant 0 : i32
    %c0_i32_0 = arith.constant 0 : i32
    %c0_i32_1 = arith.constant 0 : i32
    return %arg0, %c0_i32, %c0_i32_0 : i32, i32, i32
  }
}

module attributes {stable_mosaic.version = 11 : i64} {
  func.func @_stage_down_kernel(%arg0: i32, %arg1: memref<1x2x3x128xbf16, #tpu.memory_space<vmem>>, %arg2: memref<3x128x128xbf16, #tpu.memory_space<vmem>>, %arg3: memref<1x128xf32, #tpu.memory_space<vmem>>, %arg4: memref<3x128x128xbf16, #tpu.memory_space<vmem>>, %arg5: memref<1x128xf32, #tpu.memory_space<vmem>>, %arg6: memref<128x128xbf16, #tpu.memory_space<vmem>>, %arg7: memref<1x128xf32, #tpu.memory_space<vmem>>, %arg8: memref<3x128x128xbf16, #tpu.memory_space<vmem>>, %arg9: memref<1x128xf32, #tpu.memory_space<vmem>>, %arg10: memref<3x128x128xbf16, #tpu.memory_space<vmem>>, %arg11: memref<1x128xf32, #tpu.memory_space<vmem>>, %arg12: memref<1x2x128xbf16, #tpu.memory_space<vmem>>, %arg13: memref<4x128xbf16, #tpu.memory_space<vmem>>) attributes {dimension_semantics = [#tpu.dimension_semantics<parallel>], iteration_bounds = array<i64: 2>, scalar_prefetch = 0 : i64, scratch_operands = 1 : i64, tpu.core_type = #tpu.core_type<tc>, window_params = [{transform_indices = @transform_0, window_bounds = array<i64: 1, 2, 3, 128>}, {pipeline_mode = #tpu.pipeline_mode<synchronous>, transform_indices = @transform_1, window_bounds = array<i64: 3, 128, 128>}, {pipeline_mode = #tpu.pipeline_mode<synchronous>, transform_indices = @transform_2, window_bounds = array<i64: 1, 128>}, {pipeline_mode = #tpu.pipeline_mode<synchronous>, transform_indices = @transform_3, window_bounds = array<i64: 3, 128, 128>}, {pipeline_mode = #tpu.pipeline_mode<synchronous>, transform_indices = @transform_4, window_bounds = array<i64: 1, 128>}, {pipeline_mode = #tpu.pipeline_mode<synchronous>, transform_indices = @transform_5, window_bounds = array<i64: 128, 128>}, {pipeline_mode = #tpu.pipeline_mode<synchronous>, transform_indices = @transform_6, window_bounds = array<i64: 1, 128>}, {pipeline_mode = #tpu.pipeline_mode<synchronous>, transform_indices = @transform_7, window_bounds = array<i64: 3, 128, 128>}, {pipeline_mode = #tpu.pipeline_mode<synchronous>, transform_indices = @transform_8, window_bounds = array<i64: 1, 128>}, {pipeline_mode = #tpu.pipeline_mode<synchronous>, transform_indices = @transform_9, window_bounds = array<i64: 3, 128, 128>}, {pipeline_mode = #tpu.pipeline_mode<synchronous>, transform_indices = @transform_10, window_bounds = array<i64: 1, 128>}, {transform_indices = @transform_11, window_bounds = array<i64: 1, 2, 128>}]} {
    %cst = arith.constant 0.000000e+00 : bf16
    %0 = vector.broadcast %cst : bf16 to vector<1x128xbf16>
    %c0 = arith.constant 0 : index
    %c0_0 = arith.constant 0 : index
    %1 = vector.load %arg13[%c0, %c0_0] : memref<4x128xbf16, #tpu.memory_space<vmem>>, vector<1x128xbf16>
    tpu.vector_store %arg13[%c0, %c0_0], %0 {strides = array<i32>} : memref<4x128xbf16, #tpu.memory_space<vmem>>, vector<1x128xbf16>,
    %c3 = arith.constant 3 : index
    %c0_1 = arith.constant 0 : index
    %2 = vector.load %arg13[%c3, %c0_1] : memref<4x128xbf16, #tpu.memory_space<vmem>>, vector<1x128xbf16>
    tpu.vector_store %arg13[%c3, %c0_1], %0 {strides = array<i32>} : memref<4x128xbf16, #tpu.memory_space<vmem>>, vector<1x128xbf16>,
    %c0_2 = arith.constant 0 : index
    %c0_3 = arith.constant 0 : index
    %c0_4 = arith.constant 0 : index
    %c0_5 = arith.constant 0 : index
    %3 = vector.load %arg1[%c0_2, %c0_3, %c0_4, %c0_5] : memref<1x2x3x128xbf16, #tpu.memory_space<vmem>>, vector<1x1x2x128xbf16>
    %4 = vector.shape_cast %3 : vector<1x1x2x128xbf16> to vector<2x128xbf16>
    %c0_6 = arith.constant 0 : index
    %c1 = arith.constant 1 : index
    %c0_7 = arith.constant 0 : index
    %c0_8 = arith.constant 0 : index
    %5 = vector.load %arg1[%c0_6, %c1, %c0_7, %c0_8] : memref<1x2x3x128xbf16, #tpu.memory_space<vmem>>, vector<1x1x2x128xbf16>
    %6 = vector.shape_cast %5 : vector<1x1x2x128xbf16> to vector<2x128xbf16>
    %c0_9 = arith.constant 0 : index
    %c0_10 = arith.constant 0 : index
    %c1_11 = arith.constant 1 : index
    %c0_12 = arith.constant 0 : index
    %7 = vector.load %arg1[%c0_9, %c0_10, %c1_11, %c0_12] : memref<1x2x3x128xbf16, #tpu.memory_space<vmem>>, vector<1x1x2x128xbf16>
    %8 = vector.shape_cast %7 : vector<1x1x2x128xbf16> to vector<2x128xbf16>
    %c0_13 = arith.constant 0 : index
    %c0_14 = arith.constant 0 : index
    %c0_15 = arith.constant 0 : index
    %9 = vector.load %arg2[%c0_13, %c0_14, %c0_15] : memref<3x128x128xbf16, #tpu.memory_space<vmem>>, vector<1x128x128xbf16>
    %10 = vector.shape_cast %9 : vector<1x128x128xbf16> to vector<128x128xbf16>
    %cst_16 = arith.constant dense<0.000000e+00> : vector<2x128xf32>
    %11 = tpu.matmul %4, %10, %cst_16 {dimension_numbers = #tpu.dot_dimension_numbers<[1], [0], [0], [1], [0, 0, 1, 1], [], []>} : vector<2x128xbf16>, vector<128x128xbf16>, vector<2x128xf32> -> vector<2x128xf32>
    %c1_17 = arith.constant 1 : index
    %c0_18 = arith.constant 0 : index
    %c0_19 = arith.constant 0 : index
    %12 = vector.load %arg2[%c1_17, %c0_18, %c0_19] : memref<3x128x128xbf16, #tpu.memory_space<vmem>>, vector<1x128x128xbf16>
    %13 = vector.shape_cast %12 : vector<1x128x128xbf16> to vector<128x128xbf16>
    %cst_20 = arith.constant dense<0.000000e+00> : vector<2x128xf32>
    %14 = tpu.matmul %6, %13, %cst_20 {dimension_numbers = #tpu.dot_dimension_numbers<[1], [0], [0], [1], [0, 0, 1, 1], [], []>} : vector<2x128xbf16>, vector<128x128xbf16>, vector<2x128xf32> -> vector<2x128xf32>
    %15 = arith.addf %11, %14 : vector<2x128xf32>
    %c2 = arith.constant 2 : index
    %c0_21 = arith.constant 0 : index
    %c0_22 = arith.constant 0 : index
    %16 = vector.load %arg2[%c2, %c0_21, %c0_22] : memref<3x128x128xbf16, #tpu.memory_space<vmem>>, vector<1x128x128xbf16>
    %17 = vector.shape_cast %16 : vector<1x128x128xbf16> to vector<128x128xbf16>
    %cst_23 = arith.constant dense<0.000000e+00> : vector<2x128xf32>
    %18 = tpu.matmul %8, %17, %cst_23 {dimension_numbers = #tpu.dot_dimension_numbers<[1], [0], [0], [1], [0, 0, 1, 1], [], []>} : vector<2x128xbf16>, vector<128x128xbf16>, vector<2x128xf32> -> vector<2x128xf32>
    %19 = arith.addf %15, %18 : vector<2x128xf32>
    %c0_24 = arith.constant 0 : index
    %c0_25 = arith.constant 0 : index
    %20 = vector.load %arg3[%c0_24, %c0_25] : memref<1x128xf32, #tpu.memory_space<vmem>>, vector<1x128xf32>
    %21 = vector.broadcast %20 : vector<1x128xf32> to vector<2x128xf32>
    %22 = arith.addf %19, %21 : vector<2x128xf32>
    %cst_26 = arith.constant 0.000000e+00 : f32
    %23 = vector.broadcast %cst_26 : f32 to vector<2x128xf32>
    %24 = arith.maximumf %22, %23 : vector<2x128xf32>
    %c0_27 = arith.constant 0 : index
    %c1_28 = arith.constant 1 : index
    %c0_29 = arith.constant 0 : index
    %c0_30 = arith.constant 0 : index
    %25 = vector.load %arg1[%c0_27, %c1_28, %c0_29, %c0_30] : memref<1x2x3x128xbf16, #tpu.memory_space<vmem>>, vector<1x1x2x128xbf16>
    %26 = vector.shape_cast %25 : vector<1x1x2x128xbf16> to vector<2x128xbf16>
    %c0_31 = arith.constant 0 : index
    %c0_32 = arith.constant 0 : index
    %27 = vector.load %arg6[%c0_31, %c0_32] : memref<128x128xbf16, #tpu.memory_space<vmem>>, vector<128x128xbf16>
    %cst_33 = arith.constant dense<0.000000e+00> : vector<2x128xf32>
    %28 = tpu.matmul %26, %27, %cst_33 {dimension_numbers = #tpu.dot_dimension_numbers<[1], [0], [0], [1], [0, 0, 1, 1], [], []>} : vector<2x128xbf16>, vector<128x128xbf16>, vector<2x128xf32> -> vector<2x128xf32>
    %c0_34 = arith.constant 0 : index
    %c0_35 = arith.constant 0 : index
    %29 = vector.load %arg7[%c0_34, %c0_35] : memref<1x128xf32, #tpu.memory_space<vmem>>, vector<1x128xf32>
    %30 = vector.broadcast %29 : vector<1x128xf32> to vector<2x128xf32>
    %31 = arith.addf %28, %30 : vector<2x128xf32>
    %32 = arith.truncf %24 : vector<2x128xf32> to vector<2x128xbf16>
    %c1_36 = arith.constant 1 : index
    %c0_37 = arith.constant 0 : index
    %33 = vector.load %arg13[%c1_36, %c0_37] : memref<4x128xbf16, #tpu.memory_space<vmem>>, vector<2x128xbf16>
    tpu.vector_store %arg13[%c1_36, %c0_37], %32 {strides = array<i32>} : memref<4x128xbf16, #tpu.memory_space<vmem>>, vector<2x128xbf16>,
    %c0_38 = arith.constant 0 : index
    %c0_39 = arith.constant 0 : index
    %34 = vector.load %arg13[%c0_38, %c0_39] : memref<4x128xbf16, #tpu.memory_space<vmem>>, vector<2x128xbf16>
    %c1_40 = arith.constant 1 : index
    %c0_41 = arith.constant 0 : index
    %35 = vector.load %arg13[%c1_40, %c0_41] : memref<4x128xbf16, #tpu.memory_space<vmem>>, vector<2x128xbf16>
    %c2_42 = arith.constant 2 : index
    %c0_43 = arith.constant 0 : index
    %36 = vector.load %arg13[%c2_42, %c0_43] : memref<4x128xbf16, #tpu.memory_space<vmem>>, vector<2x128xbf16>
    %c0_44 = arith.constant 0 : index
    %c0_45 = arith.constant 0 : index
    %c0_46 = arith.constant 0 : index
    %37 = vector.load %arg4[%c0_44, %c0_45, %c0_46] : memref<3x128x128xbf16, #tpu.memory_space<vmem>>, vector<1x128x128xbf16>
    %38 = vector.shape_cast %37 : vector<1x128x128xbf16> to vector<128x128xbf16>
    %cst_47 = arith.constant dense<0.000000e+00> : vector<2x128xf32>
    %39 = tpu.matmul %34, %38, %cst_47 {dimension_numbers = #tpu.dot_dimension_numbers<[1], [0], [0], [1], [0, 0, 1, 1], [], []>} : vector<2x128xbf16>, vector<128x128xbf16>, vector<2x128xf32> -> vector<2x128xf32>
    %c1_48 = arith.constant 1 : index
    %c0_49 = arith.constant 0 : index
    %c0_50 = arith.constant 0 : index
    %40 = vector.load %arg4[%c1_48, %c0_49, %c0_50] : memref<3x128x128xbf16, #tpu.memory_space<vmem>>, vector<1x128x128xbf16>
    %41 = vector.shape_cast %40 : vector<1x128x128xbf16> to vector<128x128xbf16>
    %cst_51 = arith.constant dense<0.000000e+00> : vector<2x128xf32>
    %42 = tpu.matmul %35, %41, %cst_51 {dimension_numbers = #tpu.dot_dimension_numbers<[1], [0], [0], [1], [0, 0, 1, 1], [], []>} : vector<2x128xbf16>, vector<128x128xbf16>, vector<2x128xf32> -> vector<2x128xf32>
    %43 = arith.addf %39, %42 : vector<2x128xf32>
    %c2_52 = arith.constant 2 : index
    %c0_53 = arith.constant 0 : index
    %c0_54 = arith.constant 0 : index
    %44 = vector.load %arg4[%c2_52, %c0_53, %c0_54] : memref<3x128x128xbf16, #tpu.memory_space<vmem>>, vector<1x128x128xbf16>
    %45 = vector.shape_cast %44 : vector<1x128x128xbf16> to vector<128x128xbf16>
    %cst_55 = arith.constant dense<0.000000e+00> : vector<2x128xf32>
    %46 = tpu.matmul %36, %45, %cst_55 {dimension_numbers = #tpu.dot_dimension_numbers<[1], [0], [0], [1], [0, 0, 1, 1], [], []>} : vector<2x128xbf16>, vector<128x128xbf16>, vector<2x128xf32> -> vector<2x128xf32>
    %47 = arith.addf %43, %46 : vector<2x128xf32>
    %c0_56 = arith.constant 0 : index
    %c0_57 = arith.constant 0 : index
    %48 = vector.load %arg5[%c0_56, %c0_57] : memref<1x128xf32, #tpu.memory_space<vmem>>, vector<1x128xf32>
    %49 = vector.broadcast %48 : vector<1x128xf32> to vector<2x128xf32>
    %50 = arith.addf %47, %49 : vector<2x128xf32>
    %51 = arith.addf %50, %31 : vector<2x128xf32>
    %cst_58 = arith.constant 0.000000e+00 : f32
    %52 = vector.broadcast %cst_58 : f32 to vector<2x128xf32>
    %53 = arith.maximumf %51, %52 : vector<2x128xf32>
    %54 = arith.truncf %53 : vector<2x128xf32> to vector<2x128xbf16>
    %c1_59 = arith.constant 1 : index
    %c0_60 = arith.constant 0 : index
    %55 = vector.load %arg13[%c1_59, %c0_60] : memref<4x128xbf16, #tpu.memory_space<vmem>>, vector<2x128xbf16>
    tpu.vector_store %arg13[%c1_59, %c0_60], %54 {strides = array<i32>} : memref<4x128xbf16, #tpu.memory_space<vmem>>, vector<2x128xbf16>,
    %c0_61 = arith.constant 0 : index
    %c0_62 = arith.constant 0 : index
    %56 = vector.load %arg13[%c0_61, %c0_62] : memref<4x128xbf16, #tpu.memory_space<vmem>>, vector<2x128xbf16>
    %c1_63 = arith.constant 1 : index
    %c0_64 = arith.constant 0 : index
    %57 = vector.load %arg13[%c1_63, %c0_64] : memref<4x128xbf16, #tpu.memory_space<vmem>>, vector<2x128xbf16>
    %c2_65 = arith.constant 2 : index
    %c0_66 = arith.constant 0 : index
    %58 = vector.load %arg13[%c2_65, %c0_66] : memref<4x128xbf16, #tpu.memory_space<vmem>>, vector<2x128xbf16>
    %c0_67 = arith.constant 0 : index
    %c0_68 = arith.constant 0 : index
    %c0_69 = arith.constant 0 : index
    %59 = vector.load %arg8[%c0_67, %c0_68, %c0_69] : memref<3x128x128xbf16, #tpu.memory_space<vmem>>, vector<1x128x128xbf16>
    %60 = vector.shape_cast %59 : vector<1x128x128xbf16> to vector<128x128xbf16>
    %cst_70 = arith.constant dense<0.000000e+00> : vector<2x128xf32>
    %61 = tpu.matmul %56, %60, %cst_70 {dimension_numbers = #tpu.dot_dimension_numbers<[1], [0], [0], [1], [0, 0, 1, 1], [], []>} : vector<2x128xbf16>, vector<128x128xbf16>, vector<2x128xf32> -> vector<2x128xf32>
    %c1_71 = arith.constant 1 : index
    %c0_72 = arith.constant 0 : index
    %c0_73 = arith.constant 0 : index
    %62 = vector.load %arg8[%c1_71, %c0_72, %c0_73] : memref<3x128x128xbf16, #tpu.memory_space<vmem>>, vector<1x128x128xbf16>
    %63 = vector.shape_cast %62 : vector<1x128x128xbf16> to vector<128x128xbf16>
    %cst_74 = arith.constant dense<0.000000e+00> : vector<2x128xf32>
    %64 = tpu.matmul %57, %63, %cst_74 {dimension_numbers = #tpu.dot_dimension_numbers<[1], [0], [0], [1], [0, 0, 1, 1], [], []>} : vector<2x128xbf16>, vector<128x128xbf16>, vector<2x128xf32> -> vector<2x128xf32>
    %65 = arith.addf %61, %64 : vector<2x128xf32>
    %c2_75 = arith.constant 2 : index
    %c0_76 = arith.constant 0 : index
    %c0_77 = arith.constant 0 : index
    %66 = vector.load %arg8[%c2_75, %c0_76, %c0_77] : memref<3x128x128xbf16, #tpu.memory_space<vmem>>, vector<1x128x128xbf16>
    %67 = vector.shape_cast %66 : vector<1x128x128xbf16> to vector<128x128xbf16>
    %cst_78 = arith.constant dense<0.000000e+00> : vector<2x128xf32>
    %68 = tpu.matmul %58, %67, %cst_78 {dimension_numbers = #tpu.dot_dimension_numbers<[1], [0], [0], [1], [0, 0, 1, 1], [], []>} : vector<2x128xbf16>, vector<128x128xbf16>, vector<2x128xf32> -> vector<2x128xf32>
    %69 = arith.addf %65, %68 : vector<2x128xf32>
    %c0_79 = arith.constant 0 : index
    %c0_80 = arith.constant 0 : index
    %70 = vector.load %arg9[%c0_79, %c0_80] : memref<1x128xf32, #tpu.memory_space<vmem>>, vector<1x128xf32>
    %71 = vector.broadcast %70 : vector<1x128xf32> to vector<2x128xf32>
    %72 = arith.addf %69, %71 : vector<2x128xf32>
    %cst_81 = arith.constant 0.000000e+00 : f32
    %73 = vector.broadcast %cst_81 : f32 to vector<2x128xf32>
    %74 = arith.maximumf %72, %73 : vector<2x128xf32>
    %75 = arith.truncf %74 : vector<2x128xf32> to vector<2x128xbf16>
    %c1_82 = arith.constant 1 : index
    %c0_83 = arith.constant 0 : index
    %76 = vector.load %arg13[%c1_82, %c0_83] : memref<4x128xbf16, #tpu.memory_space<vmem>>, vector<2x128xbf16>
    tpu.vector_store %arg13[%c1_82, %c0_83], %75 {strides = array<i32>} : memref<4x128xbf16, #tpu.memory_space<vmem>>, vector<2x128xbf16>,
    %c0_84 = arith.constant 0 : index
    %c0_85 = arith.constant 0 : index
    %77 = vector.load %arg13[%c0_84, %c0_85] : memref<4x128xbf16, #tpu.memory_space<vmem>>, vector<2x128xbf16>
    %c1_86 = arith.constant 1 : index
    %c0_87 = arith.constant 0 : index
    %78 = vector.load %arg13[%c1_86, %c0_87] : memref<4x128xbf16, #tpu.memory_space<vmem>>, vector<2x128xbf16>
    %c2_88 = arith.constant 2 : index
    %c0_89 = arith.constant 0 : index
    %79 = vector.load %arg13[%c2_88, %c0_89] : memref<4x128xbf16, #tpu.memory_space<vmem>>, vector<2x128xbf16>
    %c0_90 = arith.constant 0 : index
    %c0_91 = arith.constant 0 : index
    %c0_92 = arith.constant 0 : index
    %80 = vector.load %arg10[%c0_90, %c0_91, %c0_92] : memref<3x128x128xbf16, #tpu.memory_space<vmem>>, vector<1x128x128xbf16>
    %81 = vector.shape_cast %80 : vector<1x128x128xbf16> to vector<128x128xbf16>
    %cst_93 = arith.constant dense<0.000000e+00> : vector<2x128xf32>
    %82 = tpu.matmul %77, %81, %cst_93 {dimension_numbers = #tpu.dot_dimension_numbers<[1], [0], [0], [1], [0, 0, 1, 1], [], []>} : vector<2x128xbf16>, vector<128x128xbf16>, vector<2x128xf32> -> vector<2x128xf32>
    %c1_94 = arith.constant 1 : index
    %c0_95 = arith.constant 0 : index
    %c0_96 = arith.constant 0 : index
    %83 = vector.load %arg10[%c1_94, %c0_95, %c0_96] : memref<3x128x128xbf16, #tpu.memory_space<vmem>>, vector<1x128x128xbf16>
    %84 = vector.shape_cast %83 : vector<1x128x128xbf16> to vector<128x128xbf16>
    %cst_97 = arith.constant dense<0.000000e+00> : vector<2x128xf32>
    %85 = tpu.matmul %78, %84, %cst_97 {dimension_numbers = #tpu.dot_dimension_numbers<[1], [0], [0], [1], [0, 0, 1, 1], [], []>} : vector<2x128xbf16>, vector<128x128xbf16>, vector<2x128xf32> -> vector<2x128xf32>
    %86 = arith.addf %82, %85 : vector<2x128xf32>
    %c2_98 = arith.constant 2 : index
    %c0_99 = arith.constant 0 : index
    %c0_100 = arith.constant 0 : index
    %87 = vector.load %arg10[%c2_98, %c0_99, %c0_100] : memref<3x128x128xbf16, #tpu.memory_space<vmem>>, vector<1x128x128xbf16>
    %88 = vector.shape_cast %87 : vector<1x128x128xbf16> to vector<128x128xbf16>
    %cst_101 = arith.constant dense<0.000000e+00> : vector<2x128xf32>
    %89 = tpu.matmul %79, %88, %cst_101 {dimension_numbers = #tpu.dot_dimension_numbers<[1], [0], [0], [1], [0, 0, 1, 1], [], []>} : vector<2x128xbf16>, vector<128x128xbf16>, vector<2x128xf32> -> vector<2x128xf32>
    %90 = arith.addf %86, %89 : vector<2x128xf32>
    %c0_102 = arith.constant 0 : index
    %c0_103 = arith.constant 0 : index
    %91 = vector.load %arg11[%c0_102, %c0_103] : memref<1x128xf32, #tpu.memory_space<vmem>>, vector<1x128xf32>
    %92 = vector.broadcast %91 : vector<1x128xf32> to vector<2x128xf32>
    %93 = arith.addf %90, %92 : vector<2x128xf32>
    %94 = arith.extf %54 : vector<2x128xbf16> to vector<2x128xf32>
    %95 = arith.addf %93, %94 : vector<2x128xf32>
    %cst_104 = arith.constant 0.000000e+00 : f32
    %96 = vector.broadcast %cst_104 : f32 to vector<2x128xf32>
    %97 = arith.maximumf %95, %96 : vector<2x128xf32>
    %98 = arith.truncf %97 : vector<2x128xf32> to vector<2x128xbf16>
    %c0_105 = arith.constant 0 : index
    %c0_106 = arith.constant 0 : index
    %c0_107 = arith.constant 0 : index
    %99 = vector.load %arg12[%c0_105, %c0_106, %c0_107] : memref<1x2x128xbf16, #tpu.memory_space<vmem>>, vector<1x2x128xbf16>
    %100 = vector.shape_cast %99 : vector<1x2x128xbf16> to vector<2x128xbf16>
    %101 = vector.shape_cast %98 : vector<2x128xbf16> to vector<1x2x128xbf16>
    tpu.vector_store %arg12[%c0_105, %c0_106, %c0_107], %101 {strides = array<i32>} : memref<1x2x128xbf16, #tpu.memory_space<vmem>>, vector<1x2x128xbf16>,
    return
  }
  func.func @transform_0(%arg0: i32) -> (i32, i32, i32, i32) {
    %c0_i32 = arith.constant 0 : i32
    %c0_i32_0 = arith.constant 0 : i32
    %c0_i32_1 = arith.constant 0 : i32
    %c0_i32_2 = arith.constant 0 : i32
    return %arg0, %c0_i32, %c0_i32_0, %c0_i32_1 : i32, i32, i32, i32
  }
  func.func @transform_1(%arg0: i32) -> (i32, i32, i32) {
    %c0_i32 = arith.constant 0 : i32
    %c0_i32_0 = arith.constant 0 : i32
    %c0_i32_1 = arith.constant 0 : i32
    %c0_i32_2 = arith.constant 0 : i32
    return %c0_i32, %c0_i32_0, %c0_i32_1 : i32, i32, i32
  }
  func.func @transform_2(%arg0: i32) -> (i32, i32) {
    %c0_i32 = arith.constant 0 : i32
    %c0_i32_0 = arith.constant 0 : i32
    %c0_i32_1 = arith.constant 0 : i32
    return %c0_i32, %c0_i32_0 : i32, i32
  }
  func.func @transform_3(%arg0: i32) -> (i32, i32, i32) {
    %c0_i32 = arith.constant 0 : i32
    %c0_i32_0 = arith.constant 0 : i32
    %c0_i32_1 = arith.constant 0 : i32
    %c0_i32_2 = arith.constant 0 : i32
    return %c0_i32, %c0_i32_0, %c0_i32_1 : i32, i32, i32
  }
  func.func @transform_4(%arg0: i32) -> (i32, i32) {
    %c0_i32 = arith.constant 0 : i32
    %c0_i32_0 = arith.constant 0 : i32
    %c0_i32_1 = arith.constant 0 : i32
    return %c0_i32, %c0_i32_0 : i32, i32
  }
  func.func @transform_5(%arg0: i32) -> (i32, i32) {
    %c0_i32 = arith.constant 0 : i32
    %c0_i32_0 = arith.constant 0 : i32
    %c0_i32_1 = arith.constant 0 : i32
    return %c0_i32, %c0_i32_0 : i32, i32
  }
  func.func @transform_6(%arg0: i32) -> (i32, i32) {
    %c0_i32 = arith.constant 0 : i32
    %c0_i32_0 = arith.constant 0 : i32
    %c0_i32_1 = arith.constant 0 : i32
    return %c0_i32, %c0_i32_0 : i32, i32
  }
  func.func @transform_7(%arg0: i32) -> (i32, i32, i32) {
    %c0_i32 = arith.constant 0 : i32
    %c0_i32_0 = arith.constant 0 : i32
    %c0_i32_1 = arith.constant 0 : i32
    %c0_i32_2 = arith.constant 0 : i32
    return %c0_i32, %c0_i32_0, %c0_i32_1 : i32, i32, i32
  }
  func.func @transform_8(%arg0: i32) -> (i32, i32) {
    %c0_i32 = arith.constant 0 : i32
    %c0_i32_0 = arith.constant 0 : i32
    %c0_i32_1 = arith.constant 0 : i32
    return %c0_i32, %c0_i32_0 : i32, i32
  }
  func.func @transform_9(%arg0: i32) -> (i32, i32, i32) {
    %c0_i32 = arith.constant 0 : i32
    %c0_i32_0 = arith.constant 0 : i32
    %c0_i32_1 = arith.constant 0 : i32
    %c0_i32_2 = arith.constant 0 : i32
    return %c0_i32, %c0_i32_0, %c0_i32_1 : i32, i32, i32
  }
  func.func @transform_10(%arg0: i32) -> (i32, i32) {
    %c0_i32 = arith.constant 0 : i32
    %c0_i32_0 = arith.constant 0 : i32
    %c0_i32_1 = arith.constant 0 : i32
    return %c0_i32, %c0_i32_0 : i32, i32
  }
  func.func @transform_11(%arg0: i32) -> (i32, i32, i32) {
    %c0_i32 = arith.constant 0 : i32
    %c0_i32_0 = arith.constant 0 : i32
    %c0_i32_1 = arith.constant 0 : i32
    return %arg0, %c0_i32, %c0_i32_0 : i32, i32, i32
  }
}

module attributes {stable_mosaic.version = 11 : i64} {
  func.func @_head_kernel(%arg0: i32, %arg1: memref<1x4x64xbf16, #tpu.memory_space<vmem>>, %arg2: memref<64x10xbf16, #tpu.memory_space<vmem>>, %arg3: memref<1x10xf32, #tpu.memory_space<vmem>>, %arg4: memref<1x1x64xf32, #tpu.memory_space<vmem>>, %arg5: memref<1x1x10xf32, #tpu.memory_space<vmem>>) attributes {dimension_semantics = [#tpu.dimension_semantics<parallel>], iteration_bounds = array<i64: 2>, scalar_prefetch = 0 : i64, scratch_operands = 0 : i64, tpu.core_type = #tpu.core_type<tc>, window_params = [{transform_indices = @transform_0, window_bounds = array<i64: 1, 4, 64>}, {pipeline_mode = #tpu.pipeline_mode<synchronous>, transform_indices = @transform_1, window_bounds = array<i64: 64, 10>}, {pipeline_mode = #tpu.pipeline_mode<synchronous>, transform_indices = @transform_2, window_bounds = array<i64: 1, 10>}, {transform_indices = @transform_3, window_bounds = array<i64: 1, 1, 64>}, {transform_indices = @transform_4, window_bounds = array<i64: 1, 1, 10>}]} {
    %c0 = arith.constant 0 : index
    %c0_0 = arith.constant 0 : index
    %c0_1 = arith.constant 0 : index
    %0 = vector.load %arg1[%c0, %c0_0, %c0_1] : memref<1x4x64xbf16, #tpu.memory_space<vmem>>, vector<1x4x64xbf16>
    %1 = vector.shape_cast %0 : vector<1x4x64xbf16> to vector<4x64xbf16>
    %2 = arith.extf %1 : vector<4x64xbf16> to vector<4x64xf32>
    %cst = arith.constant dense<0.000000e+00> : vector<64xf32>
    %3 = vector.multi_reduction <add>, %2, %cst [0] : vector<4x64xf32> to vector<64xf32>
    %4 = vector.shape_cast %3 : vector<64xf32> to vector<1x64xf32>
    %cst_2 = arith.constant 4.000000e+00 : f32
    %5 = vector.broadcast %cst_2 : f32 to vector<1x64xf32>
    %6 = arith.divf %4, %5 : vector<1x64xf32>
    %c0_3 = arith.constant 0 : index
    %c0_4 = arith.constant 0 : index
    %c0_5 = arith.constant 0 : index
    %7 = vector.load %arg4[%c0_3, %c0_4, %c0_5] : memref<1x1x64xf32, #tpu.memory_space<vmem>>, vector<1x1x64xf32>
    %8 = vector.shape_cast %7 : vector<1x1x64xf32> to vector<1x64xf32>
    %9 = vector.shape_cast %6 : vector<1x64xf32> to vector<1x1x64xf32>
    tpu.vector_store %arg4[%c0_3, %c0_4, %c0_5], %9 {strides = array<i32>} : memref<1x1x64xf32, #tpu.memory_space<vmem>>, vector<1x1x64xf32>,
    %10 = arith.truncf %6 : vector<1x64xf32> to vector<1x64xbf16>
    %c0_6 = arith.constant 0 : index
    %c0_7 = arith.constant 0 : index
    %11 = vector.load %arg2[%c0_6, %c0_7] : memref<64x10xbf16, #tpu.memory_space<vmem>>, vector<64x10xbf16>
    %cst_8 = arith.constant dense<0.000000e+00> : vector<1x10xf32>
    %12 = tpu.matmul %10, %11, %cst_8 {dimension_numbers = #tpu.dot_dimension_numbers<[1], [0], [0], [1], [0, 0, 1, 1], [], []>} : vector<1x64xbf16>, vector<64x10xbf16>, vector<1x10xf32> -> vector<1x10xf32>
    %c0_9 = arith.constant 0 : index
    %c0_10 = arith.constant 0 : index
    %13 = vector.load %arg3[%c0_9, %c0_10] : memref<1x10xf32, #tpu.memory_space<vmem>>, vector<1x10xf32>
    %14 = arith.addf %12, %13 : vector<1x10xf32>
    %c0_11 = arith.constant 0 : index
    %c0_12 = arith.constant 0 : index
    %c0_13 = arith.constant 0 : index
    %15 = vector.load %arg5[%c0_11, %c0_12, %c0_13] : memref<1x1x10xf32, #tpu.memory_space<vmem>>, vector<1x1x10xf32>
    %16 = vector.shape_cast %15 : vector<1x1x10xf32> to vector<1x10xf32>
    %17 = vector.shape_cast %14 : vector<1x10xf32> to vector<1x1x10xf32>
    tpu.vector_store %arg5[%c0_11, %c0_12, %c0_13], %17 {strides = array<i32>} : memref<1x1x10xf32, #tpu.memory_space<vmem>>, vector<1x1x10xf32>,
    return
  }
  func.func @transform_0(%arg0: i32) -> (i32, i32, i32) {
    %c0_i32 = arith.constant 0 : i32
    %c0_i32_0 = arith.constant 0 : i32
    %c0_i32_1 = arith.constant 0 : i32
    return %arg0, %c0_i32, %c0_i32_0 : i32, i32, i32
  }
  func.func @transform_1(%arg0: i32) -> (i32, i32) {
    %c0_i32 = arith.constant 0 : i32
    %c0_i32_0 = arith.constant 0 : i32
    %c0_i32_1 = arith.constant 0 : i32
    return %c0_i32, %c0_i32_0 : i32, i32
  }
  func.func @transform_2(%arg0: i32) -> (i32, i32) {
    %c0_i32 = arith.constant 0 : i32
    %c0_i32_0 = arith.constant 0 : i32
    %c0_i32_1 = arith.constant 0 : i32
    return %c0_i32, %c0_i32_0 : i32, i32
  }
  func.func @transform_3(%arg0: i32) -> (i32, i32, i32) {
    %c0_i32 = arith.constant 0 : i32
    %c0_i32_0 = arith.constant 0 : i32
    %c0_i32_1 = arith.constant 0 : i32
    return %arg0, %c0_i32, %c0_i32_0 : i32, i32, i32
  }
  func.func @transform_4(%arg0: i32) -> (i32, i32, i32) {
    %c0_i32 = arith.constant 0 : i32
    %c0_i32_0 = arith.constant 0 : i32
    %c0_i32_1 = arith.constant 0 : i32
    return %arg0, %c0_i32, %c0_i32_0 : i32, i32, i32
  }
}

</mosaic_0001>

<llo_original>
// kernel: _lambda_.6
$region0: #{_lambda_.6}
  #allocation0 [shape = 'u32[]', space=smem, size = 0x4, offset = 0x4, fixed_abs, tag = 'smem constant byte address 0x4 - core index']
  #allocation1 [shape = 'u32[144,128]{1,0:T(1,128)}', space=vmem, size = 0x12000, scoped, tag = 'internal scratch']
  %s0 = inlined_call_operand.vmem [shape: bf16[2,2,35,192], index: 0, kind: input, shape index: {}]
  %s1 = inlined_call_operand.vmem [shape: bf16[7,192,256], index: 1, kind: input, shape index: {}]
  %s2 = inlined_call_operand.vmem [shape: f32[1,256], index: 2, kind: input, shape index: {}]
  %s3 = inlined_call_operand.vmem [shape: bf16[2,32,256], index: 3, kind: output, shape index: {}]
  %s4 = sld [smem:[#allocation0]]
  $region45: #{_lambda_.6} parent=0
    _
  %s6 = ssub.s32 1, %s4
  %s7 = scalar_select 0, %s6, %s4
  loop: start=0, step=1, limit=4
  $region2: #{_lambda_.6} parent=0 // loop_pre_header
    _
  $region3: #{_lambda_.6} parent=0 // loop_header
    %s9 = sphi 0, %s13
    %p10 = scmp.ge.s32.totalorder %s9, 4
    %s19 = sphi 0, %s21
    %s22 = sphi 0, %s19
    %s23 = sphi 0, %s22
    %s39 = sphi 0, %s23
    %s43 = sphi 0, %s43
    %s45 = sphi 0, %s43
    %s46 = sphi 0, %s45
    %s60 = sphi 0, %s46
    %s64 = sphi 0, %s64
    %s66 = sphi 0, %s64
    %s67 = sphi 0, %s66
    %s81 = sphi 0, %s67
    %s87 = sphi 0, %s89
    %s90 = sphi 0, %s87
    %s91 = sphi 0, %s90
    %s107 = sphi 0, %s91
  $region4: #{_lambda_.6} parent=0 // loop_header_branch
    %12 = sbr.rel (%p10) target = $region8
  $region5: #{_lambda_.6} parent=0 // loop_body
    %s14 = ssub.s32 %s9, 1
    %s15 = ssub.s32 %s9, 2
    %s16 = sadd.s32 %s9, 1
    %s17 = ssub.s32 %s9, %s16
    %p18 = scmp.eq.s32.totalorder %s17, 0
    %s20 = sadd.s32 %s19, 1
    %s21 = scalar_select %p18, %s19, %s20
    %p24 = pneg %p18
    %p25 = scmp.eq.s32.totalorder %s9, 1
    %p26 = por %p24, %p25
    %p27 = scmp.ne.s32.totalorder %s19, %s22
    %p28 = scmp.eq.s32.totalorder %s9, 0
    %p29 = por %p27, %p28
    %p30 = scmp.ne.s32.totalorder %s19, %s22
    %p31 = scmp.eq.s32.totalorder %s14, 1
    %p32 = por %p30, %p31
    %p33 = scmp.ne.s32.totalorder %s22, %s23
    %p34 = scmp.eq.s32.totalorder %s14, 0
    %p35 = por %p33, %p34
    %p36 = scmp.ne.s32.totalorder %s22, %s23
    %p37 = scmp.eq.s32.totalorder %s15, 1
    %p38 = por %p36, %p37
    %p40 = scmp.ne.s32.totalorder %s23, %s39
    %p41 = scmp.eq.s32.totalorder %s15, 0
    %p42 = por %p40, %p41
    %s44 = sadd.s32 %s43, 1
    %p47 = scmp.eq.s32.totalorder %s9, 1
    %p48 = scmp.ne.s32.totalorder %s43, %s45
    %p49 = scmp.eq.s32.totalorder %s9, 0
    %p50 = por %p48, %p49
    %p51 = scmp.ne.s32.totalorder %s43, %s45
    %p52 = scmp.eq.s32.totalorder %s14, 1
    %p53 = por %p51, %p52
    %p54 = scmp.ne.s32.totalorder %s45, %s46
    %p55 = scmp.eq.s32.totalorder %s14, 0
    %p56 = por %p54, %p55
    %p57 = scmp.ne.s32.totalorder %s45, %s46
    %p58 = scmp.eq.s32.totalorder %s15, 1
    %p59 = por %p57, %p58
    %p61 = scmp.ne.s32.totalorder %s46, %s60
    %p62 = scmp.eq.s32.totalorder %s15, 0
    %p63 = por %p61, %p62
    %s65 = sadd.s32 %s64, 1
    %p68 = scmp.eq.s32.totalorder %s9, 1
    %p69 = scmp.ne.s32.totalorder %s64, %s66
    %p70 = scmp.eq.s32.totalorder %s9, 0
    %p71 = por %p69, %p70
    %p72 = scmp.ne.s32.totalorder %s64, %s66
    %p73 = scmp.eq.s32.totalorder %s14, 1
    %p74 = por %p72, %p73
    %p75 = scmp.ne.s32.totalorder %s66, %s67
    %p76 = scmp.eq.s32.totalorder %s14, 0
    %p77 = por %p75, %p76
    %p78 = scmp.ne.s32.totalorder %s66, %s67
    %p79 = scmp.eq.s32.totalorder %s15, 1
    %p80 = por %p78, %p79
    %p82 = scmp.ne.s32.totalorder %s67, %s81
    %p83 = scmp.eq.s32.totalorder %s15, 0
    %p84 = por %p82, %p83
    %s85 = ssub.s32 %s9, %s16
    %p86 = scmp.eq.s32.totalorder %s85, 0
    %s88 = sadd.s32 %s87, 1
    %s89 = scalar_select %p86, %s87, %s88
    %p92 = pneg %p86
    %p93 = scmp.eq.s32.totalorder %s9, 1
    %p94 = por %p92, %p93
    %p95 = scmp.ne.s32.totalorder %s87, %s90
    %p96 = scmp.eq.s32.totalorder %s9, 0
    %p97 = por %p95, %p96
    %p98 = scmp.ne.s32.totalorder %s87, %s90
    %p99 = scmp.eq.s32.totalorder %s14, 1
    %p100 = por %p98, %p99
    %p101 = scmp.ne.s32.totalorder %s90, %s91
    %p102 = scmp.eq.s32.totalorder %s14, 0
    %p103 = por %p101, %p102
    %p104 = scmp.ne.s32.totalorder %s90, %s91
    %p105 = scmp.eq.s32.totalorder %s15, 1
    %p106 = por %p104, %p105
    %p108 = scmp.ne.s32.totalorder %s91, %s107
    %p109 = scmp.eq.s32.totalorder %s15, 0
    %p110 = por %p108, %p109
    %p111 = scmp.le.s32.totalorder 1, %s9
    %p112 = scmp.lt.s32.totalorder %s9, 3
    %p113 = pnand %p111, %p112
    %p114 = pneg %p113
    // Predicated region
    $region9: #{_lambda_.6} parent=5 // pred_check
      _
    $region10: #{_lambda_.6} parent=5 // pred_check_branch
      %116 = sbr.rel (%p113) target = $region12
    $region11: #{_lambda_.6} parent=5 // pred_region
      %s117 = ssub.s32 %s9, 1
      // Predicated region
      $region13: #{_lambda_.6} parent=11 // pred_check
        %p118 = pneg %p56
      $region14: #{_lambda_.6} parent=11 // pred_check_branch
        %120 = sbr.rel (%p118) target = $region16
      $region15: #{_lambda_.6} parent=11 // pred_region
        _
      $region16: #{_lambda_.6} parent=11 // pred_fallthru
        _
      // Predicated region
      $region17: #{_lambda_.6} parent=11 // pred_check
        %p121 = pneg %p77
      $region18: #{_lambda_.6} parent=11 // pred_check_branch
        %123 = sbr.rel (%p121) target = $region20
      $region19: #{_lambda_.6} parent=11 // pred_region
        _
      $region20: #{_lambda_.6} parent=11 // pred_fallthru
        _
    $region12: #{_lambda_.6} parent=5 // pred_fallthru
      _
    %p124 = scmp.lt.s32.totalorder %s9, 2
    // Predicated region
    $region21: #{_lambda_.6} parent=5 // pred_check
      %p125 = pneg %p124
    $region22: #{_lambda_.6} parent=5 // pred_check_branch
      %127 = sbr.rel (%p125) target = $region24
    $region23: #{_lambda_.6} parent=5 // pred_region
      // Predicated region
      $region25: #{_lambda_.6} parent=23 // pred_check
        %p128 = pneg %p29
      $region26: #{_lambda_.6} parent=23 // pred_check_branch
        %130 = sbr.rel (%p128) target = $region28
      $region27: #{_lambda_.6} parent=23 // pred_region
        %p131 = scmp.lt.s32.totalorder %s9, 1
        %s132 = scalar_select %p131, %s9, 1
        %s133 = smul.addr %s132, 20
        %s134 = smul.addr %s133, 4
        %s135 = scalar_lea.vmem %s0, %s134
      $region28: #{_lambda_.6} parent=23 // pred_fallthru
        _
    $region24: #{_lambda_.6} parent=5 // pred_fallthru
      _
    %p136 = scmp.le.s32.totalorder 1, %s9
    %p137 = scmp.lt.s32.totalorder %s9, 3
    %p138 = pnand %p136, %p137
    %p139 = pneg %p138
    // Predicated region
    $region29: #{_lambda_.6} parent=5 // pred_check
      _
    $region30: #{_lambda_.6} parent=5 // pred_check_branch
      %141 = sbr.rel (%p138) target = $region32
    $region31: #{_lambda_.6} parent=5 // pred_region
      %s142 = ssub.s32 %s9, 1
      %p143 = scmp.lt.s32.totalorder %s14, 1
      %s144 = scalar_select %p143, %s14, 1
      %s145 = smul.addr %s144, 20
      %s146 = smul.addr %s145, 4
      %s147 = scalar_lea.vmem %s0, %s146
      %p148 = pneg %p35
      %p149 = pneg %p32
      %p150 = pneg %p56
      %p151 = pneg %p53
      %p152 = pneg %p77
      %p153 = pneg %p74
      %p154 = pneg %p103
      %p155 = pneg %p100
      %p156 = scmp.lt.s32.totalorder %s14, 1
      %s157 = scalar_select %p156, %s14, 1
      %s158 = smul.addr %s157, 8
      %s159 = smul.addr %s158, 4
      %s160 = scalar_lea.vmem %s3, %s159
      %p161 = scmp.lt.s32.totalorder %s14, 1
      %s162 = scalar_select %p161, %s14, 1
      %s163 = smul.addr %s162, 20
      %s164 = smul.addr %s163, 4
      %s165 = scalar_lea.vmem %s0, %s164
      %p166 = scmp.lt.s32.totalorder %s14, 1
      %s167 = scalar_select %p166, %s14, 1
      %s168 = smul.addr %s167, 8
      %s169 = smul.addr %s168, 4
      %s170 = scalar_lea.vmem %s3, %s169
      %v172 = vld [vmem:[%s165] sm:$0xff]
      %v173 = vld [vmem:[%s165 + $0x8] sm:$0xff]
      %v174 = vld [vmem:[%s165 + $0x10] sm:$0xff]
      %v175 = vld [vmem:[%s165 + $0x18] sm:$0xff]
      %s176 = scalar_lea.vmem %s165, 40
      %v177 = vld [vmem:[%s176] sm:$0xff]
      %v178 = vld [vmem:[%s176 + $0x8] sm:$0xff]
      %v179 = vld [vmem:[%s176 + $0x10] sm:$0xff]
      %v180 = vld [vmem:[%s176 + $0x18] sm:$0xff]
      %v181 = vld [vmem:[%s165 + $0x20] sm:$0x11]
      %v182 = vld [vmem:[%s176 + $0x20] sm:$0x11]
      %v183 = vld [vmem:[%s165] sm:$0xee]
      %v184 = vld [vmem:[%s176] sm:$0xee]
      %v185 = vld [vmem:[%s165 + $0x20] sm:$0x33]
      %v186 = vld [vmem:[%s1] sm:$0xff]
      %v187 = vld [vmem:[%s1 + $0x8] sm:$0xff]
      %v188 = vld [vmem:[%s1 + $0x10] sm:$0xff]
      %v189 = vld [vmem:[%s1 + $0x18] sm:$0xff]
      %v190 = vld [vmem:[%s1 + $0x20] sm:$0xff]
      %v191 = vld [vmem:[%s1 + $0x28] sm:$0xff]
      %v192 = vld [vmem:[%s1 + $0x30] sm:$0xff]
      %v193 = vld [vmem:[%s1 + $0x38] sm:$0xff]
      %v194 = vld [vmem:[%s1 + $0x40] sm:$0xff]
      %v195 = vld [vmem:[%s1 + $0x48] sm:$0xff]
      %v196 = vld [vmem:[%s1 + $0x50] sm:$0xff]
      %v197 = vld [vmem:[%s1 + $0x58] sm:$0xff]
      %v198 = vld [vmem:[%s1 + $0x60] sm:$0xff]
      %v199 = vld [vmem:[%s1 + $0x68] sm:$0xff]
      %v200 = vld [vmem:[%s1 + $0x70] sm:$0xff]
      %v201 = vld [vmem:[%s1 + $0x78] sm:$0xff]
      %v202 = vld [vmem:[%s1 + $0x80] sm:$0xff]
      %v203 = vld [vmem:[%s1 + $0x88] sm:$0xff]
      %v204 = vld [vmem:[%s1 + $0x90] sm:$0xff]
      %v205 = vld [vmem:[%s1 + $0x98] sm:$0xff]
      %v206 = vld [vmem:[%s1 + $0xa0] sm:$0xff]
      %v207 = vld [vmem:[%s1 + $0xa8] sm:$0xff]
      %v208 = vld [vmem:[%s1 + $0xb0] sm:$0xff]
      %v209 = vld [vmem:[%s1 + $0xb8] sm:$0xff]
      %s210 = scalar_lea.vmem %s1, 192
      %v211 = vld [vmem:[%s210] sm:$0xff]
      %v212 = vld [vmem:[%s210 + $0x8] sm:$0xff]
      %v213 = vld [vmem:[%s210 + $0x10] sm:$0xff]
      %v214 = vld [vmem:[%s210 + $0x18] sm:$0xff]
      %v215 = vld [vmem:[%s210 + $0x20] sm:$0xff]
      %v216 = vld [vmem:[%s210 + $0x28] sm:$0xff]
      %v217 = vld [vmem:[%s210 + $0x30] sm:$0xff]
      %v218 = vld [vmem:[%s210 + $0x38] sm:$0xff]
      %v219 = vld [vmem:[%s210 + $0x40] sm:$0xff]
      %v220 = vld [vmem:[%s210 + $0x48] sm:$0xff]
      %v221 = vld [vmem:[%s210 + $0x50] sm:$0xff]
      %v222 = vld [vmem:[%s210 + $0x58] sm:$0xff]
      %v223 = vld [vmem:[%s210 + $0x60] sm:$0xff]
      %v224 = vld [vmem:[%s210 + $0x68] sm:$0xff]
      %v225 = vld [vmem:[%s210 + $0x70] sm:$0xff]
      %v226 = vld [vmem:[%s210 + $0x78] sm:$0xff]
      %v227 = vld [vmem:[%s210 + $0x80] sm:$0xff]
      %v228 = vld [vmem:[%s210 + $0x88] sm:$0xff]
      %v229 = vld [vmem:[%s210 + $0x90] sm:$0xff]
      %v230 = vld [vmem:[%s210 + $0x98] sm:$0xff]
      %v231 = vld [vmem:[%s210 + $0xa0] sm:$0xff]
      %v232 = vld [vmem:[%s210 + $0xa8] sm:$0xff]
      %v233 = vld [vmem:[%s210 + $0xb0] sm:$0xff]
      %v234 = vld [vmem:[%s210 + $0xb8] sm:$0xff]
      %v239 = vunpack.c.l.b16 %v177
      %v240 = vunpack.c.h.b16 %v177
      %v241 = vunpack.c.l.b16 %v178
      %v242 = vunpack.c.h.b16 %v178
      %v243 = vunpack.c.l.b16 %v179
      %v244 = vunpack.c.h.b16 %v179
      %v245 = vunpack.c.l.b16 %v180
      %v246 = vunpack.c.h.b16 %v180
      %v247 = vpack.c.b16 %v241, %v239
      %v248 = vpack.c.b16 %v242, %v240
      %v249 = vpack.c.b16 %v245, %v243
      %v250 = vpack.c.b16 %v246, %v244
      %v277 = vunpack.c.l.b16 %v211
      %v278 = vunpack.c.h.b16 %v211
      %v279 = vunpack.c.l.b16 %v212
      %v280 = vunpack.c.h.b16 %v212
      %v281 = vunpack.c.l.b16 %v213
      %v282 = vunpack.c.h.b16 %v213
      %v283 = vunpack.c.l.b16 %v214
      %v284 = vunpack.c.h.b16 %v214
      %v285 = vunpack.c.l.b16 %v215
      %v286 = vunpack.c.h.b16 %v215
      %v287 = vunpack.c.l.b16 %v216
      %v288 = vunpack.c.h.b16 %v216
      %v289 = vunpack.c.l.b16 %v217
      %v290 = vunpack.c.h.b16 %v217
      %v291 = vunpack.c.l.b16 %v218
      %v292 = vunpack.c.h.b16 %v218
      %v293 = vunpack.c.l.b16 %v219
      %v294 = vunpack.c.h.b16 %v219
      %v295 = vunpack.c.l.b16 %v220
      %v296 = vunpack.c.h.b16 %v220
      %v297 = vunpack.c.l.b16 %v221
      %v298 = vunpack.c.h.b16 %v221
      %v299 = vunpack.c.l.b16 %v222
      %v300 = vunpack.c.h.b16 %v222
      %v301 = vunpack.c.l.b16 %v223
      %v302 = vunpack.c.h.b16 %v223
      %v303 = vunpack.c.l.b16 %v224
      %v304 = vunpack.c.h.b16 %v224
      %v305 = vunpack.c.l.b16 %v225
      %v306 = vunpack.c.h.b16 %v225
      %v307 = vunpack.c.l.b16 %v226
      %v308 = vunpack.c.h.b16 %v226
      %v309 = vunpack.c.l.b16 %v227
      %v310 = vunpack.c.h.b16 %v227
      %v311 = vunpack.c.l.b16 %v228
      %v312 = vunpack.c.h.b16 %v228
      %v313 = vunpack.c.l.b16 %v229
      %v314 = vunpack.c.h.b16 %v229
      %v315 = vunpack.c.l.b16 %v230
      %v316 = vunpack.c.h.b16 %v230
      %v317 = vunpack.c.l.b16 %v231
      %v318 = vunpack.c.h.b16 %v231
      %v319 = vunpack.c.l.b16 %v232
      %v320 = vunpack.c.h.b16 %v232
      %v321 = vunpack.c.l.b16 %v233
      %v322 = vunpack.c.h.b16 %v233
      %v323 = vunpack.c.l.b16 %v234
      %v324 = vunpack.c.h.b16 %v234
      %v325 = vpack.c.b16 %v279, %v277
      %v326 = vpack.c.b16 %v280, %v278
      %v327 = vpack.c.b16 %v283, %v281
      %v328 = vpack.c.b16 %v284, %v282
      %v329 = vpack.c.b16 %v287, %v285
      %v330 = vpack.c.b16 %v288, %v286
      %v331 = vpack.c.b16 %v291, %v289
      %v332 = vpack.c.b16 %v292, %v290
      %v333 = vpack.c.b16 %v295, %v293
      %v334 = vpack.c.b16 %v296, %v294
      %v335 = vpack.c.b16 %v299, %v297
      %v336 = vpack.c.b16 %v300, %v298
      %v337 = vpack.c.b16 %v303, %v301
      %v338 = vpack.c.b16 %v304, %v302
      %v339 = vpack.c.b16 %v307, %v305
      %v340 = vpack.c.b16 %v308, %v306
      %v341 = vpack.c.b16 %v311, %v309
      %v342 = vpack.c.b16 %v312, %v310
      %v343 = vpack.c.b16 %v315, %v313
      %v344 = vpack.c.b16 %v316, %v314
      %v345 = vpack.c.b16 %v319, %v317
      %v346 = vpack.c.b16 %v320, %v318
      %v347 = vpack.c.b16 %v323, %v321
      %v348 = vpack.c.b16 %v324, %v322
      %vm373 = vcmask 523264
      %v375 = vsel %vm373, %v248, 0
      %v378 = vsel %vm373, %v250, 0
      %380 = vmatprep.subr.bf16.mxu0 %v340
      %381 = vmatpush1.bf16.msra.mxu0 %v339
      %382 = vmatprep.subr.bf16.mxu0 %v338
      %383 = vmatpush1.bf16.msra.mxu0 %v337
      %384 = vmatprep.subr.bf16.mxu0 %v336
      %385 = vmatpush1.bf16.msra.mxu0 %v335
      %386 = vmatprep.subr.bf16.mxu0 %v334
      %387 = vmatpush1.bf16.msra.mxu0 %v333
      %388 = vmatprep.subr.bf16.mxu0 %v332
      %389 = vmatpush1.bf16.msra.mxu0 %v331
      %390 = vmatprep.subr.bf16.mxu0 %v330
      %391 = vmatpush1.bf16.msra.mxu0 %v329
      %392 = vmatprep.subr.bf16.mxu0 %v328
      %393 = vmatpush1.bf16.msra.mxu0 %v327
      %394 = vmatprep.subr.bf16.mxu0 %v326
      %395 = vmatpush1.bf16.msra.mxu0 %v325
      %396 = vmatprep.subr.bf16.mxu0 0
      %397 = vmatpush2.bf16.msra.mxu0 0
      %398 = vmatprep.subr.bf16.mxu0 0
      %399 = vmatpush2.bf16.msra.mxu0 0
      %400 = vmatprep.subr.bf16.mxu0 0
      %401 = vmatpush2.bf16.msra.mxu0 0
      %402 = vmatprep.subr.bf16.mxu0 0
      %403 = vmatpush2.bf16.msra.mxu0 0
      %404 = vmatprep.subr.bf16.mxu0 %v348
      %405 = vmatpush2.bf16.msra.mxu0 %v347
      %406 = vmatprep.subr.bf16.mxu0 %v346
      %407 = vmatpush2.bf16.msra.mxu0 %v345
      %408 = vmatprep.subr.bf16.mxu0 %v344
      %409 = vmatpush2.bf16.msra.mxu0 %v343
      %410 = vmatprep.subr.bf16.mxu0 %v342
      %411 = vmatpush2.bf16.msra.mxu0 %v341
      %412 = vmatprep.mubr.bf16.mxu0 %v375
      %413 = vmatmul.mubr.bf16.gmra.mxu0 %v247
      %v414 = vpop.f32.mrf.mxu0
      %v415 = vadd.f32 0.0, %v414
      %v416 = vpop.f32.mrf.mxu0
      %v417 = vadd.f32 0.0, %v416
      %v418 = vpop.f32.mrf.mxu0
      %v419 = vadd.f32 0.0, %v418
      %v420 = vpop.f32.mrf.mxu0
      %v421 = vadd.f32 0.0, %v420
      %422 = vmatprep.mubr.bf16.mxu0 %v378
      %423 = vmatmul.mubr.bf16.gmra.mxu0 %v249
      %v424 = vpop.f32.mrf.mxu0
      %v425 = vadd.f32 0.0, %v424
      %v426 = vpop.f32.mrf.mxu0
      %v427 = vadd.f32 0.0, %v426
      %v428 = vpop.f32.mrf.mxu0
      %v429 = vadd.f32 0.0, %v428
      %v430 = vpop.f32.mrf.mxu0
      %v431 = vadd.f32 0.0, %v430
      %432 = vdwg.mxu0
      %v437 = vunpack.c.l.b16 %v172
      %v438 = vunpack.c.h.b16 %v172
      %v439 = vunpack.c.l.b16 %v173
      %v440 = vunpack.c.h.b16 %v173
      %v441 = vunpack.c.l.b16 %v174
      %v442 = vunpack.c.h.b16 %v174
      %v443 = vunpack.c.l.b16 %v175
      %v444 = vunpack.c.h.b16 %v175
      %v445 = vpack.c.b16 %v439, %v437
      %v446 = vpack.c.b16 %v440, %v438
      %v447 = vpack.c.b16 %v443, %v441
      %v448 = vpack.c.b16 %v444, %v442
      %v475 = vunpack.c.l.b16 %v186
      %v476 = vunpack.c.h.b16 %v186
      %v477 = vunpack.c.l.b16 %v187
      %v478 = vunpack.c.h.b16 %v187
      %v479 = vunpack.c.l.b16 %v188
      %v480 = vunpack.c.h.b16 %v188
      %v481 = vunpack.c.l.b16 %v189
      %v482 = vunpack.c.h.b16 %v189
      %v483 = vunpack.c.l.b16 %v190
      %v484 = vunpack.c.h.b16 %v190
      %v485 = vunpack.c.l.b16 %v191
      %v486 = vunpack.c.h.b16 %v191
      %v487 = vunpack.c.l.b16 %v192
      %v488 = vunpack.c.h.b16 %v192
      %v489 = vunpack.c.l.b16 %v193
      %v490 = vunpack.c.h.b16 %v193
      %v491 = vunpack.c.l.b16 %v194
      %v492 = vunpack.c.h.b16 %v194
      %v493 = vunpack.c.l.b16 %v195
      %v494 = vunpack.c.h.b16 %v195
      %v495 = vunpack.c.l.b16 %v196
      %v496 = vunpack.c.h.b16 %v196
      %v497 = vunpack.c.l.b16 %v197
      %v498 = vunpack.c.h.b16 %v197
      %v499 = vunpack.c.l.b16 %v198
      %v500 = vunpack.c.h.b16 %v198
      %v501 = vunpack.c.l.b16 %v199
      %v502 = vunpack.c.h.b16 %v199
      %v503 = vunpack.c.l.b16 %v200
      %v504 = vunpack.c.h.b16 %v200
      %v505 = vunpack.c.l.b16 %v201
      %v506 = vunpack.c.h.b16 %v201
      %v507 = vunpack.c.l.b16 %v202
      %v508 = vunpack.c.h.b16 %v202
      %v509 = vunpack.c.l.b16 %v203
      %v510 = vunpack.c.h.b16 %v203
      %v511 = vunpack.c.l.b16 %v204
      %v512 = vunpack.c.h.b16 %v204
      %v513 = vunpack.c.l.b16 %v205
      %v514 = vunpack.c.h.b16 %v205
      %v515 = vunpack.c.l.b16 %v206
      %v516 = vunpack.c.h.b16 %v206
      %v517 = vunpack.c.l.b16 %v207
      %v518 = vunpack.c.h.b16 %v207
      %v519 = vunpack.c.l.b16 %v208
      %v520 = vunpack.c.h.b16 %v208
      %v521 = vunpack.c.l.b16 %v209
      %v522 = vunpack.c.h.b16 %v209
      %v523 = vpack.c.b16 %v477, %v475
      %v524 = vpack.c.b16 %v478, %v476
      %v525 = vpack.c.b16 %v481, %v479
      %v526 = vpack.c.b16 %v482, %v480
      %v527 = vpack.c.b16 %v485, %v483
      %v528 = vpack.c.b16 %v486, %v484
      %v529 = vpack.c.b16 %v489, %v487
      %v530 = vpack.c.b16 %v490, %v488
      %v531 = vpack.c.b16 %v493, %v491
      %v532 = vpack.c.b16 %v494, %v492
      %v533 = vpack.c.b16 %v497, %v495
      %v534 = vpack.c.b16 %v498, %v496
      %v535 = vpack.c.b16 %v501, %v499
      %v536 = vpack.c.b16 %v502, %v500
      %v537 = vpack.c.b16 %v505, %v503
      %v538 = vpack.c.b16 %v506, %v504
      %v539 = vpack.c.b16 %v509, %v507
      %v540 = vpack.c.b16 %v510, %v508
      %v541 = vpack.c.b16 %v513, %v511
      %v542 = vpack.c.b16 %v514, %v512
      %v543 = vpack.c.b16 %v517, %v515
      %v544 = vpack.c.b16 %v518, %v516
      %v545 = vpack.c.b16 %v521, %v519
      %v546 = vpack.c.b16 %v522, %v520
      %v572 = vsel %vm373, %v446, 0
      %v575 = vsel %vm373, %v448, 0
      %577 = vmatprep.subr.bf16.mxu0 %v538
      %578 = vmatpush1.bf16.msra.mxu0 %v537
      %579 = vmatprep.subr.bf16.mxu0 %v536
      %580 = vmatpush1.bf16.msra.mxu0 %v535
      %581 = vmatprep.subr.bf16.mxu0 %v534
      %582 = vmatpush1.bf16.msra.mxu0 %v533
      %583 = vmatprep.subr.bf16.mxu0 %v532
      %584 = vmatpush1.bf16.msra.mxu0 %v531
      %585 = vmatprep.subr.bf16.mxu0 %v530
      %586 = vmatpush1.bf16.msra.mxu0 %v529
      %587 = vmatprep.subr.bf16.mxu0 %v528
      %588 = vmatpush1.bf16.msra.mxu0 %v527
      %589 = vmatprep.subr.bf16.mxu0 %v526
      %590 = vmatpush1.bf16.msra.mxu0 %v525
      %591 = vmatprep.subr.bf16.mxu0 %v524
      %592 = vmatpush1.bf16.msra.mxu0 %v523
      %593 = vmatprep.subr.bf16.mxu0 0
      %594 = vmatpush2.bf16.msra.mxu0 0
      %595 = vmatprep.subr.bf16.mxu0 0
      %596 = vmatpush2.bf16.msra.mxu0 0
      %597 = vmatprep.subr.bf16.mxu0 0
      %598 = vmatpush2.bf16.msra.mxu0 0
      %599 = vmatprep.subr.bf16.mxu0 0
      %600 = vmatpush2.bf16.msra.mxu0 0
      %601 = vmatprep.subr.bf16.mxu0 %v546
      %602 = vmatpush2.bf16.msra.mxu0 %v545
      %603 = vmatprep.subr.bf16.mxu0 %v544
      %604 = vmatpush2.bf16.msra.mxu0 %v543
      %605 = vmatprep.subr.bf16.mxu0 %v542
      %606 = vmatpush2.bf16.msra.mxu0 %v541
      %607 = vmatprep.subr.bf16.mxu0 %v540
      %608 = vmatpush2.bf16.msra.mxu0 %v539
      %609 = vmatprep.mubr.bf16.mxu0 %v572
      %610 = vmatmul.mubr.bf16.gmra.mxu0 %v445
      %v611 = vpop.f32.mrf.mxu0
      %v612 = vadd.f32 %v415, %v611
      %v613 = vpop.f32.mrf.mxu0
      %v614 = vadd.f32 %v417, %v613
      %v615 = vpop.f32.mrf.mxu0
      %v616 = vadd.f32 %v419, %v615
      %v617 = vpop.f32.mrf.mxu0
      %v618 = vadd.f32 %v421, %v617
      %619 = vmatprep.mubr.bf16.mxu0 %v575
      %620 = vmatmul.mubr.bf16.gmra.mxu0 %v447
      %v621 = vpop.f32.mrf.mxu0
      %v622 = vadd.f32 %v425, %v621
      %v623 = vpop.f32.mrf.mxu0
      %v624 = vadd.f32 %v427, %v623
      %v625 = vpop.f32.mrf.mxu0
      %v626 = vadd.f32 %v429, %v625
      %v627 = vpop.f32.mrf.mxu0
      %v628 = vadd.f32 %v431, %v627
      %629 = vdwg.mxu0
      %s630 = scalar_lea.vmem %s1, 384
      %v631 = vld [vmem:[%s630] sm:$0xff]
      %v632 = vld [vmem:[%s630 + $0x8] sm:$0xff]
      %v633 = vld [vmem:[%s630 + $0x10] sm:$0xff]
      %v634 = vld [vmem:[%s630 + $0x18] sm:$0xff]
      %v635 = vld [vmem:[%s630 + $0x20] sm:$0xff]
      %v636 = vld [vmem:[%s630 + $0x28] sm:$0xff]
      %v637 = vld [vmem:[%s630 + $0x30] sm:$0xff]
      %v638 = vld [vmem:[%s630 + $0x38] sm:$0xff]
      %v639 = vld [vmem:[%s630 + $0x40] sm:$0xff]
      %v640 = vld [vmem:[%s630 + $0x48] sm:$0xff]
      %v641 = vld [vmem:[%s630 + $0x50] sm:$0xff]
      %v642 = vld [vmem:[%s630 + $0x58] sm:$0xff]
      %v643 = vld [vmem:[%s630 + $0x60] sm:$0xff]
      %v644 = vld [vmem:[%s630 + $0x68] sm:$0xff]
      %v645 = vld [vmem:[%s630 + $0x70] sm:$0xff]
      %v646 = vld [vmem:[%s630 + $0x78] sm:$0xff]
      %v647 = vld [vmem:[%s630 + $0x80] sm:$0xff]
      %v648 = vld [vmem:[%s630 + $0x88] sm:$0xff]
      %v649 = vld [vmem:[%s630 + $0x90] sm:$0xff]
      %v650 = vld [vmem:[%s630 + $0x98] sm:$0xff]
      %v651 = vld [vmem:[%s630 + $0xa0] sm:$0xff]
      %v652 = vld [vmem:[%s630 + $0xa8] sm:$0xff]
      %v653 = vld [vmem:[%s630 + $0xb0] sm:$0xff]
      %v654 = vld [vmem:[%s630 + $0xb8] sm:$0xff]
      %v656 = vunpack.c.l.b16 %v181
      %v657 = vunpack.c.h.b16 %v181
      %v658 = vpack.c.b16 %v656, %v656
      %v659 = vpack.c.b16 %v657, %v657
      %vm660 = vsmask.f32 7424
      %v662 = vshrl.u32 %v445, 16
      %v664 = vshll.u32 %v445, 16
      %v666 = vrot.slane %v664, 1
      %v667 = vor.u32 %v662, %v666
      %v669 = vshll.u32 %v447, 16
      %v671 = vrot.slane %v669, 1
      %v672 = vsel %vm660, %v667, %v671
      %v673 = vshrl.u32 %v446, 16
      %v675 = vshll.u32 %v446, 16
      %v677 = vrot.slane %v675, 1
      %v678 = vor.u32 %v673, %v677
      %v679 = vshll.u32 %v448, 16
      %v681 = vrot.slane %v679, 1
      %v682 = vsel %vm660, %v678, %v681
      %v683 = vshrl.u32 %v447, 16
      %v685 = vor.u32 %v683, %v671
      %v687 = vshll.u32 %v658, 16
      %v689 = vrot.slane %v687, 1
      %v690 = vsel %vm660, %v685, %v689
      %v691 = vshrl.u32 %v448, 16
      %v693 = vor.u32 %v691, %v681
      %v695 = vshll.u32 %v659, 16
      %v697 = vrot.slane %v695, 1
      %v698 = vsel %vm660, %v693, %v697
      %v725 = vunpack.c.l.b16 %v631
      %v726 = vunpack.c.h.b16 %v631
      %v727 = vunpack.c.l.b16 %v632
      %v728 = vunpack.c.h.b16 %v632
      %v729 = vunpack.c.l.b16 %v633
      %v730 = vunpack.c.h.b16 %v633
      %v731 = vunpack.c.l.b16 %v634
      %v732 = vunpack.c.h.b16 %v634
      %v733 = vunpack.c.l.b16 %v635
      %v734 = vunpack.c.h.b16 %v635
      %v735 = vunpack.c.l.b16 %v636
      %v736 = vunpack.c.h.b16 %v636
      %v737 = vunpack.c.l.b16 %v637
      %v738 = vunpack.c.h.b16 %v637
      %v739 = vunpack.c.l.b16 %v638
      %v740 = vunpack.c.h.b16 %v638
      %v741 = vunpack.c.l.b16 %v639
      %v742 = vunpack.c.h.b16 %v639
      %v743 = vunpack.c.l.b16 %v640
      %v744 = vunpack.c.h.b16 %v640
      %v745 = vunpack.c.l.b16 %v641
      %v746 = vunpack.c.h.b16 %v641
      %v747 = vunpack.c.l.b16 %v642
      %v748 = vunpack.c.h.b16 %v642
      %v749 = vunpack.c.l.b16 %v643
      %v750 = vunpack.c.h.b16 %v643
      %v751 = vunpack.c.l.b16 %v644
      %v752 = vunpack.c.h.b16 %v644
      %v753 = vunpack.c.l.b16 %v645
      %v754 = vunpack.c.h.b16 %v645
      %v755 = vunpack.c.l.b16 %v646
      %v756 = vunpack.c.h.b16 %v646
      %v757 = vunpack.c.l.b16 %v647
      %v758 = vunpack.c.h.b16 %v647
      %v759 = vunpack.c.l.b16 %v648
      %v760 = vunpack.c.h.b16 %v648
      %v761 = vunpack.c.l.b16 %v649
      %v762 = vunpack.c.h.b16 %v649
      %v763 = vunpack.c.l.b16 %v650
      %v764 = vunpack.c.h.b16 %v650
      %v765 = vunpack.c.l.b16 %v651
      %v766 = vunpack.c.h.b16 %v651
      %v767 = vunpack.c.l.b16 %v652
      %v768 = vunpack.c.h.b16 %v652
      %v769 = vunpack.c.l.b16 %v653
      %v770 = vunpack.c.h.b16 %v653
      %v771 = vunpack.c.l.b16 %v654
      %v772 = vunpack.c.h.b16 %v654
      %v773 = vpack.c.b16 %v727, %v725
      %v774 = vpack.c.b16 %v728, %v726
      %v775 = vpack.c.b16 %v731, %v729
      %v776 = vpack.c.b16 %v732, %v730
      %v777 = vpack.c.b16 %v735, %v733
      %v778 = vpack.c.b16 %v736, %v734
      %v779 = vpack.c.b16 %v739, %v737
      %v780 = vpack.c.b16 %v740, %v738
      %v781 = vpack.c.b16 %v743, %v741
      %v782 = vpack.c.b16 %v744, %v742
      %v783 = vpack.c.b16 %v747, %v745
      %v784 = vpack.c.b16 %v748, %v746
      %v785 = vpack.c.b16 %v751, %v749
      %v786 = vpack.c.b16 %v752, %v750
      %v787 = vpack.c.b16 %v755, %v753
      %v788 = vpack.c.b16 %v756, %v754
      %v789 = vpack.c.b16 %v759, %v757
      %v790 = vpack.c.b16 %v760, %v758
      %v791 = vpack.c.b16 %v763, %v761
      %v792 = vpack.c.b16 %v764, %v762
      %v793 = vpack.c.b16 %v767, %v765
      %v794 = vpack.c.b16 %v768, %v766
      %v795 = vpack.c.b16 %v771, %v769
      %v796 = vpack.c.b16 %v772, %v770
      %v822 = vsel %vm373, %v682, 0
      %v825 = vsel %vm373, %v698, 0
      %827 = vmatprep.subr.bf16.mxu0 %v788
      %828 = vmatpush1.bf16.msra.mxu0 %v787
      %829 = vmatprep.subr.bf16.mxu0 %v786
      %830 = vmatpush1.bf16.msra.mxu0 %v785
      %831 = vmatprep.subr.bf16.mxu0 %v784
      %832 = vmatpush1.bf16.msra.mxu0 %v783
      %833 = vmatprep.subr.bf16.mxu0 %v782
      %834 = vmatpush1.bf16.msra.mxu0 %v781
      %835 = vmatprep.subr.bf16.mxu0 %v780
      %836 = vmatpush1.bf16.msra.mxu0 %v779
      %837 = vmatprep.subr.bf16.mxu0 %v778
      %838 = vmatpush1.bf16.msra.mxu0 %v777
      %839 = vmatprep.subr.bf16.mxu0 %v776
      %840 = vmatpush1.bf16.msra.mxu0 %v775
      %841 = vmatprep.subr.bf16.mxu0 %v774
      %842 = vmatpush1.bf16.msra.mxu0 %v773
      %843 = vmatprep.subr.bf16.mxu0 0
      %844 = vmatpush2.bf16.msra.mxu0 0
      %845 = vmatprep.subr.bf16.mxu0 0
      %846 = vmatpush2.bf16.msra.mxu0 0
      %847 = vmatprep.subr.bf16.mxu0 0
      %848 = vmatpush2.bf16.msra.mxu0 0
      %849 = vmatprep.subr.bf16.mxu0 0
      %850 = vmatpush2.bf16.msra.mxu0 0
      %851 = vmatprep.subr.bf16.mxu0 %v796
      %852 = vmatpush2.bf16.msra.mxu0 %v795
      %853 = vmatprep.subr.bf16.mxu0 %v794
      %854 = vmatpush2.bf16.msra.mxu0 %v793
      %855 = vmatprep.subr.bf16.mxu0 %v792
      %856 = vmatpush2.bf16.msra.mxu0 %v791
      %857 = vmatprep.subr.bf16.mxu0 %v790
      %858 = vmatpush2.bf16.msra.mxu0 %v789
      %859 = vmatprep.mubr.bf16.mxu0 %v822
      %860 = vmatmul.mubr.bf16.gmra.mxu0 %v672
      %v861 = vpop.f32.mrf.mxu0
      %v862 = vadd.f32 0.0, %v861
      %v863 = vpop.f32.mrf.mxu0
      %v864 = vadd.f32 0.0, %v863
      %v865 = vpop.f32.mrf.mxu0
      %v866 = vadd.f32 0.0, %v865
      %v867 = vpop.f32.mrf.mxu0
      %v868 = vadd.f32 0.0, %v867
      %869 = vmatprep.mubr.bf16.mxu0 %v825
      %870 = vmatmul.mubr.bf16.gmra.mxu0 %v690
      %v871 = vpop.f32.mrf.mxu0
      %v872 = vadd.f32 0.0, %v871
      %v873 = vpop.f32.mrf.mxu0
      %v874 = vadd.f32 0.0, %v873
      %v875 = vpop.f32.mrf.mxu0
      %v876 = vadd.f32 0.0, %v875
      %v877 = vpop.f32.mrf.mxu0
      %v878 = vadd.f32 0.0, %v877
      %879 = vdwg.mxu0
      %v880 = vadd.f32 %v612, %v862
      %v881 = vadd.f32 %v614, %v864
      %v882 = vadd.f32 %v616, %v866
      %v883 = vadd.f32 %v618, %v868
      %v884 = vadd.f32 %v622, %v872
      %v885 = vadd.f32 %v624, %v874
      %v886 = vadd.f32 %v626, %v876
      %v887 = vadd.f32 %v628, %v878
      %s888 = scalar_lea.vmem %s1, 576
      %v889 = vld [vmem:[%s888] sm:$0xff]
      %v890 = vld [vmem:[%s888 + $0x8] sm:$0xff]
      %v891 = vld [vmem:[%s888 + $0x10] sm:$0xff]
      %v892 = vld [vmem:[%s888 + $0x18] sm:$0xff]
      %v893 = vld [vmem:[%s888 + $0x20] sm:$0xff]
      %v894 = vld [vmem:[%s888 + $0x28] sm:$0xff]
      %v895 = vld [vmem:[%s888 + $0x30] sm:$0xff]
      %v896 = vld [vmem:[%s888 + $0x38] sm:$0xff]
      %v897 = vld [vmem:[%s888 + $0x40] sm:$0xff]
      %v898 = vld [vmem:[%s888 + $0x48] sm:$0xff]
      %v899 = vld [vmem:[%s888 + $0x50] sm:$0xff]
      %v900 = vld [vmem:[%s888 + $0x58] sm:$0xff]
      %v901 = vld [vmem:[%s888 + $0x60] sm:$0xff]
      %v902 = vld [vmem:[%s888 + $0x68] sm:$0xff]
      %v903 = vld [vmem:[%s888 + $0x70] sm:$0xff]
      %v904 = vld [vmem:[%s888 + $0x78] sm:$0xff]
      %v905 = vld [vmem:[%s888 + $0x80] sm:$0xff]
      %v906 = vld [vmem:[%s888 + $0x88] sm:$0xff]
      %v907 = vld [vmem:[%s888 + $0x90] sm:$0xff]
      %v908 = vld [vmem:[%s888 + $0x98] sm:$0xff]
      %v909 = vld [vmem:[%s888 + $0xa0] sm:$0xff]
      %v910 = vld [vmem:[%s888 + $0xa8] sm:$0xff]
      %v911 = vld [vmem:[%s888 + $0xb0] sm:$0xff]
      %v912 = vld [vmem:[%s888 + $0xb8] sm:$0xff]
      %v914 = vunpack.c.l.b16 %v182
      %v915 = vunpack.c.h.b16 %v182
      %v916 = vpack.c.b16 %v914, %v914
      %v917 = vpack.c.b16 %v915, %v915
      %v919 = vshrl.u32 %v247, 16
      %v921 = vshll.u32 %v247, 16
      %v923 = vrot.slane %v921, 1
      %v924 = vor.u32 %v919, %v923
      %v926 = vshll.u32 %v249, 16
      %v928 = vrot.slane %v926, 1
      %v929 = vsel %vm660, %v924, %v928
      %v930 = vshrl.u32 %v248, 16
      %v932 = vshll.u32 %v248, 16
      %v934 = vrot.slane %v932, 1
      %v935 = vor.u32 %v930, %v934
      %v936 = vshll.u32 %v250, 16
      %v938 = vrot.slane %v936, 1
      %v939 = vsel %vm660, %v935, %v938
      %v940 = vshrl.u32 %v249, 16
      %v942 = vor.u32 %v940, %v928
      %v944 = vshll.u32 %v916, 16
      %v946 = vrot.slane %v944, 1
      %v947 = vsel %vm660, %v942, %v946
      %v948 = vshrl.u32 %v250, 16
      %v950 = vor.u32 %v948, %v938
      %v952 = vshll.u32 %v917, 16
      %v954 = vrot.slane %v952, 1
      %v955 = vsel %vm660, %v950, %v954
      %v982 = vunpack.c.l.b16 %v889
      %v983 = vunpack.c.h.b16 %v889
      %v984 = vunpack.c.l.b16 %v890
      %v985 = vunpack.c.h.b16 %v890
      %v986 = vunpack.c.l.b16 %v891
      %v987 = vunpack.c.h.b16 %v891
      %v988 = vunpack.c.l.b16 %v892
      %v989 = vunpack.c.h.b16 %v892
      %v990 = vunpack.c.l.b16 %v893
      %v991 = vunpack.c.h.b16 %v893
      %v992 = vunpack.c.l.b16 %v894
      %v993 = vunpack.c.h.b16 %v894
      %v994 = vunpack.c.l.b16 %v895
      %v995 = vunpack.c.h.b16 %v895
      %v996 = vunpack.c.l.b16 %v896
      %v997 = vunpack.c.h.b16 %v896
      %v998 = vunpack.c.l.b16 %v897
      %v999 = vunpack.c.h.b16 %v897
      %v1000 = vunpack.c.l.b16 %v898
      %v1001 = vunpack.c.h.b16 %v898
      %v1002 = vunpack.c.l.b16 %v899
      %v1003 = vunpack.c.h.b16 %v899
      %v1004 = vunpack.c.l.b16 %v900
      %v1005 = vunpack.c.h.b16 %v900
      %v1006 = vunpack.c.l.b16 %v901
      %v1007 = vunpack.c.h.b16 %v901
      %v1008 = vunpack.c.l.b16 %v902
      %v1009 = vunpack.c.h.b16 %v902
      %v1010 = vunpack.c.l.b16 %v903
      %v1011 = vunpack.c.h.b16 %v903
      %v1012 = vunpack.c.l.b16 %v904
      %v1013 = vunpack.c.h.b16 %v904
      %v1014 = vunpack.c.l.b16 %v905
      %v1015 = vunpack.c.h.b16 %v905
      %v1016 = vunpack.c.l.b16 %v906
      %v1017 = vunpack.c.h.b16 %v906
      %v1018 = vunpack.c.l.b16 %v907
      %v1019 = vunpack.c.h.b16 %v907
      %v1020 = vunpack.c.l.b16 %v908
      %v1021 = vunpack.c.h.b16 %v908
      %v1022 = vunpack.c.l.b16 %v909
      %v1023 = vunpack.c.h.b16 %v909
      %v1024 = vunpack.c.l.b16 %v910
      %v1025 = vunpack.c.h.b16 %v910
      %v1026 = vunpack.c.l.b16 %v911
      %v1027 = vunpack.c.h.b16 %v911
      %v1028 = vunpack.c.l.b16 %v912
      %v1029 = vunpack.c.h.b16 %v912
      %v1030 = vpack.c.b16 %v984, %v982
      %v1031 = vpack.c.b16 %v985, %v983
      %v1032 = vpack.c.b16 %v988, %v986
      %v1033 = vpack.c.b16 %v989, %v987
      %v1034 = vpack.c.b16 %v992, %v990
      %v1035 = vpack.c.b16 %v993, %v991
      %v1036 = vpack.c.b16 %v996, %v994
      %v1037 = vpack.c.b16 %v997, %v995
      %v1038 = vpack.c.b16 %v1000, %v998
      %v1039 = vpack.c.b16 %v1001, %v999
      %v1040 = vpack.c.b16 %v1004, %v1002
      %v1041 = vpack.c.b16 %v1005, %v1003
      %v1042 = vpack.c.b16 %v1008, %v1006
      %v1043 = vpack.c.b16 %v1009, %v1007
      %v1044 = vpack.c.b16 %v1012, %v1010
      %v1045 = vpack.c.b16 %v1013, %v1011
      %v1046 = vpack.c.b16 %v1016, %v1014
      %v1047 = vpack.c.b16 %v1017, %v1015
      %v1048 = vpack.c.b16 %v1020, %v1018
      %v1049 = vpack.c.b16 %v1021, %v1019
      %v1050 = vpack.c.b16 %v1024, %v1022
      %v1051 = vpack.c.b16 %v1025, %v1023
      %v1052 = vpack.c.b16 %v1028, %v1026
      %v1053 = vpack.c.b16 %v1029, %v1027
      %v1079 = vsel %vm373, %v939, 0
      %v1082 = vsel %vm373, %v955, 0
      %1084 = vmatprep.subr.bf16.mxu0 %v1045
      %1085 = vmatpush1.bf16.msra.mxu0 %v1044
      %1086 = vmatprep.subr.bf16.mxu0 %v1043
      %1087 = vmatpush1.bf16.msra.mxu0 %v1042
      %1088 = vmatprep.subr.bf16.mxu0 %v1041
      %1089 = vmatpush1.bf16.msra.mxu0 %v1040
      %1090 = vmatprep.subr.bf16.mxu0 %v1039
      %1091 = vmatpush1.bf16.msra.mxu0 %v1038
      %1092 = vmatprep.subr.bf16.mxu0 %v1037
      %1093 = vmatpush1.bf16.msra.mxu0 %v1036
      %1094 = vmatprep.subr.bf16.mxu0 %v1035
      %1095 = vmatpush1.bf16.msra.mxu0 %v1034
      %1096 = vmatprep.subr.bf16.mxu0 %v1033
      %1097 = vmatpush1.bf16.msra.mxu0 %v1032
      %1098 = vmatprep.subr.bf16.mxu0 %v1031
      %1099 = vmatpush1.bf16.msra.mxu0 %v1030
      %1100 = vmatprep.subr.bf16.mxu0 0
      %1101 = vmatpush2.bf16.msra.mxu0 0
      %1102 = vmatprep.subr.bf16.mxu0 0
      %1103 = vmatpush2.bf16.msra.mxu0 0
      %1104 = vmatprep.subr.bf16.mxu0 0
      %1105 = vmatpush2.bf16.msra.mxu0 0
      %1106 = vmatprep.subr.bf16.mxu0 0
      %1107 = vmatpush2.bf16.msra.mxu0 0
      %1108 = vmatprep.subr.bf16.mxu0 %v1053
      %1109 = vmatpush2.bf16.msra.mxu0 %v1052
      %1110 = vmatprep.subr.bf16.mxu0 %v1051
      %1111 = vmatpush2.bf16.msra.mxu0 %v1050
      %1112 = vmatprep.subr.bf16.mxu0 %v1049
      %1113 = vmatpush2.bf16.msra.mxu0 %v1048
      %1114 = vmatprep.subr.bf16.mxu0 %v1047
      %1115 = vmatpush2.bf16.msra.mxu0 %v1046
      %1116 = vmatprep.mubr.bf16.mxu0 %v1079
      %1117 = vmatmul.mubr.bf16.gmra.mxu0 %v929
      %v1118 = vpop.f32.mrf.mxu0
      %v1119 = vadd.f32 0.0, %v1118
      %v1120 = vpop.f32.mrf.mxu0
      %v1121 = vadd.f32 0.0, %v1120
      %v1122 = vpop.f32.mrf.mxu0
      %v1123 = vadd.f32 0.0, %v1122
      %v1124 = vpop.f32.mrf.mxu0
      %v1125 = vadd.f32 0.0, %v1124
      %1126 = vmatprep.mubr.bf16.mxu0 %v1082
      %1127 = vmatmul.mubr.bf16.gmra.mxu0 %v947
      %v1128 = vpop.f32.mrf.mxu0
      %v1129 = vadd.f32 0.0, %v1128
      %v1130 = vpop.f32.mrf.mxu0
      %v1131 = vadd.f32 0.0, %v1130
      %v1132 = vpop.f32.mrf.mxu0
      %v1133 = vadd.f32 0.0, %v1132
      %v1134 = vpop.f32.mrf.mxu0
      %v1135 = vadd.f32 0.0, %v1134
      %1136 = vdwg.mxu0
      %v1137 = vadd.f32 %v880, %v1119
      %v1138 = vadd.f32 %v881, %v1121
      %v1139 = vadd.f32 %v882, %v1123
      %v1140 = vadd.f32 %v883, %v1125
      %v1141 = vadd.f32 %v884, %v1129
      %v1142 = vadd.f32 %v885, %v1131
      %v1143 = vadd.f32 %v886, %v1133
      %v1144 = vadd.f32 %v887, %v1135
      %s1145 = scalar_lea.vmem %s1, 768
      %v1146 = vld [vmem:[%s1145] sm:$0xff]
      %v1147 = vld [vmem:[%s1145 + $0x8] sm:$0xff]
      %v1148 = vld [vmem:[%s1145 + $0x10] sm:$0xff]
      %v1149 = vld [vmem:[%s1145 + $0x18] sm:$0xff]
      %v1150 = vld [vmem:[%s1145 + $0x20] sm:$0xff]
      %v1151 = vld [vmem:[%s1145 + $0x28] sm:$0xff]
      %v1152 = vld [vmem:[%s1145 + $0x30] sm:$0xff]
      %v1153 = vld [vmem:[%s1145 + $0x38] sm:$0xff]
      %v1154 = vld [vmem:[%s1145 + $0x40] sm:$0xff]
      %v1155 = vld [vmem:[%s1145 + $0x48] sm:$0xff]
      %v1156 = vld [vmem:[%s1145 + $0x50] sm:$0xff]
      %v1157 = vld [vmem:[%s1145 + $0x58] sm:$0xff]
      %v1158 = vld [vmem:[%s1145 + $0x60] sm:$0xff]
      %v1159 = vld [vmem:[%s1145 + $0x68] sm:$0xff]
      %v1160 = vld [vmem:[%s1145 + $0x70] sm:$0xff]
      %v1161 = vld [vmem:[%s1145 + $0x78] sm:$0xff]
      %v1162 = vld [vmem:[%s1145 + $0x80] sm:$0xff]
      %v1163 = vld [vmem:[%s1145 + $0x88] sm:$0xff]
      %v1164 = vld [vmem:[%s1145 + $0x90] sm:$0xff]
      %v1165 = vld [vmem:[%s1145 + $0x98] sm:$0xff]
      %v1166 = vld [vmem:[%s1145 + $0xa0] sm:$0xff]
      %v1167 = vld [vmem:[%s1145 + $0xa8] sm:$0xff]
      %v1168 = vld [vmem:[%s1145 + $0xb0] sm:$0xff]
      %v1169 = vld [vmem:[%s1145 + $0xb8] sm:$0xff]
      %v1171 = vunpack.c.l.b16 %v183
      %v1172 = vunpack.c.h.b16 %v183
      %v1173 = vpack.c.b16 %v439, %v1171
      %v1174 = vpack.c.b16 %v440, %v1172
      %vm1175 = vcmask 1046528
      %v1176 = vrot.slane %v1173, 1
      %v1177 = vrot.slane %v447, 1
      %v1178 = vsel %vm1175, %v1176, %v1177
      %v1179 = vrot.slane %v1174, 1
      %v1180 = vrot.slane %v448, 1
      %v1181 = vsel %vm1175, %v1179, %v1180
      %v1182 = vrot.slane %v658, 1
      %v1183 = vsel %vm1175, %v1177, %v1182
      %v1184 = vrot.slane %v659, 1
      %v1185 = vsel %vm1175, %v1180, %v1184
      %v1212 = vunpack.c.l.b16 %v1146
      %v1213 = vunpack.c.h.b16 %v1146
      %v1214 = vunpack.c.l.b16 %v1147
      %v1215 = vunpack.c.h.b16 %v1147
      %v1216 = vunpack.c.l.b16 %v1148
      %v1217 = vunpack.c.h.b16 %v1148
      %v1218 = vunpack.c.l.b16 %v1149
      %v1219 = vunpack.c.h.b16 %v1149
      %v1220 = vunpack.c.l.b16 %v1150
      %v1221 = vunpack.c.h.b16 %v1150
      %v1222 = vunpack.c.l.b16 %v1151
      %v1223 = vunpack.c.h.b16 %v1151
      %v1224 = vunpack.c.l.b16 %v1152
      %v1225 = vunpack.c.h.b16 %v1152
      %v1226 = vunpack.c.l.b16 %v1153
      %v1227 = vunpack.c.h.b16 %v1153
      %v1228 = vunpack.c.l.b16 %v1154
      %v1229 = vunpack.c.h.b16 %v1154
      %v1230 = vunpack.c.l.b16 %v1155
      %v1231 = vunpack.c.h.b16 %v1155
      %v1232 = vunpack.c.l.b16 %v1156
      %v1233 = vunpack.c.h.b16 %v1156
      %v1234 = vunpack.c.l.b16 %v1157
      %v1235 = vunpack.c.h.b16 %v1157
      %v1236 = vunpack.c.l.b16 %v1158
      %v1237 = vunpack.c.h.b16 %v1158
      %v1238 = vunpack.c.l.b16 %v1159
      %v1239 = vunpack.c.h.b16 %v1159
      %v1240 = vunpack.c.l.b16 %v1160
      %v1241 = vunpack.c.h.b16 %v1160
      %v1242 = vunpack.c.l.b16 %v1161
      %v1243 = vunpack.c.h.b16 %v1161
      %v1244 = vunpack.c.l.b16 %v1162
      %v1245 = vunpack.c.h.b16 %v1162
      %v1246 = vunpack.c.l.b16 %v1163
      %v1247 = vunpack.c.h.b16 %v1163
      %v1248 = vunpack.c.l.b16 %v1164
      %v1249 = vunpack.c.h.b16 %v1164
      %v1250 = vunpack.c.l.b16 %v1165
      %v1251 = vunpack.c.h.b16 %v1165
      %v1252 = vunpack.c.l.b16 %v1166
      %v1253 = vunpack.c.h.b16 %v1166
      %v1254 = vunpack.c.l.b16 %v1167
      %v1255 = vunpack.c.h.b16 %v1167
      %v1256 = vunpack.c.l.b16 %v1168
      %v1257 = vunpack.c.h.b16 %v1168
      %v1258 = vunpack.c.l.b16 %v1169
      %v1259 = vunpack.c.h.b16 %v1169
      %v1260 = vpack.c.b16 %v1214, %v1212
      %v1261 = vpack.c.b16 %v1215, %v1213
      %v1262 = vpack.c.b16 %v1218, %v1216
      %v1263 = vpack.c.b16 %v1219, %v1217
      %v1264 = vpack.c.b16 %v1222, %v1220
      %v1265 = vpack.c.b16 %v1223, %v1221
      %v1266 = vpack.c.b16 %v1226, %v1224
      %v1267 = vpack.c.b16 %v1227, %v1225
      %v1268 = vpack.c.b16 %v1230, %v1228
      %v1269 = vpack.c.b16 %v1231, %v1229
      %v1270 = vpack.c.b16 %v1234, %v1232
      %v1271 = vpack.c.b16 %v1235, %v1233
      %v1272 = vpack.c.b16 %v1238, %v1236
      %v1273 = vpack.c.b16 %v1239, %v1237
      %v1274 = vpack.c.b16 %v1242, %v1240
      %v1275 = vpack.c.b16 %v1243, %v1241
      %v1276 = vpack.c.b16 %v1246, %v1244
      %v1277 = vpack.c.b16 %v1247, %v1245
      %v1278 = vpack.c.b16 %v1250, %v1248
      %v1279 = vpack.c.b16 %v1251, %v1249
      %v1280 = vpack.c.b16 %v1254, %v1252
      %v1281 = vpack.c.b16 %v1255, %v1253
      %v1282 = vpack.c.b16 %v1258, %v1256
      %v1283 = vpack.c.b16 %v1259, %v1257
      %v1309 = vsel %vm373, %v1181, 0
      %v1312 = vsel %vm373, %v1185, 0
      %1314 = vmatprep.subr.bf16.mxu0 %v1275
      %1315 = vmatpush1.bf16.msra.mxu0 %v1274
      %1316 = vmatprep.subr.bf16.mxu0 %v1273
      %1317 = vmatpush1.bf16.msra.mxu0 %v1272
      %1318 = vmatprep.subr.bf16.mxu0 %v1271
      %1319 = vmatpush1.bf16.msra.mxu0 %v1270
      %1320 = vmatprep.subr.bf16.mxu0 %v1269
      %1321 = vmatpush1.bf16.msra.mxu0 %v1268
      %1322 = vmatprep.subr.bf16.mxu0 %v1267
      %1323 = vmatpush1.bf16.msra.mxu0 %v1266
      %1324 = vmatprep.subr.bf16.mxu0 %v1265
      %1325 = vmatpush1.bf16.msra.mxu0 %v1264
      %1326 = vmatprep.subr.bf16.mxu0 %v1263
      %1327 = vmatpush1.bf16.msra.mxu0 %v1262
      %1328 = vmatprep.subr.bf16.mxu0 %v1261
      %1329 = vmatpush1.bf16.msra.mxu0 %v1260
      %1330 = vmatprep.subr.bf16.mxu0 0
      %1331 = vmatpush2.bf16.msra.mxu0 0
      %1332 = vmatprep.subr.bf16.mxu0 0
      %1333 = vmatpush2.bf16.msra.mxu0 0
      %1334 = vmatprep.subr.bf16.mxu0 0
      %1335 = vmatpush2.bf16.msra.mxu0 0
      %1336 = vmatprep.subr.bf16.mxu0 0
      %1337 = vmatpush2.bf16.msra.mxu0 0
      %1338 = vmatprep.subr.bf16.mxu0 %v1283
      %1339 = vmatpush2.bf16.msra.mxu0 %v1282
      %1340 = vmatprep.subr.bf16.mxu0 %v1281
      %1341 = vmatpush2.bf16.msra.mxu0 %v1280
      %1342 = vmatprep.subr.bf16.mxu0 %v1279
      %1343 = vmatpush2.bf16.msra.mxu0 %v1278
      %1344 = vmatprep.subr.bf16.mxu0 %v1277
      %1345 = vmatpush2.bf16.msra.mxu0 %v1276
      %1346 = vmatprep.mubr.bf16.mxu0 %v1309
      %1347 = vmatmul.mubr.bf16.gmra.mxu0 %v1178
      %v1348 = vpop.f32.mrf.mxu0
      %v1349 = vadd.f32 0.0, %v1348
      %v1350 = vpop.f32.mrf.mxu0
      %v1351 = vadd.f32 0.0, %v1350
      %v1352 = vpop.f32.mrf.mxu0
      %v1353 = vadd.f32 0.0, %v1352
      %v1354 = vpop.f32.mrf.mxu0
      %v1355 = vadd.f32 0.0, %v1354
      %1356 = vmatprep.mubr.bf16.mxu0 %v1312
      %1357 = vmatmul.mubr.bf16.gmra.mxu0 %v1183
      %v1358 = vpop.f32.mrf.mxu0
      %v1359 = vadd.f32 0.0, %v1358
      %v1360 = vpop.f32.mrf.mxu0
      %v1361 = vadd.f32 0.0, %v1360
      %v1362 = vpop.f32.mrf.mxu0
      %v1363 = vadd.f32 0.0, %v1362
      %v1364 = vpop.f32.mrf.mxu0
      %v1365 = vadd.f32 0.0, %v1364
      %1366 = vdwg.mxu0
      %v1367 = vadd.f32 %v1137, %v1349
      %v1368 = vadd.f32 %v1138, %v1351
      %v1369 = vadd.f32 %v1139, %v1353
      %v1370 = vadd.f32 %v1140, %v1355
      %v1371 = vadd.f32 %v1141, %v1359
      %v1372 = vadd.f32 %v1142, %v1361
      %v1373 = vadd.f32 %v1143, %v1363
      %v1374 = vadd.f32 %v1144, %v1365
      %s1375 = scalar_lea.vmem %s1, 960
      %v1376 = vld [vmem:[%s1375] sm:$0xff]
      %v1377 = vld [vmem:[%s1375 + $0x8] sm:$0xff]
      %v1378 = vld [vmem:[%s1375 + $0x10] sm:$0xff]
      %v1379 = vld [vmem:[%s1375 + $0x18] sm:$0xff]
      %v1380 = vld [vmem:[%s1375 + $0x20] sm:$0xff]
      %v1381 = vld [vmem:[%s1375 + $0x28] sm:$0xff]
      %v1382 = vld [vmem:[%s1375 + $0x30] sm:$0xff]
      %v1383 = vld [vmem:[%s1375 + $0x38] sm:$0xff]
      %v1384 = vld [vmem:[%s1375 + $0x40] sm:$0xff]
      %v1385 = vld [vmem:[%s1375 + $0x48] sm:$0xff]
      %v1386 = vld [vmem:[%s1375 + $0x50] sm:$0xff]
      %v1387 = vld [vmem:[%s1375 + $0x58] sm:$0xff]
      %v1388 = vld [vmem:[%s1375 + $0x60] sm:$0xff]
      %v1389 = vld [vmem:[%s1375 + $0x68] sm:$0xff]
      %v1390 = vld [vmem:[%s1375 + $0x70] sm:$0xff]
      %v1391 = vld [vmem:[%s1375 + $0x78] sm:$0xff]
      %v1392 = vld [vmem:[%s1375 + $0x80] sm:$0xff]
      %v1393 = vld [vmem:[%s1375 + $0x88] sm:$0xff]
      %v1394 = vld [vmem:[%s1375 + $0x90] sm:$0xff]
      %v1395 = vld [vmem:[%s1375 + $0x98] sm:$0xff]
      %v1396 = vld [vmem:[%s1375 + $0xa0] sm:$0xff]
      %v1397 = vld [vmem:[%s1375 + $0xa8] sm:$0xff]
      %v1398 = vld [vmem:[%s1375 + $0xb0] sm:$0xff]
      %v1399 = vld [vmem:[%s1375 + $0xb8] sm:$0xff]
      %v1401 = vunpack.c.l.b16 %v184
      %v1402 = vunpack.c.h.b16 %v184
      %v1403 = vpack.c.b16 %v241, %v1401
      %v1404 = vpack.c.b16 %v242, %v1402
      %v1405 = vrot.slane %v1403, 1
      %v1406 = vrot.slane %v249, 1
      %v1407 = vsel %vm1175, %v1405, %v1406
      %v1408 = vrot.slane %v1404, 1
      %v1409 = vrot.slane %v250, 1
      %v1410 = vsel %vm1175, %v1408, %v1409
      %v1411 = vrot.slane %v916, 1
      %v1412 = vsel %vm1175, %v1406, %v1411
      %v1413 = vrot.slane %v917, 1
      %v1414 = vsel %vm1175, %v1409, %v1413
      %v1441 = vunpack.c.l.b16 %v1376
      %v1442 = vunpack.c.h.b16 %v1376
      %v1443 = vunpack.c.l.b16 %v1377
      %v1444 = vunpack.c.h.b16 %v1377
      %v1445 = vunpack.c.l.b16 %v1378
      %v1446 = vunpack.c.h.b16 %v1378
      %v1447 = vunpack.c.l.b16 %v1379
      %v1448 = vunpack.c.h.b16 %v1379
      %v1449 = vunpack.c.l.b16 %v1380
      %v1450 = vunpack.c.h.b16 %v1380
      %v1451 = vunpack.c.l.b16 %v1381
      %v1452 = vunpack.c.h.b16 %v1381
      %v1453 = vunpack.c.l.b16 %v1382
      %v1454 = vunpack.c.h.b16 %v1382
      %v1455 = vunpack.c.l.b16 %v1383
      %v1456 = vunpack.c.h.b16 %v1383
      %v1457 = vunpack.c.l.b16 %v1384
      %v1458 = vunpack.c.h.b16 %v1384
      %v1459 = vunpack.c.l.b16 %v1385
      %v1460 = vunpack.c.h.b16 %v1385
      %v1461 = vunpack.c.l.b16 %v1386
      %v1462 = vunpack.c.h.b16 %v1386
      %v1463 = vunpack.c.l.b16 %v1387
      %v1464 = vunpack.c.h.b16 %v1387
      %v1465 = vunpack.c.l.b16 %v1388
      %v1466 = vunpack.c.h.b16 %v1388
      %v1467 = vunpack.c.l.b16 %v1389
      %v1468 = vunpack.c.h.b16 %v1389
      %v1469 = vunpack.c.l.b16 %v1390
      %v1470 = vunpack.c.h.b16 %v1390
      %v1471 = vunpack.c.l.b16 %v1391
      %v1472 = vunpack.c.h.b16 %v1391
      %v1473 = vunpack.c.l.b16 %v1392
      %v1474 = vunpack.c.h.b16 %v1392
      %v1475 = vunpack.c.l.b16 %v1393
      %v1476 = vunpack.c.h.b16 %v1393
      %v1477 = vunpack.c.l.b16 %v1394
      %v1478 = vunpack.c.h.b16 %v1394
      %v1479 = vunpack.c.l.b16 %v1395
      %v1480 = vunpack.c.h.b16 %v1395
      %v1481 = vunpack.c.l.b16 %v1396
      %v1482 = vunpack.c.h.b16 %v1396
      %v1483 = vunpack.c.l.b16 %v1397
      %v1484 = vunpack.c.h.b16 %v1397
      %v1485 = vunpack.c.l.b16 %v1398
      %v1486 = vunpack.c.h.b16 %v1398
      %v1487 = vunpack.c.l.b16 %v1399
      %v1488 = vunpack.c.h.b16 %v1399
      %v1489 = vpack.c.b16 %v1443, %v1441
      %v1490 = vpack.c.b16 %v1444, %v1442
      %v1491 = vpack.c.b16 %v1447, %v1445
      %v1492 = vpack.c.b16 %v1448, %v1446
      %v1493 = vpack.c.b16 %v1451, %v1449
      %v1494 = vpack.c.b16 %v1452, %v1450
      %v1495 = vpack.c.b16 %v1455, %v1453
      %v1496 = vpack.c.b16 %v1456, %v1454
      %v1497 = vpack.c.b16 %v1459, %v1457
      %v1498 = vpack.c.b16 %v1460, %v1458
      %v1499 = vpack.c.b16 %v1463, %v1461
      %v1500 = vpack.c.b16 %v1464, %v1462
      %v1501 = vpack.c.b16 %v1467, %v1465
      %v1502 = vpack.c.b16 %v1468, %v1466
      %v1503 = vpack.c.b16 %v1471, %v1469
      %v1504 = vpack.c.b16 %v1472, %v1470
      %v1505 = vpack.c.b16 %v1475, %v1473
      %v1506 = vpack.c.b16 %v1476, %v1474
      %v1507 = vpack.c.b16 %v1479, %v1477
      %v1508 = vpack.c.b16 %v1480, %v1478
      %v1509 = vpack.c.b16 %v1483, %v1481
      %v1510 = vpack.c.b16 %v1484, %v1482
      %v1511 = vpack.c.b16 %v1487, %v1485
      %v1512 = vpack.c.b16 %v1488, %v1486
      %v1538 = vsel %vm373, %v1410, 0
      %v1541 = vsel %vm373, %v1414, 0
      %1543 = vmatprep.subr.bf16.mxu0 %v1504
      %1544 = vmatpush1.bf16.msra.mxu0 %v1503
      %1545 = vmatprep.subr.bf16.mxu0 %v1502
      %1546 = vmatpush1.bf16.msra.mxu0 %v1501
      %1547 = vmatprep.subr.bf16.mxu0 %v1500
      %1548 = vmatpush1.bf16.msra.mxu0 %v1499
      %1549 = vmatprep.subr.bf16.mxu0 %v1498
      %1550 = vmatpush1.bf16.msra.mxu0 %v1497
      %1551 = vmatprep.subr.bf16.mxu0 %v1496
      %1552 = vmatpush1.bf16.msra.mxu0 %v1495
      %1553 = vmatprep.subr.bf16.mxu0 %v1494
      %1554 = vmatpush1.bf16.msra.mxu0 %v1493
      %1555 = vmatprep.subr.bf16.mxu0 %v1492
      %1556 = vmatpush1.bf16.msra.mxu0 %v1491
      %1557 = vmatprep.subr.bf16.mxu0 %v1490
      %1558 = vmatpush1.bf16.msra.mxu0 %v1489
      %1559 = vmatprep.subr.bf16.mxu0 0
      %1560 = vmatpush2.bf16.msra.mxu0 0
      %1561 = vmatprep.subr.bf16.mxu0 0
      %1562 = vmatpush2.bf16.msra.mxu0 0
      %1563 = vmatprep.subr.bf16.mxu0 0
      %1564 = vmatpush2.bf16.msra.mxu0 0
      %1565 = vmatprep.subr.bf16.mxu0 0
      %1566 = vmatpush2.bf16.msra.mxu0 0
      %1567 = vmatprep.subr.bf16.mxu0 %v1512
      %1568 = vmatpush2.bf16.msra.mxu0 %v1511
      %1569 = vmatprep.subr.bf16.mxu0 %v1510
      %1570 = vmatpush2.bf16.msra.mxu0 %v1509
      %1571 = vmatprep.subr.bf16.mxu0 %v1508
      %1572 = vmatpush2.bf16.msra.mxu0 %v1507
      %1573 = vmatprep.subr.bf16.mxu0 %v1506
      %1574 = vmatpush2.bf16.msra.mxu0 %v1505
      %1575 = vmatprep.mubr.bf16.mxu0 %v1538
      %1576 = vmatmul.mubr.bf16.gmra.mxu0 %v1407
      %v1577 = vpop.f32.mrf.mxu0
      %v1578 = vadd.f32 0.0, %v1577
      %v1579 = vpop.f32.mrf.mxu0
      %v1580 = vadd.f32 0.0, %v1579
      %v1581 = vpop.f32.mrf.mxu0
      %v1582 = vadd.f32 0.0, %v1581
      %v1583 = vpop.f32.mrf.mxu0
      %v1584 = vadd.f32 0.0, %v1583
      %1585 = vmatprep.mubr.bf16.mxu0 %v1541
      %1586 = vmatmul.mubr.bf16.gmra.mxu0 %v1412
      %v1587 = vpop.f32.mrf.mxu0
      %v1588 = vadd.f32 0.0, %v1587
      %v1589 = vpop.f32.mrf.mxu0
      %v1590 = vadd.f32 0.0, %v1589
      %v1591 = vpop.f32.mrf.mxu0
      %v1592 = vadd.f32 0.0, %v1591
      %v1593 = vpop.f32.mrf.mxu0
      %v1594 = vadd.f32 0.0, %v1593
      %1595 = vdwg.mxu0
      %v1596 = vadd.f32 %v1367, %v1578
      %v1597 = vadd.f32 %v1368, %v1580
      %v1598 = vadd.f32 %v1369, %v1582
      %v1599 = vadd.f32 %v1370, %v1584
      %v1600 = vadd.f32 %v1371, %v1588
      %v1601 = vadd.f32 %v1372, %v1590
      %v1602 = vadd.f32 %v1373, %v1592
      %v1603 = vadd.f32 %v1374, %v1594
      %s1604 = scalar_lea.vmem %s1, 1152
      %v1605 = vld [vmem:[%s1604] sm:$0xff]
      %v1606 = vld [vmem:[%s1604 + $0x8] sm:$0xff]
      %v1607 = vld [vmem:[%s1604 + $0x10] sm:$0xff]
      %v1608 = vld [vmem:[%s1604 + $0x18] sm:$0xff]
      %v1609 = vld [vmem:[%s1604 + $0x20] sm:$0xff]
      %v1610 = vld [vmem:[%s1604 + $0x28] sm:$0xff]
      %v1611 = vld [vmem:[%s1604 + $0x30] sm:$0xff]
      %v1612 = vld [vmem:[%s1604 + $0x38] sm:$0xff]
      %v1613 = vld [vmem:[%s1604 + $0x40] sm:$0xff]
      %v1614 = vld [vmem:[%s1604 + $0x48] sm:$0xff]
      %v1615 = vld [vmem:[%s1604 + $0x50] sm:$0xff]
      %v1616 = vld [vmem:[%s1604 + $0x58] sm:$0xff]
      %v1617 = vld [vmem:[%s1604 + $0x60] sm:$0xff]
      %v1618 = vld [vmem:[%s1604 + $0x68] sm:$0xff]
      %v1619 = vld [vmem:[%s1604 + $0x70] sm:$0xff]
      %v1620 = vld [vmem:[%s1604 + $0x78] sm:$0xff]
      %v1621 = vld [vmem:[%s1604 + $0x80] sm:$0xff]
      %v1622 = vld [vmem:[%s1604 + $0x88] sm:$0xff]
      %v1623 = vld [vmem:[%s1604 + $0x90] sm:$0xff]
      %v1624 = vld [vmem:[%s1604 + $0x98] sm:$0xff]
      %v1625 = vld [vmem:[%s1604 + $0xa0] sm:$0xff]
      %v1626 = vld [vmem:[%s1604 + $0xa8] sm:$0xff]
      %v1627 = vld [vmem:[%s1604 + $0xb0] sm:$0xff]
      %v1628 = vld [vmem:[%s1604 + $0xb8] sm:$0xff]
      %v1630 = vunpack.c.l.b16 %v185
      %v1631 = vunpack.c.h.b16 %v185
      %v1632 = vpack.c.b16 %v1630, %v1630
      %v1633 = vpack.c.b16 %v1631, %v1631
      %vm1634 = vsmask.f32 6400
      %v1636 = vshrl.u32 %v1173, 16
      %v1638 = vrot.slane %v1636, 1
      %v1639 = vshll.u32 %v1173, 16
      %v1641 = vrot.slane %v1639, 2
      %v1642 = vor.u32 %v1638, %v1641
      %v1643 = vrot.slane %v683, 1
      %v1644 = vrot.slane %v669, 2
      %v1645 = vor.u32 %v1643, %v1644
      %v1646 = vsel %vm1634, %v1642, %v1645
      %v1648 = vshrl.u32 %v1174, 16
      %v1650 = vrot.slane %v1648, 1
      %v1651 = vshll.u32 %v1174, 16
      %v1653 = vrot.slane %v1651, 2
      %v1654 = vor.u32 %v1650, %v1653
      %v1655 = vrot.slane %v691, 1
      %v1656 = vrot.slane %v679, 2
      %v1657 = vor.u32 %v1655, %v1656
      %v1658 = vsel %vm1634, %v1654, %v1657
      %v1660 = vshrl.u32 %v1632, 16
      %v1662 = vrot.slane %v1660, 1
      %v1663 = vshll.u32 %v1632, 16
      %v1665 = vrot.slane %v1663, 2
      %v1666 = vor.u32 %v1662, %v1665
      %v1667 = vsel %vm1634, %v1645, %v1666
      %v1669 = vshrl.u32 %v1633, 16
      %v1671 = vrot.slane %v1669, 1
      %v1672 = vshll.u32 %v1633, 16
      %v1674 = vrot.slane %v1672, 2
      %v1675 = vor.u32 %v1671, %v1674
      %v1676 = vsel %vm1634, %v1657, %v1675
      %v1703 = vunpack.c.l.b16 %v1605
      %v1704 = vunpack.c.h.b16 %v1605
      %v1705 = vunpack.c.l.b16 %v1606
      %v1706 = vunpack.c.h.b16 %v1606
      %v1707 = vunpack.c.l.b16 %v1607
      %v1708 = vunpack.c.h.b16 %v1607
      %v1709 = vunpack.c.l.b16 %v1608
      %v1710 = vunpack.c.h.b16 %v1608
      %v1711 = vunpack.c.l.b16 %v1609
      %v1712 = vunpack.c.h.b16 %v1609
      %v1713 = vunpack.c.l.b16 %v1610
      %v1714 = vunpack.c.h.b16 %v1610
      %v1715 = vunpack.c.l.b16 %v1611
      %v1716 = vunpack.c.h.b16 %v1611
      %v1717 = vunpack.c.l.b16 %v1612
      %v1718 = vunpack.c.h.b16 %v1612
      %v1719 = vunpack.c.l.b16 %v1613
      %v1720 = vunpack.c.h.b16 %v1613
      %v1721 = vunpack.c.l.b16 %v1614
      %v1722 = vunpack.c.h.b16 %v1614
      %v1723 = vunpack.c.l.b16 %v1615
      %v1724 = vunpack.c.h.b16 %v1615
      %v1725 = vunpack.c.l.b16 %v1616
      %v1726 = vunpack.c.h.b16 %v1616
      %v1727 = vunpack.c.l.b16 %v1617
      %v1728 = vunpack.c.h.b16 %v1617
      %v1729 = vunpack.c.l.b16 %v1618
      %v1730 = vunpack.c.h.b16 %v1618
      %v1731 = vunpack.c.l.b16 %v1619
      %v1732 = vunpack.c.h.b16 %v1619
      %v1733 = vunpack.c.l.b16 %v1620
      %v1734 = vunpack.c.h.b16 %v1620
      %v1735 = vunpack.c.l.b16 %v1621
      %v1736 = vunpack.c.h.b16 %v1621
      %v1737 = vunpack.c.l.b16 %v1622
      %v1738 = vunpack.c.h.b16 %v1622
      %v1739 = vunpack.c.l.b16 %v1623
      %v1740 = vunpack.c.h.b16 %v1623
      %v1741 = vunpack.c.l.b16 %v1624
      %v1742 = vunpack.c.h.b16 %v1624
      %v1743 = vunpack.c.l.b16 %v1625
      %v1744 = vunpack.c.h.b16 %v1625
      %v1745 = vunpack.c.l.b16 %v1626
      %v1746 = vunpack.c.h.b16 %v1626
      %v1747 = vunpack.c.l.b16 %v1627
      %v1748 = vunpack.c.h.b16 %v1627
      %v1749 = vunpack.c.l.b16 %v1628
      %v1750 = vunpack.c.h.b16 %v1628
      %v1751 = vpack.c.b16 %v1705, %v1703
      %v1752 = vpack.c.b16 %v1706, %v1704
      %v1753 = vpack.c.b16 %v1709, %v1707
      %v1754 = vpack.c.b16 %v1710, %v1708
      %v1755 = vpack.c.b16 %v1713, %v1711
      %v1756 = vpack.c.b16 %v1714, %v1712
      %v1757 = vpack.c.b16 %v1717, %v1715
      %v1758 = vpack.c.b16 %v1718, %v1716
      %v1759 = vpack.c.b16 %v1721, %v1719
      %v1760 = vpack.c.b16 %v1722, %v1720
      %v1761 = vpack.c.b16 %v1725, %v1723
      %v1762 = vpack.c.b16 %v1726, %v1724
      %v1763 = vpack.c.b16 %v1729, %v1727
      %v1764 = vpack.c.b16 %v1730, %v1728
      %v1765 = vpack.c.b16 %v1733, %v1731
      %v1766 = vpack.c.b16 %v1734, %v1732
      %v1767 = vpack.c.b16 %v1737, %v1735
      %v1768 = vpack.c.b16 %v1738, %v1736
      %v1769 = vpack.c.b16 %v1741, %v1739
      %v1770 = vpack.c.b16 %v1742, %v1740
      %v1771 = vpack.c.b16 %v1745, %v1743
      %v1772 = vpack.c.b16 %v1746, %v1744
      %v1773 = vpack.c.b16 %v1749, %v1747
      %v1774 = vpack.c.b16 %v1750, %v1748
      %v1800 = vsel %vm373, %v1658, 0
      %v1803 = vsel %vm373, %v1676, 0
      %1805 = vmatprep.subr.bf16.mxu0 %v1766
      %1806 = vmatpush1.bf16.msra.mxu0 %v1765
      %1807 = vmatprep.subr.bf16.mxu0 %v1764
      %1808 = vmatpush1.bf16.msra.mxu0 %v1763
      %1809 = vmatprep.subr.bf16.mxu0 %v1762
      %1810 = vmatpush1.bf16.msra.mxu0 %v1761
      %1811 = vmatprep.subr.bf16.mxu0 %v1760
      %1812 = vmatpush1.bf16.msra.mxu0 %v1759
      %1813 = vmatprep.subr.bf16.mxu0 %v1758
      %1814 = vmatpush1.bf16.msra.mxu0 %v1757
      %1815 = vmatprep.subr.bf16.mxu0 %v1756
      %1816 = vmatpush1.bf16.msra.mxu0 %v1755
      %1817 = vmatprep.subr.bf16.mxu0 %v1754
      %1818 = vmatpush1.bf16.msra.mxu0 %v1753
      %1819 = vmatprep.subr.bf16.mxu0 %v1752
      %1820 = vmatpush1.bf16.msra.mxu0 %v1751
      %1821 = vmatprep.subr.bf16.mxu0 0
      %1822 = vmatpush2.bf16.msra.mxu0 0
      %1823 = vmatprep.subr.bf16.mxu0 0
      %1824 = vmatpush2.bf16.msra.mxu0 0
      %1825 = vmatprep.subr.bf16.mxu0 0
      %1826 = vmatpush2.bf16.msra.mxu0 0
      %1827 = vmatprep.subr.bf16.mxu0 0
      %1828 = vmatpush2.bf16.msra.mxu0 0
      %1829 = vmatprep.subr.bf16.mxu0 %v1774
      %1830 = vmatpush2.bf16.msra.mxu0 %v1773
      %1831 = vmatprep.subr.bf16.mxu0 %v1772
      %1832 = vmatpush2.bf16.msra.mxu0 %v1771
      %1833 = vmatprep.subr.bf16.mxu0 %v1770
      %1834 = vmatpush2.bf16.msra.mxu0 %v1769
      %1835 = vmatprep.subr.bf16.mxu0 %v1768
      %1836 = vmatpush2.bf16.msra.mxu0 %v1767
      %1837 = vmatprep.mubr.bf16.mxu0 %v1800
      %1838 = vmatmul.mubr.bf16.gmra.mxu0 %v1646
      %v1839 = vpop.f32.mrf.mxu0
      %v1840 = vadd.f32 0.0, %v1839
      %v1841 = vpop.f32.mrf.mxu0
      %v1842 = vadd.f32 0.0, %v1841
      %v1843 = vpop.f32.mrf.mxu0
      %v1844 = vadd.f32 0.0, %v1843
      %v1845 = vpop.f32.mrf.mxu0
      %v1846 = vadd.f32 0.0, %v1845
      %1847 = vmatprep.mubr.bf16.mxu0 %v1803
      %1848 = vmatmul.mubr.bf16.gmra.mxu0 %v1667
      %v1849 = vpop.f32.mrf.mxu0
      %v1850 = vadd.f32 0.0, %v1849
      %v1851 = vpop.f32.mrf.mxu0
      %v1852 = vadd.f32 0.0, %v1851
      %v1853 = vpop.f32.mrf.mxu0
      %v1854 = vadd.f32 0.0, %v1853
      %v1855 = vpop.f32.mrf.mxu0
      %v1856 = vadd.f32 0.0, %v1855
      %1857 = vdwg.mxu0
      %v1858 = vadd.f32 %v1596, %v1840
      %v1859 = vadd.f32 %v1597, %v1842
      %v1860 = vadd.f32 %v1598, %v1844
      %v1861 = vadd.f32 %v1599, %v1846
      %v1862 = vadd.f32 %v1600, %v1850
      %v1863 = vadd.f32 %v1601, %v1852
      %v1864 = vadd.f32 %v1602, %v1854
      %v1865 = vadd.f32 %v1603, %v1856
      %v1866 = vld [vmem:[%s2] sm:$0x3]
      %v1868 = vlaneseq
      %v1869 = vshrl.u32 %v1868, 7
      %v1870 = vsub.s32 0, %v1869
      %v1871 = vrot.slane %v1866, %v1870
      %v1872 = vlaneseq
      %v1873 = vshrl.u32 %v1872, 7
      %v1874 = vsub.s32 1, %v1873
      %v1875 = vrot.slane %v1866, %v1874
      %v1878 = vadd.f32 %v1858, %v1871
      %v1879 = vadd.f32 %v1859, %v1875
      %v1880 = vadd.f32 %v1860, %v1871
      %v1881 = vadd.f32 %v1861, %v1875
      %v1882 = vadd.f32 %v1862, %v1871
      %v1883 = vadd.f32 %v1863, %v1875
      %v1884 = vadd.f32 %v1864, %v1871
      %v1885 = vadd.f32 %v1865, %v1875
      %v1886 = vmax.f32 %v1878, 0.0
      %v1887 = vmax.f32 %v1879, 0.0
      %v1888 = vmax.f32 %v1880, 0.0
      %v1889 = vmax.f32 %v1881, 0.0
      %v1890 = vmax.f32 %v1882, 0.0
      %v1891 = vmax.f32 %v1883, 0.0
      %v1892 = vmax.f32 %v1884, 0.0
      %v1893 = vmax.f32 %v1885, 0.0
      %v1894 = vpack.c.bf16 %v1888, %v1886
      %v1895 = vpack.c.bf16 %v1889, %v1887
      %v1896 = vpack.c.bf16 %v1892, %v1890
      %v1897 = vpack.c.bf16 %v1893, %v1891
      %v1902 = vunpack.c.l.b16 %v1894
      %v1903 = vunpack.c.l.b16 %v1895
      %v1904 = vunpack.c.h.b16 %v1894
      %v1905 = vunpack.c.h.b16 %v1895
      %v1906 = vunpack.c.l.b16 %v1896
      %v1907 = vunpack.c.l.b16 %v1897
      %v1908 = vunpack.c.h.b16 %v1896
      %v1909 = vunpack.c.h.b16 %v1897
      %v1910 = vpack.c.b16 %v1903, %v1902
      %v1911 = vpack.c.b16 %v1905, %v1904
      %v1912 = vpack.c.b16 %v1907, %v1906
      %v1913 = vpack.c.b16 %v1909, %v1908
      %1918 = vst [vmem:[%s170] sm:$0xff] %v1910
      %1919 = vst [vmem:[%s170 + $0x8] sm:$0xff] %v1911
      %1920 = vst [vmem:[%s170 + $0x10] sm:$0xff] %v1912
      %1921 = vst [vmem:[%s170 + $0x18] sm:$0xff] %v1913
      %p1922 = scmp.lt.s32.totalorder %s14, 1
      %s1923 = scalar_select %p1922, %s14, 1
      %s1924 = smul.addr %s1923, 8
      %s1925 = smul.addr %s1924, 4
      %s1926 = scalar_lea.vmem %s3, %s1925
      // Predicated region
      $region33: #{_lambda_.6} parent=31 // pred_check
        %p1927 = pneg %p100
      $region34: #{_lambda_.6} parent=31 // pred_check_branch
        %1929 = sbr.rel (%p1927) target = $region36
      $region35: #{_lambda_.6} parent=31 // pred_region
        _
      $region36: #{_lambda_.6} parent=31 // pred_fallthru
        _
    $region32: #{_lambda_.6} parent=5 // pred_fallthru
      _
    %p1930 = scmp.le.s32.totalorder 2, %s9
    // Predicated region
    $region37: #{_lambda_.6} parent=5 // pred_check
      %p1931 = pneg %p1930
    $region38: #{_lambda_.6} parent=5 // pred_check_branch
      %1933 = sbr.rel (%p1931) target = $region40
    $region39: #{_lambda_.6} parent=5 // pred_region
      %s1934 = ssub.s32 %s9, 2
      // Predicated region
      $region41: #{_lambda_.6} parent=39 // pred_check
        %p1935 = pneg %p106
      $region42: #{_lambda_.6} parent=39 // pred_check_branch
        %1937 = sbr.rel (%p1935) target = $region44
      $region43: #{_lambda_.6} parent=39 // pred_region
        %p1938 = scmp.lt.s32.totalorder %s15, 1
        %s1939 = scalar_select %p1938, %s15, 1
        %s1940 = smul.addr %s1939, 8
        %s1941 = smul.addr %s1940, 4
        %s1942 = scalar_lea.vmem %s3, %s1941
      $region44: #{_lambda_.6} parent=39 // pred_fallthru
        _
    $region40: #{_lambda_.6} parent=5 // pred_fallthru
      _
  $region6: #{_lambda_.6} parent=0 // loop_footer
    %s13 = sadd.s32 1, %s9
  $region7: #{_lambda_.6} parent=0 // loop_footer_branch
    %8 = sbr.rel target = $region3
  $region8: #{_lambda_.6} parent=0 // loop_exit
    _

// kernel: _lambda_.7
$region0: #{_lambda_.7}
  #allocation0 [shape = 'u32[]', space=smem, size = 0x4, offset = 0x4, fixed_abs, tag = 'smem constant byte address 0x4 - core index']
  #allocation1 [shape = 'u32[144,128]{1,0:T(1,128)}', space=vmem, size = 0x12000, scoped, tag = 'internal scratch']
  #allocation2 [shape = 'bf16[18,128]{1,0:T(8,128)(2,1)}', space=vmem, size = 0x1800, scoped, tag = 'scratch operand']
  %s0 = inlined_call_operand.vmem [shape: bf16[2,16,128], index: 0, kind: input, shape index: {}]
  %s1 = inlined_call_operand.vmem [shape: bf16[3,128,128], index: 1, kind: input, shape index: {}]
  %s2 = inlined_call_operand.vmem [shape: f32[1,128], index: 2, kind: input, shape index: {}]
  %s3 = inlined_call_operand.vmem [shape: bf16[3,128,128], index: 3, kind: input, shape index: {}]
  %s4 = inlined_call_operand.vmem [shape: f32[1,128], index: 4, kind: input, shape index: {}]
  %s5 = inlined_call_operand.vmem [shape: bf16[3,128,128], index: 5, kind: input, shape index: {}]
  %s6 = inlined_call_operand.vmem [shape: f32[1,128], index: 6, kind: input, shape index: {}]
  %s7 = inlined_call_operand.vmem [shape: bf16[3,128,128], index: 7, kind: input, shape index: {}]
  %s8 = inlined_call_operand.vmem [shape: f32[1,128], index: 8, kind: input, shape index: {}]
  %s9 = inlined_call_operand.vmem [shape: bf16[2,16,128], index: 9, kind: output, shape index: {}]
  %s10 = sld [smem:[#allocation0]]
  $region69: #{_lambda_.7} parent=0
    _
  %s12 = ssub.s32 1, %s10
  %s13 = scalar_select 0, %s12, %s10
  loop: start=0, step=1, limit=4
  $region2: #{_lambda_.7} parent=0 // loop_pre_header
    _
  $region3: #{_lambda_.7} parent=0 // loop_header
    %s15 = sphi 0, %s19
    %p16 = scmp.ge.s32.totalorder %s15, 4
    %s25 = sphi 0, %s27
    %s28 = sphi 0, %s25
    %s29 = sphi 0, %s28
    %s45 = sphi 0, %s29
    %s49 = sphi 0, %s49
    %s51 = sphi 0, %s49
    %s52 = sphi 0, %s51
    %s66 = sphi 0, %s52
    %s70 = sphi 0, %s70
    %s72 = sphi 0, %s70
    %s73 = sphi 0, %s72
    %s87 = sphi 0, %s73
    %s91 = sphi 0, %s91
    %s93 = sphi 0, %s91
    %s94 = sphi 0, %s93
    %s108 = sphi 0, %s94
    %s112 = sphi 0, %s112
    %s114 = sphi 0, %s112
    %s115 = sphi 0, %s114
    %s129 = sphi 0, %s115
    %s133 = sphi 0, %s133
    %s135 = sphi 0, %s133
    %s136 = sphi 0, %s135
    %s150 = sphi 0, %s136
    %s154 = sphi 0, %s154
    %s156 = sphi 0, %s154
    %s157 = sphi 0, %s156
    %s171 = sphi 0, %s157
    %s175 = sphi 0, %s175
    %s177 = sphi 0, %s175
    %s178 = sphi 0, %s177
    %s192 = sphi 0, %s178
    %s196 = sphi 0, %s196
    %s198 = sphi 0, %s196
    %s199 = sphi 0, %s198
    %s213 = sphi 0, %s199
    %s219 = sphi 0, %s221
    %s222 = sphi 0, %s219
    %s223 = sphi 0, %s222
    %s239 = sphi 0, %s223
  $region4: #{_lambda_.7} parent=0 // loop_header_branch
    %18 = sbr.rel (%p16) target = $region8
  $region5: #{_lambda_.7} parent=0 // loop_body
    %s20 = ssub.s32 %s15, 1
    %s21 = ssub.s32 %s15, 2
    %s22 = sadd.s32 %s15, 1
    %s23 = ssub.s32 %s15, %s22
    %p24 = scmp.eq.s32.totalorder %s23, 0
    %s26 = sadd.s32 %s25, 1
    %s27 = scalar_select %p24, %s25, %s26
    %p30 = pneg %p24
    %p31 = scmp.eq.s32.totalorder %s15, 1
    %p32 = por %p30, %p31
    %p33 = scmp.ne.s32.totalorder %s25, %s28
    %p34 = scmp.eq.s32.totalorder %s15, 0
    %p35 = por %p33, %p34
    %p36 = scmp.ne.s32.totalorder %s25, %s28
    %p37 = scmp.eq.s32.totalorder %s20, 1
    %p38 = por %p36, %p37
    %p39 = scmp.ne.s32.totalorder %s28, %s29
    %p40 = scmp.eq.s32.totalorder %s20, 0
    %p41 = por %p39, %p40
    %p42 = scmp.ne.s32.totalorder %s28, %s29
    %p43 = scmp.eq.s32.totalorder %s21, 1
    %p44 = por %p42, %p43
    %p46 = scmp.ne.s32.totalorder %s29, %s45
    %p47 = scmp.eq.s32.totalorder %s21, 0
    %p48 = por %p46, %p47
    %s50 = sadd.s32 %s49, 1
    %p53 = scmp.eq.s32.totalorder %s15, 1
    %p54 = scmp.ne.s32.totalorder %s49, %s51
    %p55 = scmp.eq.s32.totalorder %s15, 0
    %p56 = por %p54, %p55
    %p57 = scmp.ne.s32.totalorder %s49, %s51
    %p58 = scmp.eq.s32.totalorder %s20, 1
    %p59 = por %p57, %p58
    %p60 = scmp.ne.s32.totalorder %s51, %s52
    %p61 = scmp.eq.s32.totalorder %s20, 0
    %p62 = por %p60, %p61
    %p63 = scmp.ne.s32.totalorder %s51, %s52
    %p64 = scmp.eq.s32.totalorder %s21, 1
    %p65 = por %p63, %p64
    %p67 = scmp.ne.s32.totalorder %s52, %s66
    %p68 = scmp.eq.s32.totalorder %s21, 0
    %p69 = por %p67, %p68
    %s71 = sadd.s32 %s70, 1
    %p74 = scmp.eq.s32.totalorder %s15, 1
    %p75 = scmp.ne.s32.totalorder %s70, %s72
    %p76 = scmp.eq.s32.totalorder %s15, 0
    %p77 = por %p75, %p76
    %p78 = scmp.ne.s32.totalorder %s70, %s72
    %p79 = scmp.eq.s32.totalorder %s20, 1
    %p80 = por %p78, %p79
    %p81 = scmp.ne.s32.totalorder %s72, %s73
    %p82 = scmp.eq.s32.totalorder %s20, 0
    %p83 = por %p81, %p82
    %p84 = scmp.ne.s32.totalorder %s72, %s73
    %p85 = scmp.eq.s32.totalorder %s21, 1
    %p86 = por %p84, %p85
    %p88 = scmp.ne.s32.totalorder %s73, %s87
    %p89 = scmp.eq.s32.totalorder %s21, 0
    %p90 = por %p88, %p89
    %s92 = sadd.s32 %s91, 1
    %p95 = scmp.eq.s32.totalorder %s15, 1
    %p96 = scmp.ne.s32.totalorder %s91, %s93
    %p97 = scmp.eq.s32.totalorder %s15, 0
    %p98 = por %p96, %p97
    %p99 = scmp.ne.s32.totalorder %s91, %s93
    %p100 = scmp.eq.s32.totalorder %s20, 1
    %p101 = por %p99, %p100
    %p102 = scmp.ne.s32.totalorder %s93, %s94
    %p103 = scmp.eq.s32.totalorder %s20, 0
    %p104 = por %p102, %p103
    %p105 = scmp.ne.s32.totalorder %s93, %s94
    %p106 = scmp.eq.s32.totalorder %s21, 1
    %p107 = por %p105, %p106
    %p109 = scmp.ne.s32.totalorder %s94, %s108
    %p110 = scmp.eq.s32.totalorder %s21, 0
    %p111 = por %p109, %p110
    %s113 = sadd.s32 %s112, 1
    %p116 = scmp.eq.s32.totalorder %s15, 1
    %p117 = scmp.ne.s32.totalorder %s112, %s114
    %p118 = scmp.eq.s32.totalorder %s15, 0
    %p119 = por %p117, %p118
    %p120 = scmp.ne.s32.totalorder %s112, %s114
    %p121 = scmp.eq.s32.totalorder %s20, 1
    %p122 = por %p120, %p121
    %p123 = scmp.ne.s32.totalorder %s114, %s115
    %p124 = scmp.eq.s32.totalorder %s20, 0
    %p125 = por %p123, %p124
    %p126 = scmp.ne.s32.totalorder %s114, %s115
    %p127 = scmp.eq.s32.totalorder %s21, 1
    %p128 = por %p126, %p127
    %p130 = scmp.ne.s32.totalorder %s115, %s129
    %p131 = scmp.eq.s32.totalorder %s21, 0
    %p132 = por %p130, %p131
    %s134 = sadd.s32 %s133, 1
    %p137 = scmp.eq.s32.totalorder %s15, 1
    %p138 = scmp.ne.s32.totalorder %s133, %s135
    %p139 = scmp.eq.s32.totalorder %s15, 0
    %p140 = por %p138, %p139
    %p141 = scmp.ne.s32.totalorder %s133, %s135
    %p142 = scmp.eq.s32.totalorder %s20, 1
    %p143 = por %p141, %p142
    %p144 = scmp.ne.s32.totalorder %s135, %s136
    %p145 = scmp.eq.s32.totalorder %s20, 0
    %p146 = por %p144, %p145
    %p147 = scmp.ne.s32.totalorder %s135, %s136
    %p148 = scmp.eq.s32.totalorder %s21, 1
    %p149 = por %p147, %p148
    %p151 = scmp.ne.s32.totalorder %s136, %s150
    %p152 = scmp.eq.s32.totalorder %s21, 0
    %p153 = por %p151, %p152
    %s155 = sadd.s32 %s154, 1
    %p158 = scmp.eq.s32.totalorder %s15, 1
    %p159 = scmp.ne.s32.totalorder %s154, %s156
    %p160 = scmp.eq.s32.totalorder %s15, 0
    %p161 = por %p159, %p160
    %p162 = scmp.ne.s32.totalorder %s154, %s156
    %p163 = scmp.eq.s32.totalorder %s20, 1
    %p164 = por %p162, %p163
    %p165 = scmp.ne.s32.totalorder %s156, %s157
    %p166 = scmp.eq.s32.totalorder %s20, 0
    %p167 = por %p165, %p166
    %p168 = scmp.ne.s32.totalorder %s156, %s157
    %p169 = scmp.eq.s32.totalorder %s21, 1
    %p170 = por %p168, %p169
    %p172 = scmp.ne.s32.totalorder %s157, %s171
    %p173 = scmp.eq.s32.totalorder %s21, 0
    %p174 = por %p172, %p173
    %s176 = sadd.s32 %s175, 1
    %p179 = scmp.eq.s32.totalorder %s15, 1
    %p180 = scmp.ne.s32.totalorder %s175, %s177
    %p181 = scmp.eq.s32.totalorder %s15, 0
    %p182 = por %p180, %p181
    %p183 = scmp.ne.s32.totalorder %s175, %s177
    %p184 = scmp.eq.s32.totalorder %s20, 1
    %p185 = por %p183, %p184
    %p186 = scmp.ne.s32.totalorder %s177, %s178
    %p187 = scmp.eq.s32.totalorder %s20, 0
    %p188 = por %p186, %p187
    %p189 = scmp.ne.s32.totalorder %s177, %s178
    %p190 = scmp.eq.s32.totalorder %s21, 1
    %p191 = por %p189, %p190
    %p193 = scmp.ne.s32.totalorder %s178, %s192
    %p194 = scmp.eq.s32.totalorder %s21, 0
    %p195 = por %p193, %p194
    %s197 = sadd.s32 %s196, 1
    %p200 = scmp.eq.s32.totalorder %s15, 1
    %p201 = scmp.ne.s32.totalorder %s196, %s198
    %p202 = scmp.eq.s32.totalorder %s15, 0
    %p203 = por %p201, %p202
    %p204 = scmp.ne.s32.totalorder %s196, %s198
    %p205 = scmp.eq.s32.totalorder %s20, 1
    %p206 = por %p204, %p205
    %p207 = scmp.ne.s32.totalorder %s198, %s199
    %p208 = scmp.eq.s32.totalorder %s20, 0
    %p209 = por %p207, %p208
    %p210 = scmp.ne.s32.totalorder %s198, %s199
    %p211 = scmp.eq.s32.totalorder %s21, 1
    %p212 = por %p210, %p211
    %p214 = scmp.ne.s32.totalorder %s199, %s213
    %p215 = scmp.eq.s32.totalorder %s21, 0
    %p216 = por %p214, %p215
    %s217 = ssub.s32 %s15, %s22
    %p218 = scmp.eq.s32.totalorder %s217, 0
    %s220 = sadd.s32 %s219, 1
    %s221 = scalar_select %p218, %s219, %s220
    %p224 = pneg %p218
    %p225 = scmp.eq.s32.totalorder %s15, 1
    %p226 = por %p224, %p225
    %p227 = scmp.ne.s32.totalorder %s219, %s222
    %p228 = scmp.eq.s32.totalorder %s15, 0
    %p229 = por %p227, %p228
    %p230 = scmp.ne.s32.totalorder %s219, %s222
    %p231 = scmp.eq.s32.totalorder %s20, 1
    %p232 = por %p230, %p231
    %p233 = scmp.ne.s32.totalorder %s222, %s223
    %p234 = scmp.eq.s32.totalorder %s20, 0
    %p235 = por %p233, %p234
    %p236 = scmp.ne.s32.totalorder %s222, %s223
    %p237 = scmp.eq.s32.totalorder %s21, 1
    %p238 = por %p236, %p237
    %p240 = scmp.ne.s32.totalorder %s223, %s239
    %p241 = scmp.eq.s32.totalorder %s21, 0
    %p242 = por %p240, %p241
    %p243 = scmp.le.s32.totalorder 1, %s15
    %p244 = scmp.lt.s32.totalorder %s15, 3
    %p245 = pnand %p243, %p244
    %p246 = pneg %p245
    // Predicated region
    $region9: #{_lambda_.7} parent=5 // pred_check
      _
    $region10: #{_lambda_.7} parent=5 // pred_check_branch
      %248 = sbr.rel (%p245) target = $region12
    $region11: #{_lambda_.7} parent=5 // pred_region
      %s249 = ssub.s32 %s15, 1
      // Predicated region
      $region13: #{_lambda_.7} parent=11 // pred_check
        %p250 = pneg %p62
      $region14: #{_lambda_.7} parent=11 // pred_check_branch
        %252 = sbr.rel (%p250) target = $region16
      $region15: #{_lambda_.7} parent=11 // pred_region
        _
      $region16: #{_lambda_.7} parent=11 // pred_fallthru
        _
      // Predicated region
      $region17: #{_lambda_.7} parent=11 // pred_check
        %p253 = pneg %p83
      $region18: #{_lambda_.7} parent=11 // pred_check_branch
        %255 = sbr.rel (%p253) target = $region20
      $region19: #{_lambda_.7} parent=11 // pred_region
        _
      $region20: #{_lambda_.7} parent=11 // pred_fallthru
        _
      // Predicated region
      $region21: #{_lambda_.7} parent=11 // pred_check
        %p256 = pneg %p104
      $region22: #{_lambda_.7} parent=11 // pred_check_branch
        %258 = sbr.rel (%p256) target = $region24
      $region23: #{_lambda_.7} parent=11 // pred_region
        _
      $region24: #{_lambda_.7} parent=11 // pred_fallthru
        _
      // Predicated region
      $region25: #{_lambda_.7} parent=11 // pred_check
        %p259 = pneg %p125
      $region26: #{_lambda_.7} parent=11 // pred_check_branch
        %261 = sbr.rel (%p259) target = $region28
      $region27: #{_lambda_.7} parent=11 // pred_region
        _
      $region28: #{_lambda_.7} parent=11 // pred_fallthru
        _
      // Predicated region
      $region29: #{_lambda_.7} parent=11 // pred_check
        %p262 = pneg %p146
      $region30: #{_lambda_.7} parent=11 // pred_check_branch
        %264 = sbr.rel (%p262) target = $region32
      $region31: #{_lambda_.7} parent=11 // pred_region
        _
      $region32: #{_lambda_.7} parent=11 // pred_fallthru
        _
      // Predicated region
      $region33: #{_lambda_.7} parent=11 // pred_check
        %p265 = pneg %p167
      $region34: #{_lambda_.7} parent=11 // pred_check_branch
        %267 = sbr.rel (%p265) target = $region36
      $region35: #{_lambda_.7} parent=11 // pred_region
        _
      $region36: #{_lambda_.7} parent=11 // pred_fallthru
        _
      // Predicated region
      $region37: #{_lambda_.7} parent=11 // pred_check
        %p268 = pneg %p188
      $region38: #{_lambda_.7} parent=11 // pred_check_branch
        %270 = sbr.rel (%p268) target = $region40
      $region39: #{_lambda_.7} parent=11 // pred_region
        _
      $region40: #{_lambda_.7} parent=11 // pred_fallthru
        _
      // Predicated region
      $region41: #{_lambda_.7} parent=11 // pred_check
        %p271 = pneg %p209
      $region42: #{_lambda_.7} parent=11 // pred_check_branch
        %273 = sbr.rel (%p271) target = $region44
      $region43: #{_lambda_.7} parent=11 // pred_region
        _
      $region44: #{_lambda_.7} parent=11 // pred_fallthru
        _
    $region12: #{_lambda_.7} parent=5 // pred_fallthru
      _
    %p274 = scmp.lt.s32.totalorder %s15, 2
    // Predicated region
    $region45: #{_lambda_.7} parent=5 // pred_check
      %p275 = pneg %p274
    $region46: #{_lambda_.7} parent=5 // pred_check_branch
      %277 = sbr.rel (%p275) target = $region48
    $region47: #{_lambda_.7} parent=5 // pred_region
      // Predicated region
      $region49: #{_lambda_.7} parent=47 // pred_check
        %p278 = pneg %p35
      $region50: #{_lambda_.7} parent=47 // pred_check_branch
        %280 = sbr.rel (%p278) target = $region52
      $region51: #{_lambda_.7} parent=47 // pred_region
        %p281 = scmp.lt.s32.totalorder %s15, 1
        %s282 = scalar_select %p281, %s15, 1
        %s283 = smul.addr %s282, 2
        %s284 = smul.addr %s283, 4
        %s285 = scalar_lea.vmem %s0, %s284
      $region52: #{_lambda_.7} parent=47 // pred_fallthru
        _
    $region48: #{_lambda_.7} parent=5 // pred_fallthru
      _
    %p286 = scmp.le.s32.totalorder 1, %s15
    %p287 = scmp.lt.s32.totalorder %s15, 3
    %p288 = pnand %p286, %p287
    %p289 = pneg %p288
    // Predicated region
    $region53: #{_lambda_.7} parent=5 // pred_check
      _
    $region54: #{_lambda_.7} parent=5 // pred_check_branch
      %291 = sbr.rel (%p288) target = $region56
    $region55: #{_lambda_.7} parent=5 // pred_region
      %s292 = ssub.s32 %s15, 1
      %p293 = scmp.lt.s32.totalorder %s20, 1
      %s294 = scalar_select %p293, %s20, 1
      %s295 = smul.addr %s294, 2
      %s296 = smul.addr %s295, 4
      %s297 = scalar_lea.vmem %s0, %s296
      %p298 = pneg %p41
      %p299 = pneg %p38
      %p300 = pneg %p62
      %p301 = pneg %p59
      %p302 = pneg %p83
      %p303 = pneg %p80
      %p304 = pneg %p104
      %p305 = pneg %p101
      %p306 = pneg %p125
      %p307 = pneg %p122
      %p308 = pneg %p146
      %p309 = pneg %p143
      %p310 = pneg %p167
      %p311 = pneg %p164
      %p312 = pneg %p188
      %p313 = pneg %p185
      %p314 = pneg %p209
      %p315 = pneg %p206
      %p316 = pneg %p235
      %p317 = pneg %p232
      %p318 = scmp.lt.s32.totalorder %s20, 1
      %s319 = scalar_select %p318, %s20, 1
      %s320 = smul.addr %s319, 2
      %s321 = smul.addr %s320, 4
      %s322 = scalar_lea.vmem %s9, %s321
      %p323 = scmp.lt.s32.totalorder %s20, 1
      %s324 = scalar_select %p323, %s20, 1
      %s325 = smul.addr %s324, 2
      %s326 = smul.addr %s325, 4
      %s327 = scalar_lea.vmem %s0, %s326
      %p328 = scmp.lt.s32.totalorder %s20, 1
      %s329 = scalar_select %p328, %s20, 1
      %s330 = smul.addr %s329, 2
      %s331 = smul.addr %s330, 4
      %s332 = scalar_lea.vmem %s9, %s331
      %vm334 = vcmask 1040384
      %vm335 = vsmask.f32 256
      %vm336 = vmand %vm334, %vm335
      %v337 = vld [vmem:[#allocation2] sm:$0x1]
      %v338 = vsel %vm336, 0, %v337
      %339 = vst [vmem:[#allocation2] sm:$0x1] %v338
      %vm340 = vsmask.f32 7938
      %vm341 = vmand %vm334, %vm340
      %v342 = vld [vmem:[#allocation2 + $0x8] sm:$0x1]
      %v343 = vsel %vm341, 0, %v342
      %344 = vst [vmem:[#allocation2 + $0x8] sm:$0x1] %v343
      %v345 = vld [vmem:[%s327] sm:$0xf]
      %v346 = vld [vmem:[%s327 + $0x4] sm:$0xf]
      %vm347 = vsmask.f32 4368
      %vm348 = vmor %vm335, %vm347
      %v350 = vshrl.u32 %v345, 16
      %v352 = vrot.slane %v350, 7
      %v353 = vshll.u32 %v345, 16
      %v355 = vor.u32 %v352, %v353
      %v356 = vrot.slane %v352, 4
      %v358 = vshrl.u32 %v346, 16
      %v360 = vrot.slane %v358, 7
      %v361 = vshll.u32 %v346, 16
      %v363 = vor.u32 %v360, %v361
      %v364 = vsel %vm348, %v356, %v363
      %v365 = vrot.slane %v360, 4
      %vm369 = vcmask 1043456
      %vm370 = vmand %vm369, %vm340
      %v371 = vld [vmem:[#allocation2] sm:$0xf]
      %v372 = vsel %vm370, %v355, %v371
      %373 = vst [vmem:[#allocation2] sm:$0xf] %v372
      %374 = vst [vmem:[#allocation2 + $0x4] sm:$0xf] %v364
      %v375 = vld [vmem:[#allocation2 + $0x8] sm:$0x1]
      %v376 = vsel %vm336, %v365, %v375
      %377 = vst [vmem:[#allocation2 + $0x8] sm:$0x1] %v376
      %v378 = vld [vmem:[#allocation2] sm:$0xf]
      %v379 = vld [vmem:[#allocation2 + $0x4] sm:$0xf]
      %v380 = vld [vmem:[#allocation2 + $0x8] sm:$0x1]
      %v381 = vld [vmem:[#allocation2] sm:$0xe]
      %v382 = vld [vmem:[%s1] sm:$0xf]
      %v383 = vld [vmem:[%s1 + $0x4] sm:$0xf]
      %v384 = vld [vmem:[%s1 + $0x8] sm:$0xf]
      %v385 = vld [vmem:[%s1 + $0xc] sm:$0xf]
      %v386 = vld [vmem:[%s1 + $0x10] sm:$0xf]
      %v387 = vld [vmem:[%s1 + $0x14] sm:$0xf]
      %v388 = vld [vmem:[%s1 + $0x18] sm:$0xf]
      %v389 = vld [vmem:[%s1 + $0x1c] sm:$0xf]
      %v390 = vld [vmem:[%s1 + $0x20] sm:$0xf]
      %v391 = vld [vmem:[%s1 + $0x24] sm:$0xf]
      %v392 = vld [vmem:[%s1 + $0x28] sm:$0xf]
      %v393 = vld [vmem:[%s1 + $0x2c] sm:$0xf]
      %v394 = vld [vmem:[%s1 + $0x30] sm:$0xf]
      %v395 = vld [vmem:[%s1 + $0x34] sm:$0xf]
      %v396 = vld [vmem:[%s1 + $0x38] sm:$0xf]
      %v397 = vld [vmem:[%s1 + $0x3c] sm:$0xf]
      %s398 = scalar_lea.vmem %s1, 64
      %v399 = vld [vmem:[%s398] sm:$0xf]
      %v400 = vld [vmem:[%s398 + $0x4] sm:$0xf]
      %v401 = vld [vmem:[%s398 + $0x8] sm:$0xf]
      %v402 = vld [vmem:[%s398 + $0xc] sm:$0xf]
      %v403 = vld [vmem:[%s398 + $0x10] sm:$0xf]
      %v404 = vld [vmem:[%s398 + $0x14] sm:$0xf]
      %v405 = vld [vmem:[%s398 + $0x18] sm:$0xf]
      %v406 = vld [vmem:[%s398 + $0x1c] sm:$0xf]
      %v407 = vld [vmem:[%s398 + $0x20] sm:$0xf]
      %v408 = vld [vmem:[%s398 + $0x24] sm:$0xf]
      %v409 = vld [vmem:[%s398 + $0x28] sm:$0xf]
      %v410 = vld [vmem:[%s398 + $0x2c] sm:$0xf]
      %v411 = vld [vmem:[%s398 + $0x30] sm:$0xf]
      %v412 = vld [vmem:[%s398 + $0x34] sm:$0xf]
      %v413 = vld [vmem:[%s398 + $0x38] sm:$0xf]
      %v414 = vld [vmem:[%s398 + $0x3c] sm:$0xf]
      %v418 = vunpack.c.l.b16 %v378
      %v419 = vunpack.c.l.b16 %v379
      %v420 = vunpack.c.l.b16 %v380
      %v421 = vpack.c.b16 %v419, %v418
      %v422 = vpack.c.b16 %v420, %v420
      %vm423 = vsmask.f32 7424
      %v425 = vshrl.u32 %v421, 16
      %v427 = vshll.u32 %v421, 16
      %v429 = vrot.slane %v427, 1
      %v430 = vor.u32 %v425, %v429
      %v432 = vshll.u32 %v422, 16
      %v434 = vrot.slane %v432, 1
      %v435 = vsel %vm423, %v430, %v434
      %v453 = vunpack.c.l.b16 %v399
      %v454 = vunpack.c.l.b16 %v400
      %v455 = vunpack.c.l.b16 %v401
      %v456 = vunpack.c.l.b16 %v402
      %v457 = vunpack.c.l.b16 %v403
      %v458 = vunpack.c.l.b16 %v404
      %v459 = vunpack.c.l.b16 %v405
      %v460 = vunpack.c.l.b16 %v406
      %v461 = vunpack.c.l.b16 %v407
      %v462 = vunpack.c.l.b16 %v408
      %v463 = vunpack.c.l.b16 %v409
      %v464 = vunpack.c.l.b16 %v410
      %v465 = vunpack.c.l.b16 %v411
      %v466 = vunpack.c.l.b16 %v412
      %v467 = vunpack.c.l.b16 %v413
      %v468 = vunpack.c.l.b16 %v414
      %v469 = vpack.c.b16 %v454, %v453
      %v470 = vpack.c.b16 %v456, %v455
      %v471 = vpack.c.b16 %v458, %v457
      %v472 = vpack.c.b16 %v460, %v459
      %v473 = vpack.c.b16 %v462, %v461
      %v474 = vpack.c.b16 %v464, %v463
      %v475 = vpack.c.b16 %v466, %v465
      %v476 = vpack.c.b16 %v468, %v467
      %485 = vmatprep.subr.bf16.mxu0 0
      %486 = vmatpush1.bf16.msra.mxu0 %v476
      %487 = vmatprep.subr.bf16.mxu0 0
      %488 = vmatpush1.bf16.msra.mxu0 %v475
      %489 = vmatprep.subr.bf16.mxu0 0
      %490 = vmatpush1.bf16.msra.mxu0 %v474
      %491 = vmatprep.subr.bf16.mxu0 0
      %492 = vmatpush1.bf16.msra.mxu0 %v473
      %493 = vmatprep.subr.bf16.mxu0 0
      %494 = vmatpush1.bf16.msra.mxu0 %v472
      %495 = vmatprep.subr.bf16.mxu0 0
      %496 = vmatpush1.bf16.msra.mxu0 %v471
      %497 = vmatprep.subr.bf16.mxu0 0
      %498 = vmatpush1.bf16.msra.mxu0 %v470
      %499 = vmatprep.subr.bf16.mxu0 0
      %500 = vmatpush1.bf16.msra.mxu0 %v469
      %501 = vmatprep.subr.bf16.mxu0 0
      %502 = vmatpush2.bf16.msra.mxu0 0
      %503 = vmatprep.subr.bf16.mxu0 0
      %504 = vmatpush2.bf16.msra.mxu0 0
      %505 = vmatprep.subr.bf16.mxu0 0
      %506 = vmatpush2.bf16.msra.mxu0 0
      %507 = vmatprep.subr.bf16.mxu0 0
      %508 = vmatpush2.bf16.msra.mxu0 0
      %509 = vmatprep.subr.bf16.mxu0 0
      %510 = vmatpush2.bf16.msra.mxu0 0
      %511 = vmatprep.subr.bf16.mxu0 0
      %512 = vmatpush2.bf16.msra.mxu0 0
      %513 = vmatprep.subr.bf16.mxu0 0
      %514 = vmatpush2.bf16.msra.mxu0 0
      %515 = vmatprep.subr.bf16.mxu0 0
      %516 = vmatpush2.bf16.msra.mxu0 0
      %517 = vmatprep.mubr.bf16.mxu0 0
      %518 = vmatmul.mubr.bf16.gmra.mxu0 %v435
      %v519 = vpop.f32.mrf.mxu0
      %v520 = vadd.f32 0.0, %v519
      %v521 = vpop.f32.mrf.mxu0
      %v522 = vpop.f32.mrf.mxu0
      %v523 = vadd.f32 0.0, %v522
      %v524 = vpop.f32.mrf.mxu0
      %525 = vdwg.mxu0
      %v543 = vunpack.c.l.b16 %v382
      %v544 = vunpack.c.l.b16 %v383
      %v545 = vunpack.c.l.b16 %v384
      %v546 = vunpack.c.l.b16 %v385
      %v547 = vunpack.c.l.b16 %v386
      %v548 = vunpack.c.l.b16 %v387
      %v549 = vunpack.c.l.b16 %v388
      %v550 = vunpack.c.l.b16 %v389
      %v551 = vunpack.c.l.b16 %v390
      %v552 = vunpack.c.l.b16 %v391
      %v553 = vunpack.c.l.b16 %v392
      %v554 = vunpack.c.l.b16 %v393
      %v555 = vunpack.c.l.b16 %v394
      %v556 = vunpack.c.l.b16 %v395
      %v557 = vunpack.c.l.b16 %v396
      %v558 = vunpack.c.l.b16 %v397
      %v559 = vpack.c.b16 %v544, %v543
      %v560 = vpack.c.b16 %v546, %v545
      %v561 = vpack.c.b16 %v548, %v547
      %v562 = vpack.c.b16 %v550, %v549
      %v563 = vpack.c.b16 %v552, %v551
      %v564 = vpack.c.b16 %v554, %v553
      %v565 = vpack.c.b16 %v556, %v555
      %v566 = vpack.c.b16 %v558, %v557
      %575 = vmatprep.subr.bf16.mxu0 0
      %576 = vmatpush1.bf16.msra.mxu0 %v566
      %577 = vmatprep.subr.bf16.mxu0 0
      %578 = vmatpush1.bf16.msra.mxu0 %v565
      %579 = vmatprep.subr.bf16.mxu0 0
      %580 = vmatpush1.bf16.msra.mxu0 %v564
      %581 = vmatprep.subr.bf16.mxu0 0
      %582 = vmatpush1.bf16.msra.mxu0 %v563
      %583 = vmatprep.subr.bf16.mxu0 0
      %584 = vmatpush1.bf16.msra.mxu0 %v562
      %585 = vmatprep.subr.bf16.mxu0 0
      %586 = vmatpush1.bf16.msra.mxu0 %v561
      %587 = vmatprep.subr.bf16.mxu0 0
      %588 = vmatpush1.bf16.msra.mxu0 %v560
      %589 = vmatprep.subr.bf16.mxu0 0
      %590 = vmatpush1.bf16.msra.mxu0 %v559
      %591 = vmatprep.subr.bf16.mxu0 0
      %592 = vmatpush2.bf16.msra.mxu0 0
      %593 = vmatprep.subr.bf16.mxu0 0
      %594 = vmatpush2.bf16.msra.mxu0 0
      %595 = vmatprep.subr.bf16.mxu0 0
      %596 = vmatpush2.bf16.msra.mxu0 0
      %597 = vmatprep.subr.bf16.mxu0 0
      %598 = vmatpush2.bf16.msra.mxu0 0
      %599 = vmatprep.subr.bf16.mxu0 0
      %600 = vmatpush2.bf16.msra.mxu0 0
      %601 = vmatprep.subr.bf16.mxu0 0
      %602 = vmatpush2.bf16.msra.mxu0 0
      %603 = vmatprep.subr.bf16.mxu0 0
      %604 = vmatpush2.bf16.msra.mxu0 0
      %605 = vmatprep.subr.bf16.mxu0 0
      %606 = vmatpush2.bf16.msra.mxu0 0
      %607 = vmatprep.mubr.bf16.mxu0 0
      %608 = vmatmul.mubr.bf16.gmra.mxu0 %v421
      %v609 = vpop.f32.mrf.mxu0
      %v610 = vadd.f32 %v520, %v609
      %v611 = vpop.f32.mrf.mxu0
      %v612 = vpop.f32.mrf.mxu0
      %v613 = vadd.f32 %v523, %v612
      %v614 = vpop.f32.mrf.mxu0
      %615 = vdwg.mxu0
      %s616 = scalar_lea.vmem %s1, 128
      %v617 = vld [vmem:[%s616] sm:$0xf]
      %v618 = vld [vmem:[%s616 + $0x4] sm:$0xf]
      %v619 = vld [vmem:[%s616 + $0x8] sm:$0xf]
      %v620 = vld [vmem:[%s616 + $0xc] sm:$0xf]
      %v621 = vld [vmem:[%s616 + $0x10] sm:$0xf]
      %v622 = vld [vmem:[%s616 + $0x14] sm:$0xf]
      %v623 = vld [vmem:[%s616 + $0x18] sm:$0xf]
      %v624 = vld [vmem:[%s616 + $0x1c] sm:$0xf]
      %v625 = vld [vmem:[%s616 + $0x20] sm:$0xf]
      %v626 = vld [vmem:[%s616 + $0x24] sm:$0xf]
      %v627 = vld [vmem:[%s616 + $0x28] sm:$0xf]
      %v628 = vld [vmem:[%s616 + $0x2c] sm:$0xf]
      %v629 = vld [vmem:[%s616 + $0x30] sm:$0xf]
      %v630 = vld [vmem:[%s616 + $0x34] sm:$0xf]
      %v631 = vld [vmem:[%s616 + $0x38] sm:$0xf]
      %v632 = vld [vmem:[%s616 + $0x3c] sm:$0xf]
      %v634 = vunpack.c.l.b16 %v381
      %v635 = vpack.c.b16 %v419, %v634
      %vm636 = vcmask 1046528
      %v637 = vrot.slane %v635, 1
      %v638 = vrot.slane %v422, 1
      %v639 = vsel %vm636, %v637, %v638
      %v657 = vunpack.c.l.b16 %v617
      %v658 = vunpack.c.l.b16 %v618
      %v659 = vunpack.c.l.b16 %v619
      %v660 = vunpack.c.l.b16 %v620
      %v661 = vunpack.c.l.b16 %v621
      %v662 = vunpack.c.l.b16 %v622
      %v663 = vunpack.c.l.b16 %v623
      %v664 = vunpack.c.l.b16 %v624
      %v665 = vunpack.c.l.b16 %v625
      %v666 = vunpack.c.l.b16 %v626
      %v667 = vunpack.c.l.b16 %v627
      %v668 = vunpack.c.l.b16 %v628
      %v669 = vunpack.c.l.b16 %v629
      %v670 = vunpack.c.l.b16 %v630
      %v671 = vunpack.c.l.b16 %v631
      %v672 = vunpack.c.l.b16 %v632
      %v673 = vpack.c.b16 %v658, %v657
      %v674 = vpack.c.b16 %v660, %v659
      %v675 = vpack.c.b16 %v662, %v661
      %v676 = vpack.c.b16 %v664, %v663
      %v677 = vpack.c.b16 %v666, %v665
      %v678 = vpack.c.b16 %v668, %v667
      %v679 = vpack.c.b16 %v670, %v669
      %v680 = vpack.c.b16 %v672, %v671
      %689 = vmatprep.subr.bf16.mxu0 0
      %690 = vmatpush1.bf16.msra.mxu0 %v680
      %691 = vmatprep.subr.bf16.mxu0 0
      %692 = vmatpush1.bf16.msra.mxu0 %v679
      %693 = vmatprep.subr.bf16.mxu0 0
      %694 = vmatpush1.bf16.msra.mxu0 %v678
      %695 = vmatprep.subr.bf16.mxu0 0
      %696 = vmatpush1.bf16.msra.mxu0 %v677
      %697 = vmatprep.subr.bf16.mxu0 0
      %698 = vmatpush1.bf16.msra.mxu0 %v676
      %699 = vmatprep.subr.bf16.mxu0 0
      %700 = vmatpush1.bf16.msra.mxu0 %v675
      %701 = vmatprep.subr.bf16.mxu0 0
      %702 = vmatpush1.bf16.msra.mxu0 %v674
      %703 = vmatprep.subr.bf16.mxu0 0
      %704 = vmatpush1.bf16.msra.mxu0 %v673
      %705 = vmatprep.subr.bf16.mxu0 0
      %706 = vmatpush2.bf16.msra.mxu0 0
      %707 = vmatprep.subr.bf16.mxu0 0
      %708 = vmatpush2.bf16.msra.mxu0 0
      %709 = vmatprep.subr.bf16.mxu0 0
      %710 = vmatpush2.bf16.msra.mxu0 0
      %711 = vmatprep.subr.bf16.mxu0 0
      %712 = vmatpush2.bf16.msra.mxu0 0
      %713 = vmatprep.subr.bf16.mxu0 0
      %714 = vmatpush2.bf16.msra.mxu0 0
      %715 = vmatprep.subr.bf16.mxu0 0
      %716 = vmatpush2.bf16.msra.mxu0 0
      %717 = vmatprep.subr.bf16.mxu0 0
      %718 = vmatpush2.bf16.msra.mxu0 0
      %719 = vmatprep.subr.bf16.mxu0 0
      %720 = vmatpush2.bf16.msra.mxu0 0
      %721 = vmatprep.mubr.bf16.mxu0 0
      %722 = vmatmul.mubr.bf16.gmra.mxu0 %v639
      %v723 = vpop.f32.mrf.mxu0
      %v724 = vadd.f32 0.0, %v723
      %v725 = vpop.f32.mrf.mxu0
      %v726 = vpop.f32.mrf.mxu0
      %v727 = vadd.f32 0.0, %v726
      %v728 = vpop.f32.mrf.mxu0
      %729 = vdwg.mxu0
      %v730 = vadd.f32 %v610, %v724
      %v731 = vadd.f32 %v613, %v727
      %v732 = vld [vmem:[%s2] sm:$0x1]
      %v734 = vlaneseq
      %v735 = vshrl.u32 %v734, 7
      %v736 = vsub.s32 0, %v735
      %v737 = vrot.slane %v732, %v736
      %v739 = vadd.f32 %v730, %v737
      %v740 = vadd.f32 %v731, %v737
      %v741 = vmax.f32 %v739, 0.0
      %v742 = vmax.f32 %v740, 0.0
      %v743 = vpack.c.bf16 %v742, %v741
      %v745 = vunpack.c.l.b16 %v743
      %v746 = vunpack.c.h.b16 %v743
      %v747 = vpack.c.b16 %v745, %v745
      %v748 = vpack.c.b16 %v746, %v746
      %v750 = vshrl.u32 %v747, 16
      %v752 = vrot.slane %v750, 7
      %v753 = vshll.u32 %v747, 16
      %v755 = vor.u32 %v752, %v753
      %v756 = vrot.slane %v752, 4
      %v758 = vshrl.u32 %v748, 16
      %v760 = vrot.slane %v758, 7
      %v761 = vshll.u32 %v748, 16
      %v763 = vor.u32 %v760, %v761
      %v764 = vsel %vm348, %v756, %v763
      %v765 = vrot.slane %v760, 4
      %v769 = vsel %vm370, %v755, %v378
      %770 = vst [vmem:[#allocation2] sm:$0xf] %v769
      %771 = vst [vmem:[#allocation2 + $0x4] sm:$0xf] %v764
      %v772 = vld [vmem:[#allocation2 + $0x8] sm:$0x1]
      %v773 = vsel %vm336, %v765, %v772
      %774 = vst [vmem:[#allocation2 + $0x8] sm:$0x1] %v773
      %v775 = vld [vmem:[#allocation2] sm:$0xf]
      %v776 = vld [vmem:[#allocation2 + $0x4] sm:$0xf]
      %v777 = vld [vmem:[#allocation2 + $0x8] sm:$0x1]
      %v778 = vld [vmem:[#allocation2] sm:$0xe]
      %v779 = vld [vmem:[%s3] sm:$0xf]
      %v780 = vld [vmem:[%s3 + $0x4] sm:$0xf]
      %v781 = vld [vmem:[%s3 + $0x8] sm:$0xf]
      %v782 = vld [vmem:[%s3 + $0xc] sm:$0xf]
      %v783 = vld [vmem:[%s3 + $0x10] sm:$0xf]
      %v784 = vld [vmem:[%s3 + $0x14] sm:$0xf]
      %v785 = vld [vmem:[%s3 + $0x18] sm:$0xf]
      %v786 = vld [vmem:[%s3 + $0x1c] sm:$0xf]
      %v787 = vld [vmem:[%s3 + $0x20] sm:$0xf]
      %v788 = vld [vmem:[%s3 + $0x24] sm:$0xf]
      %v789 = vld [vmem:[%s3 + $0x28] sm:$0xf]
      %v790 = vld [vmem:[%s3 + $0x2c] sm:$0xf]
      %v791 = vld [vmem:[%s3 + $0x30] sm:$0xf]
      %v792 = vld [vmem:[%s3 + $0x34] sm:$0xf]
      %v793 = vld [vmem:[%s3 + $0x38] sm:$0xf]
      %v794 = vld [vmem:[%s3 + $0x3c] sm:$0xf]
      %s795 = scalar_lea.vmem %s3, 64
      %v796 = vld [vmem:[%s795] sm:$0xf]
      %v797 = vld [vmem:[%s795 + $0x4] sm:$0xf]
      %v798 = vld [vmem:[%s795 + $0x8] sm:$0xf]
      %v799 = vld [vmem:[%s795 + $0xc] sm:$0xf]
      %v800 = vld [vmem:[%s795 + $0x10] sm:$0xf]
      %v801 = vld [vmem:[%s795 + $0x14] sm:$0xf]
      %v802 = vld [vmem:[%s795 + $0x18] sm:$0xf]
      %v803 = vld [vmem:[%s795 + $0x1c] sm:$0xf]
      %v804 = vld [vmem:[%s795 + $0x20] sm:$0xf]
      %v805 = vld [vmem:[%s795 + $0x24] sm:$0xf]
      %v806 = vld [vmem:[%s795 + $0x28] sm:$0xf]
      %v807 = vld [vmem:[%s795 + $0x2c] sm:$0xf]
      %v808 = vld [vmem:[%s795 + $0x30] sm:$0xf]
      %v809 = vld [vmem:[%s795 + $0x34] sm:$0xf]
      %v810 = vld [vmem:[%s795 + $0x38] sm:$0xf]
      %v811 = vld [vmem:[%s795 + $0x3c] sm:$0xf]
      %v815 = vunpack.c.l.b16 %v775
      %v816 = vunpack.c.l.b16 %v776
      %v817 = vunpack.c.l.b16 %v777
      %v818 = vpack.c.b16 %v816, %v815
      %v819 = vpack.c.b16 %v817, %v817
      %v821 = vshrl.u32 %v818, 16
      %v823 = vshll.u32 %v818, 16
      %v825 = vrot.slane %v823, 1
      %v826 = vor.u32 %v821, %v825
      %v828 = vshll.u32 %v819, 16
      %v830 = vrot.slane %v828, 1
      %v831 = vsel %vm423, %v826, %v830
      %v849 = vunpack.c.l.b16 %v796
      %v850 = vunpack.c.l.b16 %v797
      %v851 = vunpack.c.l.b16 %v798
      %v852 = vunpack.c.l.b16 %v799
      %v853 = vunpack.c.l.b16 %v800
      %v854 = vunpack.c.l.b16 %v801
      %v855 = vunpack.c.l.b16 %v802
      %v856 = vunpack.c.l.b16 %v803
      %v857 = vunpack.c.l.b16 %v804
      %v858 = vunpack.c.l.b16 %v805
      %v859 = vunpack.c.l.b16 %v806
      %v860 = vunpack.c.l.b16 %v807
      %v861 = vunpack.c.l.b16 %v808
      %v862 = vunpack.c.l.b16 %v809
      %v863 = vunpack.c.l.b16 %v810
      %v864 = vunpack.c.l.b16 %v811
      %v865 = vpack.c.b16 %v850, %v849
      %v866 = vpack.c.b16 %v852, %v851
      %v867 = vpack.c.b16 %v854, %v853
      %v868 = vpack.c.b16 %v856, %v855
      %v869 = vpack.c.b16 %v858, %v857
      %v870 = vpack.c.b16 %v860, %v859
      %v871 = vpack.c.b16 %v862, %v861
      %v872 = vpack.c.b16 %v864, %v863
      %881 = vmatprep.subr.bf16.mxu0 0
      %882 = vmatpush1.bf16.msra.mxu0 %v872
      %883 = vmatprep.subr.bf16.mxu0 0
      %884 = vmatpush1.bf16.msra.mxu0 %v871
      %885 = vmatprep.subr.bf16.mxu0 0
      %886 = vmatpush1.bf16.msra.mxu0 %v870
      %887 = vmatprep.subr.bf16.mxu0 0
      %888 = vmatpush1.bf16.msra.mxu0 %v869
      %889 = vmatprep.subr.bf16.mxu0 0
      %890 = vmatpush1.bf16.msra.mxu0 %v868
      %891 = vmatprep.subr.bf16.mxu0 0
      %892 = vmatpush1.bf16.msra.mxu0 %v867
      %893 = vmatprep.subr.bf16.mxu0 0
      %894 = vmatpush1.bf16.msra.mxu0 %v866
      %895 = vmatprep.subr.bf16.mxu0 0
      %896 = vmatpush1.bf16.msra.mxu0 %v865
      %897 = vmatprep.subr.bf16.mxu0 0
      %898 = vmatpush2.bf16.msra.mxu0 0
      %899 = vmatprep.subr.bf16.mxu0 0
      %900 = vmatpush2.bf16.msra.mxu0 0
      %901 = vmatprep.subr.bf16.mxu0 0
      %902 = vmatpush2.bf16.msra.mxu0 0
      %903 = vmatprep.subr.bf16.mxu0 0
      %904 = vmatpush2.bf16.msra.mxu0 0
      %905 = vmatprep.subr.bf16.mxu0 0
      %906 = vmatpush2.bf16.msra.mxu0 0
      %907 = vmatprep.subr.bf16.mxu0 0
      %908 = vmatpush2.bf16.msra.mxu0 0
      %909 = vmatprep.subr.bf16.mxu0 0
      %910 = vmatpush2.bf16.msra.mxu0 0
      %911 = vmatprep.subr.bf16.mxu0 0
      %912 = vmatpush2.bf16.msra.mxu0 0
      %913 = vmatprep.mubr.bf16.mxu0 0
      %914 = vmatmul.mubr.bf16.gmra.mxu0 %v831
      %v915 = vpop.f32.mrf.mxu0
      %v916 = vadd.f32 0.0, %v915
      %v917 = vpop.f32.mrf.mxu0
      %v918 = vpop.f32.mrf.mxu0
      %v919 = vadd.f32 0.0, %v918
      %v920 = vpop.f32.mrf.mxu0
      %921 = vdwg.mxu0
      %v939 = vunpack.c.l.b16 %v779
      %v940 = vunpack.c.l.b16 %v780
      %v941 = vunpack.c.l.b16 %v781
      %v942 = vunpack.c.l.b16 %v782
      %v943 = vunpack.c.l.b16 %v783
      %v944 = vunpack.c.l.b16 %v784
      %v945 = vunpack.c.l.b16 %v785
      %v946 = vunpack.c.l.b16 %v786
      %v947 = vunpack.c.l.b16 %v787
      %v948 = vunpack.c.l.b16 %v788
      %v949 = vunpack.c.l.b16 %v789
      %v950 = vunpack.c.l.b16 %v790
      %v951 = vunpack.c.l.b16 %v791
      %v952 = vunpack.c.l.b16 %v792
      %v953 = vunpack.c.l.b16 %v793
      %v954 = vunpack.c.l.b16 %v794
      %v955 = vpack.c.b16 %v940, %v939
      %v956 = vpack.c.b16 %v942, %v941
      %v957 = vpack.c.b16 %v944, %v943
      %v958 = vpack.c.b16 %v946, %v945
      %v959 = vpack.c.b16 %v948, %v947
      %v960 = vpack.c.b16 %v950, %v949
      %v961 = vpack.c.b16 %v952, %v951
      %v962 = vpack.c.b16 %v954, %v953
      %971 = vmatprep.subr.bf16.mxu0 0
      %972 = vmatpush1.bf16.msra.mxu0 %v962
      %973 = vmatprep.subr.bf16.mxu0 0
      %974 = vmatpush1.bf16.msra.mxu0 %v961
      %975 = vmatprep.subr.bf16.mxu0 0
      %976 = vmatpush1.bf16.msra.mxu0 %v960
      %977 = vmatprep.subr.bf16.mxu0 0
      %978 = vmatpush1.bf16.msra.mxu0 %v959
      %979 = vmatprep.subr.bf16.mxu0 0
      %980 = vmatpush1.bf16.msra.mxu0 %v958
      %981 = vmatprep.subr.bf16.mxu0 0
      %982 = vmatpush1.bf16.msra.mxu0 %v957
      %983 = vmatprep.subr.bf16.mxu0 0
      %984 = vmatpush1.bf16.msra.mxu0 %v956
      %985 = vmatprep.subr.bf16.mxu0 0
      %986 = vmatpush1.bf16.msra.mxu0 %v955
      %987 = vmatprep.subr.bf16.mxu0 0
      %988 = vmatpush2.bf16.msra.mxu0 0
      %989 = vmatprep.subr.bf16.mxu0 0
      %990 = vmatpush2.bf16.msra.mxu0 0
      %991 = vmatprep.subr.bf16.mxu0 0
      %992 = vmatpush2.bf16.msra.mxu0 0
      %993 = vmatprep.subr.bf16.mxu0 0
      %994 = vmatpush2.bf16.msra.mxu0 0
      %995 = vmatprep.subr.bf16.mxu0 0
      %996 = vmatpush2.bf16.msra.mxu0 0
      %997 = vmatprep.subr.bf16.mxu0 0
      %998 = vmatpush2.bf16.msra.mxu0 0
      %999 = vmatprep.subr.bf16.mxu0 0
      %1000 = vmatpush2.bf16.msra.mxu0 0
      %1001 = vmatprep.subr.bf16.mxu0 0
      %1002 = vmatpush2.bf16.msra.mxu0 0
      %1003 = vmatprep.mubr.bf16.mxu0 0
      %1004 = vmatmul.mubr.bf16.gmra.mxu0 %v818
      %v1005 = vpop.f32.mrf.mxu0
      %v1006 = vadd.f32 %v916, %v1005
      %v1007 = vpop.f32.mrf.mxu0
      %v1008 = vpop.f32.mrf.mxu0
      %v1009 = vadd.f32 %v919, %v1008
      %v1010 = vpop.f32.mrf.mxu0
      %1011 = vdwg.mxu0
      %s1012 = scalar_lea.vmem %s3, 128
      %v1013 = vld [vmem:[%s1012] sm:$0xf]
      %v1014 = vld [vmem:[%s1012 + $0x4] sm:$0xf]
      %v1015 = vld [vmem:[%s1012 + $0x8] sm:$0xf]
      %v1016 = vld [vmem:[%s1012 + $0xc] sm:$0xf]
      %v1017 = vld [vmem:[%s1012 + $0x10] sm:$0xf]
      %v1018 = vld [vmem:[%s1012 + $0x14] sm:$0xf]
      %v1019 = vld [vmem:[%s1012 + $0x18] sm:$0xf]
      %v1020 = vld [vmem:[%s1012 + $0x1c] sm:$0xf]
      %v1021 = vld [vmem:[%s1012 + $0x20] sm:$0xf]
      %v1022 = vld [vmem:[%s1012 + $0x24] sm:$0xf]
      %v1023 = vld [vmem:[%s1012 + $0x28] sm:$0xf]
      %v1024 = vld [vmem:[%s1012 + $0x2c] sm:$0xf]
      %v1025 = vld [vmem:[%s1012 + $0x30] sm:$0xf]
      %v1026 = vld [vmem:[%s1012 + $0x34] sm:$0xf]
      %v1027 = vld [vmem:[%s1012 + $0x38] sm:$0xf]
      %v1028 = vld [vmem:[%s1012 + $0x3c] sm:$0xf]
      %v1030 = vunpack.c.l.b16 %v778
      %v1031 = vpack.c.b16 %v816, %v1030
      %v1032 = vrot.slane %v1031, 1
      %v1033 = vrot.slane %v819, 1
      %v1034 = vsel %vm636, %v1032, %v1033
      %v1052 = vunpack.c.l.b16 %v1013
      %v1053 = vunpack.c.l.b16 %v1014
      %v1054 = vunpack.c.l.b16 %v1015
      %v1055 = vunpack.c.l.b16 %v1016
      %v1056 = vunpack.c.l.b16 %v1017
      %v1057 = vunpack.c.l.b16 %v1018
      %v1058 = vunpack.c.l.b16 %v1019
      %v1059 = vunpack.c.l.b16 %v1020
      %v1060 = vunpack.c.l.b16 %v1021
      %v1061 = vunpack.c.l.b16 %v1022
      %v1062 = vunpack.c.l.b16 %v1023
      %v1063 = vunpack.c.l.b16 %v1024
      %v1064 = vunpack.c.l.b16 %v1025
      %v1065 = vunpack.c.l.b16 %v1026
      %v1066 = vunpack.c.l.b16 %v1027
      %v1067 = vunpack.c.l.b16 %v1028
      %v1068 = vpack.c.b16 %v1053, %v1052
      %v1069 = vpack.c.b16 %v1055, %v1054
      %v1070 = vpack.c.b16 %v1057, %v1056
      %v1071 = vpack.c.b16 %v1059, %v1058
      %v1072 = vpack.c.b16 %v1061, %v1060
      %v1073 = vpack.c.b16 %v1063, %v1062
      %v1074 = vpack.c.b16 %v1065, %v1064
      %v1075 = vpack.c.b16 %v1067, %v1066
      %1084 = vmatprep.subr.bf16.mxu0 0
      %1085 = vmatpush1.bf16.msra.mxu0 %v1075
      %1086 = vmatprep.subr.bf16.mxu0 0
      %1087 = vmatpush1.bf16.msra.mxu0 %v1074
      %1088 = vmatprep.subr.bf16.mxu0 0
      %1089 = vmatpush1.bf16.msra.mxu0 %v1073
      %1090 = vmatprep.subr.bf16.mxu0 0
      %1091 = vmatpush1.bf16.msra.mxu0 %v1072
      %1092 = vmatprep.subr.bf16.mxu0 0
      %1093 = vmatpush1.bf16.msra.mxu0 %v1071
      %1094 = vmatprep.subr.bf16.mxu0 0
      %1095 = vmatpush1.bf16.msra.mxu0 %v1070
      %1096 = vmatprep.subr.bf16.mxu0 0
      %1097 = vmatpush1.bf16.msra.mxu0 %v1069
      %1098 = vmatprep.subr.bf16.mxu0 0
      %1099 = vmatpush1.bf16.msra.mxu0 %v1068
      %1100 = vmatprep.subr.bf16.mxu0 0
      %1101 = vmatpush2.bf16.msra.mxu0 0
      %1102 = vmatprep.subr.bf16.mxu0 0
      %1103 = vmatpush2.bf16.msra.mxu0 0
      %1104 = vmatprep.subr.bf16.mxu0 0
      %1105 = vmatpush2.bf16.msra.mxu0 0
      %1106 = vmatprep.subr.bf16.mxu0 0
      %1107 = vmatpush2.bf16.msra.mxu0 0
      %1108 = vmatprep.subr.bf16.mxu0 0
      %1109 = vmatpush2.bf16.msra.mxu0 0
      %1110 = vmatprep.subr.bf16.mxu0 0
      %1111 = vmatpush2.bf16.msra.mxu0 0
      %1112 = vmatprep.subr.bf16.mxu0 0
      %1113 = vmatpush2.bf16.msra.mxu0 0
      %1114 = vmatprep.subr.bf16.mxu0 0
      %1115 = vmatpush2.bf16.msra.mxu0 0
      %1116 = vmatprep.mubr.bf16.mxu0 0
      %1117 = vmatmul.mubr.bf16.gmra.mxu0 %v1034
      %v1118 = vpop.f32.mrf.mxu0
      %v1119 = vadd.f32 0.0, %v1118
      %v1120 = vpop.f32.mrf.mxu0
      %v1121 = vpop.f32.mrf.mxu0
      %v1122 = vadd.f32 0.0, %v1121
      %v1123 = vpop.f32.mrf.mxu0
      %1124 = vdwg.mxu0
      %v1125 = vadd.f32 %v1006, %v1119
      %v1126 = vadd.f32 %v1009, %v1122
      %v1127 = vld [vmem:[%s4] sm:$0x1]
      %v1129 = vlaneseq
      %v1130 = vshrl.u32 %v1129, 7
      %v1131 = vsub.s32 0, %v1130
      %v1132 = vrot.slane %v1127, %v1131
      %v1134 = vadd.f32 %v1125, %v1132
      %v1135 = vadd.f32 %v1126, %v1132
      %v1136 = vunpack.c.l.bf16 %v345
      %v1137 = vunpack.c.l.bf16 %v346
      %v1138 = vadd.f32 %v1134, %v1136
      %v1139 = vadd.f32 %v1135, %v1137
      %v1140 = vmax.f32 %v1138, 0.0
      %v1141 = vmax.f32 %v1139, 0.0
      %v1142 = vpack.c.bf16 %v1141, %v1140
      %v1144 = vunpack.c.l.b16 %v1142
      %v1145 = vunpack.c.h.b16 %v1142
      %v1146 = vpack.c.b16 %v1144, %v1144
      %v1147 = vpack.c.b16 %v1145, %v1145
      %v1149 = vshrl.u32 %v1146, 16
      %v1151 = vrot.slane %v1149, 7
      %v1152 = vshll.u32 %v1146, 16
      %v1154 = vor.u32 %v1151, %v1152
      %v1155 = vrot.slane %v1151, 4
      %v1157 = vshrl.u32 %v1147, 16
      %v1159 = vrot.slane %v1157, 7
      %v1160 = vshll.u32 %v1147, 16
      %v1162 = vor.u32 %v1159, %v1160
      %v1163 = vsel %vm348, %v1155, %v1162
      %v1164 = vrot.slane %v1159, 4
      %v1168 = vsel %vm370, %v1154, %v775
      %1169 = vst [vmem:[#allocation2] sm:$0xf] %v1168
      %1170 = vst [vmem:[#allocation2 + $0x4] sm:$0xf] %v1163
      %v1171 = vld [vmem:[#allocation2 + $0x8] sm:$0x1]
      %v1172 = vsel %vm336, %v1164, %v1171
      %1173 = vst [vmem:[#allocation2 + $0x8] sm:$0x1] %v1172
      %v1174 = vld [vmem:[#allocation2] sm:$0xf]
      %v1175 = vld [vmem:[#allocation2 + $0x4] sm:$0xf]
      %v1176 = vld [vmem:[#allocation2 + $0x8] sm:$0x1]
      %v1177 = vld [vmem:[#allocation2] sm:$0xe]
      %v1178 = vld [vmem:[%s5] sm:$0xf]
      %v1179 = vld [vmem:[%s5 + $0x4] sm:$0xf]
      %v1180 = vld [vmem:[%s5 + $0x8] sm:$0xf]
      %v1181 = vld [vmem:[%s5 + $0xc] sm:$0xf]
      %v1182 = vld [vmem:[%s5 + $0x10] sm:$0xf]
      %v1183 = vld [vmem:[%s5 + $0x14] sm:$0xf]
      %v1184 = vld [vmem:[%s5 + $0x18] sm:$0xf]
      %v1185 = vld [vmem:[%s5 + $0x1c] sm:$0xf]
      %v1186 = vld [vmem:[%s5 + $0x20] sm:$0xf]
      %v1187 = vld [vmem:[%s5 + $0x24] sm:$0xf]
      %v1188 = vld [vmem:[%s5 + $0x28] sm:$0xf]
      %v1189 = vld [vmem:[%s5 + $0x2c] sm:$0xf]
      %v1190 = vld [vmem:[%s5 + $0x30] sm:$0xf]
      %v1191 = vld [vmem:[%s5 + $0x34] sm:$0xf]
      %v1192 = vld [vmem:[%s5 + $0x38] sm:$0xf]
      %v1193 = vld [vmem:[%s5 + $0x3c] sm:$0xf]
      %s1194 = scalar_lea.vmem %s5, 64
      %v1195 = vld [vmem:[%s1194] sm:$0xf]
      %v1196 = vld [vmem:[%s1194 + $0x4] sm:$0xf]
      %v1197 = vld [vmem:[%s1194 + $0x8] sm:$0xf]
      %v1198 = vld [vmem:[%s1194 + $0xc] sm:$0xf]
      %v1199 = vld [vmem:[%s1194 + $0x10] sm:$0xf]
      %v1200 = vld [vmem:[%s1194 + $0x14] sm:$0xf]
      %v1201 = vld [vmem:[%s1194 + $0x18] sm:$0xf]
      %v1202 = vld [vmem:[%s1194 + $0x1c] sm:$0xf]
      %v1203 = vld [vmem:[%s1194 + $0x20] sm:$0xf]
      %v1204 = vld [vmem:[%s1194 + $0x24] sm:$0xf]
      %v1205 = vld [vmem:[%s1194 + $0x28] sm:$0xf]
      %v1206 = vld [vmem:[%s1194 + $0x2c] sm:$0xf]
      %v1207 = vld [vmem:[%s1194 + $0x30] sm:$0xf]
      %v1208 = vld [vmem:[%s1194 + $0x34] sm:$0xf]
      %v1209 = vld [vmem:[%s1194 + $0x38] sm:$0xf]
      %v1210 = vld [vmem:[%s1194 + $0x3c] sm:$0xf]
      %v1214 = vunpack.c.l.b16 %v1174
      %v1215 = vunpack.c.l.b16 %v1175
      %v1216 = vunpack.c.l.b16 %v1176
      %v1217 = vpack.c.b16 %v1215, %v1214
      %v1218 = vpack.c.b16 %v1216, %v1216
      %v1220 = vshrl.u32 %v1217, 16
      %v1222 = vshll.u32 %v1217, 16
      %v1224 = vrot.slane %v1222, 1
      %v1225 = vor.u32 %v1220, %v1224
      %v1227 = vshll.u32 %v1218, 16
      %v1229 = vrot.slane %v1227, 1
      %v1230 = vsel %vm423, %v1225, %v1229
      %v1248 = vunpack.c.l.b16 %v1195
      %v1249 = vunpack.c.l.b16 %v1196
      %v1250 = vunpack.c.l.b16 %v1197
      %v1251 = vunpack.c.l.b16 %v1198
      %v1252 = vunpack.c.l.b16 %v1199
      %v1253 = vunpack.c.l.b16 %v1200
      %v1254 = vunpack.c.l.b16 %v1201
      %v1255 = vunpack.c.l.b16 %v1202
      %v1256 = vunpack.c.l.b16 %v1203
      %v1257 = vunpack.c.l.b16 %v1204
      %v1258 = vunpack.c.l.b16 %v1205
      %v1259 = vunpack.c.l.b16 %v1206
      %v1260 = vunpack.c.l.b16 %v1207
      %v1261 = vunpack.c.l.b16 %v1208
      %v1262 = vunpack.c.l.b16 %v1209
      %v1263 = vunpack.c.l.b16 %v1210
      %v1264 = vpack.c.b16 %v1249, %v1248
      %v1265 = vpack.c.b16 %v1251, %v1250
      %v1266 = vpack.c.b16 %v1253, %v1252
      %v1267 = vpack.c.b16 %v1255, %v1254
      %v1268 = vpack.c.b16 %v1257, %v1256
      %v1269 = vpack.c.b16 %v1259, %v1258
      %v1270 = vpack.c.b16 %v1261, %v1260
      %v1271 = vpack.c.b16 %v1263, %v1262
      %1280 = vmatprep.subr.bf16.mxu0 0
      %1281 = vmatpush1.bf16.msra.mxu0 %v1271
      %1282 = vmatprep.subr.bf16.mxu0 0
      %1283 = vmatpush1.bf16.msra.mxu0 %v1270
      %1284 = vmatprep.subr.bf16.mxu0 0
      %1285 = vmatpush1.bf16.msra.mxu0 %v1269
      %1286 = vmatprep.subr.bf16.mxu0 0
      %1287 = vmatpush1.bf16.msra.mxu0 %v1268
      %1288 = vmatprep.subr.bf16.mxu0 0
      %1289 = vmatpush1.bf16.msra.mxu0 %v1267
      %1290 = vmatprep.subr.bf16.mxu0 0
      %1291 = vmatpush1.bf16.msra.mxu0 %v1266
      %1292 = vmatprep.subr.bf16.mxu0 0
      %1293 = vmatpush1.bf16.msra.mxu0 %v1265
      %1294 = vmatprep.subr.bf16.mxu0 0
      %1295 = vmatpush1.bf16.msra.mxu0 %v1264
      %1296 = vmatprep.subr.bf16.mxu0 0
      %1297 = vmatpush2.bf16.msra.mxu0 0
      %1298 = vmatprep.subr.bf16.mxu0 0
      %1299 = vmatpush2.bf16.msra.mxu0 0
      %1300 = vmatprep.subr.bf16.mxu0 0
      %1301 = vmatpush2.bf16.msra.mxu0 0
      %1302 = vmatprep.subr.bf16.mxu0 0
      %1303 = vmatpush2.bf16.msra.mxu0 0
      %1304 = vmatprep.subr.bf16.mxu0 0
      %1305 = vmatpush2.bf16.msra.mxu0 0
      %1306 = vmatprep.subr.bf16.mxu0 0
      %1307 = vmatpush2.bf16.msra.mxu0 0
      %1308 = vmatprep.subr.bf16.mxu0 0
      %1309 = vmatpush2.bf16.msra.mxu0 0
      %1310 = vmatprep.subr.bf16.mxu0 0
      %1311 = vmatpush2.bf16.msra.mxu0 0
      %1312 = vmatprep.mubr.bf16.mxu0 0
      %1313 = vmatmul.mubr.bf16.gmra.mxu0 %v1230
      %v1314 = vpop.f32.mrf.mxu0
      %v1315 = vadd.f32 0.0, %v1314
      %v1316 = vpop.f32.mrf.mxu0
      %v1317 = vpop.f32.mrf.mxu0
      %v1318 = vadd.f32 0.0, %v1317
      %v1319 = vpop.f32.mrf.mxu0
      %1320 = vdwg.mxu0
      %v1338 = vunpack.c.l.b16 %v1178
      %v1339 = vunpack.c.l.b16 %v1179
      %v1340 = vunpack.c.l.b16 %v1180
      %v1341 = vunpack.c.l.b16 %v1181
      %v1342 = vunpack.c.l.b16 %v1182
      %v1343 = vunpack.c.l.b16 %v1183
      %v1344 = vunpack.c.l.b16 %v1184
      %v1345 = vunpack.c.l.b16 %v1185
      %v1346 = vunpack.c.l.b16 %v1186
      %v1347 = vunpack.c.l.b16 %v1187
      %v1348 = vunpack.c.l.b16 %v1188
      %v1349 = vunpack.c.l.b16 %v1189
      %v1350 = vunpack.c.l.b16 %v1190
      %v1351 = vunpack.c.l.b16 %v1191
      %v1352 = vunpack.c.l.b16 %v1192
      %v1353 = vunpack.c.l.b16 %v1193
      %v1354 = vpack.c.b16 %v1339, %v1338
      %v1355 = vpack.c.b16 %v1341, %v1340
      %v1356 = vpack.c.b16 %v1343, %v1342
      %v1357 = vpack.c.b16 %v1345, %v1344
      %v1358 = vpack.c.b16 %v1347, %v1346
      %v1359 = vpack.c.b16 %v1349, %v1348
      %v1360 = vpack.c.b16 %v1351, %v1350
      %v1361 = vpack.c.b16 %v1353, %v1352
      %1370 = vmatprep.subr.bf16.mxu0 0
      %1371 = vmatpush1.bf16.msra.mxu0 %v1361
      %1372 = vmatprep.subr.bf16.mxu0 0
      %1373 = vmatpush1.bf16.msra.mxu0 %v1360
      %1374 = vmatprep.subr.bf16.mxu0 0
      %1375 = vmatpush1.bf16.msra.mxu0 %v1359
      %1376 = vmatprep.subr.bf16.mxu0 0
      %1377 = vmatpush1.bf16.msra.mxu0 %v1358
      %1378 = vmatprep.subr.bf16.mxu0 0
      %1379 = vmatpush1.bf16.msra.mxu0 %v1357
      %1380 = vmatprep.subr.bf16.mxu0 0
      %1381 = vmatpush1.bf16.msra.mxu0 %v1356
      %1382 = vmatprep.subr.bf16.mxu0 0
      %1383 = vmatpush1.bf16.msra.mxu0 %v1355
      %1384 = vmatprep.subr.bf16.mxu0 0
      %1385 = vmatpush1.bf16.msra.mxu0 %v1354
      %1386 = vmatprep.subr.bf16.mxu0 0
      %1387 = vmatpush2.bf16.msra.mxu0 0
      %1388 = vmatprep.subr.bf16.mxu0 0
      %1389 = vmatpush2.bf16.msra.mxu0 0
      %1390 = vmatprep.subr.bf16.mxu0 0
      %1391 = vmatpush2.bf16.msra.mxu0 0
      %1392 = vmatprep.subr.bf16.mxu0 0
      %1393 = vmatpush2.bf16.msra.mxu0 0
      %1394 = vmatprep.subr.bf16.mxu0 0
      %1395 = vmatpush2.bf16.msra.mxu0 0
      %1396 = vmatprep.subr.bf16.mxu0 0
      %1397 = vmatpush2.bf16.msra.mxu0 0
      %1398 = vmatprep.subr.bf16.mxu0 0
      %1399 = vmatpush2.bf16.msra.mxu0 0
      %1400 = vmatprep.subr.bf16.mxu0 0
      %1401 = vmatpush2.bf16.msra.mxu0 0
      %1402 = vmatprep.mubr.bf16.mxu0 0
      %1403 = vmatmul.mubr.bf16.gmra.mxu0 %v1217
      %v1404 = vpop.f32.mrf.mxu0
      %v1405 = vadd.f32 %v1315, %v1404
      %v1406 = vpop.f32.mrf.mxu0
      %v1407 = vpop.f32.mrf.mxu0
      %v1408 = vadd.f32 %v1318, %v1407
      %v1409 = vpop.f32.mrf.mxu0
      %1410 = vdwg.mxu0
      %s1411 = scalar_lea.vmem %s5, 128
      %v1412 = vld [vmem:[%s1411] sm:$0xf]
      %v1413 = vld [vmem:[%s1411 + $0x4] sm:$0xf]
      %v1414 = vld [vmem:[%s1411 + $0x8] sm:$0xf]
      %v1415 = vld [vmem:[%s1411 + $0xc] sm:$0xf]
      %v1416 = vld [vmem:[%s1411 + $0x10] sm:$0xf]
      %v1417 = vld [vmem:[%s1411 + $0x14] sm:$0xf]
      %v1418 = vld [vmem:[%s1411 + $0x18] sm:$0xf]
      %v1419 = vld [vmem:[%s1411 + $0x1c] sm:$0xf]
      %v1420 = vld [vmem:[%s1411 + $0x20] sm:$0xf]
      %v1421 = vld [vmem:[%s1411 + $0x24] sm:$0xf]
      %v1422 = vld [vmem:[%s1411 + $0x28] sm:$0xf]
      %v1423 = vld [vmem:[%s1411 + $0x2c] sm:$0xf]
      %v1424 = vld [vmem:[%s1411 + $0x30] sm:$0xf]
      %v1425 = vld [vmem:[%s1411 + $0x34] sm:$0xf]
      %v1426 = vld [vmem:[%s1411 + $0x38] sm:$0xf]
      %v1427 = vld [vmem:[%s1411 + $0x3c] sm:$0xf]
      %v1429 = vunpack.c.l.b16 %v1177
      %v1430 = vpack.c.b16 %v1215, %v1429
      %v1431 = vrot.slane %v1430, 1
      %v1432 = vrot.slane %v1218, 1
      %v1433 = vsel %vm636, %v1431, %v1432
      %v1451 = vunpack.c.l.b16 %v1412
      %v1452 = vunpack.c.l.b16 %v1413
      %v1453 = vunpack.c.l.b16 %v1414
      %v1454 = vunpack.c.l.b16 %v1415
      %v1455 = vunpack.c.l.b16 %v1416
      %v1456 = vunpack.c.l.b16 %v1417
      %v1457 = vunpack.c.l.b16 %v1418
      %v1458 = vunpack.c.l.b16 %v1419
      %v1459 = vunpack.c.l.b16 %v1420
      %v1460 = vunpack.c.l.b16 %v1421
      %v1461 = vunpack.c.l.b16 %v1422
      %v1462 = vunpack.c.l.b16 %v1423
      %v1463 = vunpack.c.l.b16 %v1424
      %v1464 = vunpack.c.l.b16 %v1425
      %v1465 = vunpack.c.l.b16 %v1426
      %v1466 = vunpack.c.l.b16 %v1427
      %v1467 = vpack.c.b16 %v1452, %v1451
      %v1468 = vpack.c.b16 %v1454, %v1453
      %v1469 = vpack.c.b16 %v1456, %v1455
      %v1470 = vpack.c.b16 %v1458, %v1457
      %v1471 = vpack.c.b16 %v1460, %v1459
      %v1472 = vpack.c.b16 %v1462, %v1461
      %v1473 = vpack.c.b16 %v1464, %v1463
      %v1474 = vpack.c.b16 %v1466, %v1465
      %1483 = vmatprep.subr.bf16.mxu0 0
      %1484 = vmatpush1.bf16.msra.mxu0 %v1474
      %1485 = vmatprep.subr.bf16.mxu0 0
      %1486 = vmatpush1.bf16.msra.mxu0 %v1473
      %1487 = vmatprep.subr.bf16.mxu0 0
      %1488 = vmatpush1.bf16.msra.mxu0 %v1472
      %1489 = vmatprep.subr.bf16.mxu0 0
      %1490 = vmatpush1.bf16.msra.mxu0 %v1471
      %1491 = vmatprep.subr.bf16.mxu0 0
      %1492 = vmatpush1.bf16.msra.mxu0 %v1470
      %1493 = vmatprep.subr.bf16.mxu0 0
      %1494 = vmatpush1.bf16.msra.mxu0 %v1469
      %1495 = vmatprep.subr.bf16.mxu0 0
      %1496 = vmatpush1.bf16.msra.mxu0 %v1468
      %1497 = vmatprep.subr.bf16.mxu0 0
      %1498 = vmatpush1.bf16.msra.mxu0 %v1467
      %1499 = vmatprep.subr.bf16.mxu0 0
      %1500 = vmatpush2.bf16.msra.mxu0 0
      %1501 = vmatprep.subr.bf16.mxu0 0
      %1502 = vmatpush2.bf16.msra.mxu0 0
      %1503 = vmatprep.subr.bf16.mxu0 0
      %1504 = vmatpush2.bf16.msra.mxu0 0
      %1505 = vmatprep.subr.bf16.mxu0 0
      %1506 = vmatpush2.bf16.msra.mxu0 0
      %1507 = vmatprep.subr.bf16.mxu0 0
      %1508 = vmatpush2.bf16.msra.mxu0 0
      %1509 = vmatprep.subr.bf16.mxu0 0
      %1510 = vmatpush2.bf16.msra.mxu0 0
      %1511 = vmatprep.subr.bf16.mxu0 0
      %1512 = vmatpush2.bf16.msra.mxu0 0
      %1513 = vmatprep.subr.bf16.mxu0 0
      %1514 = vmatpush2.bf16.msra.mxu0 0
      %1515 = vmatprep.mubr.bf16.mxu0 0
      %1516 = vmatmul.mubr.bf16.gmra.mxu0 %v1433
      %v1517 = vpop.f32.mrf.mxu0
      %v1518 = vadd.f32 0.0, %v1517
      %v1519 = vpop.f32.mrf.mxu0
      %v1520 = vpop.f32.mrf.mxu0
      %v1521 = vadd.f32 0.0, %v1520
      %v1522 = vpop.f32.mrf.mxu0
      %1523 = vdwg.mxu0
      %v1524 = vadd.f32 %v1405, %v1518
      %v1525 = vadd.f32 %v1408, %v1521
      %v1526 = vld [vmem:[%s6] sm:$0x1]
      %v1528 = vlaneseq
      %v1529 = vshrl.u32 %v1528, 7
      %v1530 = vsub.s32 0, %v1529
      %v1531 = vrot.slane %v1526, %v1530
      %v1533 = vadd.f32 %v1524, %v1531
      %v1534 = vadd.f32 %v1525, %v1531
      %v1535 = vmax.f32 %v1533, 0.0
      %v1536 = vmax.f32 %v1534, 0.0
      %v1537 = vpack.c.bf16 %v1536, %v1535
      %v1539 = vunpack.c.l.b16 %v1537
      %v1540 = vunpack.c.h.b16 %v1537
      %v1541 = vpack.c.b16 %v1539, %v1539
      %v1542 = vpack.c.b16 %v1540, %v1540
      %v1544 = vshrl.u32 %v1541, 16
      %v1546 = vrot.slane %v1544, 7
      %v1547 = vshll.u32 %v1541, 16
      %v1549 = vor.u32 %v1546, %v1547
      %v1550 = vrot.slane %v1546, 4
      %v1552 = vshrl.u32 %v1542, 16
      %v1554 = vrot.slane %v1552, 7
      %v1555 = vshll.u32 %v1542, 16
      %v1557 = vor.u32 %v1554, %v1555
      %v1558 = vsel %vm348, %v1550, %v1557
      %v1559 = vrot.slane %v1554, 4
      %v1563 = vsel %vm370, %v1549, %v1174
      %1564 = vst [vmem:[#allocation2] sm:$0xf] %v1563
      %1565 = vst [vmem:[#allocation2 + $0x4] sm:$0xf] %v1558
      %v1566 = vld [vmem:[#allocation2 + $0x8] sm:$0x1]
      %v1567 = vsel %vm336, %v1559, %v1566
      %1568 = vst [vmem:[#allocation2 + $0x8] sm:$0x1] %v1567
      %v1569 = vld [vmem:[#allocation2] sm:$0xf]
      %v1570 = vld [vmem:[#allocation2 + $0x4] sm:$0xf]
      %v1571 = vld [vmem:[#allocation2 + $0x8] sm:$0x1]
      %v1572 = vld [vmem:[#allocation2] sm:$0xe]
      %v1573 = vld [vmem:[%s7] sm:$0xf]
      %v1574 = vld [vmem:[%s7 + $0x4] sm:$0xf]
      %v1575 = vld [vmem:[%s7 + $0x8] sm:$0xf]
      %v1576 = vld [vmem:[%s7 + $0xc] sm:$0xf]
      %v1577 = vld [vmem:[%s7 + $0x10] sm:$0xf]
      %v1578 = vld [vmem:[%s7 + $0x14] sm:$0xf]
      %v1579 = vld [vmem:[%s7 + $0x18] sm:$0xf]
      %v1580 = vld [vmem:[%s7 + $0x1c] sm:$0xf]
      %v1581 = vld [vmem:[%s7 + $0x20] sm:$0xf]
      %v1582 = vld [vmem:[%s7 + $0x24] sm:$0xf]
      %v1583 = vld [vmem:[%s7 + $0x28] sm:$0xf]
      %v1584 = vld [vmem:[%s7 + $0x2c] sm:$0xf]
      %v1585 = vld [vmem:[%s7 + $0x30] sm:$0xf]
      %v1586 = vld [vmem:[%s7 + $0x34] sm:$0xf]
      %v1587 = vld [vmem:[%s7 + $0x38] sm:$0xf]
      %v1588 = vld [vmem:[%s7 + $0x3c] sm:$0xf]
      %s1589 = scalar_lea.vmem %s7, 64
      %v1590 = vld [vmem:[%s1589] sm:$0xf]
      %v1591 = vld [vmem:[%s1589 + $0x4] sm:$0xf]
      %v1592 = vld [vmem:[%s1589 + $0x8] sm:$0xf]
      %v1593 = vld [vmem:[%s1589 + $0xc] sm:$0xf]
      %v1594 = vld [vmem:[%s1589 + $0x10] sm:$0xf]
      %v1595 = vld [vmem:[%s1589 + $0x14] sm:$0xf]
      %v1596 = vld [vmem:[%s1589 + $0x18] sm:$0xf]
      %v1597 = vld [vmem:[%s1589 + $0x1c] sm:$0xf]
      %v1598 = vld [vmem:[%s1589 + $0x20] sm:$0xf]
      %v1599 = vld [vmem:[%s1589 + $0x24] sm:$0xf]
      %v1600 = vld [vmem:[%s1589 + $0x28] sm:$0xf]
      %v1601 = vld [vmem:[%s1589 + $0x2c] sm:$0xf]
      %v1602 = vld [vmem:[%s1589 + $0x30] sm:$0xf]
      %v1603 = vld [vmem:[%s1589 + $0x34] sm:$0xf]
      %v1604 = vld [vmem:[%s1589 + $0x38] sm:$0xf]
      %v1605 = vld [vmem:[%s1589 + $0x3c] sm:$0xf]
      %v1609 = vunpack.c.l.b16 %v1569
      %v1610 = vunpack.c.l.b16 %v1570
      %v1611 = vunpack.c.l.b16 %v1571
      %v1612 = vpack.c.b16 %v1610, %v1609
      %v1613 = vpack.c.b16 %v1611, %v1611
      %v1615 = vshrl.u32 %v1612, 16
      %v1617 = vshll.u32 %v1612, 16
      %v1619 = vrot.slane %v1617, 1
      %v1620 = vor.u32 %v1615, %v1619
      %v1622 = vshll.u32 %v1613, 16
      %v1624 = vrot.slane %v1622, 1
      %v1625 = vsel %vm423, %v1620, %v1624
      %v1643 = vunpack.c.l.b16 %v1590
      %v1644 = vunpack.c.l.b16 %v1591
      %v1645 = vunpack.c.l.b16 %v1592
      %v1646 = vunpack.c.l.b16 %v1593
      %v1647 = vunpack.c.l.b16 %v1594
      %v1648 = vunpack.c.l.b16 %v1595
      %v1649 = vunpack.c.l.b16 %v1596
      %v1650 = vunpack.c.l.b16 %v1597
      %v1651 = vunpack.c.l.b16 %v1598
      %v1652 = vunpack.c.l.b16 %v1599
      %v1653 = vunpack.c.l.b16 %v1600
      %v1654 = vunpack.c.l.b16 %v1601
      %v1655 = vunpack.c.l.b16 %v1602
      %v1656 = vunpack.c.l.b16 %v1603
      %v1657 = vunpack.c.l.b16 %v1604
      %v1658 = vunpack.c.l.b16 %v1605
      %v1659 = vpack.c.b16 %v1644, %v1643
      %v1660 = vpack.c.b16 %v1646, %v1645
      %v1661 = vpack.c.b16 %v1648, %v1647
      %v1662 = vpack.c.b16 %v1650, %v1649
      %v1663 = vpack.c.b16 %v1652, %v1651
      %v1664 = vpack.c.b16 %v1654, %v1653
      %v1665 = vpack.c.b16 %v1656, %v1655
      %v1666 = vpack.c.b16 %v1658, %v1657
      %1675 = vmatprep.subr.bf16.mxu0 0
      %1676 = vmatpush1.bf16.msra.mxu0 %v1666
      %1677 = vmatprep.subr.bf16.mxu0 0
      %1678 = vmatpush1.bf16.msra.mxu0 %v1665
      %1679 = vmatprep.subr.bf16.mxu0 0
      %1680 = vmatpush1.bf16.msra.mxu0 %v1664
      %1681 = vmatprep.subr.bf16.mxu0 0
      %1682 = vmatpush1.bf16.msra.mxu0 %v1663
      %1683 = vmatprep.subr.bf16.mxu0 0
      %1684 = vmatpush1.bf16.msra.mxu0 %v1662
      %1685 = vmatprep.subr.bf16.mxu0 0
      %1686 = vmatpush1.bf16.msra.mxu0 %v1661
      %1687 = vmatprep.subr.bf16.mxu0 0
      %1688 = vmatpush1.bf16.msra.mxu0 %v1660
      %1689 = vmatprep.subr.bf16.mxu0 0
      %1690 = vmatpush1.bf16.msra.mxu0 %v1659
      %1691 = vmatprep.subr.bf16.mxu0 0
      %1692 = vmatpush2.bf16.msra.mxu0 0
      %1693 = vmatprep.subr.bf16.mxu0 0
      %1694 = vmatpush2.bf16.msra.mxu0 0
      %1695 = vmatprep.subr.bf16.mxu0 0
      %1696 = vmatpush2.bf16.msra.mxu0 0
      %1697 = vmatprep.subr.bf16.mxu0 0
      %1698 = vmatpush2.bf16.msra.mxu0 0
      %1699 = vmatprep.subr.bf16.mxu0 0
      %1700 = vmatpush2.bf16.msra.mxu0 0
      %1701 = vmatprep.subr.bf16.mxu0 0
      %1702 = vmatpush2.bf16.msra.mxu0 0
      %1703 = vmatprep.subr.bf16.mxu0 0
      %1704 = vmatpush2.bf16.msra.mxu0 0
      %1705 = vmatprep.subr.bf16.mxu0 0
      %1706 = vmatpush2.bf16.msra.mxu0 0
      %1707 = vmatprep.mubr.bf16.mxu0 0
      %1708 = vmatmul.mubr.bf16.gmra.mxu0 %v1625
      %v1709 = vpop.f32.mrf.mxu0
      %v1710 = vadd.f32 0.0, %v1709
      %v1711 = vpop.f32.mrf.mxu0
      %v1712 = vpop.f32.mrf.mxu0
      %v1713 = vadd.f32 0.0, %v1712
      %v1714 = vpop.f32.mrf.mxu0
      %1715 = vdwg.mxu0
      %v1733 = vunpack.c.l.b16 %v1573
      %v1734 = vunpack.c.l.b16 %v1574
      %v1735 = vunpack.c.l.b16 %v1575
      %v1736 = vunpack.c.l.b16 %v1576
      %v1737 = vunpack.c.l.b16 %v1577
      %v1738 = vunpack.c.l.b16 %v1578
      %v1739 = vunpack.c.l.b16 %v1579
      %v1740 = vunpack.c.l.b16 %v1580
      %v1741 = vunpack.c.l.b16 %v1581
      %v1742 = vunpack.c.l.b16 %v1582
      %v1743 = vunpack.c.l.b16 %v1583
      %v1744 = vunpack.c.l.b16 %v1584
      %v1745 = vunpack.c.l.b16 %v1585
      %v1746 = vunpack.c.l.b16 %v1586
      %v1747 = vunpack.c.l.b16 %v1587
      %v1748 = vunpack.c.l.b16 %v1588
      %v1749 = vpack.c.b16 %v1734, %v1733
      %v1750 = vpack.c.b16 %v1736, %v1735
      %v1751 = vpack.c.b16 %v1738, %v1737
      %v1752 = vpack.c.b16 %v1740, %v1739
      %v1753 = vpack.c.b16 %v1742, %v1741
      %v1754 = vpack.c.b16 %v1744, %v1743
      %v1755 = vpack.c.b16 %v1746, %v1745
      %v1756 = vpack.c.b16 %v1748, %v1747
      %1765 = vmatprep.subr.bf16.mxu0 0
      %1766 = vmatpush1.bf16.msra.mxu0 %v1756
      %1767 = vmatprep.subr.bf16.mxu0 0
      %1768 = vmatpush1.bf16.msra.mxu0 %v1755
      %1769 = vmatprep.subr.bf16.mxu0 0
      %1770 = vmatpush1.bf16.msra.mxu0 %v1754
      %1771 = vmatprep.subr.bf16.mxu0 0
      %1772 = vmatpush1.bf16.msra.mxu0 %v1753
      %1773 = vmatprep.subr.bf16.mxu0 0
      %1774 = vmatpush1.bf16.msra.mxu0 %v1752
      %1775 = vmatprep.subr.bf16.mxu0 0
      %1776 = vmatpush1.bf16.msra.mxu0 %v1751
      %1777 = vmatprep.subr.bf16.mxu0 0
      %1778 = vmatpush1.bf16.msra.mxu0 %v1750
      %1779 = vmatprep.subr.bf16.mxu0 0
      %1780 = vmatpush1.bf16.msra.mxu0 %v1749
      %1781 = vmatprep.subr.bf16.mxu0 0
      %1782 = vmatpush2.bf16.msra.mxu0 0
      %1783 = vmatprep.subr.bf16.mxu0 0
      %1784 = vmatpush2.bf16.msra.mxu0 0
      %1785 = vmatprep.subr.bf16.mxu0 0
      %1786 = vmatpush2.bf16.msra.mxu0 0
      %1787 = vmatprep.subr.bf16.mxu0 0
      %1788 = vmatpush2.bf16.msra.mxu0 0
      %1789 = vmatprep.subr.bf16.mxu0 0
      %1790 = vmatpush2.bf16.msra.mxu0 0
      %1791 = vmatprep.subr.bf16.mxu0 0
      %1792 = vmatpush2.bf16.msra.mxu0 0
      %1793 = vmatprep.subr.bf16.mxu0 0
      %1794 = vmatpush2.bf16.msra.mxu0 0
      %1795 = vmatprep.subr.bf16.mxu0 0
      %1796 = vmatpush2.bf16.msra.mxu0 0
      %1797 = vmatprep.mubr.bf16.mxu0 0
      %1798 = vmatmul.mubr.bf16.gmra.mxu0 %v1612
      %v1799 = vpop.f32.mrf.mxu0
      %v1800 = vadd.f32 %v1710, %v1799
      %v1801 = vpop.f32.mrf.mxu0
      %v1802 = vpop.f32.mrf.mxu0
      %v1803 = vadd.f32 %v1713, %v1802
      %v1804 = vpop.f32.mrf.mxu0
      %1805 = vdwg.mxu0
      %s1806 = scalar_lea.vmem %s7, 128
      %v1807 = vld [vmem:[%s1806] sm:$0xf]
      %v1808 = vld [vmem:[%s1806 + $0x4] sm:$0xf]
      %v1809 = vld [vmem:[%s1806 + $0x8] sm:$0xf]
      %v1810 = vld [vmem:[%s1806 + $0xc] sm:$0xf]
      %v1811 = vld [vmem:[%s1806 + $0x10] sm:$0xf]
      %v1812 = vld [vmem:[%s1806 + $0x14] sm:$0xf]
      %v1813 = vld [vmem:[%s1806 + $0x18] sm:$0xf]
      %v1814 = vld [vmem:[%s1806 + $0x1c] sm:$0xf]
      %v1815 = vld [vmem:[%s1806 + $0x20] sm:$0xf]
      %v1816 = vld [vmem:[%s1806 + $0x24] sm:$0xf]
      %v1817 = vld [vmem:[%s1806 + $0x28] sm:$0xf]
      %v1818 = vld [vmem:[%s1806 + $0x2c] sm:$0xf]
      %v1819 = vld [vmem:[%s1806 + $0x30] sm:$0xf]
      %v1820 = vld [vmem:[%s1806 + $0x34] sm:$0xf]
      %v1821 = vld [vmem:[%s1806 + $0x38] sm:$0xf]
      %v1822 = vld [vmem:[%s1806 + $0x3c] sm:$0xf]
      %v1824 = vunpack.c.l.b16 %v1572
      %v1825 = vpack.c.b16 %v1610, %v1824
      %v1826 = vrot.slane %v1825, 1
      %v1827 = vrot.slane %v1613, 1
      %v1828 = vsel %vm636, %v1826, %v1827
      %v1846 = vunpack.c.l.b16 %v1807
      %v1847 = vunpack.c.l.b16 %v1808
      %v1848 = vunpack.c.l.b16 %v1809
      %v1849 = vunpack.c.l.b16 %v1810
      %v1850 = vunpack.c.l.b16 %v1811
      %v1851 = vunpack.c.l.b16 %v1812
      %v1852 = vunpack.c.l.b16 %v1813
      %v1853 = vunpack.c.l.b16 %v1814
      %v1854 = vunpack.c.l.b16 %v1815
      %v1855 = vunpack.c.l.b16 %v1816
      %v1856 = vunpack.c.l.b16 %v1817
      %v1857 = vunpack.c.l.b16 %v1818
      %v1858 = vunpack.c.l.b16 %v1819
      %v1859 = vunpack.c.l.b16 %v1820
      %v1860 = vunpack.c.l.b16 %v1821
      %v1861 = vunpack.c.l.b16 %v1822
      %v1862 = vpack.c.b16 %v1847, %v1846
      %v1863 = vpack.c.b16 %v1849, %v1848
      %v1864 = vpack.c.b16 %v1851, %v1850
      %v1865 = vpack.c.b16 %v1853, %v1852
      %v1866 = vpack.c.b16 %v1855, %v1854
      %v1867 = vpack.c.b16 %v1857, %v1856
      %v1868 = vpack.c.b16 %v1859, %v1858
      %v1869 = vpack.c.b16 %v1861, %v1860
      %1878 = vmatprep.subr.bf16.mxu0 0
      %1879 = vmatpush1.bf16.msra.mxu0 %v1869
      %1880 = vmatprep.subr.bf16.mxu0 0
      %1881 = vmatpush1.bf16.msra.mxu0 %v1868
      %1882 = vmatprep.subr.bf16.mxu0 0
      %1883 = vmatpush1.bf16.msra.mxu0 %v1867
      %1884 = vmatprep.subr.bf16.mxu0 0
      %1885 = vmatpush1.bf16.msra.mxu0 %v1866
      %1886 = vmatprep.subr.bf16.mxu0 0
      %1887 = vmatpush1.bf16.msra.mxu0 %v1865
      %1888 = vmatprep.subr.bf16.mxu0 0
      %1889 = vmatpush1.bf16.msra.mxu0 %v1864
      %1890 = vmatprep.subr.bf16.mxu0 0
      %1891 = vmatpush1.bf16.msra.mxu0 %v1863
      %1892 = vmatprep.subr.bf16.mxu0 0
      %1893 = vmatpush1.bf16.msra.mxu0 %v1862
      %1894 = vmatprep.subr.bf16.mxu0 0
      %1895 = vmatpush2.bf16.msra.mxu0 0
      %1896 = vmatprep.subr.bf16.mxu0 0
      %1897 = vmatpush2.bf16.msra.mxu0 0
      %1898 = vmatprep.subr.bf16.mxu0 0
      %1899 = vmatpush2.bf16.msra.mxu0 0
      %1900 = vmatprep.subr.bf16.mxu0 0
      %1901 = vmatpush2.bf16.msra.mxu0 0
      %1902 = vmatprep.subr.bf16.mxu0 0
      %1903 = vmatpush2.bf16.msra.mxu0 0
      %1904 = vmatprep.subr.bf16.mxu0 0
      %1905 = vmatpush2.bf16.msra.mxu0 0
      %1906 = vmatprep.subr.bf16.mxu0 0
      %1907 = vmatpush2.bf16.msra.mxu0 0
      %1908 = vmatprep.subr.bf16.mxu0 0
      %1909 = vmatpush2.bf16.msra.mxu0 0
      %1910 = vmatprep.mubr.bf16.mxu0 0
      %1911 = vmatmul.mubr.bf16.gmra.mxu0 %v1828
      %v1912 = vpop.f32.mrf.mxu0
      %v1913 = vadd.f32 0.0, %v1912
      %v1914 = vpop.f32.mrf.mxu0
      %v1915 = vpop.f32.mrf.mxu0
      %v1916 = vadd.f32 0.0, %v1915
      %v1917 = vpop.f32.mrf.mxu0
      %1918 = vdwg.mxu0
      %v1919 = vadd.f32 %v1800, %v1913
      %v1920 = vadd.f32 %v1803, %v1916
      %v1921 = vld [vmem:[%s8] sm:$0x1]
      %v1923 = vlaneseq
      %v1924 = vshrl.u32 %v1923, 7
      %v1925 = vsub.s32 0, %v1924
      %v1926 = vrot.slane %v1921, %v1925
      %v1928 = vadd.f32 %v1919, %v1926
      %v1929 = vadd.f32 %v1920, %v1926
      %v1930 = vunpack.c.l.bf16 %v1142
      %v1931 = vunpack.c.h.bf16 %v1142
      %v1932 = vadd.f32 %v1928, %v1930
      %v1933 = vadd.f32 %v1929, %v1931
      %v1934 = vmax.f32 %v1932, 0.0
      %v1935 = vmax.f32 %v1933, 0.0
      %v1936 = vpack.c.bf16 %v1935, %v1934
      %v1938 = vunpack.c.l.b16 %v1936
      %v1939 = vunpack.c.h.b16 %v1936
      %v1940 = vpack.c.b16 %v1938, %v1938
      %v1941 = vpack.c.b16 %v1939, %v1939
      %1944 = vst [vmem:[%s332] sm:$0xf] %v1940
      %1945 = vst [vmem:[%s332 + $0x4] sm:$0xf] %v1941
      %p1946 = scmp.lt.s32.totalorder %s20, 1
      %s1947 = scalar_select %p1946, %s20, 1
      %s1948 = smul.addr %s1947, 2
      %s1949 = smul.addr %s1948, 4
      %s1950 = scalar_lea.vmem %s9, %s1949
      // Predicated region
      $region57: #{_lambda_.7} parent=55 // pred_check
        %p1951 = pneg %p232
      $region58: #{_lambda_.7} parent=55 // pred_check_branch
        %1953 = sbr.rel (%p1951) target = $region60
      $region59: #{_lambda_.7} parent=55 // pred_region
        _
      $region60: #{_lambda_.7} parent=55 // pred_fallthru
        _
    $region56: #{_lambda_.7} parent=5 // pred_fallthru
      _
    %p1954 = scmp.le.s32.totalorder 2, %s15
    // Predicated region
    $region61: #{_lambda_.7} parent=5 // pred_check
      %p1955 = pneg %p1954
    $region62: #{_lambda_.7} parent=5 // pred_check_branch
      %1957 = sbr.rel (%p1955) target = $region64
    $region63: #{_lambda_.7} parent=5 // pred_region
      %s1958 = ssub.s32 %s15, 2
      // Predicated region
      $region65: #{_lambda_.7} parent=63 // pred_check
        %p1959 = pneg %p238
      $region66: #{_lambda_.7} parent=63 // pred_check_branch
        %1961 = sbr.rel (%p1959) target = $region68
      $region67: #{_lambda_.7} parent=63 // pred_region
        %p1962 = scmp.lt.s32.totalorder %s21, 1
        %s1963 = scalar_select %p1962, %s21, 1
        %s1964 = smul.addr %s1963, 2
        %s1965 = smul.addr %s1964, 4
        %s1966 = scalar_lea.vmem %s9, %s1965
      $region68: #{_lambda_.7} parent=63 // pred_fallthru
        _
    $region64: #{_lambda_.7} parent=5 // pred_fallthru
      _
  $region6: #{_lambda_.7} parent=0 // loop_footer
    %s19 = sadd.s32 1, %s15
  $region7: #{_lambda_.7} parent=0 // loop_footer_branch
    %14 = sbr.rel target = $region3
  $region8: #{_lambda_.7} parent=0 // loop_exit
    _

// kernel: _lambda_.8
$region0: #{_lambda_.8}
  #allocation0 [shape = 'u32[]', space=smem, size = 0x4, offset = 0x4, fixed_abs, tag = 'smem constant byte address 0x4 - core index']
  #allocation1 [shape = 'u32[144,128]{1,0:T(1,128)}', space=vmem, size = 0x12000, scoped, tag = 'internal scratch']
  #allocation2 [shape = 'bf16[10,128]{1,0:T(8,128)(2,1)}', space=vmem, size = 0x1000, scoped, tag = 'scratch operand']
  %s0 = inlined_call_operand.vmem [shape: bf16[2,2,9,128], index: 0, kind: input, shape index: {}]
  %s1 = inlined_call_operand.vmem [shape: bf16[3,128,128], index: 1, kind: input, shape index: {}]
  %s2 = inlined_call_operand.vmem [shape: f32[1,128], index: 2, kind: input, shape index: {}]
  %s3 = inlined_call_operand.vmem [shape: bf16[3,128,128], index: 3, kind: input, shape index: {}]
  %s4 = inlined_call_operand.vmem [shape: f32[1,128], index: 4, kind: input, shape index: {}]
  %s5 = inlined_call_operand.vmem [shape: bf16[128,128], index: 5, kind: input, shape index: {}]
  %s6 = inlined_call_operand.vmem [shape: f32[1,128], index: 6, kind: input, shape index: {}]
  %s7 = inlined_call_operand.vmem [shape: bf16[3,128,128], index: 7, kind: input, shape index: {}]
  %s8 = inlined_call_operand.vmem [shape: f32[1,128], index: 8, kind: input, shape index: {}]
  %s9 = inlined_call_operand.vmem [shape: bf16[3,128,128], index: 9, kind: input, shape index: {}]
  %s10 = inlined_call_operand.vmem [shape: f32[1,128], index: 10, kind: input, shape index: {}]
  %s11 = inlined_call_operand.vmem [shape: bf16[2,8,128], index: 11, kind: output, shape index: {}]
  %s12 = sld [smem:[#allocation0]]
  $region77: #{_lambda_.8} parent=0
    _
  %s14 = ssub.s32 1, %s12
  %s15 = scalar_select 0, %s14, %s12
  loop: start=0, step=1, limit=4
  $region2: #{_lambda_.8} parent=0 // loop_pre_header
    _
  $region3: #{_lambda_.8} parent=0 // loop_header
    %s17 = sphi 0, %s21
    %p18 = scmp.ge.s32.totalorder %s17, 4
    %s27 = sphi 0, %s29
    %s30 = sphi 0, %s27
    %s31 = sphi 0, %s30
    %s47 = sphi 0, %s31
    %s51 = sphi 0, %s51
    %s53 = sphi 0, %s51
    %s54 = sphi 0, %s53
    %s68 = sphi 0, %s54
    %s72 = sphi 0, %s72
    %s74 = sphi 0, %s72
    %s75 = sphi 0, %s74
    %s89 = sphi 0, %s75
    %s93 = sphi 0, %s93
    %s95 = sphi 0, %s93
    %s96 = sphi 0, %s95
    %s110 = sphi 0, %s96
    %s114 = sphi 0, %s114
    %s116 = sphi 0, %s114
    %s117 = sphi 0, %s116
    %s131 = sphi 0, %s117
    %s135 = sphi 0, %s135
    %s137 = sphi 0, %s135
    %s138 = sphi 0, %s137
    %s152 = sphi 0, %s138
    %s156 = sphi 0, %s156
    %s158 = sphi 0, %s156
    %s159 = sphi 0, %s158
    %s173 = sphi 0, %s159
    %s177 = sphi 0, %s177
    %s179 = sphi 0, %s177
    %s180 = sphi 0, %s179
    %s194 = sphi 0, %s180
    %s198 = sphi 0, %s198
    %s200 = sphi 0, %s198
    %s201 = sphi 0, %s200
    %s215 = sphi 0, %s201
    %s219 = sphi 0, %s219
    %s221 = sphi 0, %s219
    %s222 = sphi 0, %s221
    %s236 = sphi 0, %s222
    %s240 = sphi 0, %s240
    %s242 = sphi 0, %s240
    %s243 = sphi 0, %s242
    %s257 = sphi 0, %s243
    %s263 = sphi 0, %s265
    %s266 = sphi 0, %s263
    %s267 = sphi 0, %s266
    %s283 = sphi 0, %s267
  $region4: #{_lambda_.8} parent=0 // loop_header_branch
    %20 = sbr.rel (%p18) target = $region8
  $region5: #{_lambda_.8} parent=0 // loop_body
    %s22 = ssub.s32 %s17, 1
    %s23 = ssub.s32 %s17, 2
    %s24 = sadd.s32 %s17, 1
    %s25 = ssub.s32 %s17, %s24
    %p26 = scmp.eq.s32.totalorder %s25, 0
    %s28 = sadd.s32 %s27, 1
    %s29 = scalar_select %p26, %s27, %s28
    %p32 = pneg %p26
    %p33 = scmp.eq.s32.totalorder %s17, 1
    %p34 = por %p32, %p33
    %p35 = scmp.ne.s32.totalorder %s27, %s30
    %p36 = scmp.eq.s32.totalorder %s17, 0
    %p37 = por %p35, %p36
    %p38 = scmp.ne.s32.totalorder %s27, %s30
    %p39 = scmp.eq.s32.totalorder %s22, 1
    %p40 = por %p38, %p39
    %p41 = scmp.ne.s32.totalorder %s30, %s31
    %p42 = scmp.eq.s32.totalorder %s22, 0
    %p43 = por %p41, %p42
    %p44 = scmp.ne.s32.totalorder %s30, %s31
    %p45 = scmp.eq.s32.totalorder %s23, 1
    %p46 = por %p44, %p45
    %p48 = scmp.ne.s32.totalorder %s31, %s47
    %p49 = scmp.eq.s32.totalorder %s23, 0
    %p50 = por %p48, %p49
    %s52 = sadd.s32 %s51, 1
    %p55 = scmp.eq.s32.totalorder %s17, 1
    %p56 = scmp.ne.s32.totalorder %s51, %s53
    %p57 = scmp.eq.s32.totalorder %s17, 0
    %p58 = por %p56, %p57
    %p59 = scmp.ne.s32.totalorder %s51, %s53
    %p60 = scmp.eq.s32.totalorder %s22, 1
    %p61 = por %p59, %p60
    %p62 = scmp.ne.s32.totalorder %s53, %s54
    %p63 = scmp.eq.s32.totalorder %s22, 0
    %p64 = por %p62, %p63
    %p65 = scmp.ne.s32.totalorder %s53, %s54
    %p66 = scmp.eq.s32.totalorder %s23, 1
    %p67 = por %p65, %p66
    %p69 = scmp.ne.s32.totalorder %s54, %s68
    %p70 = scmp.eq.s32.totalorder %s23, 0
    %p71 = por %p69, %p70
    %s73 = sadd.s32 %s72, 1
    %p76 = scmp.eq.s32.totalorder %s17, 1
    %p77 = scmp.ne.s32.totalorder %s72, %s74
    %p78 = scmp.eq.s32.totalorder %s17, 0
    %p79 = por %p77, %p78
    %p80 = scmp.ne.s32.totalorder %s72, %s74
    %p81 = scmp.eq.s32.totalorder %s22, 1
    %p82 = por %p80, %p81
    %p83 = scmp.ne.s32.totalorder %s74, %s75
    %p84 = scmp.eq.s32.totalorder %s22, 0
    %p85 = por %p83, %p84
    %p86 = scmp.ne.s32.totalorder %s74, %s75
    %p87 = scmp.eq.s32.totalorder %s23, 1
    %p88 = por %p86, %p87
    %p90 = scmp.ne.s32.totalorder %s75, %s89
    %p91 = scmp.eq.s32.totalorder %s23, 0
    %p92 = por %p90, %p91
    %s94 = sadd.s32 %s93, 1
    %p97 = scmp.eq.s32.totalorder %s17, 1
    %p98 = scmp.ne.s32.totalorder %s93, %s95
    %p99 = scmp.eq.s32.totalorder %s17, 0
    %p100 = por %p98, %p99
    %p101 = scmp.ne.s32.totalorder %s93, %s95
    %p102 = scmp.eq.s32.totalorder %s22, 1
    %p103 = por %p101, %p102
    %p104 = scmp.ne.s32.totalorder %s95, %s96
    %p105 = scmp.eq.s32.totalorder %s22, 0
    %p106 = por %p104, %p105
    %p107 = scmp.ne.s32.totalorder %s95, %s96
    %p108 = scmp.eq.s32.totalorder %s23, 1
    %p109 = por %p107, %p108
    %p111 = scmp.ne.s32.totalorder %s96, %s110
    %p112 = scmp.eq.s32.totalorder %s23, 0
    %p113 = por %p111, %p112
    %s115 = sadd.s32 %s114, 1
    %p118 = scmp.eq.s32.totalorder %s17, 1
    %p119 = scmp.ne.s32.totalorder %s114, %s116
    %p120 = scmp.eq.s32.totalorder %s17, 0
    %p121 = por %p119, %p120
    %p122 = scmp.ne.s32.totalorder %s114, %s116
    %p123 = scmp.eq.s32.totalorder %s22, 1
    %p124 = por %p122, %p123
    %p125 = scmp.ne.s32.totalorder %s116, %s117
    %p126 = scmp.eq.s32.totalorder %s22, 0
    %p127 = por %p125, %p126
    %p128 = scmp.ne.s32.totalorder %s116, %s117
    %p129 = scmp.eq.s32.totalorder %s23, 1
    %p130 = por %p128, %p129
    %p132 = scmp.ne.s32.totalorder %s117, %s131
    %p133 = scmp.eq.s32.totalorder %s23, 0
    %p134 = por %p132, %p133
    %s136 = sadd.s32 %s135, 1
    %p139 = scmp.eq.s32.totalorder %s17, 1
    %p140 = scmp.ne.s32.totalorder %s135, %s137
    %p141 = scmp.eq.s32.totalorder %s17, 0
    %p142 = por %p140, %p141
    %p143 = scmp.ne.s32.totalorder %s135, %s137
    %p144 = scmp.eq.s32.totalorder %s22, 1
    %p145 = por %p143, %p144
    %p146 = scmp.ne.s32.totalorder %s137, %s138
    %p147 = scmp.eq.s32.totalorder %s22, 0
    %p148 = por %p146, %p147
    %p149 = scmp.ne.s32.totalorder %s137, %s138
    %p150 = scmp.eq.s32.totalorder %s23, 1
    %p151 = por %p149, %p150
    %p153 = scmp.ne.s32.totalorder %s138, %s152
    %p154 = scmp.eq.s32.totalorder %s23, 0
    %p155 = por %p153, %p154
    %s157 = sadd.s32 %s156, 1
    %p160 = scmp.eq.s32.totalorder %s17, 1
    %p161 = scmp.ne.s32.totalorder %s156, %s158
    %p162 = scmp.eq.s32.totalorder %s17, 0
    %p163 = por %p161, %p162
    %p164 = scmp.ne.s32.totalorder %s156, %s158
    %p165 = scmp.eq.s32.totalorder %s22, 1
    %p166 = por %p164, %p165
    %p167 = scmp.ne.s32.totalorder %s158, %s159
    %p168 = scmp.eq.s32.totalorder %s22, 0
    %p169 = por %p167, %p168
    %p170 = scmp.ne.s32.totalorder %s158, %s159
    %p171 = scmp.eq.s32.totalorder %s23, 1
    %p172 = por %p170, %p171
    %p174 = scmp.ne.s32.totalorder %s159, %s173
    %p175 = scmp.eq.s32.totalorder %s23, 0
    %p176 = por %p174, %p175
    %s178 = sadd.s32 %s177, 1
    %p181 = scmp.eq.s32.totalorder %s17, 1
    %p182 = scmp.ne.s32.totalorder %s177, %s179
    %p183 = scmp.eq.s32.totalorder %s17, 0
    %p184 = por %p182, %p183
    %p185 = scmp.ne.s32.totalorder %s177, %s179
    %p186 = scmp.eq.s32.totalorder %s22, 1
    %p187 = por %p185, %p186
    %p188 = scmp.ne.s32.totalorder %s179, %s180
    %p189 = scmp.eq.s32.totalorder %s22, 0
    %p190 = por %p188, %p189
    %p191 = scmp.ne.s32.totalorder %s179, %s180
    %p192 = scmp.eq.s32.totalorder %s23, 1
    %p193 = por %p191, %p192
    %p195 = scmp.ne.s32.totalorder %s180, %s194
    %p196 = scmp.eq.s32.totalorder %s23, 0
    %p197 = por %p195, %p196
    %s199 = sadd.s32 %s198, 1
    %p202 = scmp.eq.s32.totalorder %s17, 1
    %p203 = scmp.ne.s32.totalorder %s198, %s200
    %p204 = scmp.eq.s32.totalorder %s17, 0
    %p205 = por %p203, %p204
    %p206 = scmp.ne.s32.totalorder %s198, %s200
    %p207 = scmp.eq.s32.totalorder %s22, 1
    %p208 = por %p206, %p207
    %p209 = scmp.ne.s32.totalorder %s200, %s201
    %p210 = scmp.eq.s32.totalorder %s22, 0
    %p211 = por %p209, %p210
    %p212 = scmp.ne.s32.totalorder %s200, %s201
    %p213 = scmp.eq.s32.totalorder %s23, 1
    %p214 = por %p212, %p213
    %p216 = scmp.ne.s32.totalorder %s201, %s215
    %p217 = scmp.eq.s32.totalorder %s23, 0
    %p218 = por %p216, %p217
    %s220 = sadd.s32 %s219, 1
    %p223 = scmp.eq.s32.totalorder %s17, 1
    %p224 = scmp.ne.s32.totalorder %s219, %s221
    %p225 = scmp.eq.s32.totalorder %s17, 0
    %p226 = por %p224, %p225
    %p227 = scmp.ne.s32.totalorder %s219, %s221
    %p228 = scmp.eq.s32.totalorder %s22, 1
    %p229 = por %p227, %p228
    %p230 = scmp.ne.s32.totalorder %s221, %s222
    %p231 = scmp.eq.s32.totalorder %s22, 0
    %p232 = por %p230, %p231
    %p233 = scmp.ne.s32.totalorder %s221, %s222
    %p234 = scmp.eq.s32.totalorder %s23, 1
    %p235 = por %p233, %p234
    %p237 = scmp.ne.s32.totalorder %s222, %s236
    %p238 = scmp.eq.s32.totalorder %s23, 0
    %p239 = por %p237, %p238
    %s241 = sadd.s32 %s240, 1
    %p244 = scmp.eq.s32.totalorder %s17, 1
    %p245 = scmp.ne.s32.totalorder %s240, %s242
    %p246 = scmp.eq.s32.totalorder %s17, 0
    %p247 = por %p245, %p246
    %p248 = scmp.ne.s32.totalorder %s240, %s242
    %p249 = scmp.eq.s32.totalorder %s22, 1
    %p250 = por %p248, %p249
    %p251 = scmp.ne.s32.totalorder %s242, %s243
    %p252 = scmp.eq.s32.totalorder %s22, 0
    %p253 = por %p251, %p252
    %p254 = scmp.ne.s32.totalorder %s242, %s243
    %p255 = scmp.eq.s32.totalorder %s23, 1
    %p256 = por %p254, %p255
    %p258 = scmp.ne.s32.totalorder %s243, %s257
    %p259 = scmp.eq.s32.totalorder %s23, 0
    %p260 = por %p258, %p259
    %s261 = ssub.s32 %s17, %s24
    %p262 = scmp.eq.s32.totalorder %s261, 0
    %s264 = sadd.s32 %s263, 1
    %s265 = scalar_select %p262, %s263, %s264
    %p268 = pneg %p262
    %p269 = scmp.eq.s32.totalorder %s17, 1
    %p270 = por %p268, %p269
    %p271 = scmp.ne.s32.totalorder %s263, %s266
    %p272 = scmp.eq.s32.totalorder %s17, 0
    %p273 = por %p271, %p272
    %p274 = scmp.ne.s32.totalorder %s263, %s266
    %p275 = scmp.eq.s32.totalorder %s22, 1
    %p276 = por %p274, %p275
    %p277 = scmp.ne.s32.totalorder %s266, %s267
    %p278 = scmp.eq.s32.totalorder %s22, 0
    %p279 = por %p277, %p278
    %p280 = scmp.ne.s32.totalorder %s266, %s267
    %p281 = scmp.eq.s32.totalorder %s23, 1
    %p282 = por %p280, %p281
    %p284 = scmp.ne.s32.totalorder %s267, %s283
    %p285 = scmp.eq.s32.totalorder %s23, 0
    %p286 = por %p284, %p285
    %p287 = scmp.le.s32.totalorder 1, %s17
    %p288 = scmp.lt.s32.totalorder %s17, 3
    %p289 = pnand %p287, %p288
    %p290 = pneg %p289
    // Predicated region
    $region9: #{_lambda_.8} parent=5 // pred_check
      _
    $region10: #{_lambda_.8} parent=5 // pred_check_branch
      %292 = sbr.rel (%p289) target = $region12
    $region11: #{_lambda_.8} parent=5 // pred_region
      %s293 = ssub.s32 %s17, 1
      // Predicated region
      $region13: #{_lambda_.8} parent=11 // pred_check
        %p294 = pneg %p64
      $region14: #{_lambda_.8} parent=11 // pred_check_branch
        %296 = sbr.rel (%p294) target = $region16
      $region15: #{_lambda_.8} parent=11 // pred_region
        _
      $region16: #{_lambda_.8} parent=11 // pred_fallthru
        _
      // Predicated region
      $region17: #{_lambda_.8} parent=11 // pred_check
        %p297 = pneg %p85
      $region18: #{_lambda_.8} parent=11 // pred_check_branch
        %299 = sbr.rel (%p297) target = $region20
      $region19: #{_lambda_.8} parent=11 // pred_region
        _
      $region20: #{_lambda_.8} parent=11 // pred_fallthru
        _
      // Predicated region
      $region21: #{_lambda_.8} parent=11 // pred_check
        %p300 = pneg %p106
      $region22: #{_lambda_.8} parent=11 // pred_check_branch
        %302 = sbr.rel (%p300) target = $region24
      $region23: #{_lambda_.8} parent=11 // pred_region
        _
      $region24: #{_lambda_.8} parent=11 // pred_fallthru
        _
      // Predicated region
      $region25: #{_lambda_.8} parent=11 // pred_check
        %p303 = pneg %p127
      $region26: #{_lambda_.8} parent=11 // pred_check_branch
        %305 = sbr.rel (%p303) target = $region28
      $region27: #{_lambda_.8} parent=11 // pred_region
        _
      $region28: #{_lambda_.8} parent=11 // pred_fallthru
        _
      // Predicated region
      $region29: #{_lambda_.8} parent=11 // pred_check
        %p306 = pneg %p148
      $region30: #{_lambda_.8} parent=11 // pred_check_branch
        %308 = sbr.rel (%p306) target = $region32
      $region31: #{_lambda_.8} parent=11 // pred_region
        _
      $region32: #{_lambda_.8} parent=11 // pred_fallthru
        _
      // Predicated region
      $region33: #{_lambda_.8} parent=11 // pred_check
        %p309 = pneg %p169
      $region34: #{_lambda_.8} parent=11 // pred_check_branch
        %311 = sbr.rel (%p309) target = $region36
      $region35: #{_lambda_.8} parent=11 // pred_region
        _
      $region36: #{_lambda_.8} parent=11 // pred_fallthru
        _
      // Predicated region
      $region37: #{_lambda_.8} parent=11 // pred_check
        %p312 = pneg %p190
      $region38: #{_lambda_.8} parent=11 // pred_check_branch
        %314 = sbr.rel (%p312) target = $region40
      $region39: #{_lambda_.8} parent=11 // pred_region
        _
      $region40: #{_lambda_.8} parent=11 // pred_fallthru
        _
      // Predicated region
      $region41: #{_lambda_.8} parent=11 // pred_check
        %p315 = pneg %p211
      $region42: #{_lambda_.8} parent=11 // pred_check_branch
        %317 = sbr.rel (%p315) target = $region44
      $region43: #{_lambda_.8} parent=11 // pred_region
        _
      $region44: #{_lambda_.8} parent=11 // pred_fallthru
        _
      // Predicated region
      $region45: #{_lambda_.8} parent=11 // pred_check
        %p318 = pneg %p232
      $region46: #{_lambda_.8} parent=11 // pred_check_branch
        %320 = sbr.rel (%p318) target = $region48
      $region47: #{_lambda_.8} parent=11 // pred_region
        _
      $region48: #{_lambda_.8} parent=11 // pred_fallthru
        _
      // Predicated region
      $region49: #{_lambda_.8} parent=11 // pred_check
        %p321 = pneg %p253
      $region50: #{_lambda_.8} parent=11 // pred_check_branch
        %323 = sbr.rel (%p321) target = $region52
      $region51: #{_lambda_.8} parent=11 // pred_region
        _
      $region52: #{_lambda_.8} parent=11 // pred_fallthru
        _
    $region12: #{_lambda_.8} parent=5 // pred_fallthru
      _
    %p324 = scmp.lt.s32.totalorder %s17, 2
    // Predicated region
    $region53: #{_lambda_.8} parent=5 // pred_check
      %p325 = pneg %p324
    $region54: #{_lambda_.8} parent=5 // pred_check_branch
      %327 = sbr.rel (%p325) target = $region56
    $region55: #{_lambda_.8} parent=5 // pred_region
      // Predicated region
      $region57: #{_lambda_.8} parent=55 // pred_check
        %p328 = pneg %p37
      $region58: #{_lambda_.8} parent=55 // pred_check_branch
        %330 = sbr.rel (%p328) target = $region60
      $region59: #{_lambda_.8} parent=55 // pred_region
        %p331 = scmp.lt.s32.totalorder %s17, 1
        %s332 = scalar_select %p331, %s17, 1
        %s333 = smul.addr %s332, 4
        %s334 = smul.addr %s333, 4
        %s335 = scalar_lea.vmem %s0, %s334
      $region60: #{_lambda_.8} parent=55 // pred_fallthru
        _
    $region56: #{_lambda_.8} parent=5 // pred_fallthru
      _
    %p336 = scmp.le.s32.totalorder 1, %s17
    %p337 = scmp.lt.s32.totalorder %s17, 3
    %p338 = pnand %p336, %p337
    %p339 = pneg %p338
    // Predicated region
    $region61: #{_lambda_.8} parent=5 // pred_check
      _
    $region62: #{_lambda_.8} parent=5 // pred_check_branch
      %341 = sbr.rel (%p338) target = $region64
    $region63: #{_lambda_.8} parent=5 // pred_region
      %s342 = ssub.s32 %s17, 1
      %p343 = scmp.lt.s32.totalorder %s22, 1
      %s344 = scalar_select %p343, %s22, 1
      %s345 = smul.addr %s344, 4
      %s346 = smul.addr %s345, 4
      %s347 = scalar_lea.vmem %s0, %s346
      %p348 = pneg %p43
      %p349 = pneg %p40
      %p350 = pneg %p64
      %p351 = pneg %p61
      %p352 = pneg %p85
      %p353 = pneg %p82
      %p354 = pneg %p106
      %p355 = pneg %p103
      %p356 = pneg %p127
      %p357 = pneg %p124
      %p358 = pneg %p148
      %p359 = pneg %p145
      %p360 = pneg %p169
      %p361 = pneg %p166
      %p362 = pneg %p190
      %p363 = pneg %p187
      %p364 = pneg %p211
      %p365 = pneg %p208
      %p366 = pneg %p232
      %p367 = pneg %p229
      %p368 = pneg %p253
      %p369 = pneg %p250
      %p370 = pneg %p279
      %p371 = pneg %p276
      %p372 = scmp.lt.s32.totalorder %s22, 1
      %s373 = scalar_select %p372, %s22, 1
      %s374 = smul.addr %s373, 4
      %s375 = scalar_lea.vmem %s11, %s374
      %p376 = scmp.lt.s32.totalorder %s22, 1
      %s377 = scalar_select %p376, %s22, 1
      %s378 = smul.addr %s377, 4
      %s379 = smul.addr %s378, 4
      %s380 = scalar_lea.vmem %s0, %s379
      %p381 = scmp.lt.s32.totalorder %s22, 1
      %s382 = scalar_select %p381, %s22, 1
      %s383 = smul.addr %s382, 4
      %s384 = scalar_lea.vmem %s11, %s383
      %vm386 = vcmask 1040384
      %vm387 = vsmask.f32 256
      %vm388 = vmand %vm386, %vm387
      %v389 = vld [vmem:[#allocation2] sm:$0x1]
      %v390 = vsel %vm388, 0, %v389
      %391 = vst [vmem:[#allocation2] sm:$0x1] %v390
      %vm392 = vsmask.f32 7938
      %vm393 = vmand %vm386, %vm392
      %v394 = vld [vmem:[#allocation2 + $0x4] sm:$0x1]
      %v395 = vsel %vm393, 0, %v394
      %396 = vst [vmem:[#allocation2 + $0x4] sm:$0x1] %v395
      %v397 = vld [vmem:[%s380] sm:$0xf]
      %s398 = scalar_lea.vmem %s380, 8
      %v399 = vld [vmem:[%s398] sm:$0xf]
      %v400 = vld [vmem:[%s380 + $0x4] sm:$0x1]
      %v401 = vld [vmem:[%s1] sm:$0xf]
      %v402 = vld [vmem:[%s1 + $0x4] sm:$0xf]
      %v403 = vld [vmem:[%s1 + $0x8] sm:$0xf]
      %v404 = vld [vmem:[%s1 + $0xc] sm:$0xf]
      %v405 = vld [vmem:[%s1 + $0x10] sm:$0xf]
      %v406 = vld [vmem:[%s1 + $0x14] sm:$0xf]
      %v407 = vld [vmem:[%s1 + $0x18] sm:$0xf]
      %v408 = vld [vmem:[%s1 + $0x1c] sm:$0xf]
      %v409 = vld [vmem:[%s1 + $0x20] sm:$0xf]
      %v410 = vld [vmem:[%s1 + $0x24] sm:$0xf]
      %v411 = vld [vmem:[%s1 + $0x28] sm:$0xf]
      %v412 = vld [vmem:[%s1 + $0x2c] sm:$0xf]
      %v413 = vld [vmem:[%s1 + $0x30] sm:$0xf]
      %v414 = vld [vmem:[%s1 + $0x34] sm:$0xf]
      %v415 = vld [vmem:[%s1 + $0x38] sm:$0xf]
      %v416 = vld [vmem:[%s1 + $0x3c] sm:$0xf]
      %s417 = scalar_lea.vmem %s1, 64
      %v418 = vld [vmem:[%s417] sm:$0xf]
      %v419 = vld [vmem:[%s417 + $0x4] sm:$0xf]
      %v420 = vld [vmem:[%s417 + $0x8] sm:$0xf]
      %v421 = vld [vmem:[%s417 + $0xc] sm:$0xf]
      %v422 = vld [vmem:[%s417 + $0x10] sm:$0xf]
      %v423 = vld [vmem:[%s417 + $0x14] sm:$0xf]
      %v424 = vld [vmem:[%s417 + $0x18] sm:$0xf]
      %v425 = vld [vmem:[%s417 + $0x1c] sm:$0xf]
      %v426 = vld [vmem:[%s417 + $0x20] sm:$0xf]
      %v427 = vld [vmem:[%s417 + $0x24] sm:$0xf]
      %v428 = vld [vmem:[%s417 + $0x28] sm:$0xf]
      %v429 = vld [vmem:[%s417 + $0x2c] sm:$0xf]
      %v430 = vld [vmem:[%s417 + $0x30] sm:$0xf]
      %v431 = vld [vmem:[%s417 + $0x34] sm:$0xf]
      %v432 = vld [vmem:[%s417 + $0x38] sm:$0xf]
      %v433 = vld [vmem:[%s417 + $0x3c] sm:$0xf]
      %v450 = vunpack.c.l.b16 %v418
      %v451 = vunpack.c.l.b16 %v419
      %v452 = vunpack.c.l.b16 %v420
      %v453 = vunpack.c.l.b16 %v421
      %v454 = vunpack.c.l.b16 %v422
      %v455 = vunpack.c.l.b16 %v423
      %v456 = vunpack.c.l.b16 %v424
      %v457 = vunpack.c.l.b16 %v425
      %v458 = vunpack.c.l.b16 %v426
      %v459 = vunpack.c.l.b16 %v427
      %v460 = vunpack.c.l.b16 %v428
      %v461 = vunpack.c.l.b16 %v429
      %v462 = vunpack.c.l.b16 %v430
      %v463 = vunpack.c.l.b16 %v431
      %v464 = vunpack.c.l.b16 %v432
      %v465 = vunpack.c.l.b16 %v433
      %v466 = vpack.c.b16 %v451, %v450
      %v467 = vpack.c.b16 %v453, %v452
      %v468 = vpack.c.b16 %v455, %v454
      %v469 = vpack.c.b16 %v457, %v456
      %v470 = vpack.c.b16 %v459, %v458
      %v471 = vpack.c.b16 %v461, %v460
      %v472 = vpack.c.b16 %v463, %v462
      %v473 = vpack.c.b16 %v465, %v464
      %482 = vmatprep.subr.bf16.mxu0 0
      %483 = vmatpush1.bf16.msra.mxu0 %v473
      %484 = vmatprep.subr.bf16.mxu0 0
      %485 = vmatpush1.bf16.msra.mxu0 %v472
      %486 = vmatprep.subr.bf16.mxu0 0
      %487 = vmatpush1.bf16.msra.mxu0 %v471
      %488 = vmatprep.subr.bf16.mxu0 0
      %489 = vmatpush1.bf16.msra.mxu0 %v470
      %490 = vmatprep.subr.bf16.mxu0 0
      %491 = vmatpush1.bf16.msra.mxu0 %v469
      %492 = vmatprep.subr.bf16.mxu0 0
      %493 = vmatpush1.bf16.msra.mxu0 %v468
      %494 = vmatprep.subr.bf16.mxu0 0
      %495 = vmatpush1.bf16.msra.mxu0 %v467
      %496 = vmatprep.subr.bf16.mxu0 0
      %497 = vmatpush1.bf16.msra.mxu0 %v466
      %498 = vmatprep.subr.bf16.mxu0 0
      %499 = vmatpush2.bf16.msra.mxu0 0
      %500 = vmatprep.subr.bf16.mxu0 0
      %501 = vmatpush2.bf16.msra.mxu0 0
      %502 = vmatprep.subr.bf16.mxu0 0
      %503 = vmatpush2.bf16.msra.mxu0 0
      %504 = vmatprep.subr.bf16.mxu0 0
      %505 = vmatpush2.bf16.msra.mxu0 0
      %506 = vmatprep.subr.bf16.mxu0 0
      %507 = vmatpush2.bf16.msra.mxu0 0
      %508 = vmatprep.subr.bf16.mxu0 0
      %509 = vmatpush2.bf16.msra.mxu0 0
      %510 = vmatprep.subr.bf16.mxu0 0
      %511 = vmatpush2.bf16.msra.mxu0 0
      %512 = vmatprep.subr.bf16.mxu0 0
      %513 = vmatpush2.bf16.msra.mxu0 0
      %514 = vmatprep.mubr.bf16.mxu0 0
      %515 = vmatmul.mubr.bf16.gmra.mxu0 %v399
      %v516 = vpop.f32.mrf.mxu0
      %v517 = vadd.f32 0.0, %v516
      %v518 = vpop.f32.mrf.mxu0
      %v519 = vpop.f32.mrf.mxu0
      %v520 = vpop.f32.mrf.mxu0
      %521 = vdwg.mxu0
      %v538 = vunpack.c.l.b16 %v401
      %v539 = vunpack.c.l.b16 %v402
      %v540 = vunpack.c.l.b16 %v403
      %v541 = vunpack.c.l.b16 %v404
      %v542 = vunpack.c.l.b16 %v405
      %v543 = vunpack.c.l.b16 %v406
      %v544 = vunpack.c.l.b16 %v407
      %v545 = vunpack.c.l.b16 %v408
      %v546 = vunpack.c.l.b16 %v409
      %v547 = vunpack.c.l.b16 %v410
      %v548 = vunpack.c.l.b16 %v411
      %v549 = vunpack.c.l.b16 %v412
      %v550 = vunpack.c.l.b16 %v413
      %v551 = vunpack.c.l.b16 %v414
      %v552 = vunpack.c.l.b16 %v415
      %v553 = vunpack.c.l.b16 %v416
      %v554 = vpack.c.b16 %v539, %v538
      %v555 = vpack.c.b16 %v541, %v540
      %v556 = vpack.c.b16 %v543, %v542
      %v557 = vpack.c.b16 %v545, %v544
      %v558 = vpack.c.b16 %v547, %v546
      %v559 = vpack.c.b16 %v549, %v548
      %v560 = vpack.c.b16 %v551, %v550
      %v561 = vpack.c.b16 %v553, %v552
      %570 = vmatprep.subr.bf16.mxu0 0
      %571 = vmatpush1.bf16.msra.mxu0 %v561
      %572 = vmatprep.subr.bf16.mxu0 0
      %573 = vmatpush1.bf16.msra.mxu0 %v560
      %574 = vmatprep.subr.bf16.mxu0 0
      %575 = vmatpush1.bf16.msra.mxu0 %v559
      %576 = vmatprep.subr.bf16.mxu0 0
      %577 = vmatpush1.bf16.msra.mxu0 %v558
      %578 = vmatprep.subr.bf16.mxu0 0
      %579 = vmatpush1.bf16.msra.mxu0 %v557
      %580 = vmatprep.subr.bf16.mxu0 0
      %581 = vmatpush1.bf16.msra.mxu0 %v556
      %582 = vmatprep.subr.bf16.mxu0 0
      %583 = vmatpush1.bf16.msra.mxu0 %v555
      %584 = vmatprep.subr.bf16.mxu0 0
      %585 = vmatpush1.bf16.msra.mxu0 %v554
      %586 = vmatprep.subr.bf16.mxu0 0
      %587 = vmatpush2.bf16.msra.mxu0 0
      %588 = vmatprep.subr.bf16.mxu0 0
      %589 = vmatpush2.bf16.msra.mxu0 0
      %590 = vmatprep.subr.bf16.mxu0 0
      %591 = vmatpush2.bf16.msra.mxu0 0
      %592 = vmatprep.subr.bf16.mxu0 0
      %593 = vmatpush2.bf16.msra.mxu0 0
      %594 = vmatprep.subr.bf16.mxu0 0
      %595 = vmatpush2.bf16.msra.mxu0 0
      %596 = vmatprep.subr.bf16.mxu0 0
      %597 = vmatpush2.bf16.msra.mxu0 0
      %598 = vmatprep.subr.bf16.mxu0 0
      %599 = vmatpush2.bf16.msra.mxu0 0
      %600 = vmatprep.subr.bf16.mxu0 0
      %601 = vmatpush2.bf16.msra.mxu0 0
      %602 = vmatprep.mubr.bf16.mxu0 0
      %603 = vmatmul.mubr.bf16.gmra.mxu0 %v397
      %v604 = vpop.f32.mrf.mxu0
      %v605 = vadd.f32 %v517, %v604
      %v606 = vpop.f32.mrf.mxu0
      %v607 = vpop.f32.mrf.mxu0
      %v608 = vpop.f32.mrf.mxu0
      %609 = vdwg.mxu0
      %s610 = scalar_lea.vmem %s1, 128
      %v611 = vld [vmem:[%s610] sm:$0xf]
      %v612 = vld [vmem:[%s610 + $0x4] sm:$0xf]
      %v613 = vld [vmem:[%s610 + $0x8] sm:$0xf]
      %v614 = vld [vmem:[%s610 + $0xc] sm:$0xf]
      %v615 = vld [vmem:[%s610 + $0x10] sm:$0xf]
      %v616 = vld [vmem:[%s610 + $0x14] sm:$0xf]
      %v617 = vld [vmem:[%s610 + $0x18] sm:$0xf]
      %v618 = vld [vmem:[%s610 + $0x1c] sm:$0xf]
      %v619 = vld [vmem:[%s610 + $0x20] sm:$0xf]
      %v620 = vld [vmem:[%s610 + $0x24] sm:$0xf]
      %v621 = vld [vmem:[%s610 + $0x28] sm:$0xf]
      %v622 = vld [vmem:[%s610 + $0x2c] sm:$0xf]
      %v623 = vld [vmem:[%s610 + $0x30] sm:$0xf]
      %v624 = vld [vmem:[%s610 + $0x34] sm:$0xf]
      %v625 = vld [vmem:[%s610 + $0x38] sm:$0xf]
      %v626 = vld [vmem:[%s610 + $0x3c] sm:$0xf]
      %v629 = vunpack.c.l.b16 %v397
      %v630 = vunpack.c.l.b16 %v400
      %v631 = vpack.c.b16 %v630, %v629
      %v633 = vshrl.u32 %v631, 16
      %v635 = vshll.u32 %v631, 16
      %v637 = vrot.slane %v635, 1
      %v638 = vor.u32 %v633, %v637
      %v656 = vunpack.c.l.b16 %v611
      %v657 = vunpack.c.l.b16 %v612
      %v658 = vunpack.c.l.b16 %v613
      %v659 = vunpack.c.l.b16 %v614
      %v660 = vunpack.c.l.b16 %v615
      %v661 = vunpack.c.l.b16 %v616
      %v662 = vunpack.c.l.b16 %v617
      %v663 = vunpack.c.l.b16 %v618
      %v664 = vunpack.c.l.b16 %v619
      %v665 = vunpack.c.l.b16 %v620
      %v666 = vunpack.c.l.b16 %v621
      %v667 = vunpack.c.l.b16 %v622
      %v668 = vunpack.c.l.b16 %v623
      %v669 = vunpack.c.l.b16 %v624
      %v670 = vunpack.c.l.b16 %v625
      %v671 = vunpack.c.l.b16 %v626
      %v672 = vpack.c.b16 %v657, %v656
      %v673 = vpack.c.b16 %v659, %v658
      %v674 = vpack.c.b16 %v661, %v660
      %v675 = vpack.c.b16 %v663, %v662
      %v676 = vpack.c.b16 %v665, %v664
      %v677 = vpack.c.b16 %v667, %v666
      %v678 = vpack.c.b16 %v669, %v668
      %v679 = vpack.c.b16 %v671, %v670
      %688 = vmatprep.subr.bf16.mxu0 0
      %689 = vmatpush1.bf16.msra.mxu0 %v679
      %690 = vmatprep.subr.bf16.mxu0 0
      %691 = vmatpush1.bf16.msra.mxu0 %v678
      %692 = vmatprep.subr.bf16.mxu0 0
      %693 = vmatpush1.bf16.msra.mxu0 %v677
      %694 = vmatprep.subr.bf16.mxu0 0
      %695 = vmatpush1.bf16.msra.mxu0 %v676
      %696 = vmatprep.subr.bf16.mxu0 0
      %697 = vmatpush1.bf16.msra.mxu0 %v675
      %698 = vmatprep.subr.bf16.mxu0 0
      %699 = vmatpush1.bf16.msra.mxu0 %v674
      %700 = vmatprep.subr.bf16.mxu0 0
      %701 = vmatpush1.bf16.msra.mxu0 %v673
      %702 = vmatprep.subr.bf16.mxu0 0
      %703 = vmatpush1.bf16.msra.mxu0 %v672
      %704 = vmatprep.subr.bf16.mxu0 0
      %705 = vmatpush2.bf16.msra.mxu0 0
      %706 = vmatprep.subr.bf16.mxu0 0
      %707 = vmatpush2.bf16.msra.mxu0 0
      %708 = vmatprep.subr.bf16.mxu0 0
      %709 = vmatpush2.bf16.msra.mxu0 0
      %710 = vmatprep.subr.bf16.mxu0 0
      %711 = vmatpush2.bf16.msra.mxu0 0
      %712 = vmatprep.subr.bf16.mxu0 0
      %713 = vmatpush2.bf16.msra.mxu0 0
      %714 = vmatprep.subr.bf16.mxu0 0
      %715 = vmatpush2.bf16.msra.mxu0 0
      %716 = vmatprep.subr.bf16.mxu0 0
      %717 = vmatpush2.bf16.msra.mxu0 0
      %718 = vmatprep.subr.bf16.mxu0 0
      %719 = vmatpush2.bf16.msra.mxu0 0
      %720 = vmatprep.mubr.bf16.mxu0 0
      %721 = vmatmul.mubr.bf16.gmra.mxu0 %v638
      %v722 = vpop.f32.mrf.mxu0
      %v723 = vadd.f32 0.0, %v722
      %v724 = vpop.f32.mrf.mxu0
      %v725 = vpop.f32.mrf.mxu0
      %v726 = vpop.f32.mrf.mxu0
      %727 = vdwg.mxu0
      %v728 = vadd.f32 %v605, %v723
      %v729 = vld [vmem:[%s2] sm:$0x1]
      %v731 = vlaneseq
      %v732 = vshrl.u32 %v731, 7
      %v733 = vsub.s32 0, %v732
      %v734 = vrot.slane %v729, %v733
      %v736 = vadd.f32 %v728, %v734
      %v737 = vmax.f32 %v736, 0.0
      %v738 = vld [vmem:[%s5] sm:$0xf]
      %v739 = vld [vmem:[%s5 + $0x4] sm:$0xf]
      %v740 = vld [vmem:[%s5 + $0x8] sm:$0xf]
      %v741 = vld [vmem:[%s5 + $0xc] sm:$0xf]
      %v742 = vld [vmem:[%s5 + $0x10] sm:$0xf]
      %v743 = vld [vmem:[%s5 + $0x14] sm:$0xf]
      %v744 = vld [vmem:[%s5 + $0x18] sm:$0xf]
      %v745 = vld [vmem:[%s5 + $0x1c] sm:$0xf]
      %v746 = vld [vmem:[%s5 + $0x20] sm:$0xf]
      %v747 = vld [vmem:[%s5 + $0x24] sm:$0xf]
      %v748 = vld [vmem:[%s5 + $0x28] sm:$0xf]
      %v749 = vld [vmem:[%s5 + $0x2c] sm:$0xf]
      %v750 = vld [vmem:[%s5 + $0x30] sm:$0xf]
      %v751 = vld [vmem:[%s5 + $0x34] sm:$0xf]
      %v752 = vld [vmem:[%s5 + $0x38] sm:$0xf]
      %v753 = vld [vmem:[%s5 + $0x3c] sm:$0xf]
      %v754 = vld [vmem:[%s6] sm:$0x1]
      %v756 = vlaneseq
      %v757 = vshrl.u32 %v756, 7
      %v758 = vsub.s32 0, %v757
      %v759 = vrot.slane %v754, %v758
      %v777 = vunpack.c.l.b16 %v738
      %v778 = vunpack.c.l.b16 %v739
      %v779 = vunpack.c.l.b16 %v740
      %v780 = vunpack.c.l.b16 %v741
      %v781 = vunpack.c.l.b16 %v742
      %v782 = vunpack.c.l.b16 %v743
      %v783 = vunpack.c.l.b16 %v744
      %v784 = vunpack.c.l.b16 %v745
      %v785 = vunpack.c.l.b16 %v746
      %v786 = vunpack.c.l.b16 %v747
      %v787 = vunpack.c.l.b16 %v748
      %v788 = vunpack.c.l.b16 %v749
      %v789 = vunpack.c.l.b16 %v750
      %v790 = vunpack.c.l.b16 %v751
      %v791 = vunpack.c.l.b16 %v752
      %v792 = vunpack.c.l.b16 %v753
      %v793 = vpack.c.b16 %v778, %v777
      %v794 = vpack.c.b16 %v780, %v779
      %v795 = vpack.c.b16 %v782, %v781
      %v796 = vpack.c.b16 %v784, %v783
      %v797 = vpack.c.b16 %v786, %v785
      %v798 = vpack.c.b16 %v788, %v787
      %v799 = vpack.c.b16 %v790, %v789
      %v800 = vpack.c.b16 %v792, %v791
      %809 = vmatprep.subr.bf16.mxu0 0
      %810 = vmatpush1.bf16.msra.mxu0 %v800
      %811 = vmatprep.subr.bf16.mxu0 0
      %812 = vmatpush1.bf16.msra.mxu0 %v799
      %813 = vmatprep.subr.bf16.mxu0 0
      %814 = vmatpush1.bf16.msra.mxu0 %v798
      %815 = vmatprep.subr.bf16.mxu0 0
      %816 = vmatpush1.bf16.msra.mxu0 %v797
      %817 = vmatprep.subr.bf16.mxu0 0
      %818 = vmatpush1.bf16.msra.mxu0 %v796
      %819 = vmatprep.subr.bf16.mxu0 0
      %820 = vmatpush1.bf16.msra.mxu0 %v795
      %821 = vmatprep.subr.bf16.mxu0 0
      %822 = vmatpush1.bf16.msra.mxu0 %v794
      %823 = vmatprep.subr.bf16.mxu0 0
      %824 = vmatpush1.bf16.msra.mxu0 %v793
      %825 = vmatprep.subr.bf16.mxu0 0
      %826 = vmatpush2.bf16.msra.mxu0 0
      %827 = vmatprep.subr.bf16.mxu0 0
      %828 = vmatpush2.bf16.msra.mxu0 0
      %829 = vmatprep.subr.bf16.mxu0 0
      %830 = vmatpush2.bf16.msra.mxu0 0
      %831 = vmatprep.subr.bf16.mxu0 0
      %832 = vmatpush2.bf16.msra.mxu0 0
      %833 = vmatprep.subr.bf16.mxu0 0
      %834 = vmatpush2.bf16.msra.mxu0 0
      %835 = vmatprep.subr.bf16.mxu0 0
      %836 = vmatpush2.bf16.msra.mxu0 0
      %837 = vmatprep.subr.bf16.mxu0 0
      %838 = vmatpush2.bf16.msra.mxu0 0
      %839 = vmatprep.subr.bf16.mxu0 0
      %840 = vmatpush2.bf16.msra.mxu0 0
      %841 = vmatprep.mubr.bf16.mxu0 0
      %842 = vmatmul.mubr.bf16.gmra.mxu0 %v399
      %v843 = vpop.f32.mrf.mxu0
      %v844 = vadd.f32 %v759, %v843
      %v845 = vpop.f32.mrf.mxu0
      %v846 = vpop.f32.mrf.mxu0
      %v847 = vpop.f32.mrf.mxu0
      %848 = vdwg.mxu0
      %v849 = vpack.c.bf16 %v737, %v737
      %v851 = vunpack.c.l.b16 %v849
      %v852 = vpack.c.b16 %v851, %v851
      %v854 = vshrl.u32 %v852, 16
      %v856 = vrot.slane %v854, 7
      %v857 = vshll.u32 %v852, 16
      %v859 = vor.u32 %v856, %v857
      %v860 = vrot.slane %v856, 4
      %vm863 = vcmask 1043456
      %vm864 = vmand %vm863, %vm392
      %v865 = vld [vmem:[#allocation2] sm:$0xf]
      %v866 = vsel %vm864, %v859, %v865
      %867 = vst [vmem:[#allocation2] sm:$0xf] %v866
      %v868 = vld [vmem:[#allocation2 + $0x4] sm:$0x1]
      %v869 = vsel %vm388, %v860, %v868
      %870 = vst [vmem:[#allocation2 + $0x4] sm:$0x1] %v869
      %v871 = vld [vmem:[#allocation2] sm:$0xf]
      %v872 = vld [vmem:[#allocation2 + $0x4] sm:$0x1]
      %v873 = vld [vmem:[#allocation2] sm:$0xe]
      %v874 = vld [vmem:[%s3] sm:$0xf]
      %v875 = vld [vmem:[%s3 + $0x4] sm:$0xf]
      %v876 = vld [vmem:[%s3 + $0x8] sm:$0xf]
      %v877 = vld [vmem:[%s3 + $0xc] sm:$0xf]
      %v878 = vld [vmem:[%s3 + $0x10] sm:$0xf]
      %v879 = vld [vmem:[%s3 + $0x14] sm:$0xf]
      %v880 = vld [vmem:[%s3 + $0x18] sm:$0xf]
      %v881 = vld [vmem:[%s3 + $0x1c] sm:$0xf]
      %v882 = vld [vmem:[%s3 + $0x20] sm:$0xf]
      %v883 = vld [vmem:[%s3 + $0x24] sm:$0xf]
      %v884 = vld [vmem:[%s3 + $0x28] sm:$0xf]
      %v885 = vld [vmem:[%s3 + $0x2c] sm:$0xf]
      %v886 = vld [vmem:[%s3 + $0x30] sm:$0xf]
      %v887 = vld [vmem:[%s3 + $0x34] sm:$0xf]
      %v888 = vld [vmem:[%s3 + $0x38] sm:$0xf]
      %v889 = vld [vmem:[%s3 + $0x3c] sm:$0xf]
      %s890 = scalar_lea.vmem %s3, 64
      %v891 = vld [vmem:[%s890] sm:$0xf]
      %v892 = vld [vmem:[%s890 + $0x4] sm:$0xf]
      %v893 = vld [vmem:[%s890 + $0x8] sm:$0xf]
      %v894 = vld [vmem:[%s890 + $0xc] sm:$0xf]
      %v895 = vld [vmem:[%s890 + $0x10] sm:$0xf]
      %v896 = vld [vmem:[%s890 + $0x14] sm:$0xf]
      %v897 = vld [vmem:[%s890 + $0x18] sm:$0xf]
      %v898 = vld [vmem:[%s890 + $0x1c] sm:$0xf]
      %v899 = vld [vmem:[%s890 + $0x20] sm:$0xf]
      %v900 = vld [vmem:[%s890 + $0x24] sm:$0xf]
      %v901 = vld [vmem:[%s890 + $0x28] sm:$0xf]
      %v902 = vld [vmem:[%s890 + $0x2c] sm:$0xf]
      %v903 = vld [vmem:[%s890 + $0x30] sm:$0xf]
      %v904 = vld [vmem:[%s890 + $0x34] sm:$0xf]
      %v905 = vld [vmem:[%s890 + $0x38] sm:$0xf]
      %v906 = vld [vmem:[%s890 + $0x3c] sm:$0xf]
      %v909 = vunpack.c.l.b16 %v871
      %v910 = vunpack.c.l.b16 %v872
      %v911 = vpack.c.b16 %v910, %v909
      %v913 = vshrl.u32 %v911, 16
      %v915 = vshll.u32 %v911, 16
      %v917 = vrot.slane %v915, 1
      %v918 = vor.u32 %v913, %v917
      %v936 = vunpack.c.l.b16 %v891
      %v937 = vunpack.c.l.b16 %v892
      %v938 = vunpack.c.l.b16 %v893
      %v939 = vunpack.c.l.b16 %v894
      %v940 = vunpack.c.l.b16 %v895
      %v941 = vunpack.c.l.b16 %v896
      %v942 = vunpack.c.l.b16 %v897
      %v943 = vunpack.c.l.b16 %v898
      %v944 = vunpack.c.l.b16 %v899
      %v945 = vunpack.c.l.b16 %v900
      %v946 = vunpack.c.l.b16 %v901
      %v947 = vunpack.c.l.b16 %v902
      %v948 = vunpack.c.l.b16 %v903
      %v949 = vunpack.c.l.b16 %v904
      %v950 = vunpack.c.l.b16 %v905
      %v951 = vunpack.c.l.b16 %v906
      %v952 = vpack.c.b16 %v937, %v936
      %v953 = vpack.c.b16 %v939, %v938
      %v954 = vpack.c.b16 %v941, %v940
      %v955 = vpack.c.b16 %v943, %v942
      %v956 = vpack.c.b16 %v945, %v944
      %v957 = vpack.c.b16 %v947, %v946
      %v958 = vpack.c.b16 %v949, %v948
      %v959 = vpack.c.b16 %v951, %v950
      %968 = vmatprep.subr.bf16.mxu0 0
      %969 = vmatpush1.bf16.msra.mxu0 %v959
      %970 = vmatprep.subr.bf16.mxu0 0
      %971 = vmatpush1.bf16.msra.mxu0 %v958
      %972 = vmatprep.subr.bf16.mxu0 0
      %973 = vmatpush1.bf16.msra.mxu0 %v957
      %974 = vmatprep.subr.bf16.mxu0 0
      %975 = vmatpush1.bf16.msra.mxu0 %v956
      %976 = vmatprep.subr.bf16.mxu0 0
      %977 = vmatpush1.bf16.msra.mxu0 %v955
      %978 = vmatprep.subr.bf16.mxu0 0
      %979 = vmatpush1.bf16.msra.mxu0 %v954
      %980 = vmatprep.subr.bf16.mxu0 0
      %981 = vmatpush1.bf16.msra.mxu0 %v953
      %982 = vmatprep.subr.bf16.mxu0 0
      %983 = vmatpush1.bf16.msra.mxu0 %v952
      %984 = vmatprep.subr.bf16.mxu0 0
      %985 = vmatpush2.bf16.msra.mxu0 0
      %986 = vmatprep.subr.bf16.mxu0 0
      %987 = vmatpush2.bf16.msra.mxu0 0
      %988 = vmatprep.subr.bf16.mxu0 0
      %989 = vmatpush2.bf16.msra.mxu0 0
      %990 = vmatprep.subr.bf16.mxu0 0
      %991 = vmatpush2.bf16.msra.mxu0 0
      %992 = vmatprep.subr.bf16.mxu0 0
      %993 = vmatpush2.bf16.msra.mxu0 0
      %994 = vmatprep.subr.bf16.mxu0 0
      %995 = vmatpush2.bf16.msra.mxu0 0
      %996 = vmatprep.subr.bf16.mxu0 0
      %997 = vmatpush2.bf16.msra.mxu0 0
      %998 = vmatprep.subr.bf16.mxu0 0
      %999 = vmatpush2.bf16.msra.mxu0 0
      %1000 = vmatprep.mubr.bf16.mxu0 0
      %1001 = vmatmul.mubr.bf16.gmra.mxu0 %v918
      %v1002 = vpop.f32.mrf.mxu0
      %v1003 = vadd.f32 0.0, %v1002
      %v1004 = vpop.f32.mrf.mxu0
      %v1005 = vpop.f32.mrf.mxu0
      %v1006 = vpop.f32.mrf.mxu0
      %1007 = vdwg.mxu0
      %v1024 = vunpack.c.l.b16 %v874
      %v1025 = vunpack.c.l.b16 %v875
      %v1026 = vunpack.c.l.b16 %v876
      %v1027 = vunpack.c.l.b16 %v877
      %v1028 = vunpack.c.l.b16 %v878
      %v1029 = vunpack.c.l.b16 %v879
      %v1030 = vunpack.c.l.b16 %v880
      %v1031 = vunpack.c.l.b16 %v881
      %v1032 = vunpack.c.l.b16 %v882
      %v1033 = vunpack.c.l.b16 %v883
      %v1034 = vunpack.c.l.b16 %v884
      %v1035 = vunpack.c.l.b16 %v885
      %v1036 = vunpack.c.l.b16 %v886
      %v1037 = vunpack.c.l.b16 %v887
      %v1038 = vunpack.c.l.b16 %v888
      %v1039 = vunpack.c.l.b16 %v889
      %v1040 = vpack.c.b16 %v1025, %v1024
      %v1041 = vpack.c.b16 %v1027, %v1026
      %v1042 = vpack.c.b16 %v1029, %v1028
      %v1043 = vpack.c.b16 %v1031, %v1030
      %v1044 = vpack.c.b16 %v1033, %v1032
      %v1045 = vpack.c.b16 %v1035, %v1034
      %v1046 = vpack.c.b16 %v1037, %v1036
      %v1047 = vpack.c.b16 %v1039, %v1038
      %1056 = vmatprep.subr.bf16.mxu0 0
      %1057 = vmatpush1.bf16.msra.mxu0 %v1047
      %1058 = vmatprep.subr.bf16.mxu0 0
      %1059 = vmatpush1.bf16.msra.mxu0 %v1046
      %1060 = vmatprep.subr.bf16.mxu0 0
      %1061 = vmatpush1.bf16.msra.mxu0 %v1045
      %1062 = vmatprep.subr.bf16.mxu0 0
      %1063 = vmatpush1.bf16.msra.mxu0 %v1044
      %1064 = vmatprep.subr.bf16.mxu0 0
      %1065 = vmatpush1.bf16.msra.mxu0 %v1043
      %1066 = vmatprep.subr.bf16.mxu0 0
      %1067 = vmatpush1.bf16.msra.mxu0 %v1042
      %1068 = vmatprep.subr.bf16.mxu0 0
      %1069 = vmatpush1.bf16.msra.mxu0 %v1041
      %1070 = vmatprep.subr.bf16.mxu0 0
      %1071 = vmatpush1.bf16.msra.mxu0 %v1040
      %1072 = vmatprep.subr.bf16.mxu0 0
      %1073 = vmatpush2.bf16.msra.mxu0 0
      %1074 = vmatprep.subr.bf16.mxu0 0
      %1075 = vmatpush2.bf16.msra.mxu0 0
      %1076 = vmatprep.subr.bf16.mxu0 0
      %1077 = vmatpush2.bf16.msra.mxu0 0
      %1078 = vmatprep.subr.bf16.mxu0 0
      %1079 = vmatpush2.bf16.msra.mxu0 0
      %1080 = vmatprep.subr.bf16.mxu0 0
      %1081 = vmatpush2.bf16.msra.mxu0 0
      %1082 = vmatprep.subr.bf16.mxu0 0
      %1083 = vmatpush2.bf16.msra.mxu0 0
      %1084 = vmatprep.subr.bf16.mxu0 0
      %1085 = vmatpush2.bf16.msra.mxu0 0
      %1086 = vmatprep.subr.bf16.mxu0 0
      %1087 = vmatpush2.bf16.msra.mxu0 0
      %1088 = vmatprep.mubr.bf16.mxu0 0
      %1089 = vmatmul.mubr.bf16.gmra.mxu0 %v871
      %v1090 = vpop.f32.mrf.mxu0
      %v1091 = vadd.f32 %v1003, %v1090
      %v1092 = vpop.f32.mrf.mxu0
      %v1093 = vpop.f32.mrf.mxu0
      %v1094 = vpop.f32.mrf.mxu0
      %1095 = vdwg.mxu0
      %s1096 = scalar_lea.vmem %s3, 128
      %v1097 = vld [vmem:[%s1096] sm:$0xf]
      %v1098 = vld [vmem:[%s1096 + $0x4] sm:$0xf]
      %v1099 = vld [vmem:[%s1096 + $0x8] sm:$0xf]
      %v1100 = vld [vmem:[%s1096 + $0xc] sm:$0xf]
      %v1101 = vld [vmem:[%s1096 + $0x10] sm:$0xf]
      %v1102 = vld [vmem:[%s1096 + $0x14] sm:$0xf]
      %v1103 = vld [vmem:[%s1096 + $0x18] sm:$0xf]
      %v1104 = vld [vmem:[%s1096 + $0x1c] sm:$0xf]
      %v1105 = vld [vmem:[%s1096 + $0x20] sm:$0xf]
      %v1106 = vld [vmem:[%s1096 + $0x24] sm:$0xf]
      %v1107 = vld [vmem:[%s1096 + $0x28] sm:$0xf]
      %v1108 = vld [vmem:[%s1096 + $0x2c] sm:$0xf]
      %v1109 = vld [vmem:[%s1096 + $0x30] sm:$0xf]
      %v1110 = vld [vmem:[%s1096 + $0x34] sm:$0xf]
      %v1111 = vld [vmem:[%s1096 + $0x38] sm:$0xf]
      %v1112 = vld [vmem:[%s1096 + $0x3c] sm:$0xf]
      %v1114 = vunpack.c.l.b16 %v873
      %v1115 = vpack.c.b16 %v910, %v1114
      %v1116 = vrot.slane %v1115, 1
      %v1134 = vunpack.c.l.b16 %v1097
      %v1135 = vunpack.c.l.b16 %v1098
      %v1136 = vunpack.c.l.b16 %v1099
      %v1137 = vunpack.c.l.b16 %v1100
      %v1138 = vunpack.c.l.b16 %v1101
      %v1139 = vunpack.c.l.b16 %v1102
      %v1140 = vunpack.c.l.b16 %v1103
      %v1141 = vunpack.c.l.b16 %v1104
      %v1142 = vunpack.c.l.b16 %v1105
      %v1143 = vunpack.c.l.b16 %v1106
      %v1144 = vunpack.c.l.b16 %v1107
      %v1145 = vunpack.c.l.b16 %v1108
      %v1146 = vunpack.c.l.b16 %v1109
      %v1147 = vunpack.c.l.b16 %v1110
      %v1148 = vunpack.c.l.b16 %v1111
      %v1149 = vunpack.c.l.b16 %v1112
      %v1150 = vpack.c.b16 %v1135, %v1134
      %v1151 = vpack.c.b16 %v1137, %v1136
      %v1152 = vpack.c.b16 %v1139, %v1138
      %v1153 = vpack.c.b16 %v1141, %v1140
      %v1154 = vpack.c.b16 %v1143, %v1142
      %v1155 = vpack.c.b16 %v1145, %v1144
      %v1156 = vpack.c.b16 %v1147, %v1146
      %v1157 = vpack.c.b16 %v1149, %v1148
      %1166 = vmatprep.subr.bf16.mxu0 0
      %1167 = vmatpush1.bf16.msra.mxu0 %v1157
      %1168 = vmatprep.subr.bf16.mxu0 0
      %1169 = vmatpush1.bf16.msra.mxu0 %v1156
      %1170 = vmatprep.subr.bf16.mxu0 0
      %1171 = vmatpush1.bf16.msra.mxu0 %v1155
      %1172 = vmatprep.subr.bf16.mxu0 0
      %1173 = vmatpush1.bf16.msra.mxu0 %v1154
      %1174 = vmatprep.subr.bf16.mxu0 0
      %1175 = vmatpush1.bf16.msra.mxu0 %v1153
      %1176 = vmatprep.subr.bf16.mxu0 0
      %1177 = vmatpush1.bf16.msra.mxu0 %v1152
      %1178 = vmatprep.subr.bf16.mxu0 0
      %1179 = vmatpush1.bf16.msra.mxu0 %v1151
      %1180 = vmatprep.subr.bf16.mxu0 0
      %1181 = vmatpush1.bf16.msra.mxu0 %v1150
      %1182 = vmatprep.subr.bf16.mxu0 0
      %1183 = vmatpush2.bf16.msra.mxu0 0
      %1184 = vmatprep.subr.bf16.mxu0 0
      %1185 = vmatpush2.bf16.msra.mxu0 0
      %1186 = vmatprep.subr.bf16.mxu0 0
      %1187 = vmatpush2.bf16.msra.mxu0 0
      %1188 = vmatprep.subr.bf16.mxu0 0
      %1189 = vmatpush2.bf16.msra.mxu0 0
      %1190 = vmatprep.subr.bf16.mxu0 0
      %1191 = vmatpush2.bf16.msra.mxu0 0
      %1192 = vmatprep.subr.bf16.mxu0 0
      %1193 = vmatpush2.bf16.msra.mxu0 0
      %1194 = vmatprep.subr.bf16.mxu0 0
      %1195 = vmatpush2.bf16.msra.mxu0 0
      %1196 = vmatprep.subr.bf16.mxu0 0
      %1197 = vmatpush2.bf16.msra.mxu0 0
      %1198 = vmatprep.mubr.bf16.mxu0 0
      %1199 = vmatmul.mubr.bf16.gmra.mxu0 %v1116
      %v1200 = vpop.f32.mrf.mxu0
      %v1201 = vadd.f32 0.0, %v1200
      %v1202 = vpop.f32.mrf.mxu0
      %v1203 = vpop.f32.mrf.mxu0
      %v1204 = vpop.f32.mrf.mxu0
      %1205 = vdwg.mxu0
      %v1206 = vadd.f32 %v1091, %v1201
      %v1207 = vld [vmem:[%s4] sm:$0x1]
      %v1209 = vlaneseq
      %v1210 = vshrl.u32 %v1209, 7
      %v1211 = vsub.s32 0, %v1210
      %v1212 = vrot.slane %v1207, %v1211
      %v1214 = vadd.f32 %v1206, %v1212
      %v1215 = vadd.f32 %v1214, %v844
      %v1216 = vmax.f32 %v1215, 0.0
      %v1217 = vpack.c.bf16 %v1216, %v1216
      %v1219 = vunpack.c.l.b16 %v1217
      %v1220 = vpack.c.b16 %v1219, %v1219
      %v1222 = vshrl.u32 %v1220, 16
      %v1224 = vrot.slane %v1222, 7
      %v1225 = vshll.u32 %v1220, 16
      %v1227 = vor.u32 %v1224, %v1225
      %v1228 = vrot.slane %v1224, 4
      %v1231 = vsel %vm864, %v1227, %v871
      %1232 = vst [vmem:[#allocation2] sm:$0xf] %v1231
      %v1233 = vld [vmem:[#allocation2 + $0x4] sm:$0x1]
      %v1234 = vsel %vm388, %v1228, %v1233
      %1235 = vst [vmem:[#allocation2 + $0x4] sm:$0x1] %v1234
      %v1236 = vld [vmem:[#allocation2] sm:$0xf]
      %v1237 = vld [vmem:[#allocation2 + $0x4] sm:$0x1]
      %v1238 = vld [vmem:[#allocation2] sm:$0xe]
      %v1239 = vld [vmem:[%s7] sm:$0xf]
      %v1240 = vld [vmem:[%s7 + $0x4] sm:$0xf]
      %v1241 = vld [vmem:[%s7 + $0x8] sm:$0xf]
      %v1242 = vld [vmem:[%s7 + $0xc] sm:$0xf]
      %v1243 = vld [vmem:[%s7 + $0x10] sm:$0xf]
      %v1244 = vld [vmem:[%s7 + $0x14] sm:$0xf]
      %v1245 = vld [vmem:[%s7 + $0x18] sm:$0xf]
      %v1246 = vld [vmem:[%s7 + $0x1c] sm:$0xf]
      %v1247 = vld [vmem:[%s7 + $0x20] sm:$0xf]
      %v1248 = vld [vmem:[%s7 + $0x24] sm:$0xf]
      %v1249 = vld [vmem:[%s7 + $0x28] sm:$0xf]
      %v1250 = vld [vmem:[%s7 + $0x2c] sm:$0xf]
      %v1251 = vld [vmem:[%s7 + $0x30] sm:$0xf]
      %v1252 = vld [vmem:[%s7 + $0x34] sm:$0xf]
      %v1253 = vld [vmem:[%s7 + $0x38] sm:$0xf]
      %v1254 = vld [vmem:[%s7 + $0x3c] sm:$0xf]
      %s1255 = scalar_lea.vmem %s7, 64
      %v1256 = vld [vmem:[%s1255] sm:$0xf]
      %v1257 = vld [vmem:[%s1255 + $0x4] sm:$0xf]
      %v1258 = vld [vmem:[%s1255 + $0x8] sm:$0xf]
      %v1259 = vld [vmem:[%s1255 + $0xc] sm:$0xf]
      %v1260 = vld [vmem:[%s1255 + $0x10] sm:$0xf]
      %v1261 = vld [vmem:[%s1255 + $0x14] sm:$0xf]
      %v1262 = vld [vmem:[%s1255 + $0x18] sm:$0xf]
      %v1263 = vld [vmem:[%s1255 + $0x1c] sm:$0xf]
      %v1264 = vld [vmem:[%s1255 + $0x20] sm:$0xf]
      %v1265 = vld [vmem:[%s1255 + $0x24] sm:$0xf]
      %v1266 = vld [vmem:[%s1255 + $0x28] sm:$0xf]
      %v1267 = vld [vmem:[%s1255 + $0x2c] sm:$0xf]
      %v1268 = vld [vmem:[%s1255 + $0x30] sm:$0xf]
      %v1269 = vld [vmem:[%s1255 + $0x34] sm:$0xf]
      %v1270 = vld [vmem:[%s1255 + $0x38] sm:$0xf]
      %v1271 = vld [vmem:[%s1255 + $0x3c] sm:$0xf]
      %v1274 = vunpack.c.l.b16 %v1236
      %v1275 = vunpack.c.l.b16 %v1237
      %v1276 = vpack.c.b16 %v1275, %v1274
      %v1278 = vshrl.u32 %v1276, 16
      %v1280 = vshll.u32 %v1276, 16
      %v1282 = vrot.slane %v1280, 1
      %v1283 = vor.u32 %v1278, %v1282
      %v1301 = vunpack.c.l.b16 %v1256
      %v1302 = vunpack.c.l.b16 %v1257
      %v1303 = vunpack.c.l.b16 %v1258
      %v1304 = vunpack.c.l.b16 %v1259
      %v1305 = vunpack.c.l.b16 %v1260
      %v1306 = vunpack.c.l.b16 %v1261
      %v1307 = vunpack.c.l.b16 %v1262
      %v1308 = vunpack.c.l.b16 %v1263
      %v1309 = vunpack.c.l.b16 %v1264
      %v1310 = vunpack.c.l.b16 %v1265
      %v1311 = vunpack.c.l.b16 %v1266
      %v1312 = vunpack.c.l.b16 %v1267
      %v1313 = vunpack.c.l.b16 %v1268
      %v1314 = vunpack.c.l.b16 %v1269
      %v1315 = vunpack.c.l.b16 %v1270
      %v1316 = vunpack.c.l.b16 %v1271
      %v1317 = vpack.c.b16 %v1302, %v1301
      %v1318 = vpack.c.b16 %v1304, %v1303
      %v1319 = vpack.c.b16 %v1306, %v1305
      %v1320 = vpack.c.b16 %v1308, %v1307
      %v1321 = vpack.c.b16 %v1310, %v1309
      %v1322 = vpack.c.b16 %v1312, %v1311
      %v1323 = vpack.c.b16 %v1314, %v1313
      %v1324 = vpack.c.b16 %v1316, %v1315
      %1333 = vmatprep.subr.bf16.mxu0 0
      %1334 = vmatpush1.bf16.msra.mxu0 %v1324
      %1335 = vmatprep.subr.bf16.mxu0 0
      %1336 = vmatpush1.bf16.msra.mxu0 %v1323
      %1337 = vmatprep.subr.bf16.mxu0 0
      %1338 = vmatpush1.bf16.msra.mxu0 %v1322
      %1339 = vmatprep.subr.bf16.mxu0 0
      %1340 = vmatpush1.bf16.msra.mxu0 %v1321
      %1341 = vmatprep.subr.bf16.mxu0 0
      %1342 = vmatpush1.bf16.msra.mxu0 %v1320
      %1343 = vmatprep.subr.bf16.mxu0 0
      %1344 = vmatpush1.bf16.msra.mxu0 %v1319
      %1345 = vmatprep.subr.bf16.mxu0 0
      %1346 = vmatpush1.bf16.msra.mxu0 %v1318
      %1347 = vmatprep.subr.bf16.mxu0 0
      %1348 = vmatpush1.bf16.msra.mxu0 %v1317
      %1349 = vmatprep.subr.bf16.mxu0 0
      %1350 = vmatpush2.bf16.msra.mxu0 0
      %1351 = vmatprep.subr.bf16.mxu0 0
      %1352 = vmatpush2.bf16.msra.mxu0 0
      %1353 = vmatprep.subr.bf16.mxu0 0
      %1354 = vmatpush2.bf16.msra.mxu0 0
      %1355 = vmatprep.subr.bf16.mxu0 0
      %1356 = vmatpush2.bf16.msra.mxu0 0
      %1357 = vmatprep.subr.bf16.mxu0 0
      %1358 = vmatpush2.bf16.msra.mxu0 0
      %1359 = vmatprep.subr.bf16.mxu0 0
      %1360 = vmatpush2.bf16.msra.mxu0 0
      %1361 = vmatprep.subr.bf16.mxu0 0
      %1362 = vmatpush2.bf16.msra.mxu0 0
      %1363 = vmatprep.subr.bf16.mxu0 0
      %1364 = vmatpush2.bf16.msra.mxu0 0
      %1365 = vmatprep.mubr.bf16.mxu0 0
      %1366 = vmatmul.mubr.bf16.gmra.mxu0 %v1283
      %v1367 = vpop.f32.mrf.mxu0
      %v1368 = vadd.f32 0.0, %v1367
      %v1369 = vpop.f32.mrf.mxu0
      %v1370 = vpop.f32.mrf.mxu0
      %v1371 = vpop.f32.mrf.mxu0
      %1372 = vdwg.mxu0
      %v1389 = vunpack.c.l.b16 %v1239
      %v1390 = vunpack.c.l.b16 %v1240
      %v1391 = vunpack.c.l.b16 %v1241
      %v1392 = vunpack.c.l.b16 %v1242
      %v1393 = vunpack.c.l.b16 %v1243
      %v1394 = vunpack.c.l.b16 %v1244
      %v1395 = vunpack.c.l.b16 %v1245
      %v1396 = vunpack.c.l.b16 %v1246
      %v1397 = vunpack.c.l.b16 %v1247
      %v1398 = vunpack.c.l.b16 %v1248
      %v1399 = vunpack.c.l.b16 %v1249
      %v1400 = vunpack.c.l.b16 %v1250
      %v1401 = vunpack.c.l.b16 %v1251
      %v1402 = vunpack.c.l.b16 %v1252
      %v1403 = vunpack.c.l.b16 %v1253
      %v1404 = vunpack.c.l.b16 %v1254
      %v1405 = vpack.c.b16 %v1390, %v1389
      %v1406 = vpack.c.b16 %v1392, %v1391
      %v1407 = vpack.c.b16 %v1394, %v1393
      %v1408 = vpack.c.b16 %v1396, %v1395
      %v1409 = vpack.c.b16 %v1398, %v1397
      %v1410 = vpack.c.b16 %v1400, %v1399
      %v1411 = vpack.c.b16 %v1402, %v1401
      %v1412 = vpack.c.b16 %v1404, %v1403
      %1421 = vmatprep.subr.bf16.mxu0 0
      %1422 = vmatpush1.bf16.msra.mxu0 %v1412
      %1423 = vmatprep.subr.bf16.mxu0 0
      %1424 = vmatpush1.bf16.msra.mxu0 %v1411
      %1425 = vmatprep.subr.bf16.mxu0 0
      %1426 = vmatpush1.bf16.msra.mxu0 %v1410
      %1427 = vmatprep.subr.bf16.mxu0 0
      %1428 = vmatpush1.bf16.msra.mxu0 %v1409
      %1429 = vmatprep.subr.bf16.mxu0 0
      %1430 = vmatpush1.bf16.msra.mxu0 %v1408
      %1431 = vmatprep.subr.bf16.mxu0 0
      %1432 = vmatpush1.bf16.msra.mxu0 %v1407
      %1433 = vmatprep.subr.bf16.mxu0 0
      %1434 = vmatpush1.bf16.msra.mxu0 %v1406
      %1435 = vmatprep.subr.bf16.mxu0 0
      %1436 = vmatpush1.bf16.msra.mxu0 %v1405
      %1437 = vmatprep.subr.bf16.mxu0 0
      %1438 = vmatpush2.bf16.msra.mxu0 0
      %1439 = vmatprep.subr.bf16.mxu0 0
      %1440 = vmatpush2.bf16.msra.mxu0 0
      %1441 = vmatprep.subr.bf16.mxu0 0
      %1442 = vmatpush2.bf16.msra.mxu0 0
      %1443 = vmatprep.subr.bf16.mxu0 0
      %1444 = vmatpush2.bf16.msra.mxu0 0
      %1445 = vmatprep.subr.bf16.mxu0 0
      %1446 = vmatpush2.bf16.msra.mxu0 0
      %1447 = vmatprep.subr.bf16.mxu0 0
      %1448 = vmatpush2.bf16.msra.mxu0 0
      %1449 = vmatprep.subr.bf16.mxu0 0
      %1450 = vmatpush2.bf16.msra.mxu0 0
      %1451 = vmatprep.subr.bf16.mxu0 0
      %1452 = vmatpush2.bf16.msra.mxu0 0
      %1453 = vmatprep.mubr.bf16.mxu0 0
      %1454 = vmatmul.mubr.bf16.gmra.mxu0 %v1236
      %v1455 = vpop.f32.mrf.mxu0
      %v1456 = vadd.f32 %v1368, %v1455
      %v1457 = vpop.f32.mrf.mxu0
      %v1458 = vpop.f32.mrf.mxu0
      %v1459 = vpop.f32.mrf.mxu0
      %1460 = vdwg.mxu0
      %s1461 = scalar_lea.vmem %s7, 128
      %v1462 = vld [vmem:[%s1461] sm:$0xf]
      %v1463 = vld [vmem:[%s1461 + $0x4] sm:$0xf]
      %v1464 = vld [vmem:[%s1461 + $0x8] sm:$0xf]
      %v1465 = vld [vmem:[%s1461 + $0xc] sm:$0xf]
      %v1466 = vld [vmem:[%s1461 + $0x10] sm:$0xf]
      %v1467 = vld [vmem:[%s1461 + $0x14] sm:$0xf]
      %v1468 = vld [vmem:[%s1461 + $0x18] sm:$0xf]
      %v1469 = vld [vmem:[%s1461 + $0x1c] sm:$0xf]
      %v1470 = vld [vmem:[%s1461 + $0x20] sm:$0xf]
      %v1471 = vld [vmem:[%s1461 + $0x24] sm:$0xf]
      %v1472 = vld [vmem:[%s1461 + $0x28] sm:$0xf]
      %v1473 = vld [vmem:[%s1461 + $0x2c] sm:$0xf]
      %v1474 = vld [vmem:[%s1461 + $0x30] sm:$0xf]
      %v1475 = vld [vmem:[%s1461 + $0x34] sm:$0xf]
      %v1476 = vld [vmem:[%s1461 + $0x38] sm:$0xf]
      %v1477 = vld [vmem:[%s1461 + $0x3c] sm:$0xf]
      %v1479 = vunpack.c.l.b16 %v1238
      %v1480 = vpack.c.b16 %v1275, %v1479
      %v1481 = vrot.slane %v1480, 1
      %v1499 = vunpack.c.l.b16 %v1462
      %v1500 = vunpack.c.l.b16 %v1463
      %v1501 = vunpack.c.l.b16 %v1464
      %v1502 = vunpack.c.l.b16 %v1465
      %v1503 = vunpack.c.l.b16 %v1466
      %v1504 = vunpack.c.l.b16 %v1467
      %v1505 = vunpack.c.l.b16 %v1468
      %v1506 = vunpack.c.l.b16 %v1469
      %v1507 = vunpack.c.l.b16 %v1470
      %v1508 = vunpack.c.l.b16 %v1471
      %v1509 = vunpack.c.l.b16 %v1472
      %v1510 = vunpack.c.l.b16 %v1473
      %v1511 = vunpack.c.l.b16 %v1474
      %v1512 = vunpack.c.l.b16 %v1475
      %v1513 = vunpack.c.l.b16 %v1476
      %v1514 = vunpack.c.l.b16 %v1477
      %v1515 = vpack.c.b16 %v1500, %v1499
      %v1516 = vpack.c.b16 %v1502, %v1501
      %v1517 = vpack.c.b16 %v1504, %v1503
      %v1518 = vpack.c.b16 %v1506, %v1505
      %v1519 = vpack.c.b16 %v1508, %v1507
      %v1520 = vpack.c.b16 %v1510, %v1509
      %v1521 = vpack.c.b16 %v1512, %v1511
      %v1522 = vpack.c.b16 %v1514, %v1513
      %1531 = vmatprep.subr.bf16.mxu0 0
      %1532 = vmatpush1.bf16.msra.mxu0 %v1522
      %1533 = vmatprep.subr.bf16.mxu0 0
      %1534 = vmatpush1.bf16.msra.mxu0 %v1521
      %1535 = vmatprep.subr.bf16.mxu0 0
      %1536 = vmatpush1.bf16.msra.mxu0 %v1520
      %1537 = vmatprep.subr.bf16.mxu0 0
      %1538 = vmatpush1.bf16.msra.mxu0 %v1519
      %1539 = vmatprep.subr.bf16.mxu0 0
      %1540 = vmatpush1.bf16.msra.mxu0 %v1518
      %1541 = vmatprep.subr.bf16.mxu0 0
      %1542 = vmatpush1.bf16.msra.mxu0 %v1517
      %1543 = vmatprep.subr.bf16.mxu0 0
      %1544 = vmatpush1.bf16.msra.mxu0 %v1516
      %1545 = vmatprep.subr.bf16.mxu0 0
      %1546 = vmatpush1.bf16.msra.mxu0 %v1515
      %1547 = vmatprep.subr.bf16.mxu0 0
      %1548 = vmatpush2.bf16.msra.mxu0 0
      %1549 = vmatprep.subr.bf16.mxu0 0
      %1550 = vmatpush2.bf16.msra.mxu0 0
      %1551 = vmatprep.subr.bf16.mxu0 0
      %1552 = vmatpush2.bf16.msra.mxu0 0
      %1553 = vmatprep.subr.bf16.mxu0 0
      %1554 = vmatpush2.bf16.msra.mxu0 0
      %1555 = vmatprep.subr.bf16.mxu0 0
      %1556 = vmatpush2.bf16.msra.mxu0 0
      %1557 = vmatprep.subr.bf16.mxu0 0
      %1558 = vmatpush2.bf16.msra.mxu0 0
      %1559 = vmatprep.subr.bf16.mxu0 0
      %1560 = vmatpush2.bf16.msra.mxu0 0
      %1561 = vmatprep.subr.bf16.mxu0 0
      %1562 = vmatpush2.bf16.msra.mxu0 0
      %1563 = vmatprep.mubr.bf16.mxu0 0
      %1564 = vmatmul.mubr.bf16.gmra.mxu0 %v1481
      %v1565 = vpop.f32.mrf.mxu0
      %v1566 = vadd.f32 0.0, %v1565
      %v1567 = vpop.f32.mrf.mxu0
      %v1568 = vpop.f32.mrf.mxu0
      %v1569 = vpop.f32.mrf.mxu0
      %1570 = vdwg.mxu0
      %v1571 = vadd.f32 %v1456, %v1566
      %v1572 = vld [vmem:[%s8] sm:$0x1]
      %v1574 = vlaneseq
      %v1575 = vshrl.u32 %v1574, 7
      %v1576 = vsub.s32 0, %v1575
      %v1577 = vrot.slane %v1572, %v1576
      %v1579 = vadd.f32 %v1571, %v1577
      %v1580 = vmax.f32 %v1579, 0.0
      %v1581 = vpack.c.bf16 %v1580, %v1580
      %v1583 = vunpack.c.l.b16 %v1581
      %v1584 = vpack.c.b16 %v1583, %v1583
      %v1586 = vshrl.u32 %v1584, 16
      %v1588 = vrot.slane %v1586, 7
      %v1589 = vshll.u32 %v1584, 16
      %v1591 = vor.u32 %v1588, %v1589
      %v1592 = vrot.slane %v1588, 4
      %v1595 = vsel %vm864, %v1591, %v1236
      %1596 = vst [vmem:[#allocation2] sm:$0xf] %v1595
      %v1597 = vld [vmem:[#allocation2 + $0x4] sm:$0x1]
      %v1598 = vsel %vm388, %v1592, %v1597
      %1599 = vst [vmem:[#allocation2 + $0x4] sm:$0x1] %v1598
      %v1600 = vld [vmem:[#allocation2] sm:$0xf]
      %v1601 = vld [vmem:[#allocation2 + $0x4] sm:$0x1]
      %v1602 = vld [vmem:[#allocation2] sm:$0xe]
      %v1603 = vld [vmem:[%s9] sm:$0xf]
      %v1604 = vld [vmem:[%s9 + $0x4] sm:$0xf]
      %v1605 = vld [vmem:[%s9 + $0x8] sm:$0xf]
      %v1606 = vld [vmem:[%s9 + $0xc] sm:$0xf]
      %v1607 = vld [vmem:[%s9 + $0x10] sm:$0xf]
      %v1608 = vld [vmem:[%s9 + $0x14] sm:$0xf]
      %v1609 = vld [vmem:[%s9 + $0x18] sm:$0xf]
      %v1610 = vld [vmem:[%s9 + $0x1c] sm:$0xf]
      %v1611 = vld [vmem:[%s9 + $0x20] sm:$0xf]
      %v1612 = vld [vmem:[%s9 + $0x24] sm:$0xf]
      %v1613 = vld [vmem:[%s9 + $0x28] sm:$0xf]
      %v1614 = vld [vmem:[%s9 + $0x2c] sm:$0xf]
      %v1615 = vld [vmem:[%s9 + $0x30] sm:$0xf]
      %v1616 = vld [vmem:[%s9 + $0x34] sm:$0xf]
      %v1617 = vld [vmem:[%s9 + $0x38] sm:$0xf]
      %v1618 = vld [vmem:[%s9 + $0x3c] sm:$0xf]
      %s1619 = scalar_lea.vmem %s9, 64
      %v1620 = vld [vmem:[%s1619] sm:$0xf]
      %v1621 = vld [vmem:[%s1619 + $0x4] sm:$0xf]
      %v1622 = vld [vmem:[%s1619 + $0x8] sm:$0xf]
      %v1623 = vld [vmem:[%s1619 + $0xc] sm:$0xf]
      %v1624 = vld [vmem:[%s1619 + $0x10] sm:$0xf]
      %v1625 = vld [vmem:[%s1619 + $0x14] sm:$0xf]
      %v1626 = vld [vmem:[%s1619 + $0x18] sm:$0xf]
      %v1627 = vld [vmem:[%s1619 + $0x1c] sm:$0xf]
      %v1628 = vld [vmem:[%s1619 + $0x20] sm:$0xf]
      %v1629 = vld [vmem:[%s1619 + $0x24] sm:$0xf]
      %v1630 = vld [vmem:[%s1619 + $0x28] sm:$0xf]
      %v1631 = vld [vmem:[%s1619 + $0x2c] sm:$0xf]
      %v1632 = vld [vmem:[%s1619 + $0x30] sm:$0xf]
      %v1633 = vld [vmem:[%s1619 + $0x34] sm:$0xf]
      %v1634 = vld [vmem:[%s1619 + $0x38] sm:$0xf]
      %v1635 = vld [vmem:[%s1619 + $0x3c] sm:$0xf]
      %v1638 = vunpack.c.l.b16 %v1600
      %v1639 = vunpack.c.l.b16 %v1601
      %v1640 = vpack.c.b16 %v1639, %v1638
      %v1642 = vshrl.u32 %v1640, 16
      %v1644 = vshll.u32 %v1640, 16
      %v1646 = vrot.slane %v1644, 1
      %v1647 = vor.u32 %v1642, %v1646
      %v1665 = vunpack.c.l.b16 %v1620
      %v1666 = vunpack.c.l.b16 %v1621
      %v1667 = vunpack.c.l.b16 %v1622
      %v1668 = vunpack.c.l.b16 %v1623
      %v1669 = vunpack.c.l.b16 %v1624
      %v1670 = vunpack.c.l.b16 %v1625
      %v1671 = vunpack.c.l.b16 %v1626
      %v1672 = vunpack.c.l.b16 %v1627
      %v1673 = vunpack.c.l.b16 %v1628
      %v1674 = vunpack.c.l.b16 %v1629
      %v1675 = vunpack.c.l.b16 %v1630
      %v1676 = vunpack.c.l.b16 %v1631
      %v1677 = vunpack.c.l.b16 %v1632
      %v1678 = vunpack.c.l.b16 %v1633
      %v1679 = vunpack.c.l.b16 %v1634
      %v1680 = vunpack.c.l.b16 %v1635
      %v1681 = vpack.c.b16 %v1666, %v1665
      %v1682 = vpack.c.b16 %v1668, %v1667
      %v1683 = vpack.c.b16 %v1670, %v1669
      %v1684 = vpack.c.b16 %v1672, %v1671
      %v1685 = vpack.c.b16 %v1674, %v1673
      %v1686 = vpack.c.b16 %v1676, %v1675
      %v1687 = vpack.c.b16 %v1678, %v1677
      %v1688 = vpack.c.b16 %v1680, %v1679
      %1697 = vmatprep.subr.bf16.mxu0 0
      %1698 = vmatpush1.bf16.msra.mxu0 %v1688
      %1699 = vmatprep.subr.bf16.mxu0 0
      %1700 = vmatpush1.bf16.msra.mxu0 %v1687
      %1701 = vmatprep.subr.bf16.mxu0 0
      %1702 = vmatpush1.bf16.msra.mxu0 %v1686
      %1703 = vmatprep.subr.bf16.mxu0 0
      %1704 = vmatpush1.bf16.msra.mxu0 %v1685
      %1705 = vmatprep.subr.bf16.mxu0 0
      %1706 = vmatpush1.bf16.msra.mxu0 %v1684
      %1707 = vmatprep.subr.bf16.mxu0 0
      %1708 = vmatpush1.bf16.msra.mxu0 %v1683
      %1709 = vmatprep.subr.bf16.mxu0 0
      %1710 = vmatpush1.bf16.msra.mxu0 %v1682
      %1711 = vmatprep.subr.bf16.mxu0 0
      %1712 = vmatpush1.bf16.msra.mxu0 %v1681
      %1713 = vmatprep.subr.bf16.mxu0 0
      %1714 = vmatpush2.bf16.msra.mxu0 0
      %1715 = vmatprep.subr.bf16.mxu0 0
      %1716 = vmatpush2.bf16.msra.mxu0 0
      %1717 = vmatprep.subr.bf16.mxu0 0
      %1718 = vmatpush2.bf16.msra.mxu0 0
      %1719 = vmatprep.subr.bf16.mxu0 0
      %1720 = vmatpush2.bf16.msra.mxu0 0
      %1721 = vmatprep.subr.bf16.mxu0 0
      %1722 = vmatpush2.bf16.msra.mxu0 0
      %1723 = vmatprep.subr.bf16.mxu0 0
      %1724 = vmatpush2.bf16.msra.mxu0 0
      %1725 = vmatprep.subr.bf16.mxu0 0
      %1726 = vmatpush2.bf16.msra.mxu0 0
      %1727 = vmatprep.subr.bf16.mxu0 0
      %1728 = vmatpush2.bf16.msra.mxu0 0
      %1729 = vmatprep.mubr.bf16.mxu0 0
      %1730 = vmatmul.mubr.bf16.gmra.mxu0 %v1647
      %v1731 = vpop.f32.mrf.mxu0
      %v1732 = vadd.f32 0.0, %v1731
      %v1733 = vpop.f32.mrf.mxu0
      %v1734 = vpop.f32.mrf.mxu0
      %v1735 = vpop.f32.mrf.mxu0
      %1736 = vdwg.mxu0
      %v1753 = vunpack.c.l.b16 %v1603
      %v1754 = vunpack.c.l.b16 %v1604
      %v1755 = vunpack.c.l.b16 %v1605
      %v1756 = vunpack.c.l.b16 %v1606
      %v1757 = vunpack.c.l.b16 %v1607
      %v1758 = vunpack.c.l.b16 %v1608
      %v1759 = vunpack.c.l.b16 %v1609
      %v1760 = vunpack.c.l.b16 %v1610
      %v1761 = vunpack.c.l.b16 %v1611
      %v1762 = vunpack.c.l.b16 %v1612
      %v1763 = vunpack.c.l.b16 %v1613
      %v1764 = vunpack.c.l.b16 %v1614
      %v1765 = vunpack.c.l.b16 %v1615
      %v1766 = vunpack.c.l.b16 %v1616
      %v1767 = vunpack.c.l.b16 %v1617
      %v1768 = vunpack.c.l.b16 %v1618
      %v1769 = vpack.c.b16 %v1754, %v1753
      %v1770 = vpack.c.b16 %v1756, %v1755
      %v1771 = vpack.c.b16 %v1758, %v1757
      %v1772 = vpack.c.b16 %v1760, %v1759
      %v1773 = vpack.c.b16 %v1762, %v1761
      %v1774 = vpack.c.b16 %v1764, %v1763
      %v1775 = vpack.c.b16 %v1766, %v1765
      %v1776 = vpack.c.b16 %v1768, %v1767
      %1785 = vmatprep.subr.bf16.mxu0 0
      %1786 = vmatpush1.bf16.msra.mxu0 %v1776
      %1787 = vmatprep.subr.bf16.mxu0 0
      %1788 = vmatpush1.bf16.msra.mxu0 %v1775
      %1789 = vmatprep.subr.bf16.mxu0 0
      %1790 = vmatpush1.bf16.msra.mxu0 %v1774
      %1791 = vmatprep.subr.bf16.mxu0 0
      %1792 = vmatpush1.bf16.msra.mxu0 %v1773
      %1793 = vmatprep.subr.bf16.mxu0 0
      %1794 = vmatpush1.bf16.msra.mxu0 %v1772
      %1795 = vmatprep.subr.bf16.mxu0 0
      %1796 = vmatpush1.bf16.msra.mxu0 %v1771
      %1797 = vmatprep.subr.bf16.mxu0 0
      %1798 = vmatpush1.bf16.msra.mxu0 %v1770
      %1799 = vmatprep.subr.bf16.mxu0 0
      %1800 = vmatpush1.bf16.msra.mxu0 %v1769
      %1801 = vmatprep.subr.bf16.mxu0 0
      %1802 = vmatpush2.bf16.msra.mxu0 0
      %1803 = vmatprep.subr.bf16.mxu0 0
      %1804 = vmatpush2.bf16.msra.mxu0 0
      %1805 = vmatprep.subr.bf16.mxu0 0
      %1806 = vmatpush2.bf16.msra.mxu0 0
      %1807 = vmatprep.subr.bf16.mxu0 0
      %1808 = vmatpush2.bf16.msra.mxu0 0
      %1809 = vmatprep.subr.bf16.mxu0 0
      %1810 = vmatpush2.bf16.msra.mxu0 0
      %1811 = vmatprep.subr.bf16.mxu0 0
      %1812 = vmatpush2.bf16.msra.mxu0 0
      %1813 = vmatprep.subr.bf16.mxu0 0
      %1814 = vmatpush2.bf16.msra.mxu0 0
      %1815 = vmatprep.subr.bf16.mxu0 0
      %1816 = vmatpush2.bf16.msra.mxu0 0
      %1817 = vmatprep.mubr.bf16.mxu0 0
      %1818 = vmatmul.mubr.bf16.gmra.mxu0 %v1600
      %v1819 = vpop.f32.mrf.mxu0
      %v1820 = vadd.f32 %v1732, %v1819
      %v1821 = vpop.f32.mrf.mxu0
      %v1822 = vpop.f32.mrf.mxu0
      %v1823 = vpop.f32.mrf.mxu0
      %1824 = vdwg.mxu0
      %s1825 = scalar_lea.vmem %s9, 128
      %v1826 = vld [vmem:[%s1825] sm:$0xf]
      %v1827 = vld [vmem:[%s1825 + $0x4] sm:$0xf]
      %v1828 = vld [vmem:[%s1825 + $0x8] sm:$0xf]
      %v1829 = vld [vmem:[%s1825 + $0xc] sm:$0xf]
      %v1830 = vld [vmem:[%s1825 + $0x10] sm:$0xf]
      %v1831 = vld [vmem:[%s1825 + $0x14] sm:$0xf]
      %v1832 = vld [vmem:[%s1825 + $0x18] sm:$0xf]
      %v1833 = vld [vmem:[%s1825 + $0x1c] sm:$0xf]
      %v1834 = vld [vmem:[%s1825 + $0x20] sm:$0xf]
      %v1835 = vld [vmem:[%s1825 + $0x24] sm:$0xf]
      %v1836 = vld [vmem:[%s1825 + $0x28] sm:$0xf]
      %v1837 = vld [vmem:[%s1825 + $0x2c] sm:$0xf]
      %v1838 = vld [vmem:[%s1825 + $0x30] sm:$0xf]
      %v1839 = vld [vmem:[%s1825 + $0x34] sm:$0xf]
      %v1840 = vld [vmem:[%s1825 + $0x38] sm:$0xf]
      %v1841 = vld [vmem:[%s1825 + $0x3c] sm:$0xf]
      %v1843 = vunpack.c.l.b16 %v1602
      %v1844 = vpack.c.b16 %v1639, %v1843
      %v1845 = vrot.slane %v1844, 1
      %v1863 = vunpack.c.l.b16 %v1826
      %v1864 = vunpack.c.l.b16 %v1827
      %v1865 = vunpack.c.l.b16 %v1828
      %v1866 = vunpack.c.l.b16 %v1829
      %v1867 = vunpack.c.l.b16 %v1830
      %v1868 = vunpack.c.l.b16 %v1831
      %v1869 = vunpack.c.l.b16 %v1832
      %v1870 = vunpack.c.l.b16 %v1833
      %v1871 = vunpack.c.l.b16 %v1834
      %v1872 = vunpack.c.l.b16 %v1835
      %v1873 = vunpack.c.l.b16 %v1836
      %v1874 = vunpack.c.l.b16 %v1837
      %v1875 = vunpack.c.l.b16 %v1838
      %v1876 = vunpack.c.l.b16 %v1839
      %v1877 = vunpack.c.l.b16 %v1840
      %v1878 = vunpack.c.l.b16 %v1841
      %v1879 = vpack.c.b16 %v1864, %v1863
      %v1880 = vpack.c.b16 %v1866, %v1865
      %v1881 = vpack.c.b16 %v1868, %v1867
      %v1882 = vpack.c.b16 %v1870, %v1869
      %v1883 = vpack.c.b16 %v1872, %v1871
      %v1884 = vpack.c.b16 %v1874, %v1873
      %v1885 = vpack.c.b16 %v1876, %v1875
      %v1886 = vpack.c.b16 %v1878, %v1877
      %1895 = vmatprep.subr.bf16.mxu0 0
      %1896 = vmatpush1.bf16.msra.mxu0 %v1886
      %1897 = vmatprep.subr.bf16.mxu0 0
      %1898 = vmatpush1.bf16.msra.mxu0 %v1885
      %1899 = vmatprep.subr.bf16.mxu0 0
      %1900 = vmatpush1.bf16.msra.mxu0 %v1884
      %1901 = vmatprep.subr.bf16.mxu0 0
      %1902 = vmatpush1.bf16.msra.mxu0 %v1883
      %1903 = vmatprep.subr.bf16.mxu0 0
      %1904 = vmatpush1.bf16.msra.mxu0 %v1882
      %1905 = vmatprep.subr.bf16.mxu0 0
      %1906 = vmatpush1.bf16.msra.mxu0 %v1881
      %1907 = vmatprep.subr.bf16.mxu0 0
      %1908 = vmatpush1.bf16.msra.mxu0 %v1880
      %1909 = vmatprep.subr.bf16.mxu0 0
      %1910 = vmatpush1.bf16.msra.mxu0 %v1879
      %1911 = vmatprep.subr.bf16.mxu0 0
      %1912 = vmatpush2.bf16.msra.mxu0 0
      %1913 = vmatprep.subr.bf16.mxu0 0
      %1914 = vmatpush2.bf16.msra.mxu0 0
      %1915 = vmatprep.subr.bf16.mxu0 0
      %1916 = vmatpush2.bf16.msra.mxu0 0
      %1917 = vmatprep.subr.bf16.mxu0 0
      %1918 = vmatpush2.bf16.msra.mxu0 0
      %1919 = vmatprep.subr.bf16.mxu0 0
      %1920 = vmatpush2.bf16.msra.mxu0 0
      %1921 = vmatprep.subr.bf16.mxu0 0
      %1922 = vmatpush2.bf16.msra.mxu0 0
      %1923 = vmatprep.subr.bf16.mxu0 0
      %1924 = vmatpush2.bf16.msra.mxu0 0
      %1925 = vmatprep.subr.bf16.mxu0 0
      %1926 = vmatpush2.bf16.msra.mxu0 0
      %1927 = vmatprep.mubr.bf16.mxu0 0
      %1928 = vmatmul.mubr.bf16.gmra.mxu0 %v1845
      %v1929 = vpop.f32.mrf.mxu0
      %v1930 = vadd.f32 0.0, %v1929
      %v1931 = vpop.f32.mrf.mxu0
      %v1932 = vpop.f32.mrf.mxu0
      %v1933 = vpop.f32.mrf.mxu0
      %1934 = vdwg.mxu0
      %v1935 = vadd.f32 %v1820, %v1930
      %v1936 = vld [vmem:[%s10] sm:$0x1]
      %v1938 = vlaneseq
      %v1939 = vshrl.u32 %v1938, 7
      %v1940 = vsub.s32 0, %v1939
      %v1941 = vrot.slane %v1936, %v1940
      %v1943 = vadd.f32 %v1935, %v1941
      %v1944 = vunpack.c.l.bf16 %v1217
      %v1945 = vadd.f32 %v1943, %v1944
      %v1946 = vmax.f32 %v1945, 0.0
      %v1947 = vpack.c.bf16 %v1946, %v1946
      %1948 = vst [vmem:[%s384] sm:$0xf] %v1947
      %p1949 = scmp.lt.s32.totalorder %s22, 1
      %s1950 = scalar_select %p1949, %s22, 1
      %s1951 = smul.addr %s1950, 4
      %s1952 = scalar_lea.vmem %s11, %s1951
      // Predicated region
      $region65: #{_lambda_.8} parent=63 // pred_check
        %p1953 = pneg %p276
      $region66: #{_lambda_.8} parent=63 // pred_check_branch
        %1955 = sbr.rel (%p1953) target = $region68
      $region67: #{_lambda_.8} parent=63 // pred_region
        _
      $region68: #{_lambda_.8} parent=63 // pred_fallthru
        _
    $region64: #{_lambda_.8} parent=5 // pred_fallthru
      _
    %p1956 = scmp.le.s32.totalorder 2, %s17
    // Predicated region
    $region69: #{_lambda_.8} parent=5 // pred_check
      %p1957 = pneg %p1956
    $region70: #{_lambda_.8} parent=5 // pred_check_branch
      %1959 = sbr.rel (%p1957) target = $region72
    $region71: #{_lambda_.8} parent=5 // pred_region
      %s1960 = ssub.s32 %s17, 2
      // Predicated region
      $region73: #{_lambda_.8} parent=71 // pred_check
        %p1961 = pneg %p282
      $region74: #{_lambda_.8} parent=71 // pred_check_branch
        %1963 = sbr.rel (%p1961) target = $region76
      $region75: #{_lambda_.8} parent=71 // pred_region
        %p1964 = scmp.lt.s32.totalorder %s23, 1
        %s1965 = scalar_select %p1964, %s23, 1
        %s1966 = smul.addr %s1965, 4
        %s1967 = scalar_lea.vmem %s11, %s1966
      $region76: #{_lambda_.8} parent=71 // pred_fallthru
        _
    $region72: #{_lambda_.8} parent=5 // pred_fallthru
      _
  $region6: #{_lambda_.8} parent=0 // loop_footer
    %s21 = sadd.s32 1, %s17
  $region7: #{_lambda_.8} parent=0 // loop_footer_branch
    %16 = sbr.rel target = $region3
  $region8: #{_lambda_.8} parent=0 // loop_exit
    _

// kernel: _lambda_.9
$region0: #{_lambda_.9}
  #allocation0 [shape = 'u32[]', space=smem, size = 0x4, offset = 0x4, fixed_abs, tag = 'smem constant byte address 0x4 - core index']
  #allocation1 [shape = 'u32[144,128]{1,0:T(1,128)}', space=vmem, size = 0x12000, scoped, tag = 'internal scratch']
  #allocation2 [shape = 'bf16[6,128]{1,0:T(8,128)(2,1)}', space=vmem, size = 0x800, scoped, tag = 'scratch operand']
  %s0 = inlined_call_operand.vmem [shape: bf16[2,2,5,128], index: 0, kind: input, shape index: {}]
  %s1 = inlined_call_operand.vmem [shape: bf16[3,128,128], index: 1, kind: input, shape index: {}]
  %s2 = inlined_call_operand.vmem [shape: f32[1,128], index: 2, kind: input, shape index: {}]
  %s3 = inlined_call_operand.vmem [shape: bf16[3,128,128], index: 3, kind: input, shape index: {}]
  %s4 = inlined_call_operand.vmem [shape: f32[1,128], index: 4, kind: input, shape index: {}]
  %s5 = inlined_call_operand.vmem [shape: bf16[128,128], index: 5, kind: input, shape index: {}]
  %s6 = inlined_call_operand.vmem [shape: f32[1,128], index: 6, kind: input, shape index: {}]
  %s7 = inlined_call_operand.vmem [shape: bf16[3,128,128], index: 7, kind: input, shape index: {}]
  %s8 = inlined_call_operand.vmem [shape: f32[1,128], index: 8, kind: input, shape index: {}]
  %s9 = inlined_call_operand.vmem [shape: bf16[3,128,128], index: 9, kind: input, shape index: {}]
  %s10 = inlined_call_operand.vmem [shape: f32[1,128], index: 10, kind: input, shape index: {}]
  %s11 = inlined_call_operand.vmem [shape: bf16[2,4,128], index: 11, kind: output, shape index: {}]
  %s12 = sld [smem:[#allocation0]]
  $region77: #{_lambda_.9} parent=0
    _
  %s14 = ssub.s32 1, %s12
  %s15 = scalar_select 0, %s14, %s12
  loop: start=0, step=1, limit=4
  $region2: #{_lambda_.9} parent=0 // loop_pre_header
    _
  $region3: #{_lambda_.9} parent=0 // loop_header
    %s17 = sphi 0, %s21
    %p18 = scmp.ge.s32.totalorder %s17, 4
    %s27 = sphi 0, %s29
    %s30 = sphi 0, %s27
    %s31 = sphi 0, %s30
    %s47 = sphi 0, %s31
    %s51 = sphi 0, %s51
    %s53 = sphi 0, %s51
    %s54 = sphi 0, %s53
    %s68 = sphi 0, %s54
    %s72 = sphi 0, %s72
    %s74 = sphi 0, %s72
    %s75 = sphi 0, %s74
    %s89 = sphi 0, %s75
    %s93 = sphi 0, %s93
    %s95 = sphi 0, %s93
    %s96 = sphi 0, %s95
    %s110 = sphi 0, %s96
    %s114 = sphi 0, %s114
    %s116 = sphi 0, %s114
    %s117 = sphi 0, %s116
    %s131 = sphi 0, %s117
    %s135 = sphi 0, %s135
    %s137 = sphi 0, %s135
    %s138 = sphi 0, %s137
    %s152 = sphi 0, %s138
    %s156 = sphi 0, %s156
    %s158 = sphi 0, %s156
    %s159 = sphi 0, %s158
    %s173 = sphi 0, %s159
    %s177 = sphi 0, %s177
    %s179 = sphi 0, %s177
    %s180 = sphi 0, %s179
    %s194 = sphi 0, %s180
    %s198 = sphi 0, %s198
    %s200 = sphi 0, %s198
    %s201 = sphi 0, %s200
    %s215 = sphi 0, %s201
    %s219 = sphi 0, %s219
    %s221 = sphi 0, %s219
    %s222 = sphi 0, %s221
    %s236 = sphi 0, %s222
    %s240 = sphi 0, %s240
    %s242 = sphi 0, %s240
    %s243 = sphi 0, %s242
    %s257 = sphi 0, %s243
    %s263 = sphi 0, %s265
    %s266 = sphi 0, %s263
    %s267 = sphi 0, %s266
    %s283 = sphi 0, %s267
  $region4: #{_lambda_.9} parent=0 // loop_header_branch
    %20 = sbr.rel (%p18) target = $region8
  $region5: #{_lambda_.9} parent=0 // loop_body
    %s22 = ssub.s32 %s17, 1
    %s23 = ssub.s32 %s17, 2
    %s24 = sadd.s32 %s17, 1
    %s25 = ssub.s32 %s17, %s24
    %p26 = scmp.eq.s32.totalorder %s25, 0
    %s28 = sadd.s32 %s27, 1
    %s29 = scalar_select %p26, %s27, %s28
    %p32 = pneg %p26
    %p33 = scmp.eq.s32.totalorder %s17, 1
    %p34 = por %p32, %p33
    %p35 = scmp.ne.s32.totalorder %s27, %s30
    %p36 = scmp.eq.s32.totalorder %s17, 0
    %p37 = por %p35, %p36
    %p38 = scmp.ne.s32.totalorder %s27, %s30
    %p39 = scmp.eq.s32.totalorder %s22, 1
    %p40 = por %p38, %p39
    %p41 = scmp.ne.s32.totalorder %s30, %s31
    %p42 = scmp.eq.s32.totalorder %s22, 0
    %p43 = por %p41, %p42
    %p44 = scmp.ne.s32.totalorder %s30, %s31
    %p45 = scmp.eq.s32.totalorder %s23, 1
    %p46 = por %p44, %p45
    %p48 = scmp.ne.s32.totalorder %s31, %s47
    %p49 = scmp.eq.s32.totalorder %s23, 0
    %p50 = por %p48, %p49
    %s52 = sadd.s32 %s51, 1
    %p55 = scmp.eq.s32.totalorder %s17, 1
    %p56 = scmp.ne.s32.totalorder %s51, %s53
    %p57 = scmp.eq.s32.totalorder %s17, 0
    %p58 = por %p56, %p57
    %p59 = scmp.ne.s32.totalorder %s51, %s53
    %p60 = scmp.eq.s32.totalorder %s22, 1
    %p61 = por %p59, %p60
    %p62 = scmp.ne.s32.totalorder %s53, %s54
    %p63 = scmp.eq.s32.totalorder %s22, 0
    %p64 = por %p62, %p63
    %p65 = scmp.ne.s32.totalorder %s53, %s54
    %p66 = scmp.eq.s32.totalorder %s23, 1
    %p67 = por %p65, %p66
    %p69 = scmp.ne.s32.totalorder %s54, %s68
    %p70 = scmp.eq.s32.totalorder %s23, 0
    %p71 = por %p69, %p70
    %s73 = sadd.s32 %s72, 1
    %p76 = scmp.eq.s32.totalorder %s17, 1
    %p77 = scmp.ne.s32.totalorder %s72, %s74
    %p78 = scmp.eq.s32.totalorder %s17, 0
    %p79 = por %p77, %p78
    %p80 = scmp.ne.s32.totalorder %s72, %s74
    %p81 = scmp.eq.s32.totalorder %s22, 1
    %p82 = por %p80, %p81
    %p83 = scmp.ne.s32.totalorder %s74, %s75
    %p84 = scmp.eq.s32.totalorder %s22, 0
    %p85 = por %p83, %p84
    %p86 = scmp.ne.s32.totalorder %s74, %s75
    %p87 = scmp.eq.s32.totalorder %s23, 1
    %p88 = por %p86, %p87
    %p90 = scmp.ne.s32.totalorder %s75, %s89
    %p91 = scmp.eq.s32.totalorder %s23, 0
    %p92 = por %p90, %p91
    %s94 = sadd.s32 %s93, 1
    %p97 = scmp.eq.s32.totalorder %s17, 1
    %p98 = scmp.ne.s32.totalorder %s93, %s95
    %p99 = scmp.eq.s32.totalorder %s17, 0
    %p100 = por %p98, %p99
    %p101 = scmp.ne.s32.totalorder %s93, %s95
    %p102 = scmp.eq.s32.totalorder %s22, 1
    %p103 = por %p101, %p102
    %p104 = scmp.ne.s32.totalorder %s95, %s96
    %p105 = scmp.eq.s32.totalorder %s22, 0
    %p106 = por %p104, %p105
    %p107 = scmp.ne.s32.totalorder %s95, %s96
    %p108 = scmp.eq.s32.totalorder %s23, 1
    %p109 = por %p107, %p108
    %p111 = scmp.ne.s32.totalorder %s96, %s110
    %p112 = scmp.eq.s32.totalorder %s23, 0
    %p113 = por %p111, %p112
    %s115 = sadd.s32 %s114, 1
    %p118 = scmp.eq.s32.totalorder %s17, 1
    %p119 = scmp.ne.s32.totalorder %s114, %s116
    %p120 = scmp.eq.s32.totalorder %s17, 0
    %p121 = por %p119, %p120
    %p122 = scmp.ne.s32.totalorder %s114, %s116
    %p123 = scmp.eq.s32.totalorder %s22, 1
    %p124 = por %p122, %p123
    %p125 = scmp.ne.s32.totalorder %s116, %s117
    %p126 = scmp.eq.s32.totalorder %s22, 0
    %p127 = por %p125, %p126
    %p128 = scmp.ne.s32.totalorder %s116, %s117
    %p129 = scmp.eq.s32.totalorder %s23, 1
    %p130 = por %p128, %p129
    %p132 = scmp.ne.s32.totalorder %s117, %s131
    %p133 = scmp.eq.s32.totalorder %s23, 0
    %p134 = por %p132, %p133
    %s136 = sadd.s32 %s135, 1
    %p139 = scmp.eq.s32.totalorder %s17, 1
    %p140 = scmp.ne.s32.totalorder %s135, %s137
    %p141 = scmp.eq.s32.totalorder %s17, 0
    %p142 = por %p140, %p141
    %p143 = scmp.ne.s32.totalorder %s135, %s137
    %p144 = scmp.eq.s32.totalorder %s22, 1
    %p145 = por %p143, %p144
    %p146 = scmp.ne.s32.totalorder %s137, %s138
    %p147 = scmp.eq.s32.totalorder %s22, 0
    %p148 = por %p146, %p147
    %p149 = scmp.ne.s32.totalorder %s137, %s138
    %p150 = scmp.eq.s32.totalorder %s23, 1
    %p151 = por %p149, %p150
    %p153 = scmp.ne.s32.totalorder %s138, %s152
    %p154 = scmp.eq.s32.totalorder %s23, 0
    %p155 = por %p153, %p154
    %s157 = sadd.s32 %s156, 1
    %p160 = scmp.eq.s32.totalorder %s17, 1
    %p161 = scmp.ne.s32.totalorder %s156, %s158
    %p162 = scmp.eq.s32.totalorder %s17, 0
    %p163 = por %p161, %p162
    %p164 = scmp.ne.s32.totalorder %s156, %s158
    %p165 = scmp.eq.s32.totalorder %s22, 1
    %p166 = por %p164, %p165
    %p167 = scmp.ne.s32.totalorder %s158, %s159
    %p168 = scmp.eq.s32.totalorder %s22, 0
    %p169 = por %p167, %p168
    %p170 = scmp.ne.s32.totalorder %s158, %s159
    %p171 = scmp.eq.s32.totalorder %s23, 1
    %p172 = por %p170, %p171
    %p174 = scmp.ne.s32.totalorder %s159, %s173
    %p175 = scmp.eq.s32.totalorder %s23, 0
    %p176 = por %p174, %p175
    %s178 = sadd.s32 %s177, 1
    %p181 = scmp.eq.s32.totalorder %s17, 1
    %p182 = scmp.ne.s32.totalorder %s177, %s179
    %p183 = scmp.eq.s32.totalorder %s17, 0
    %p184 = por %p182, %p183
    %p185 = scmp.ne.s32.totalorder %s177, %s179
    %p186 = scmp.eq.s32.totalorder %s22, 1
    %p187 = por %p185, %p186
    %p188 = scmp.ne.s32.totalorder %s179, %s180
    %p189 = scmp.eq.s32.totalorder %s22, 0
    %p190 = por %p188, %p189
    %p191 = scmp.ne.s32.totalorder %s179, %s180
    %p192 = scmp.eq.s32.totalorder %s23, 1
    %p193 = por %p191, %p192
    %p195 = scmp.ne.s32.totalorder %s180, %s194
    %p196 = scmp.eq.s32.totalorder %s23, 0
    %p197 = por %p195, %p196
    %s199 = sadd.s32 %s198, 1
    %p202 = scmp.eq.s32.totalorder %s17, 1
    %p203 = scmp.ne.s32.totalorder %s198, %s200
    %p204 = scmp.eq.s32.totalorder %s17, 0
    %p205 = por %p203, %p204
    %p206 = scmp.ne.s32.totalorder %s198, %s200
    %p207 = scmp.eq.s32.totalorder %s22, 1
    %p208 = por %p206, %p207
    %p209 = scmp.ne.s32.totalorder %s200, %s201
    %p210 = scmp.eq.s32.totalorder %s22, 0
    %p211 = por %p209, %p210
    %p212 = scmp.ne.s32.totalorder %s200, %s201
    %p213 = scmp.eq.s32.totalorder %s23, 1
    %p214 = por %p212, %p213
    %p216 = scmp.ne.s32.totalorder %s201, %s215
    %p217 = scmp.eq.s32.totalorder %s23, 0
    %p218 = por %p216, %p217
    %s220 = sadd.s32 %s219, 1
    %p223 = scmp.eq.s32.totalorder %s17, 1
    %p224 = scmp.ne.s32.totalorder %s219, %s221
    %p225 = scmp.eq.s32.totalorder %s17, 0
    %p226 = por %p224, %p225
    %p227 = scmp.ne.s32.totalorder %s219, %s221
    %p228 = scmp.eq.s32.totalorder %s22, 1
    %p229 = por %p227, %p228
    %p230 = scmp.ne.s32.totalorder %s221, %s222
    %p231 = scmp.eq.s32.totalorder %s22, 0
    %p232 = por %p230, %p231
    %p233 = scmp.ne.s32.totalorder %s221, %s222
    %p234 = scmp.eq.s32.totalorder %s23, 1
    %p235 = por %p233, %p234
    %p237 = scmp.ne.s32.totalorder %s222, %s236
    %p238 = scmp.eq.s32.totalorder %s23, 0
    %p239 = por %p237, %p238
    %s241 = sadd.s32 %s240, 1
    %p244 = scmp.eq.s32.totalorder %s17, 1
    %p245 = scmp.ne.s32.totalorder %s240, %s242
    %p246 = scmp.eq.s32.totalorder %s17, 0
    %p247 = por %p245, %p246
    %p248 = scmp.ne.s32.totalorder %s240, %s242
    %p249 = scmp.eq.s32.totalorder %s22, 1
    %p250 = por %p248, %p249
    %p251 = scmp.ne.s32.totalorder %s242, %s243
    %p252 = scmp.eq.s32.totalorder %s22, 0
    %p253 = por %p251, %p252
    %p254 = scmp.ne.s32.totalorder %s242, %s243
    %p255 = scmp.eq.s32.totalorder %s23, 1
    %p256 = por %p254, %p255
    %p258 = scmp.ne.s32.totalorder %s243, %s257
    %p259 = scmp.eq.s32.totalorder %s23, 0
    %p260 = por %p258, %p259
    %s261 = ssub.s32 %s17, %s24
    %p262 = scmp.eq.s32.totalorder %s261, 0
    %s264 = sadd.s32 %s263, 1
    %s265 = scalar_select %p262, %s263, %s264
    %p268 = pneg %p262
    %p269 = scmp.eq.s32.totalorder %s17, 1
    %p270 = por %p268, %p269
    %p271 = scmp.ne.s32.totalorder %s263, %s266
    %p272 = scmp.eq.s32.totalorder %s17, 0
    %p273 = por %p271, %p272
    %p274 = scmp.ne.s32.totalorder %s263, %s266
    %p275 = scmp.eq.s32.totalorder %s22, 1
    %p276 = por %p274, %p275
    %p277 = scmp.ne.s32.totalorder %s266, %s267
    %p278 = scmp.eq.s32.totalorder %s22, 0
    %p279 = por %p277, %p278
    %p280 = scmp.ne.s32.totalorder %s266, %s267
    %p281 = scmp.eq.s32.totalorder %s23, 1
    %p282 = por %p280, %p281
    %p284 = scmp.ne.s32.totalorder %s267, %s283
    %p285 = scmp.eq.s32.totalorder %s23, 0
    %p286 = por %p284, %p285
    %p287 = scmp.le.s32.totalorder 1, %s17
    %p288 = scmp.lt.s32.totalorder %s17, 3
    %p289 = pnand %p287, %p288
    %p290 = pneg %p289
    // Predicated region
    $region9: #{_lambda_.9} parent=5 // pred_check
      _
    $region10: #{_lambda_.9} parent=5 // pred_check_branch
      %292 = sbr.rel (%p289) target = $region12
    $region11: #{_lambda_.9} parent=5 // pred_region
      %s293 = ssub.s32 %s17, 1
      // Predicated region
      $region13: #{_lambda_.9} parent=11 // pred_check
        %p294 = pneg %p64
      $region14: #{_lambda_.9} parent=11 // pred_check_branch
        %296 = sbr.rel (%p294) target = $region16
      $region15: #{_lambda_.9} parent=11 // pred_region
        _
      $region16: #{_lambda_.9} parent=11 // pred_fallthru
        _
      // Predicated region
      $region17: #{_lambda_.9} parent=11 // pred_check
        %p297 = pneg %p85
      $region18: #{_lambda_.9} parent=11 // pred_check_branch
        %299 = sbr.rel (%p297) target = $region20
      $region19: #{_lambda_.9} parent=11 // pred_region
        _
      $region20: #{_lambda_.9} parent=11 // pred_fallthru
        _
      // Predicated region
      $region21: #{_lambda_.9} parent=11 // pred_check
        %p300 = pneg %p106
      $region22: #{_lambda_.9} parent=11 // pred_check_branch
        %302 = sbr.rel (%p300) target = $region24
      $region23: #{_lambda_.9} parent=11 // pred_region
        _
      $region24: #{_lambda_.9} parent=11 // pred_fallthru
        _
      // Predicated region
      $region25: #{_lambda_.9} parent=11 // pred_check
        %p303 = pneg %p127
      $region26: #{_lambda_.9} parent=11 // pred_check_branch
        %305 = sbr.rel (%p303) target = $region28
      $region27: #{_lambda_.9} parent=11 // pred_region
        _
      $region28: #{_lambda_.9} parent=11 // pred_fallthru
        _
      // Predicated region
      $region29: #{_lambda_.9} parent=11 // pred_check
        %p306 = pneg %p148
      $region30: #{_lambda_.9} parent=11 // pred_check_branch
        %308 = sbr.rel (%p306) target = $region32
      $region31: #{_lambda_.9} parent=11 // pred_region
        _
      $region32: #{_lambda_.9} parent=11 // pred_fallthru
        _
      // Predicated region
      $region33: #{_lambda_.9} parent=11 // pred_check
        %p309 = pneg %p169
      $region34: #{_lambda_.9} parent=11 // pred_check_branch
        %311 = sbr.rel (%p309) target = $region36
      $region35: #{_lambda_.9} parent=11 // pred_region
        _
      $region36: #{_lambda_.9} parent=11 // pred_fallthru
        _
      // Predicated region
      $region37: #{_lambda_.9} parent=11 // pred_check
        %p312 = pneg %p190
      $region38: #{_lambda_.9} parent=11 // pred_check_branch
        %314 = sbr.rel (%p312) target = $region40
      $region39: #{_lambda_.9} parent=11 // pred_region
        _
      $region40: #{_lambda_.9} parent=11 // pred_fallthru
        _
      // Predicated region
      $region41: #{_lambda_.9} parent=11 // pred_check
        %p315 = pneg %p211
      $region42: #{_lambda_.9} parent=11 // pred_check_branch
        %317 = sbr.rel (%p315) target = $region44
      $region43: #{_lambda_.9} parent=11 // pred_region
        _
      $region44: #{_lambda_.9} parent=11 // pred_fallthru
        _
      // Predicated region
      $region45: #{_lambda_.9} parent=11 // pred_check
        %p318 = pneg %p232
      $region46: #{_lambda_.9} parent=11 // pred_check_branch
        %320 = sbr.rel (%p318) target = $region48
      $region47: #{_lambda_.9} parent=11 // pred_region
        _
      $region48: #{_lambda_.9} parent=11 // pred_fallthru
        _
      // Predicated region
      $region49: #{_lambda_.9} parent=11 // pred_check
        %p321 = pneg %p253
      $region50: #{_lambda_.9} parent=11 // pred_check_branch
        %323 = sbr.rel (%p321) target = $region52
      $region51: #{_lambda_.9} parent=11 // pred_region
        _
      $region52: #{_lambda_.9} parent=11 // pred_fallthru
        _
    $region12: #{_lambda_.9} parent=5 // pred_fallthru
      _
    %p324 = scmp.lt.s32.totalorder %s17, 2
    // Predicated region
    $region53: #{_lambda_.9} parent=5 // pred_check
      %p325 = pneg %p324
    $region54: #{_lambda_.9} parent=5 // pred_check_branch
      %327 = sbr.rel (%p325) target = $region56
    $region55: #{_lambda_.9} parent=5 // pred_region
      // Predicated region
      $region57: #{_lambda_.9} parent=55 // pred_check
        %p328 = pneg %p37
      $region58: #{_lambda_.9} parent=55 // pred_check_branch
        %330 = sbr.rel (%p328) target = $region60
      $region59: #{_lambda_.9} parent=55 // pred_region
        %p331 = scmp.lt.s32.totalorder %s17, 1
        %s332 = scalar_select %p331, %s17, 1
        %s333 = smul.addr %s332, 2
        %s334 = smul.addr %s333, 4
        %s335 = scalar_lea.vmem %s0, %s334
      $region60: #{_lambda_.9} parent=55 // pred_fallthru
        _
    $region56: #{_lambda_.9} parent=5 // pred_fallthru
      _
    %p336 = scmp.le.s32.totalorder 1, %s17
    %p337 = scmp.lt.s32.totalorder %s17, 3
    %p338 = pnand %p336, %p337
    %p339 = pneg %p338
    // Predicated region
    $region61: #{_lambda_.9} parent=5 // pred_check
      _
    $region62: #{_lambda_.9} parent=5 // pred_check_branch
      %341 = sbr.rel (%p338) target = $region64
    $region63: #{_lambda_.9} parent=5 // pred_region
      %s342 = ssub.s32 %s17, 1
      %p343 = scmp.lt.s32.totalorder %s22, 1
      %s344 = scalar_select %p343, %s22, 1
      %s345 = smul.addr %s344, 2
      %s346 = smul.addr %s345, 4
      %s347 = scalar_lea.vmem %s0, %s346
      %p348 = pneg %p43
      %p349 = pneg %p40
      %p350 = pneg %p64
      %p351 = pneg %p61
      %p352 = pneg %p85
      %p353 = pneg %p82
      %p354 = pneg %p106
      %p355 = pneg %p103
      %p356 = pneg %p127
      %p357 = pneg %p124
      %p358 = pneg %p148
      %p359 = pneg %p145
      %p360 = pneg %p169
      %p361 = pneg %p166
      %p362 = pneg %p190
      %p363 = pneg %p187
      %p364 = pneg %p211
      %p365 = pneg %p208
      %p366 = pneg %p232
      %p367 = pneg %p229
      %p368 = pneg %p253
      %p369 = pneg %p250
      %p370 = pneg %p279
      %p371 = pneg %p276
      %p372 = scmp.lt.s32.totalorder %s22, 1
      %s373 = scalar_select %p372, %s22, 1
      %s374 = smul.addr %s373, 2
      %s375 = scalar_lea.vmem %s11, %s374
      %p376 = scmp.lt.s32.totalorder %s22, 1
      %s377 = scalar_select %p376, %s22, 1
      %s378 = smul.addr %s377, 2
      %s379 = smul.addr %s378, 4
      %s380 = scalar_lea.vmem %s0, %s379
      %p381 = scmp.lt.s32.totalorder %s22, 1
      %s382 = scalar_select %p381, %s22, 1
      %s383 = smul.addr %s382, 2
      %s384 = scalar_lea.vmem %s11, %s383
      %vm386 = vcmask 1040384
      %vm387 = vsmask.f32 256
      %vm388 = vmand %vm386, %vm387
      %v389 = vld [vmem:[#allocation2] sm:$0x1]
      %v390 = vsel %vm388, 0, %v389
      %391 = vst [vmem:[#allocation2] sm:$0x1] %v390
      %vm392 = vcmask 1042434
      %vm393 = vsmask.f32 7946
      %vm394 = vmand %vm392, %vm393
      %v395 = vld [vmem:[#allocation2] sm:$0x4]
      %v396 = vsel %vm394, 0, %v395
      %397 = vst [vmem:[#allocation2] sm:$0x4] %v396
      %v398 = vld [vmem:[%s380] sm:$0x3]
      %s399 = scalar_lea.vmem %s380, 4
      %v400 = vld [vmem:[%s399] sm:$0x3]
      %v401 = vld [vmem:[%s380] sm:$0x7]
      %v402 = vld [vmem:[%s1] sm:$0xf]
      %v403 = vld [vmem:[%s1 + $0x4] sm:$0xf]
      %v404 = vld [vmem:[%s1 + $0x8] sm:$0xf]
      %v405 = vld [vmem:[%s1 + $0xc] sm:$0xf]
      %v406 = vld [vmem:[%s1 + $0x10] sm:$0xf]
      %v407 = vld [vmem:[%s1 + $0x14] sm:$0xf]
      %v408 = vld [vmem:[%s1 + $0x18] sm:$0xf]
      %v409 = vld [vmem:[%s1 + $0x1c] sm:$0xf]
      %v410 = vld [vmem:[%s1 + $0x20] sm:$0xf]
      %v411 = vld [vmem:[%s1 + $0x24] sm:$0xf]
      %v412 = vld [vmem:[%s1 + $0x28] sm:$0xf]
      %v413 = vld [vmem:[%s1 + $0x2c] sm:$0xf]
      %v414 = vld [vmem:[%s1 + $0x30] sm:$0xf]
      %v415 = vld [vmem:[%s1 + $0x34] sm:$0xf]
      %v416 = vld [vmem:[%s1 + $0x38] sm:$0xf]
      %v417 = vld [vmem:[%s1 + $0x3c] sm:$0xf]
      %s418 = scalar_lea.vmem %s1, 64
      %v419 = vld [vmem:[%s418] sm:$0xf]
      %v420 = vld [vmem:[%s418 + $0x4] sm:$0xf]
      %v421 = vld [vmem:[%s418 + $0x8] sm:$0xf]
      %v422 = vld [vmem:[%s418 + $0xc] sm:$0xf]
      %v423 = vld [vmem:[%s418 + $0x10] sm:$0xf]
      %v424 = vld [vmem:[%s418 + $0x14] sm:$0xf]
      %v425 = vld [vmem:[%s418 + $0x18] sm:$0xf]
      %v426 = vld [vmem:[%s418 + $0x1c] sm:$0xf]
      %v427 = vld [vmem:[%s418 + $0x20] sm:$0xf]
      %v428 = vld [vmem:[%s418 + $0x24] sm:$0xf]
      %v429 = vld [vmem:[%s418 + $0x28] sm:$0xf]
      %v430 = vld [vmem:[%s418 + $0x2c] sm:$0xf]
      %v431 = vld [vmem:[%s418 + $0x30] sm:$0xf]
      %v432 = vld [vmem:[%s418 + $0x34] sm:$0xf]
      %v433 = vld [vmem:[%s418 + $0x38] sm:$0xf]
      %v434 = vld [vmem:[%s418 + $0x3c] sm:$0xf]
      %v451 = vunpack.c.l.b16 %v419
      %v452 = vunpack.c.l.b16 %v420
      %v453 = vunpack.c.l.b16 %v421
      %v454 = vunpack.c.l.b16 %v422
      %v455 = vunpack.c.l.b16 %v423
      %v456 = vunpack.c.l.b16 %v424
      %v457 = vunpack.c.l.b16 %v425
      %v458 = vunpack.c.l.b16 %v426
      %v459 = vunpack.c.l.b16 %v427
      %v460 = vunpack.c.l.b16 %v428
      %v461 = vunpack.c.l.b16 %v429
      %v462 = vunpack.c.l.b16 %v430
      %v463 = vunpack.c.l.b16 %v431
      %v464 = vunpack.c.l.b16 %v432
      %v465 = vunpack.c.l.b16 %v433
      %v466 = vunpack.c.l.b16 %v434
      %v467 = vpack.c.b16 %v452, %v451
      %v468 = vpack.c.b16 %v454, %v453
      %v469 = vpack.c.b16 %v456, %v455
      %v470 = vpack.c.b16 %v458, %v457
      %v471 = vpack.c.b16 %v460, %v459
      %v472 = vpack.c.b16 %v462, %v461
      %v473 = vpack.c.b16 %v464, %v463
      %v474 = vpack.c.b16 %v466, %v465
      %483 = vmatprep.subr.bf16.mxu0 0
      %484 = vmatpush1.bf16.msra.mxu0 %v474
      %485 = vmatprep.subr.bf16.mxu0 0
      %486 = vmatpush1.bf16.msra.mxu0 %v473
      %487 = vmatprep.subr.bf16.mxu0 0
      %488 = vmatpush1.bf16.msra.mxu0 %v472
      %489 = vmatprep.subr.bf16.mxu0 0
      %490 = vmatpush1.bf16.msra.mxu0 %v471
      %491 = vmatprep.subr.bf16.mxu0 0
      %492 = vmatpush1.bf16.msra.mxu0 %v470
      %493 = vmatprep.subr.bf16.mxu0 0
      %494 = vmatpush1.bf16.msra.mxu0 %v469
      %495 = vmatprep.subr.bf16.mxu0 0
      %496 = vmatpush1.bf16.msra.mxu0 %v468
      %497 = vmatprep.subr.bf16.mxu0 0
      %498 = vmatpush1.bf16.msra.mxu0 %v467
      %499 = vmatprep.subr.bf16.mxu0 0
      %500 = vmatpush2.bf16.msra.mxu0 0
      %501 = vmatprep.subr.bf16.mxu0 0
      %502 = vmatpush2.bf16.msra.mxu0 0
      %503 = vmatprep.subr.bf16.mxu0 0
      %504 = vmatpush2.bf16.msra.mxu0 0
      %505 = vmatprep.subr.bf16.mxu0 0
      %506 = vmatpush2.bf16.msra.mxu0 0
      %507 = vmatprep.subr.bf16.mxu0 0
      %508 = vmatpush2.bf16.msra.mxu0 0
      %509 = vmatprep.subr.bf16.mxu0 0
      %510 = vmatpush2.bf16.msra.mxu0 0
      %511 = vmatprep.subr.bf16.mxu0 0
      %512 = vmatpush2.bf16.msra.mxu0 0
      %513 = vmatprep.subr.bf16.mxu0 0
      %514 = vmatpush2.bf16.msra.mxu0 0
      %515 = vmatprep.mubr.bf16.mxu0 0
      %516 = vmatmul.mubr.bf16.gmra.mxu0 %v400
      %v517 = vpop.f32.mrf.mxu0
      %v518 = vadd.f32 0.0, %v517
      %v519 = vpop.f32.mrf.mxu0
      %v520 = vpop.f32.mrf.mxu0
      %v521 = vpop.f32.mrf.mxu0
      %522 = vdwg.mxu0
      %v539 = vunpack.c.l.b16 %v402
      %v540 = vunpack.c.l.b16 %v403
      %v541 = vunpack.c.l.b16 %v404
      %v542 = vunpack.c.l.b16 %v405
      %v543 = vunpack.c.l.b16 %v406
      %v544 = vunpack.c.l.b16 %v407
      %v545 = vunpack.c.l.b16 %v408
      %v546 = vunpack.c.l.b16 %v409
      %v547 = vunpack.c.l.b16 %v410
      %v548 = vunpack.c.l.b16 %v411
      %v549 = vunpack.c.l.b16 %v412
      %v550 = vunpack.c.l.b16 %v413
      %v551 = vunpack.c.l.b16 %v414
      %v552 = vunpack.c.l.b16 %v415
      %v553 = vunpack.c.l.b16 %v416
      %v554 = vunpack.c.l.b16 %v417
      %v555 = vpack.c.b16 %v540, %v539
      %v556 = vpack.c.b16 %v542, %v541
      %v557 = vpack.c.b16 %v544, %v543
      %v558 = vpack.c.b16 %v546, %v545
      %v559 = vpack.c.b16 %v548, %v547
      %v560 = vpack.c.b16 %v550, %v549
      %v561 = vpack.c.b16 %v552, %v551
      %v562 = vpack.c.b16 %v554, %v553
      %571 = vmatprep.subr.bf16.mxu0 0
      %572 = vmatpush1.bf16.msra.mxu0 %v562
      %573 = vmatprep.subr.bf16.mxu0 0
      %574 = vmatpush1.bf16.msra.mxu0 %v561
      %575 = vmatprep.subr.bf16.mxu0 0
      %576 = vmatpush1.bf16.msra.mxu0 %v560
      %577 = vmatprep.subr.bf16.mxu0 0
      %578 = vmatpush1.bf16.msra.mxu0 %v559
      %579 = vmatprep.subr.bf16.mxu0 0
      %580 = vmatpush1.bf16.msra.mxu0 %v558
      %581 = vmatprep.subr.bf16.mxu0 0
      %582 = vmatpush1.bf16.msra.mxu0 %v557
      %583 = vmatprep.subr.bf16.mxu0 0
      %584 = vmatpush1.bf16.msra.mxu0 %v556
      %585 = vmatprep.subr.bf16.mxu0 0
      %586 = vmatpush1.bf16.msra.mxu0 %v555
      %587 = vmatprep.subr.bf16.mxu0 0
      %588 = vmatpush2.bf16.msra.mxu0 0
      %589 = vmatprep.subr.bf16.mxu0 0
      %590 = vmatpush2.bf16.msra.mxu0 0
      %591 = vmatprep.subr.bf16.mxu0 0
      %592 = vmatpush2.bf16.msra.mxu0 0
      %593 = vmatprep.subr.bf16.mxu0 0
      %594 = vmatpush2.bf16.msra.mxu0 0
      %595 = vmatprep.subr.bf16.mxu0 0
      %596 = vmatpush2.bf16.msra.mxu0 0
      %597 = vmatprep.subr.bf16.mxu0 0
      %598 = vmatpush2.bf16.msra.mxu0 0
      %599 = vmatprep.subr.bf16.mxu0 0
      %600 = vmatpush2.bf16.msra.mxu0 0
      %601 = vmatprep.subr.bf16.mxu0 0
      %602 = vmatpush2.bf16.msra.mxu0 0
      %603 = vmatprep.mubr.bf16.mxu0 0
      %604 = vmatmul.mubr.bf16.gmra.mxu0 %v398
      %v605 = vpop.f32.mrf.mxu0
      %v606 = vadd.f32 %v518, %v605
      %v607 = vpop.f32.mrf.mxu0
      %v608 = vpop.f32.mrf.mxu0
      %v609 = vpop.f32.mrf.mxu0
      %610 = vdwg.mxu0
      %s611 = scalar_lea.vmem %s1, 128
      %v612 = vld [vmem:[%s611] sm:$0xf]
      %v613 = vld [vmem:[%s611 + $0x4] sm:$0xf]
      %v614 = vld [vmem:[%s611 + $0x8] sm:$0xf]
      %v615 = vld [vmem:[%s611 + $0xc] sm:$0xf]
      %v616 = vld [vmem:[%s611 + $0x10] sm:$0xf]
      %v617 = vld [vmem:[%s611 + $0x14] sm:$0xf]
      %v618 = vld [vmem:[%s611 + $0x18] sm:$0xf]
      %v619 = vld [vmem:[%s611 + $0x1c] sm:$0xf]
      %v620 = vld [vmem:[%s611 + $0x20] sm:$0xf]
      %v621 = vld [vmem:[%s611 + $0x24] sm:$0xf]
      %v622 = vld [vmem:[%s611 + $0x28] sm:$0xf]
      %v623 = vld [vmem:[%s611 + $0x2c] sm:$0xf]
      %v624 = vld [vmem:[%s611 + $0x30] sm:$0xf]
      %v625 = vld [vmem:[%s611 + $0x34] sm:$0xf]
      %v626 = vld [vmem:[%s611 + $0x38] sm:$0xf]
      %v627 = vld [vmem:[%s611 + $0x3c] sm:$0xf]
      %v629 = vunpack.c.l.b16 %v401
      %v630 = vpack.c.b16 %v629, %v629
      %v632 = vshrl.u32 %v630, 16
      %v634 = vshll.u32 %v630, 16
      %v636 = vrot.slane %v634, 1
      %v637 = vor.u32 %v632, %v636
      %v655 = vunpack.c.l.b16 %v612
      %v656 = vunpack.c.l.b16 %v613
      %v657 = vunpack.c.l.b16 %v614
      %v658 = vunpack.c.l.b16 %v615
      %v659 = vunpack.c.l.b16 %v616
      %v660 = vunpack.c.l.b16 %v617
      %v661 = vunpack.c.l.b16 %v618
      %v662 = vunpack.c.l.b16 %v619
      %v663 = vunpack.c.l.b16 %v620
      %v664 = vunpack.c.l.b16 %v621
      %v665 = vunpack.c.l.b16 %v622
      %v666 = vunpack.c.l.b16 %v623
      %v667 = vunpack.c.l.b16 %v624
      %v668 = vunpack.c.l.b16 %v625
      %v669 = vunpack.c.l.b16 %v626
      %v670 = vunpack.c.l.b16 %v627
      %v671 = vpack.c.b16 %v656, %v655
      %v672 = vpack.c.b16 %v658, %v657
      %v673 = vpack.c.b16 %v660, %v659
      %v674 = vpack.c.b16 %v662, %v661
      %v675 = vpack.c.b16 %v664, %v663
      %v676 = vpack.c.b16 %v666, %v665
      %v677 = vpack.c.b16 %v668, %v667
      %v678 = vpack.c.b16 %v670, %v669
      %687 = vmatprep.subr.bf16.mxu0 0
      %688 = vmatpush1.bf16.msra.mxu0 %v678
      %689 = vmatprep.subr.bf16.mxu0 0
      %690 = vmatpush1.bf16.msra.mxu0 %v677
      %691 = vmatprep.subr.bf16.mxu0 0
      %692 = vmatpush1.bf16.msra.mxu0 %v676
      %693 = vmatprep.subr.bf16.mxu0 0
      %694 = vmatpush1.bf16.msra.mxu0 %v675
      %695 = vmatprep.subr.bf16.mxu0 0
      %696 = vmatpush1.bf16.msra.mxu0 %v674
      %697 = vmatprep.subr.bf16.mxu0 0
      %698 = vmatpush1.bf16.msra.mxu0 %v673
      %699 = vmatprep.subr.bf16.mxu0 0
      %700 = vmatpush1.bf16.msra.mxu0 %v672
      %701 = vmatprep.subr.bf16.mxu0 0
      %702 = vmatpush1.bf16.msra.mxu0 %v671
      %703 = vmatprep.subr.bf16.mxu0 0
      %704 = vmatpush2.bf16.msra.mxu0 0
      %705 = vmatprep.subr.bf16.mxu0 0
      %706 = vmatpush2.bf16.msra.mxu0 0
      %707 = vmatprep.subr.bf16.mxu0 0
      %708 = vmatpush2.bf16.msra.mxu0 0
      %709 = vmatprep.subr.bf16.mxu0 0
      %710 = vmatpush2.bf16.msra.mxu0 0
      %711 = vmatprep.subr.bf16.mxu0 0
      %712 = vmatpush2.bf16.msra.mxu0 0
      %713 = vmatprep.subr.bf16.mxu0 0
      %714 = vmatpush2.bf16.msra.mxu0 0
      %715 = vmatprep.subr.bf16.mxu0 0
      %716 = vmatpush2.bf16.msra.mxu0 0
      %717 = vmatprep.subr.bf16.mxu0 0
      %718 = vmatpush2.bf16.msra.mxu0 0
      %719 = vmatprep.mubr.bf16.mxu0 0
      %720 = vmatmul.mubr.bf16.gmra.mxu0 %v637
      %v721 = vpop.f32.mrf.mxu0
      %v722 = vadd.f32 0.0, %v721
      %v723 = vpop.f32.mrf.mxu0
      %v724 = vpop.f32.mrf.mxu0
      %v725 = vpop.f32.mrf.mxu0
      %726 = vdwg.mxu0
      %v727 = vadd.f32 %v606, %v722
      %v728 = vld [vmem:[%s2] sm:$0x1]
      %v730 = vlaneseq
      %v731 = vshrl.u32 %v730, 7
      %v732 = vsub.s32 0, %v731
      %v733 = vrot.slane %v728, %v732
      %v735 = vadd.f32 %v727, %v733
      %v736 = vmax.f32 %v735, 0.0
      %v737 = vld [vmem:[%s5] sm:$0xf]
      %v738 = vld [vmem:[%s5 + $0x4] sm:$0xf]
      %v739 = vld [vmem:[%s5 + $0x8] sm:$0xf]
      %v740 = vld [vmem:[%s5 + $0xc] sm:$0xf]
      %v741 = vld [vmem:[%s5 + $0x10] sm:$0xf]
      %v742 = vld [vmem:[%s5 + $0x14] sm:$0xf]
      %v743 = vld [vmem:[%s5 + $0x18] sm:$0xf]
      %v744 = vld [vmem:[%s5 + $0x1c] sm:$0xf]
      %v745 = vld [vmem:[%s5 + $0x20] sm:$0xf]
      %v746 = vld [vmem:[%s5 + $0x24] sm:$0xf]
      %v747 = vld [vmem:[%s5 + $0x28] sm:$0xf]
      %v748 = vld [vmem:[%s5 + $0x2c] sm:$0xf]
      %v749 = vld [vmem:[%s5 + $0x30] sm:$0xf]
      %v750 = vld [vmem:[%s5 + $0x34] sm:$0xf]
      %v751 = vld [vmem:[%s5 + $0x38] sm:$0xf]
      %v752 = vld [vmem:[%s5 + $0x3c] sm:$0xf]
      %v753 = vld [vmem:[%s6] sm:$0x1]
      %v755 = vlaneseq
      %v756 = vshrl.u32 %v755, 7
      %v757 = vsub.s32 0, %v756
      %v758 = vrot.slane %v753, %v757
      %v776 = vunpack.c.l.b16 %v737
      %v777 = vunpack.c.l.b16 %v738
      %v778 = vunpack.c.l.b16 %v739
      %v779 = vunpack.c.l.b16 %v740
      %v780 = vunpack.c.l.b16 %v741
      %v781 = vunpack.c.l.b16 %v742
      %v782 = vunpack.c.l.b16 %v743
      %v783 = vunpack.c.l.b16 %v744
      %v784 = vunpack.c.l.b16 %v745
      %v785 = vunpack.c.l.b16 %v746
      %v786 = vunpack.c.l.b16 %v747
      %v787 = vunpack.c.l.b16 %v748
      %v788 = vunpack.c.l.b16 %v749
      %v789 = vunpack.c.l.b16 %v750
      %v790 = vunpack.c.l.b16 %v751
      %v791 = vunpack.c.l.b16 %v752
      %v792 = vpack.c.b16 %v777, %v776
      %v793 = vpack.c.b16 %v779, %v778
      %v794 = vpack.c.b16 %v781, %v780
      %v795 = vpack.c.b16 %v783, %v782
      %v796 = vpack.c.b16 %v785, %v784
      %v797 = vpack.c.b16 %v787, %v786
      %v798 = vpack.c.b16 %v789, %v788
      %v799 = vpack.c.b16 %v791, %v790
      %808 = vmatprep.subr.bf16.mxu0 0
      %809 = vmatpush1.bf16.msra.mxu0 %v799
      %810 = vmatprep.subr.bf16.mxu0 0
      %811 = vmatpush1.bf16.msra.mxu0 %v798
      %812 = vmatprep.subr.bf16.mxu0 0
      %813 = vmatpush1.bf16.msra.mxu0 %v797
      %814 = vmatprep.subr.bf16.mxu0 0
      %815 = vmatpush1.bf16.msra.mxu0 %v796
      %816 = vmatprep.subr.bf16.mxu0 0
      %817 = vmatpush1.bf16.msra.mxu0 %v795
      %818 = vmatprep.subr.bf16.mxu0 0
      %819 = vmatpush1.bf16.msra.mxu0 %v794
      %820 = vmatprep.subr.bf16.mxu0 0
      %821 = vmatpush1.bf16.msra.mxu0 %v793
      %822 = vmatprep.subr.bf16.mxu0 0
      %823 = vmatpush1.bf16.msra.mxu0 %v792
      %824 = vmatprep.subr.bf16.mxu0 0
      %825 = vmatpush2.bf16.msra.mxu0 0
      %826 = vmatprep.subr.bf16.mxu0 0
      %827 = vmatpush2.bf16.msra.mxu0 0
      %828 = vmatprep.subr.bf16.mxu0 0
      %829 = vmatpush2.bf16.msra.mxu0 0
      %830 = vmatprep.subr.bf16.mxu0 0
      %831 = vmatpush2.bf16.msra.mxu0 0
      %832 = vmatprep.subr.bf16.mxu0 0
      %833 = vmatpush2.bf16.msra.mxu0 0
      %834 = vmatprep.subr.bf16.mxu0 0
      %835 = vmatpush2.bf16.msra.mxu0 0
      %836 = vmatprep.subr.bf16.mxu0 0
      %837 = vmatpush2.bf16.msra.mxu0 0
      %838 = vmatprep.subr.bf16.mxu0 0
      %839 = vmatpush2.bf16.msra.mxu0 0
      %840 = vmatprep.mubr.bf16.mxu0 0
      %841 = vmatmul.mubr.bf16.gmra.mxu0 %v400
      %v842 = vpop.f32.mrf.mxu0
      %v843 = vadd.f32 %v758, %v842
      %v844 = vpop.f32.mrf.mxu0
      %v845 = vpop.f32.mrf.mxu0
      %v846 = vpop.f32.mrf.mxu0
      %847 = vdwg.mxu0
      %v848 = vpack.c.bf16 %v736, %v736
      %v850 = vunpack.c.l.b16 %v848
      %v851 = vpack.c.b16 %v850, %v850
      %v853 = vshrl.u32 %v851, 16
      %v855 = vrot.slane %v853, 7
      %v856 = vshll.u32 %v851, 16
      %v858 = vor.u32 %v855, %v856
      %vm860 = vcmask 1042432
      %vm861 = vsmask.f32 2306
      %vm862 = vmand %vm860, %vm861
      %v863 = vld [vmem:[#allocation2] sm:$0x7]
      %v864 = vsel %vm862, %v858, %v863
      %865 = vst [vmem:[#allocation2] sm:$0x7] %v864
      %v866 = vld [vmem:[#allocation2] sm:$0x3]
      %v867 = vld [vmem:[#allocation2] sm:$0x7]
      %v868 = vld [vmem:[#allocation2] sm:$0x6]
      %v869 = vld [vmem:[%s3] sm:$0xf]
      %v870 = vld [vmem:[%s3 + $0x4] sm:$0xf]
      %v871 = vld [vmem:[%s3 + $0x8] sm:$0xf]
      %v872 = vld [vmem:[%s3 + $0xc] sm:$0xf]
      %v873 = vld [vmem:[%s3 + $0x10] sm:$0xf]
      %v874 = vld [vmem:[%s3 + $0x14] sm:$0xf]
      %v875 = vld [vmem:[%s3 + $0x18] sm:$0xf]
      %v876 = vld [vmem:[%s3 + $0x1c] sm:$0xf]
      %v877 = vld [vmem:[%s3 + $0x20] sm:$0xf]
      %v878 = vld [vmem:[%s3 + $0x24] sm:$0xf]
      %v879 = vld [vmem:[%s3 + $0x28] sm:$0xf]
      %v880 = vld [vmem:[%s3 + $0x2c] sm:$0xf]
      %v881 = vld [vmem:[%s3 + $0x30] sm:$0xf]
      %v882 = vld [vmem:[%s3 + $0x34] sm:$0xf]
      %v883 = vld [vmem:[%s3 + $0x38] sm:$0xf]
      %v884 = vld [vmem:[%s3 + $0x3c] sm:$0xf]
      %s885 = scalar_lea.vmem %s3, 64
      %v886 = vld [vmem:[%s885] sm:$0xf]
      %v887 = vld [vmem:[%s885 + $0x4] sm:$0xf]
      %v888 = vld [vmem:[%s885 + $0x8] sm:$0xf]
      %v889 = vld [vmem:[%s885 + $0xc] sm:$0xf]
      %v890 = vld [vmem:[%s885 + $0x10] sm:$0xf]
      %v891 = vld [vmem:[%s885 + $0x14] sm:$0xf]
      %v892 = vld [vmem:[%s885 + $0x18] sm:$0xf]
      %v893 = vld [vmem:[%s885 + $0x1c] sm:$0xf]
      %v894 = vld [vmem:[%s885 + $0x20] sm:$0xf]
      %v895 = vld [vmem:[%s885 + $0x24] sm:$0xf]
      %v896 = vld [vmem:[%s885 + $0x28] sm:$0xf]
      %v897 = vld [vmem:[%s885 + $0x2c] sm:$0xf]
      %v898 = vld [vmem:[%s885 + $0x30] sm:$0xf]
      %v899 = vld [vmem:[%s885 + $0x34] sm:$0xf]
      %v900 = vld [vmem:[%s885 + $0x38] sm:$0xf]
      %v901 = vld [vmem:[%s885 + $0x3c] sm:$0xf]
      %v903 = vunpack.c.l.b16 %v867
      %v904 = vpack.c.b16 %v903, %v903
      %v906 = vshrl.u32 %v904, 16
      %v908 = vshll.u32 %v904, 16
      %v910 = vrot.slane %v908, 1
      %v911 = vor.u32 %v906, %v910
      %v929 = vunpack.c.l.b16 %v886
      %v930 = vunpack.c.l.b16 %v887
      %v931 = vunpack.c.l.b16 %v888
      %v932 = vunpack.c.l.b16 %v889
      %v933 = vunpack.c.l.b16 %v890
      %v934 = vunpack.c.l.b16 %v891
      %v935 = vunpack.c.l.b16 %v892
      %v936 = vunpack.c.l.b16 %v893
      %v937 = vunpack.c.l.b16 %v894
      %v938 = vunpack.c.l.b16 %v895
      %v939 = vunpack.c.l.b16 %v896
      %v940 = vunpack.c.l.b16 %v897
      %v941 = vunpack.c.l.b16 %v898
      %v942 = vunpack.c.l.b16 %v899
      %v943 = vunpack.c.l.b16 %v900
      %v944 = vunpack.c.l.b16 %v901
      %v945 = vpack.c.b16 %v930, %v929
      %v946 = vpack.c.b16 %v932, %v931
      %v947 = vpack.c.b16 %v934, %v933
      %v948 = vpack.c.b16 %v936, %v935
      %v949 = vpack.c.b16 %v938, %v937
      %v950 = vpack.c.b16 %v940, %v939
      %v951 = vpack.c.b16 %v942, %v941
      %v952 = vpack.c.b16 %v944, %v943
      %961 = vmatprep.subr.bf16.mxu0 0
      %962 = vmatpush1.bf16.msra.mxu0 %v952
      %963 = vmatprep.subr.bf16.mxu0 0
      %964 = vmatpush1.bf16.msra.mxu0 %v951
      %965 = vmatprep.subr.bf16.mxu0 0
      %966 = vmatpush1.bf16.msra.mxu0 %v950
      %967 = vmatprep.subr.bf16.mxu0 0
      %968 = vmatpush1.bf16.msra.mxu0 %v949
      %969 = vmatprep.subr.bf16.mxu0 0
      %970 = vmatpush1.bf16.msra.mxu0 %v948
      %971 = vmatprep.subr.bf16.mxu0 0
      %972 = vmatpush1.bf16.msra.mxu0 %v947
      %973 = vmatprep.subr.bf16.mxu0 0
      %974 = vmatpush1.bf16.msra.mxu0 %v946
      %975 = vmatprep.subr.bf16.mxu0 0
      %976 = vmatpush1.bf16.msra.mxu0 %v945
      %977 = vmatprep.subr.bf16.mxu0 0
      %978 = vmatpush2.bf16.msra.mxu0 0
      %979 = vmatprep.subr.bf16.mxu0 0
      %980 = vmatpush2.bf16.msra.mxu0 0
      %981 = vmatprep.subr.bf16.mxu0 0
      %982 = vmatpush2.bf16.msra.mxu0 0
      %983 = vmatprep.subr.bf16.mxu0 0
      %984 = vmatpush2.bf16.msra.mxu0 0
      %985 = vmatprep.subr.bf16.mxu0 0
      %986 = vmatpush2.bf16.msra.mxu0 0
      %987 = vmatprep.subr.bf16.mxu0 0
      %988 = vmatpush2.bf16.msra.mxu0 0
      %989 = vmatprep.subr.bf16.mxu0 0
      %990 = vmatpush2.bf16.msra.mxu0 0
      %991 = vmatprep.subr.bf16.mxu0 0
      %992 = vmatpush2.bf16.msra.mxu0 0
      %993 = vmatprep.mubr.bf16.mxu0 0
      %994 = vmatmul.mubr.bf16.gmra.mxu0 %v911
      %v995 = vpop.f32.mrf.mxu0
      %v996 = vadd.f32 0.0, %v995
      %v997 = vpop.f32.mrf.mxu0
      %v998 = vpop.f32.mrf.mxu0
      %v999 = vpop.f32.mrf.mxu0
      %1000 = vdwg.mxu0
      %v1017 = vunpack.c.l.b16 %v869
      %v1018 = vunpack.c.l.b16 %v870
      %v1019 = vunpack.c.l.b16 %v871
      %v1020 = vunpack.c.l.b16 %v872
      %v1021 = vunpack.c.l.b16 %v873
      %v1022 = vunpack.c.l.b16 %v874
      %v1023 = vunpack.c.l.b16 %v875
      %v1024 = vunpack.c.l.b16 %v876
      %v1025 = vunpack.c.l.b16 %v877
      %v1026 = vunpack.c.l.b16 %v878
      %v1027 = vunpack.c.l.b16 %v879
      %v1028 = vunpack.c.l.b16 %v880
      %v1029 = vunpack.c.l.b16 %v881
      %v1030 = vunpack.c.l.b16 %v882
      %v1031 = vunpack.c.l.b16 %v883
      %v1032 = vunpack.c.l.b16 %v884
      %v1033 = vpack.c.b16 %v1018, %v1017
      %v1034 = vpack.c.b16 %v1020, %v1019
      %v1035 = vpack.c.b16 %v1022, %v1021
      %v1036 = vpack.c.b16 %v1024, %v1023
      %v1037 = vpack.c.b16 %v1026, %v1025
      %v1038 = vpack.c.b16 %v1028, %v1027
      %v1039 = vpack.c.b16 %v1030, %v1029
      %v1040 = vpack.c.b16 %v1032, %v1031
      %1049 = vmatprep.subr.bf16.mxu0 0
      %1050 = vmatpush1.bf16.msra.mxu0 %v1040
      %1051 = vmatprep.subr.bf16.mxu0 0
      %1052 = vmatpush1.bf16.msra.mxu0 %v1039
      %1053 = vmatprep.subr.bf16.mxu0 0
      %1054 = vmatpush1.bf16.msra.mxu0 %v1038
      %1055 = vmatprep.subr.bf16.mxu0 0
      %1056 = vmatpush1.bf16.msra.mxu0 %v1037
      %1057 = vmatprep.subr.bf16.mxu0 0
      %1058 = vmatpush1.bf16.msra.mxu0 %v1036
      %1059 = vmatprep.subr.bf16.mxu0 0
      %1060 = vmatpush1.bf16.msra.mxu0 %v1035
      %1061 = vmatprep.subr.bf16.mxu0 0
      %1062 = vmatpush1.bf16.msra.mxu0 %v1034
      %1063 = vmatprep.subr.bf16.mxu0 0
      %1064 = vmatpush1.bf16.msra.mxu0 %v1033
      %1065 = vmatprep.subr.bf16.mxu0 0
      %1066 = vmatpush2.bf16.msra.mxu0 0
      %1067 = vmatprep.subr.bf16.mxu0 0
      %1068 = vmatpush2.bf16.msra.mxu0 0
      %1069 = vmatprep.subr.bf16.mxu0 0
      %1070 = vmatpush2.bf16.msra.mxu0 0
      %1071 = vmatprep.subr.bf16.mxu0 0
      %1072 = vmatpush2.bf16.msra.mxu0 0
      %1073 = vmatprep.subr.bf16.mxu0 0
      %1074 = vmatpush2.bf16.msra.mxu0 0
      %1075 = vmatprep.subr.bf16.mxu0 0
      %1076 = vmatpush2.bf16.msra.mxu0 0
      %1077 = vmatprep.subr.bf16.mxu0 0
      %1078 = vmatpush2.bf16.msra.mxu0 0
      %1079 = vmatprep.subr.bf16.mxu0 0
      %1080 = vmatpush2.bf16.msra.mxu0 0
      %1081 = vmatprep.mubr.bf16.mxu0 0
      %1082 = vmatmul.mubr.bf16.gmra.mxu0 %v866
      %v1083 = vpop.f32.mrf.mxu0
      %v1084 = vadd.f32 %v996, %v1083
      %v1085 = vpop.f32.mrf.mxu0
      %v1086 = vpop.f32.mrf.mxu0
      %v1087 = vpop.f32.mrf.mxu0
      %1088 = vdwg.mxu0
      %s1089 = scalar_lea.vmem %s3, 128
      %v1090 = vld [vmem:[%s1089] sm:$0xf]
      %v1091 = vld [vmem:[%s1089 + $0x4] sm:$0xf]
      %v1092 = vld [vmem:[%s1089 + $0x8] sm:$0xf]
      %v1093 = vld [vmem:[%s1089 + $0xc] sm:$0xf]
      %v1094 = vld [vmem:[%s1089 + $0x10] sm:$0xf]
      %v1095 = vld [vmem:[%s1089 + $0x14] sm:$0xf]
      %v1096 = vld [vmem:[%s1089 + $0x18] sm:$0xf]
      %v1097 = vld [vmem:[%s1089 + $0x1c] sm:$0xf]
      %v1098 = vld [vmem:[%s1089 + $0x20] sm:$0xf]
      %v1099 = vld [vmem:[%s1089 + $0x24] sm:$0xf]
      %v1100 = vld [vmem:[%s1089 + $0x28] sm:$0xf]
      %v1101 = vld [vmem:[%s1089 + $0x2c] sm:$0xf]
      %v1102 = vld [vmem:[%s1089 + $0x30] sm:$0xf]
      %v1103 = vld [vmem:[%s1089 + $0x34] sm:$0xf]
      %v1104 = vld [vmem:[%s1089 + $0x38] sm:$0xf]
      %v1105 = vld [vmem:[%s1089 + $0x3c] sm:$0xf]
      %v1107 = vunpack.c.l.b16 %v868
      %v1108 = vpack.c.b16 %v1107, %v1107
      %v1109 = vrot.slane %v1108, 1
      %v1127 = vunpack.c.l.b16 %v1090
      %v1128 = vunpack.c.l.b16 %v1091
      %v1129 = vunpack.c.l.b16 %v1092
      %v1130 = vunpack.c.l.b16 %v1093
      %v1131 = vunpack.c.l.b16 %v1094
      %v1132 = vunpack.c.l.b16 %v1095
      %v1133 = vunpack.c.l.b16 %v1096
      %v1134 = vunpack.c.l.b16 %v1097
      %v1135 = vunpack.c.l.b16 %v1098
      %v1136 = vunpack.c.l.b16 %v1099
      %v1137 = vunpack.c.l.b16 %v1100
      %v1138 = vunpack.c.l.b16 %v1101
      %v1139 = vunpack.c.l.b16 %v1102
      %v1140 = vunpack.c.l.b16 %v1103
      %v1141 = vunpack.c.l.b16 %v1104
      %v1142 = vunpack.c.l.b16 %v1105
      %v1143 = vpack.c.b16 %v1128, %v1127
      %v1144 = vpack.c.b16 %v1130, %v1129
      %v1145 = vpack.c.b16 %v1132, %v1131
      %v1146 = vpack.c.b16 %v1134, %v1133
      %v1147 = vpack.c.b16 %v1136, %v1135
      %v1148 = vpack.c.b16 %v1138, %v1137
      %v1149 = vpack.c.b16 %v1140, %v1139
      %v1150 = vpack.c.b16 %v1142, %v1141
      %1159 = vmatprep.subr.bf16.mxu0 0
      %1160 = vmatpush1.bf16.msra.mxu0 %v1150
      %1161 = vmatprep.subr.bf16.mxu0 0
      %1162 = vmatpush1.bf16.msra.mxu0 %v1149
      %1163 = vmatprep.subr.bf16.mxu0 0
      %1164 = vmatpush1.bf16.msra.mxu0 %v1148
      %1165 = vmatprep.subr.bf16.mxu0 0
      %1166 = vmatpush1.bf16.msra.mxu0 %v1147
      %1167 = vmatprep.subr.bf16.mxu0 0
      %1168 = vmatpush1.bf16.msra.mxu0 %v1146
      %1169 = vmatprep.subr.bf16.mxu0 0
      %1170 = vmatpush1.bf16.msra.mxu0 %v1145
      %1171 = vmatprep.subr.bf16.mxu0 0
      %1172 = vmatpush1.bf16.msra.mxu0 %v1144
      %1173 = vmatprep.subr.bf16.mxu0 0
      %1174 = vmatpush1.bf16.msra.mxu0 %v1143
      %1175 = vmatprep.subr.bf16.mxu0 0
      %1176 = vmatpush2.bf16.msra.mxu0 0
      %1177 = vmatprep.subr.bf16.mxu0 0
      %1178 = vmatpush2.bf16.msra.mxu0 0
      %1179 = vmatprep.subr.bf16.mxu0 0
      %1180 = vmatpush2.bf16.msra.mxu0 0
      %1181 = vmatprep.subr.bf16.mxu0 0
      %1182 = vmatpush2.bf16.msra.mxu0 0
      %1183 = vmatprep.subr.bf16.mxu0 0
      %1184 = vmatpush2.bf16.msra.mxu0 0
      %1185 = vmatprep.subr.bf16.mxu0 0
      %1186 = vmatpush2.bf16.msra.mxu0 0
      %1187 = vmatprep.subr.bf16.mxu0 0
      %1188 = vmatpush2.bf16.msra.mxu0 0
      %1189 = vmatprep.subr.bf16.mxu0 0
      %1190 = vmatpush2.bf16.msra.mxu0 0
      %1191 = vmatprep.mubr.bf16.mxu0 0
      %1192 = vmatmul.mubr.bf16.gmra.mxu0 %v1109
      %v1193 = vpop.f32.mrf.mxu0
      %v1194 = vadd.f32 0.0, %v1193
      %v1195 = vpop.f32.mrf.mxu0
      %v1196 = vpop.f32.mrf.mxu0
      %v1197 = vpop.f32.mrf.mxu0
      %1198 = vdwg.mxu0
      %v1199 = vadd.f32 %v1084, %v1194
      %v1200 = vld [vmem:[%s4] sm:$0x1]
      %v1202 = vlaneseq
      %v1203 = vshrl.u32 %v1202, 7
      %v1204 = vsub.s32 0, %v1203
      %v1205 = vrot.slane %v1200, %v1204
      %v1207 = vadd.f32 %v1199, %v1205
      %v1208 = vadd.f32 %v1207, %v843
      %v1209 = vmax.f32 %v1208, 0.0
      %v1210 = vpack.c.bf16 %v1209, %v1209
      %v1212 = vunpack.c.l.b16 %v1210
      %v1213 = vpack.c.b16 %v1212, %v1212
      %v1215 = vshrl.u32 %v1213, 16
      %v1217 = vrot.slane %v1215, 7
      %v1218 = vshll.u32 %v1213, 16
      %v1220 = vor.u32 %v1217, %v1218
      %v1222 = vsel %vm862, %v1220, %v867
      %1223 = vst [vmem:[#allocation2] sm:$0x7] %v1222
      %v1224 = vld [vmem:[#allocation2] sm:$0x3]
      %v1225 = vld [vmem:[#allocation2] sm:$0x7]
      %v1226 = vld [vmem:[#allocation2] sm:$0x6]
      %v1227 = vld [vmem:[%s7] sm:$0xf]
      %v1228 = vld [vmem:[%s7 + $0x4] sm:$0xf]
      %v1229 = vld [vmem:[%s7 + $0x8] sm:$0xf]
      %v1230 = vld [vmem:[%s7 + $0xc] sm:$0xf]
      %v1231 = vld [vmem:[%s7 + $0x10] sm:$0xf]
      %v1232 = vld [vmem:[%s7 + $0x14] sm:$0xf]
      %v1233 = vld [vmem:[%s7 + $0x18] sm:$0xf]
      %v1234 = vld [vmem:[%s7 + $0x1c] sm:$0xf]
      %v1235 = vld [vmem:[%s7 + $0x20] sm:$0xf]
      %v1236 = vld [vmem:[%s7 + $0x24] sm:$0xf]
      %v1237 = vld [vmem:[%s7 + $0x28] sm:$0xf]
      %v1238 = vld [vmem:[%s7 + $0x2c] sm:$0xf]
      %v1239 = vld [vmem:[%s7 + $0x30] sm:$0xf]
      %v1240 = vld [vmem:[%s7 + $0x34] sm:$0xf]
      %v1241 = vld [vmem:[%s7 + $0x38] sm:$0xf]
      %v1242 = vld [vmem:[%s7 + $0x3c] sm:$0xf]
      %s1243 = scalar_lea.vmem %s7, 64
      %v1244 = vld [vmem:[%s1243] sm:$0xf]
      %v1245 = vld [vmem:[%s1243 + $0x4] sm:$0xf]
      %v1246 = vld [vmem:[%s1243 + $0x8] sm:$0xf]
      %v1247 = vld [vmem:[%s1243 + $0xc] sm:$0xf]
      %v1248 = vld [vmem:[%s1243 + $0x10] sm:$0xf]
      %v1249 = vld [vmem:[%s1243 + $0x14] sm:$0xf]
      %v1250 = vld [vmem:[%s1243 + $0x18] sm:$0xf]
      %v1251 = vld [vmem:[%s1243 + $0x1c] sm:$0xf]
      %v1252 = vld [vmem:[%s1243 + $0x20] sm:$0xf]
      %v1253 = vld [vmem:[%s1243 + $0x24] sm:$0xf]
      %v1254 = vld [vmem:[%s1243 + $0x28] sm:$0xf]
      %v1255 = vld [vmem:[%s1243 + $0x2c] sm:$0xf]
      %v1256 = vld [vmem:[%s1243 + $0x30] sm:$0xf]
      %v1257 = vld [vmem:[%s1243 + $0x34] sm:$0xf]
      %v1258 = vld [vmem:[%s1243 + $0x38] sm:$0xf]
      %v1259 = vld [vmem:[%s1243 + $0x3c] sm:$0xf]
      %v1261 = vunpack.c.l.b16 %v1225
      %v1262 = vpack.c.b16 %v1261, %v1261
      %v1264 = vshrl.u32 %v1262, 16
      %v1266 = vshll.u32 %v1262, 16
      %v1268 = vrot.slane %v1266, 1
      %v1269 = vor.u32 %v1264, %v1268
      %v1287 = vunpack.c.l.b16 %v1244
      %v1288 = vunpack.c.l.b16 %v1245
      %v1289 = vunpack.c.l.b16 %v1246
      %v1290 = vunpack.c.l.b16 %v1247
      %v1291 = vunpack.c.l.b16 %v1248
      %v1292 = vunpack.c.l.b16 %v1249
      %v1293 = vunpack.c.l.b16 %v1250
      %v1294 = vunpack.c.l.b16 %v1251
      %v1295 = vunpack.c.l.b16 %v1252
      %v1296 = vunpack.c.l.b16 %v1253
      %v1297 = vunpack.c.l.b16 %v1254
      %v1298 = vunpack.c.l.b16 %v1255
      %v1299 = vunpack.c.l.b16 %v1256
      %v1300 = vunpack.c.l.b16 %v1257
      %v1301 = vunpack.c.l.b16 %v1258
      %v1302 = vunpack.c.l.b16 %v1259
      %v1303 = vpack.c.b16 %v1288, %v1287
      %v1304 = vpack.c.b16 %v1290, %v1289
      %v1305 = vpack.c.b16 %v1292, %v1291
      %v1306 = vpack.c.b16 %v1294, %v1293
      %v1307 = vpack.c.b16 %v1296, %v1295
      %v1308 = vpack.c.b16 %v1298, %v1297
      %v1309 = vpack.c.b16 %v1300, %v1299
      %v1310 = vpack.c.b16 %v1302, %v1301
      %1319 = vmatprep.subr.bf16.mxu0 0
      %1320 = vmatpush1.bf16.msra.mxu0 %v1310
      %1321 = vmatprep.subr.bf16.mxu0 0
      %1322 = vmatpush1.bf16.msra.mxu0 %v1309
      %1323 = vmatprep.subr.bf16.mxu0 0
      %1324 = vmatpush1.bf16.msra.mxu0 %v1308
      %1325 = vmatprep.subr.bf16.mxu0 0
      %1326 = vmatpush1.bf16.msra.mxu0 %v1307
      %1327 = vmatprep.subr.bf16.mxu0 0
      %1328 = vmatpush1.bf16.msra.mxu0 %v1306
      %1329 = vmatprep.subr.bf16.mxu0 0
      %1330 = vmatpush1.bf16.msra.mxu0 %v1305
      %1331 = vmatprep.subr.bf16.mxu0 0
      %1332 = vmatpush1.bf16.msra.mxu0 %v1304
      %1333 = vmatprep.subr.bf16.mxu0 0
      %1334 = vmatpush1.bf16.msra.mxu0 %v1303
      %1335 = vmatprep.subr.bf16.mxu0 0
      %1336 = vmatpush2.bf16.msra.mxu0 0
      %1337 = vmatprep.subr.bf16.mxu0 0
      %1338 = vmatpush2.bf16.msra.mxu0 0
      %1339 = vmatprep.subr.bf16.mxu0 0
      %1340 = vmatpush2.bf16.msra.mxu0 0
      %1341 = vmatprep.subr.bf16.mxu0 0
      %1342 = vmatpush2.bf16.msra.mxu0 0
      %1343 = vmatprep.subr.bf16.mxu0 0
      %1344 = vmatpush2.bf16.msra.mxu0 0
      %1345 = vmatprep.subr.bf16.mxu0 0
      %1346 = vmatpush2.bf16.msra.mxu0 0
      %1347 = vmatprep.subr.bf16.mxu0 0
      %1348 = vmatpush2.bf16.msra.mxu0 0
      %1349 = vmatprep.subr.bf16.mxu0 0
      %1350 = vmatpush2.bf16.msra.mxu0 0
      %1351 = vmatprep.mubr.bf16.mxu0 0
      %1352 = vmatmul.mubr.bf16.gmra.mxu0 %v1269
      %v1353 = vpop.f32.mrf.mxu0
      %v1354 = vadd.f32 0.0, %v1353
      %v1355 = vpop.f32.mrf.mxu0
      %v1356 = vpop.f32.mrf.mxu0
      %v1357 = vpop.f32.mrf.mxu0
      %1358 = vdwg.mxu0
      %v1375 = vunpack.c.l.b16 %v1227
      %v1376 = vunpack.c.l.b16 %v1228
      %v1377 = vunpack.c.l.b16 %v1229
      %v1378 = vunpack.c.l.b16 %v1230
      %v1379 = vunpack.c.l.b16 %v1231
      %v1380 = vunpack.c.l.b16 %v1232
      %v1381 = vunpack.c.l.b16 %v1233
      %v1382 = vunpack.c.l.b16 %v1234
      %v1383 = vunpack.c.l.b16 %v1235
      %v1384 = vunpack.c.l.b16 %v1236
      %v1385 = vunpack.c.l.b16 %v1237
      %v1386 = vunpack.c.l.b16 %v1238
      %v1387 = vunpack.c.l.b16 %v1239
      %v1388 = vunpack.c.l.b16 %v1240
      %v1389 = vunpack.c.l.b16 %v1241
      %v1390 = vunpack.c.l.b16 %v1242
      %v1391 = vpack.c.b16 %v1376, %v1375
      %v1392 = vpack.c.b16 %v1378, %v1377
      %v1393 = vpack.c.b16 %v1380, %v1379
      %v1394 = vpack.c.b16 %v1382, %v1381
      %v1395 = vpack.c.b16 %v1384, %v1383
      %v1396 = vpack.c.b16 %v1386, %v1385
      %v1397 = vpack.c.b16 %v1388, %v1387
      %v1398 = vpack.c.b16 %v1390, %v1389
      %1407 = vmatprep.subr.bf16.mxu0 0
      %1408 = vmatpush1.bf16.msra.mxu0 %v1398
      %1409 = vmatprep.subr.bf16.mxu0 0
      %1410 = vmatpush1.bf16.msra.mxu0 %v1397
      %1411 = vmatprep.subr.bf16.mxu0 0
      %1412 = vmatpush1.bf16.msra.mxu0 %v1396
      %1413 = vmatprep.subr.bf16.mxu0 0
      %1414 = vmatpush1.bf16.msra.mxu0 %v1395
      %1415 = vmatprep.subr.bf16.mxu0 0
      %1416 = vmatpush1.bf16.msra.mxu0 %v1394
      %1417 = vmatprep.subr.bf16.mxu0 0
      %1418 = vmatpush1.bf16.msra.mxu0 %v1393
      %1419 = vmatprep.subr.bf16.mxu0 0
      %1420 = vmatpush1.bf16.msra.mxu0 %v1392
      %1421 = vmatprep.subr.bf16.mxu0 0
      %1422 = vmatpush1.bf16.msra.mxu0 %v1391
      %1423 = vmatprep.subr.bf16.mxu0 0
      %1424 = vmatpush2.bf16.msra.mxu0 0
      %1425 = vmatprep.subr.bf16.mxu0 0
      %1426 = vmatpush2.bf16.msra.mxu0 0
      %1427 = vmatprep.subr.bf16.mxu0 0
      %1428 = vmatpush2.bf16.msra.mxu0 0
      %1429 = vmatprep.subr.bf16.mxu0 0
      %1430 = vmatpush2.bf16.msra.mxu0 0
      %1431 = vmatprep.subr.bf16.mxu0 0
      %1432 = vmatpush2.bf16.msra.mxu0 0
      %1433 = vmatprep.subr.bf16.mxu0 0
      %1434 = vmatpush2.bf16.msra.mxu0 0
      %1435 = vmatprep.subr.bf16.mxu0 0
      %1436 = vmatpush2.bf16.msra.mxu0 0
      %1437 = vmatprep.subr.bf16.mxu0 0
      %1438 = vmatpush2.bf16.msra.mxu0 0
      %1439 = vmatprep.mubr.bf16.mxu0 0
      %1440 = vmatmul.mubr.bf16.gmra.mxu0 %v1224
      %v1441 = vpop.f32.mrf.mxu0
      %v1442 = vadd.f32 %v1354, %v1441
      %v1443 = vpop.f32.mrf.mxu0
      %v1444 = vpop.f32.mrf.mxu0
      %v1445 = vpop.f32.mrf.mxu0
      %1446 = vdwg.mxu0
      %s1447 = scalar_lea.vmem %s7, 128
      %v1448 = vld [vmem:[%s1447] sm:$0xf]
      %v1449 = vld [vmem:[%s1447 + $0x4] sm:$0xf]
      %v1450 = vld [vmem:[%s1447 + $0x8] sm:$0xf]
      %v1451 = vld [vmem:[%s1447 + $0xc] sm:$0xf]
      %v1452 = vld [vmem:[%s1447 + $0x10] sm:$0xf]
      %v1453 = vld [vmem:[%s1447 + $0x14] sm:$0xf]
      %v1454 = vld [vmem:[%s1447 + $0x18] sm:$0xf]
      %v1455 = vld [vmem:[%s1447 + $0x1c] sm:$0xf]
      %v1456 = vld [vmem:[%s1447 + $0x20] sm:$0xf]
      %v1457 = vld [vmem:[%s1447 + $0x24] sm:$0xf]
      %v1458 = vld [vmem:[%s1447 + $0x28] sm:$0xf]
      %v1459 = vld [vmem:[%s1447 + $0x2c] sm:$0xf]
      %v1460 = vld [vmem:[%s1447 + $0x30] sm:$0xf]
      %v1461 = vld [vmem:[%s1447 + $0x34] sm:$0xf]
      %v1462 = vld [vmem:[%s1447 + $0x38] sm:$0xf]
      %v1463 = vld [vmem:[%s1447 + $0x3c] sm:$0xf]
      %v1465 = vunpack.c.l.b16 %v1226
      %v1466 = vpack.c.b16 %v1465, %v1465
      %v1467 = vrot.slane %v1466, 1
      %v1485 = vunpack.c.l.b16 %v1448
      %v1486 = vunpack.c.l.b16 %v1449
      %v1487 = vunpack.c.l.b16 %v1450
      %v1488 = vunpack.c.l.b16 %v1451
      %v1489 = vunpack.c.l.b16 %v1452
      %v1490 = vunpack.c.l.b16 %v1453
      %v1491 = vunpack.c.l.b16 %v1454
      %v1492 = vunpack.c.l.b16 %v1455
      %v1493 = vunpack.c.l.b16 %v1456
      %v1494 = vunpack.c.l.b16 %v1457
      %v1495 = vunpack.c.l.b16 %v1458
      %v1496 = vunpack.c.l.b16 %v1459
      %v1497 = vunpack.c.l.b16 %v1460
      %v1498 = vunpack.c.l.b16 %v1461
      %v1499 = vunpack.c.l.b16 %v1462
      %v1500 = vunpack.c.l.b16 %v1463
      %v1501 = vpack.c.b16 %v1486, %v1485
      %v1502 = vpack.c.b16 %v1488, %v1487
      %v1503 = vpack.c.b16 %v1490, %v1489
      %v1504 = vpack.c.b16 %v1492, %v1491
      %v1505 = vpack.c.b16 %v1494, %v1493
      %v1506 = vpack.c.b16 %v1496, %v1495
      %v1507 = vpack.c.b16 %v1498, %v1497
      %v1508 = vpack.c.b16 %v1500, %v1499
      %1517 = vmatprep.subr.bf16.mxu0 0
      %1518 = vmatpush1.bf16.msra.mxu0 %v1508
      %1519 = vmatprep.subr.bf16.mxu0 0
      %1520 = vmatpush1.bf16.msra.mxu0 %v1507
      %1521 = vmatprep.subr.bf16.mxu0 0
      %1522 = vmatpush1.bf16.msra.mxu0 %v1506
      %1523 = vmatprep.subr.bf16.mxu0 0
      %1524 = vmatpush1.bf16.msra.mxu0 %v1505
      %1525 = vmatprep.subr.bf16.mxu0 0
      %1526 = vmatpush1.bf16.msra.mxu0 %v1504
      %1527 = vmatprep.subr.bf16.mxu0 0
      %1528 = vmatpush1.bf16.msra.mxu0 %v1503
      %1529 = vmatprep.subr.bf16.mxu0 0
      %1530 = vmatpush1.bf16.msra.mxu0 %v1502
      %1531 = vmatprep.subr.bf16.mxu0 0
      %1532 = vmatpush1.bf16.msra.mxu0 %v1501
      %1533 = vmatprep.subr.bf16.mxu0 0
      %1534 = vmatpush2.bf16.msra.mxu0 0
      %1535 = vmatprep.subr.bf16.mxu0 0
      %1536 = vmatpush2.bf16.msra.mxu0 0
      %1537 = vmatprep.subr.bf16.mxu0 0
      %1538 = vmatpush2.bf16.msra.mxu0 0
      %1539 = vmatprep.subr.bf16.mxu0 0
      %1540 = vmatpush2.bf16.msra.mxu0 0
      %1541 = vmatprep.subr.bf16.mxu0 0
      %1542 = vmatpush2.bf16.msra.mxu0 0
      %1543 = vmatprep.subr.bf16.mxu0 0
      %1544 = vmatpush2.bf16.msra.mxu0 0
      %1545 = vmatprep.subr.bf16.mxu0 0
      %1546 = vmatpush2.bf16.msra.mxu0 0
      %1547 = vmatprep.subr.bf16.mxu0 0
      %1548 = vmatpush2.bf16.msra.mxu0 0
      %1549 = vmatprep.mubr.bf16.mxu0 0
      %1550 = vmatmul.mubr.bf16.gmra.mxu0 %v1467
      %v1551 = vpop.f32.mrf.mxu0
      %v1552 = vadd.f32 0.0, %v1551
      %v1553 = vpop.f32.mrf.mxu0
      %v1554 = vpop.f32.mrf.mxu0
      %v1555 = vpop.f32.mrf.mxu0
      %1556 = vdwg.mxu0
      %v1557 = vadd.f32 %v1442, %v1552
      %v1558 = vld [vmem:[%s8] sm:$0x1]
      %v1560 = vlaneseq
      %v1561 = vshrl.u32 %v1560, 7
      %v1562 = vsub.s32 0, %v1561
      %v1563 = vrot.slane %v1558, %v1562
      %v1565 = vadd.f32 %v1557, %v1563
      %v1566 = vmax.f32 %v1565, 0.0
      %v1567 = vpack.c.bf16 %v1566, %v1566
      %v1569 = vunpack.c.l.b16 %v1567
      %v1570 = vpack.c.b16 %v1569, %v1569
      %v1572 = vshrl.u32 %v1570, 16
      %v1574 = vrot.slane %v1572, 7
      %v1575 = vshll.u32 %v1570, 16
      %v1577 = vor.u32 %v1574, %v1575
      %v1579 = vsel %vm862, %v1577, %v1225
      %1580 = vst [vmem:[#allocation2] sm:$0x7] %v1579
      %v1581 = vld [vmem:[#allocation2] sm:$0x3]
      %v1582 = vld [vmem:[#allocation2] sm:$0x7]
      %v1583 = vld [vmem:[#allocation2] sm:$0x6]
      %v1584 = vld [vmem:[%s9] sm:$0xf]
      %v1585 = vld [vmem:[%s9 + $0x4] sm:$0xf]
      %v1586 = vld [vmem:[%s9 + $0x8] sm:$0xf]
      %v1587 = vld [vmem:[%s9 + $0xc] sm:$0xf]
      %v1588 = vld [vmem:[%s9 + $0x10] sm:$0xf]
      %v1589 = vld [vmem:[%s9 + $0x14] sm:$0xf]
      %v1590 = vld [vmem:[%s9 + $0x18] sm:$0xf]
      %v1591 = vld [vmem:[%s9 + $0x1c] sm:$0xf]
      %v1592 = vld [vmem:[%s9 + $0x20] sm:$0xf]
      %v1593 = vld [vmem:[%s9 + $0x24] sm:$0xf]
      %v1594 = vld [vmem:[%s9 + $0x28] sm:$0xf]
      %v1595 = vld [vmem:[%s9 + $0x2c] sm:$0xf]
      %v1596 = vld [vmem:[%s9 + $0x30] sm:$0xf]
      %v1597 = vld [vmem:[%s9 + $0x34] sm:$0xf]
      %v1598 = vld [vmem:[%s9 + $0x38] sm:$0xf]
      %v1599 = vld [vmem:[%s9 + $0x3c] sm:$0xf]
      %s1600 = scalar_lea.vmem %s9, 64
      %v1601 = vld [vmem:[%s1600] sm:$0xf]
      %v1602 = vld [vmem:[%s1600 + $0x4] sm:$0xf]
      %v1603 = vld [vmem:[%s1600 + $0x8] sm:$0xf]
      %v1604 = vld [vmem:[%s1600 + $0xc] sm:$0xf]
      %v1605 = vld [vmem:[%s1600 + $0x10] sm:$0xf]
      %v1606 = vld [vmem:[%s1600 + $0x14] sm:$0xf]
      %v1607 = vld [vmem:[%s1600 + $0x18] sm:$0xf]
      %v1608 = vld [vmem:[%s1600 + $0x1c] sm:$0xf]
      %v1609 = vld [vmem:[%s1600 + $0x20] sm:$0xf]
      %v1610 = vld [vmem:[%s1600 + $0x24] sm:$0xf]
      %v1611 = vld [vmem:[%s1600 + $0x28] sm:$0xf]
      %v1612 = vld [vmem:[%s1600 + $0x2c] sm:$0xf]
      %v1613 = vld [vmem:[%s1600 + $0x30] sm:$0xf]
      %v1614 = vld [vmem:[%s1600 + $0x34] sm:$0xf]
      %v1615 = vld [vmem:[%s1600 + $0x38] sm:$0xf]
      %v1616 = vld [vmem:[%s1600 + $0x3c] sm:$0xf]
      %v1618 = vunpack.c.l.b16 %v1582
      %v1619 = vpack.c.b16 %v1618, %v1618
      %v1621 = vshrl.u32 %v1619, 16
      %v1623 = vshll.u32 %v1619, 16
      %v1625 = vrot.slane %v1623, 1
      %v1626 = vor.u32 %v1621, %v1625
      %v1644 = vunpack.c.l.b16 %v1601
      %v1645 = vunpack.c.l.b16 %v1602
      %v1646 = vunpack.c.l.b16 %v1603
      %v1647 = vunpack.c.l.b16 %v1604
      %v1648 = vunpack.c.l.b16 %v1605
      %v1649 = vunpack.c.l.b16 %v1606
      %v1650 = vunpack.c.l.b16 %v1607
      %v1651 = vunpack.c.l.b16 %v1608
      %v1652 = vunpack.c.l.b16 %v1609
      %v1653 = vunpack.c.l.b16 %v1610
      %v1654 = vunpack.c.l.b16 %v1611
      %v1655 = vunpack.c.l.b16 %v1612
      %v1656 = vunpack.c.l.b16 %v1613
      %v1657 = vunpack.c.l.b16 %v1614
      %v1658 = vunpack.c.l.b16 %v1615
      %v1659 = vunpack.c.l.b16 %v1616
      %v1660 = vpack.c.b16 %v1645, %v1644
      %v1661 = vpack.c.b16 %v1647, %v1646
      %v1662 = vpack.c.b16 %v1649, %v1648
      %v1663 = vpack.c.b16 %v1651, %v1650
      %v1664 = vpack.c.b16 %v1653, %v1652
      %v1665 = vpack.c.b16 %v1655, %v1654
      %v1666 = vpack.c.b16 %v1657, %v1656
      %v1667 = vpack.c.b16 %v1659, %v1658
      %1676 = vmatprep.subr.bf16.mxu0 0
      %1677 = vmatpush1.bf16.msra.mxu0 %v1667
      %1678 = vmatprep.subr.bf16.mxu0 0
      %1679 = vmatpush1.bf16.msra.mxu0 %v1666
      %1680 = vmatprep.subr.bf16.mxu0 0
      %1681 = vmatpush1.bf16.msra.mxu0 %v1665
      %1682 = vmatprep.subr.bf16.mxu0 0
      %1683 = vmatpush1.bf16.msra.mxu0 %v1664
      %1684 = vmatprep.subr.bf16.mxu0 0
      %1685 = vmatpush1.bf16.msra.mxu0 %v1663
      %1686 = vmatprep.subr.bf16.mxu0 0
      %1687 = vmatpush1.bf16.msra.mxu0 %v1662
      %1688 = vmatprep.subr.bf16.mxu0 0
      %1689 = vmatpush1.bf16.msra.mxu0 %v1661
      %1690 = vmatprep.subr.bf16.mxu0 0
      %1691 = vmatpush1.bf16.msra.mxu0 %v1660
      %1692 = vmatprep.subr.bf16.mxu0 0
      %1693 = vmatpush2.bf16.msra.mxu0 0
      %1694 = vmatprep.subr.bf16.mxu0 0
      %1695 = vmatpush2.bf16.msra.mxu0 0
      %1696 = vmatprep.subr.bf16.mxu0 0
      %1697 = vmatpush2.bf16.msra.mxu0 0
      %1698 = vmatprep.subr.bf16.mxu0 0
      %1699 = vmatpush2.bf16.msra.mxu0 0
      %1700 = vmatprep.subr.bf16.mxu0 0
      %1701 = vmatpush2.bf16.msra.mxu0 0
      %1702 = vmatprep.subr.bf16.mxu0 0
      %1703 = vmatpush2.bf16.msra.mxu0 0
      %1704 = vmatprep.subr.bf16.mxu0 0
      %1705 = vmatpush2.bf16.msra.mxu0 0
      %1706 = vmatprep.subr.bf16.mxu0 0
      %1707 = vmatpush2.bf16.msra.mxu0 0
      %1708 = vmatprep.mubr.bf16.mxu0 0
      %1709 = vmatmul.mubr.bf16.gmra.mxu0 %v1626
      %v1710 = vpop.f32.mrf.mxu0
      %v1711 = vadd.f32 0.0, %v1710
      %v1712 = vpop.f32.mrf.mxu0
      %v1713 = vpop.f32.mrf.mxu0
      %v1714 = vpop.f32.mrf.mxu0
      %1715 = vdwg.mxu0
      %v1732 = vunpack.c.l.b16 %v1584
      %v1733 = vunpack.c.l.b16 %v1585
      %v1734 = vunpack.c.l.b16 %v1586
      %v1735 = vunpack.c.l.b16 %v1587
      %v1736 = vunpack.c.l.b16 %v1588
      %v1737 = vunpack.c.l.b16 %v1589
      %v1738 = vunpack.c.l.b16 %v1590
      %v1739 = vunpack.c.l.b16 %v1591
      %v1740 = vunpack.c.l.b16 %v1592
      %v1741 = vunpack.c.l.b16 %v1593
      %v1742 = vunpack.c.l.b16 %v1594
      %v1743 = vunpack.c.l.b16 %v1595
      %v1744 = vunpack.c.l.b16 %v1596
      %v1745 = vunpack.c.l.b16 %v1597
      %v1746 = vunpack.c.l.b16 %v1598
      %v1747 = vunpack.c.l.b16 %v1599
      %v1748 = vpack.c.b16 %v1733, %v1732
      %v1749 = vpack.c.b16 %v1735, %v1734
      %v1750 = vpack.c.b16 %v1737, %v1736
      %v1751 = vpack.c.b16 %v1739, %v1738
      %v1752 = vpack.c.b16 %v1741, %v1740
      %v1753 = vpack.c.b16 %v1743, %v1742
      %v1754 = vpack.c.b16 %v1745, %v1744
      %v1755 = vpack.c.b16 %v1747, %v1746
      %1764 = vmatprep.subr.bf16.mxu0 0
      %1765 = vmatpush1.bf16.msra.mxu0 %v1755
      %1766 = vmatprep.subr.bf16.mxu0 0
      %1767 = vmatpush1.bf16.msra.mxu0 %v1754
      %1768 = vmatprep.subr.bf16.mxu0 0
      %1769 = vmatpush1.bf16.msra.mxu0 %v1753
      %1770 = vmatprep.subr.bf16.mxu0 0
      %1771 = vmatpush1.bf16.msra.mxu0 %v1752
      %1772 = vmatprep.subr.bf16.mxu0 0
      %1773 = vmatpush1.bf16.msra.mxu0 %v1751
      %1774 = vmatprep.subr.bf16.mxu0 0
      %1775 = vmatpush1.bf16.msra.mxu0 %v1750
      %1776 = vmatprep.subr.bf16.mxu0 0
      %1777 = vmatpush1.bf16.msra.mxu0 %v1749
      %1778 = vmatprep.subr.bf16.mxu0 0
      %1779 = vmatpush1.bf16.msra.mxu0 %v1748
      %1780 = vmatprep.subr.bf16.mxu0 0
      %1781 = vmatpush2.bf16.msra.mxu0 0
      %1782 = vmatprep.subr.bf16.mxu0 0
      %1783 = vmatpush2.bf16.msra.mxu0 0
      %1784 = vmatprep.subr.bf16.mxu0 0
      %1785 = vmatpush2.bf16.msra.mxu0 0
      %1786 = vmatprep.subr.bf16.mxu0 0
      %1787 = vmatpush2.bf16.msra.mxu0 0
      %1788 = vmatprep.subr.bf16.mxu0 0
      %1789 = vmatpush2.bf16.msra.mxu0 0
      %1790 = vmatprep.subr.bf16.mxu0 0
      %1791 = vmatpush2.bf16.msra.mxu0 0
      %1792 = vmatprep.subr.bf16.mxu0 0
      %1793 = vmatpush2.bf16.msra.mxu0 0
      %1794 = vmatprep.subr.bf16.mxu0 0
      %1795 = vmatpush2.bf16.msra.mxu0 0
      %1796 = vmatprep.mubr.bf16.mxu0 0
      %1797 = vmatmul.mubr.bf16.gmra.mxu0 %v1581
      %v1798 = vpop.f32.mrf.mxu0
      %v1799 = vadd.f32 %v1711, %v1798
      %v1800 = vpop.f32.mrf.mxu0
      %v1801 = vpop.f32.mrf.mxu0
      %v1802 = vpop.f32.mrf.mxu0
      %1803 = vdwg.mxu0
      %s1804 = scalar_lea.vmem %s9, 128
      %v1805 = vld [vmem:[%s1804] sm:$0xf]
      %v1806 = vld [vmem:[%s1804 + $0x4] sm:$0xf]
      %v1807 = vld [vmem:[%s1804 + $0x8] sm:$0xf]
      %v1808 = vld [vmem:[%s1804 + $0xc] sm:$0xf]
      %v1809 = vld [vmem:[%s1804 + $0x10] sm:$0xf]
      %v1810 = vld [vmem:[%s1804 + $0x14] sm:$0xf]
      %v1811 = vld [vmem:[%s1804 + $0x18] sm:$0xf]
      %v1812 = vld [vmem:[%s1804 + $0x1c] sm:$0xf]
      %v1813 = vld [vmem:[%s1804 + $0x20] sm:$0xf]
      %v1814 = vld [vmem:[%s1804 + $0x24] sm:$0xf]
      %v1815 = vld [vmem:[%s1804 + $0x28] sm:$0xf]
      %v1816 = vld [vmem:[%s1804 + $0x2c] sm:$0xf]
      %v1817 = vld [vmem:[%s1804 + $0x30] sm:$0xf]
      %v1818 = vld [vmem:[%s1804 + $0x34] sm:$0xf]
      %v1819 = vld [vmem:[%s1804 + $0x38] sm:$0xf]
      %v1820 = vld [vmem:[%s1804 + $0x3c] sm:$0xf]
      %v1822 = vunpack.c.l.b16 %v1583
      %v1823 = vpack.c.b16 %v1822, %v1822
      %v1824 = vrot.slane %v1823, 1
      %v1842 = vunpack.c.l.b16 %v1805
      %v1843 = vunpack.c.l.b16 %v1806
      %v1844 = vunpack.c.l.b16 %v1807
      %v1845 = vunpack.c.l.b16 %v1808
      %v1846 = vunpack.c.l.b16 %v1809
      %v1847 = vunpack.c.l.b16 %v1810
      %v1848 = vunpack.c.l.b16 %v1811
      %v1849 = vunpack.c.l.b16 %v1812
      %v1850 = vunpack.c.l.b16 %v1813
      %v1851 = vunpack.c.l.b16 %v1814
      %v1852 = vunpack.c.l.b16 %v1815
      %v1853 = vunpack.c.l.b16 %v1816
      %v1854 = vunpack.c.l.b16 %v1817
      %v1855 = vunpack.c.l.b16 %v1818
      %v1856 = vunpack.c.l.b16 %v1819
      %v1857 = vunpack.c.l.b16 %v1820
      %v1858 = vpack.c.b16 %v1843, %v1842
      %v1859 = vpack.c.b16 %v1845, %v1844
      %v1860 = vpack.c.b16 %v1847, %v1846
      %v1861 = vpack.c.b16 %v1849, %v1848
      %v1862 = vpack.c.b16 %v1851, %v1850
      %v1863 = vpack.c.b16 %v1853, %v1852
      %v1864 = vpack.c.b16 %v1855, %v1854
      %v1865 = vpack.c.b16 %v1857, %v1856
      %1874 = vmatprep.subr.bf16.mxu0 0
      %1875 = vmatpush1.bf16.msra.mxu0 %v1865
      %1876 = vmatprep.subr.bf16.mxu0 0
      %1877 = vmatpush1.bf16.msra.mxu0 %v1864
      %1878 = vmatprep.subr.bf16.mxu0 0
      %1879 = vmatpush1.bf16.msra.mxu0 %v1863
      %1880 = vmatprep.subr.bf16.mxu0 0
      %1881 = vmatpush1.bf16.msra.mxu0 %v1862
      %1882 = vmatprep.subr.bf16.mxu0 0
      %1883 = vmatpush1.bf16.msra.mxu0 %v1861
      %1884 = vmatprep.subr.bf16.mxu0 0
      %1885 = vmatpush1.bf16.msra.mxu0 %v1860
      %1886 = vmatprep.subr.bf16.mxu0 0
      %1887 = vmatpush1.bf16.msra.mxu0 %v1859
      %1888 = vmatprep.subr.bf16.mxu0 0
      %1889 = vmatpush1.bf16.msra.mxu0 %v1858
      %1890 = vmatprep.subr.bf16.mxu0 0
      %1891 = vmatpush2.bf16.msra.mxu0 0
      %1892 = vmatprep.subr.bf16.mxu0 0
      %1893 = vmatpush2.bf16.msra.mxu0 0
      %1894 = vmatprep.subr.bf16.mxu0 0
      %1895 = vmatpush2.bf16.msra.mxu0 0
      %1896 = vmatprep.subr.bf16.mxu0 0
      %1897 = vmatpush2.bf16.msra.mxu0 0
      %1898 = vmatprep.subr.bf16.mxu0 0
      %1899 = vmatpush2.bf16.msra.mxu0 0
      %1900 = vmatprep.subr.bf16.mxu0 0
      %1901 = vmatpush2.bf16.msra.mxu0 0
      %1902 = vmatprep.subr.bf16.mxu0 0
      %1903 = vmatpush2.bf16.msra.mxu0 0
      %1904 = vmatprep.subr.bf16.mxu0 0
      %1905 = vmatpush2.bf16.msra.mxu0 0
      %1906 = vmatprep.mubr.bf16.mxu0 0
      %1907 = vmatmul.mubr.bf16.gmra.mxu0 %v1824
      %v1908 = vpop.f32.mrf.mxu0
      %v1909 = vadd.f32 0.0, %v1908
      %v1910 = vpop.f32.mrf.mxu0
      %v1911 = vpop.f32.mrf.mxu0
      %v1912 = vpop.f32.mrf.mxu0
      %1913 = vdwg.mxu0
      %v1914 = vadd.f32 %v1799, %v1909
      %v1915 = vld [vmem:[%s10] sm:$0x1]
      %v1917 = vlaneseq
      %v1918 = vshrl.u32 %v1917, 7
      %v1919 = vsub.s32 0, %v1918
      %v1920 = vrot.slane %v1915, %v1919
      %v1922 = vadd.f32 %v1914, %v1920
      %v1923 = vunpack.c.l.bf16 %v1210
      %v1924 = vadd.f32 %v1922, %v1923
      %v1925 = vmax.f32 %v1924, 0.0
      %v1926 = vpack.c.bf16 %v1925, %v1925
      %1927 = vst [vmem:[%s384] sm:$0x3] %v1926
      %p1928 = scmp.lt.s32.totalorder %s22, 1
      %s1929 = scalar_select %p1928, %s22, 1
      %s1930 = smul.addr %s1929, 2
      %s1931 = scalar_lea.vmem %s11, %s1930
      // Predicated region
      $region65: #{_lambda_.9} parent=63 // pred_check
        %p1932 = pneg %p276
      $region66: #{_lambda_.9} parent=63 // pred_check_branch
        %1934 = sbr.rel (%p1932) target = $region68
      $region67: #{_lambda_.9} parent=63 // pred_region
        _
      $region68: #{_lambda_.9} parent=63 // pred_fallthru
        _
    $region64: #{_lambda_.9} parent=5 // pred_fallthru
      _
    %p1935 = scmp.le.s32.totalorder 2, %s17
    // Predicated region
    $region69: #{_lambda_.9} parent=5 // pred_check
      %p1936 = pneg %p1935
    $region70: #{_lambda_.9} parent=5 // pred_check_branch
      %1938 = sbr.rel (%p1936) target = $region72
    $region71: #{_lambda_.9} parent=5 // pred_region
      %s1939 = ssub.s32 %s17, 2
      // Predicated region
      $region73: #{_lambda_.9} parent=71 // pred_check
        %p1940 = pneg %p282
      $region74: #{_lambda_.9} parent=71 // pred_check_branch
        %1942 = sbr.rel (%p1940) target = $region76
      $region75: #{_lambda_.9} parent=71 // pred_region
        %p1943 = scmp.lt.s32.totalorder %s23, 1
        %s1944 = scalar_select %p1943, %s23, 1
        %s1945 = smul.addr %s1944, 2
        %s1946 = scalar_lea.vmem %s11, %s1945
      $region76: #{_lambda_.9} parent=71 // pred_fallthru
        _
    $region72: #{_lambda_.9} parent=5 // pred_fallthru
      _
  $region6: #{_lambda_.9} parent=0 // loop_footer
    %s21 = sadd.s32 1, %s17
  $region7: #{_lambda_.9} parent=0 // loop_footer_branch
    %16 = sbr.rel target = $region3
  $region8: #{_lambda_.9} parent=0 // loop_exit
    _

// kernel: _lambda_.11
$region0: #{_lambda_.11}
  #allocation0 [shape = 'u32[]', space=smem, size = 0x4, offset = 0x4, fixed_abs, tag = 'smem constant byte address 0x4 - core index']
  #allocation1 [shape = 'u32[144,128]{1,0:T(1,128)}', space=vmem, size = 0x12000, scoped, tag = 'internal scratch']
  %s0 = inlined_call_operand.vmem [shape: bf16[2,4,64], index: 0, kind: input, shape index: {}]
  %s1 = inlined_call_operand.vmem [shape: bf16[64,10], index: 1, kind: input, shape index: {}]
  %s2 = inlined_call_operand.vmem [shape: f32[1,10], index: 2, kind: input, shape index: {}]
  %s3 = inlined_call_operand.hbm [shape: f32[2,1,64], index: 3, kind: output, shape index: {0}]
  %s4 = inlined_call_operand.hbm [shape: f32[2,1,10], index: 4, kind: output, shape index: {1}]
  %5 = xla_tuple %s3, %s4
  %s6 = sld [smem:[#allocation0]]
  $region53: #{_lambda_.11} parent=0
    _
  %s8 = ssub.s32 1, %s6
  %s9 = scalar_select 0, %s8, %s6
  $region1: #{_lambda_.11} parent=0
    #allocation2 [shape = 'u8[1024]{0}', space=vmem, size = 0x400, scoped, tag = 'output window, operand 0']
    #allocation3 [shape = 's32[2]{0}', space=sflag, size = 0x8, scoped, tag = 'scoped memory for _lambda_.11']
    #allocation4 [shape = 'u8[1024]{0}', space=vmem, size = 0x400, scoped, tag = 'output window, operand 1']
    #allocation5 [shape = 's32[2]{0}', space=sflag, size = 0x8, scoped, tag = 'scoped memory for _lambda_.11']
    %10 = vsyncpa [#allocation3], 0
    %s11 = scalar_lea.sflag [#allocation3], 1
    %12 = vsyncpa %s11, 0
    %13 = vsyncpa [#allocation5], 0
    %s14 = scalar_lea.sflag [#allocation5], 1
    %15 = vsyncpa %s14, 0
    loop: start=0, step=1, limit=4
    $region2: #{_lambda_.11} parent=1 // loop_pre_header
      _
    $region3: #{_lambda_.11} parent=1 // loop_header
      %s17 = sphi 0, %s21
      %p18 = scmp.ge.s32.totalorder %s17, 4
      %s27 = sphi 0, %s29
      %s30 = sphi 0, %s27
      %s31 = sphi 0, %s30
      %s47 = sphi 0, %s31
      %s51 = sphi 0, %s51
      %s53 = sphi 0, %s51
      %s54 = sphi 0, %s53
      %s68 = sphi 0, %s54
      %s72 = sphi 0, %s72
      %s74 = sphi 0, %s72
      %s75 = sphi 0, %s74
      %s89 = sphi 0, %s75
      %s95 = sphi 0, %s97
      %s98 = sphi 0, %s95
      %s99 = sphi 0, %s98
      %s115 = sphi 0, %s99
      %s121 = sphi 0, %s123
      %s124 = sphi 0, %s121
      %s125 = sphi 0, %s124
      %s141 = sphi 0, %s125
    $region4: #{_lambda_.11} parent=1 // loop_header_branch
      %20 = sbr.rel (%p18) target = $region8
    $region5: #{_lambda_.11} parent=1 // loop_body
      %s22 = ssub.s32 %s17, 1
      %s23 = ssub.s32 %s17, 2
      %s24 = sadd.s32 %s17, 1
      %s25 = ssub.s32 %s17, %s24
      %p26 = scmp.eq.s32.totalorder %s25, 0
      %s28 = sadd.s32 %s27, 1
      %s29 = scalar_select %p26, %s27, %s28
      %p32 = pneg %p26
      %p33 = scmp.eq.s32.totalorder %s17, 1
      %p34 = por %p32, %p33
      %p35 = scmp.ne.s32.totalorder %s27, %s30
      %p36 = scmp.eq.s32.totalorder %s17, 0
      %p37 = por %p35, %p36
      %p38 = scmp.ne.s32.totalorder %s27, %s30
      %p39 = scmp.eq.s32.totalorder %s22, 1
      %p40 = por %p38, %p39
      %p41 = scmp.ne.s32.totalorder %s30, %s31
      %p42 = scmp.eq.s32.totalorder %s22, 0
      %p43 = por %p41, %p42
      %p44 = scmp.ne.s32.totalorder %s30, %s31
      %p45 = scmp.eq.s32.totalorder %s23, 1
      %p46 = por %p44, %p45
      %p48 = scmp.ne.s32.totalorder %s31, %s47
      %p49 = scmp.eq.s32.totalorder %s23, 0
      %p50 = por %p48, %p49
      %s52 = sadd.s32 %s51, 1
      %p55 = scmp.eq.s32.totalorder %s17, 1
      %p56 = scmp.ne.s32.totalorder %s51, %s53
      %p57 = scmp.eq.s32.totalorder %s17, 0
      %p58 = por %p56, %p57
      %p59 = scmp.ne.s32.totalorder %s51, %s53
      %p60 = scmp.eq.s32.totalorder %s22, 1
      %p61 = por %p59, %p60
      %p62 = scmp.ne.s32.totalorder %s53, %s54
      %p63 = scmp.eq.s32.totalorder %s22, 0
      %p64 = por %p62, %p63
      %p65 = scmp.ne.s32.totalorder %s53, %s54
      %p66 = scmp.eq.s32.totalorder %s23, 1
      %p67 = por %p65, %p66
      %p69 = scmp.ne.s32.totalorder %s54, %s68
      %p70 = scmp.eq.s32.totalorder %s23, 0
      %p71 = por %p69, %p70
      %s73 = sadd.s32 %s72, 1
      %p76 = scmp.eq.s32.totalorder %s17, 1
      %p77 = scmp.ne.s32.totalorder %s72, %s74
      %p78 = scmp.eq.s32.totalorder %s17, 0
      %p79 = por %p77, %p78
      %p80 = scmp.ne.s32.totalorder %s72, %s74
      %p81 = scmp.eq.s32.totalorder %s22, 1
      %p82 = por %p80, %p81
      %p83 = scmp.ne.s32.totalorder %s74, %s75
      %p84 = scmp.eq.s32.totalorder %s22, 0
      %p85 = por %p83, %p84
      %p86 = scmp.ne.s32.totalorder %s74, %s75
      %p87 = scmp.eq.s32.totalorder %s23, 1
      %p88 = por %p86, %p87
      %p90 = scmp.ne.s32.totalorder %s75, %s89
      %p91 = scmp.eq.s32.totalorder %s23, 0
      %p92 = por %p90, %p91
      %s93 = ssub.s32 %s17, %s24
      %p94 = scmp.eq.s32.totalorder %s93, 0
      %s96 = sadd.s32 %s95, 1
      %s97 = scalar_select %p94, %s95, %s96
      %p100 = pneg %p94
      %p101 = scmp.eq.s32.totalorder %s17, 1
      %p102 = por %p100, %p101
      %p103 = scmp.ne.s32.totalorder %s95, %s98
      %p104 = scmp.eq.s32.totalorder %s17, 0
      %p105 = por %p103, %p104
      %p106 = scmp.ne.s32.totalorder %s95, %s98
      %p107 = scmp.eq.s32.totalorder %s22, 1
      %p108 = por %p106, %p107
      %p109 = scmp.ne.s32.totalorder %s98, %s99
      %p110 = scmp.eq.s32.totalorder %s22, 0
      %p111 = por %p109, %p110
      %p112 = scmp.ne.s32.totalorder %s98, %s99
      %p113 = scmp.eq.s32.totalorder %s23, 1
      %p114 = por %p112, %p113
      %p116 = scmp.ne.s32.totalorder %s99, %s115
      %p117 = scmp.eq.s32.totalorder %s23, 0
      %p118 = por %p116, %p117
      %s119 = ssub.s32 %s17, %s24
      %p120 = scmp.eq.s32.totalorder %s119, 0
      %s122 = sadd.s32 %s121, 1
      %s123 = scalar_select %p120, %s121, %s122
      %p126 = pneg %p120
      %p127 = scmp.eq.s32.totalorder %s17, 1
      %p128 = por %p126, %p127
      %p129 = scmp.ne.s32.totalorder %s121, %s124
      %p130 = scmp.eq.s32.totalorder %s17, 0
      %p131 = por %p129, %p130
      %p132 = scmp.ne.s32.totalorder %s121, %s124
      %p133 = scmp.eq.s32.totalorder %s22, 1
      %p134 = por %p132, %p133
      %p135 = scmp.ne.s32.totalorder %s124, %s125
      %p136 = scmp.eq.s32.totalorder %s22, 0
      %p137 = por %p135, %p136
      %p138 = scmp.ne.s32.totalorder %s124, %s125
      %p139 = scmp.eq.s32.totalorder %s23, 1
      %p140 = por %p138, %p139
      %p142 = scmp.ne.s32.totalorder %s125, %s141
      %p143 = scmp.eq.s32.totalorder %s23, 0
      %p144 = por %p142, %p143
      %p145 = scmp.le.s32.totalorder 1, %s17
      %p146 = scmp.lt.s32.totalorder %s17, 3
      %p147 = pnand %p145, %p146
      %p148 = pneg %p147
      // Predicated region
      $region9: #{_lambda_.11} parent=5 // pred_check
        _
      $region10: #{_lambda_.11} parent=5 // pred_check_branch
        %150 = sbr.rel (%p147) target = $region12
      $region11: #{_lambda_.11} parent=5 // pred_region
        %s151 = ssub.s32 %s17, 1
        // Predicated region
        $region13: #{_lambda_.11} parent=11 // pred_check
          %p152 = pneg %p64
        $region14: #{_lambda_.11} parent=11 // pred_check_branch
          %154 = sbr.rel (%p152) target = $region16
        $region15: #{_lambda_.11} parent=11 // pred_region
          _
        $region16: #{_lambda_.11} parent=11 // pred_fallthru
          _
        // Predicated region
        $region17: #{_lambda_.11} parent=11 // pred_check
          %p155 = pneg %p85
        $region18: #{_lambda_.11} parent=11 // pred_check_branch
          %157 = sbr.rel (%p155) target = $region20
        $region19: #{_lambda_.11} parent=11 // pred_region
          _
        $region20: #{_lambda_.11} parent=11 // pred_fallthru
          _
      $region12: #{_lambda_.11} parent=5 // pred_fallthru
        _
      %p158 = scmp.lt.s32.totalorder %s17, 2
      // Predicated region
      $region21: #{_lambda_.11} parent=5 // pred_check
        %p159 = pneg %p158
      $region22: #{_lambda_.11} parent=5 // pred_check_branch
        %161 = sbr.rel (%p159) target = $region24
      $region23: #{_lambda_.11} parent=5 // pred_region
        // Predicated region
        $region25: #{_lambda_.11} parent=23 // pred_check
          %p162 = pneg %p37
        $region26: #{_lambda_.11} parent=23 // pred_check_branch
          %164 = sbr.rel (%p162) target = $region28
        $region27: #{_lambda_.11} parent=23 // pred_region
          %p165 = scmp.lt.s32.totalorder %s17, 1
          %s166 = scalar_select %p165, %s17, 1
          %s167 = smul.addr %s166, 2
          %s168 = scalar_lea.vmem %s0, %s167
        $region28: #{_lambda_.11} parent=23 // pred_fallthru
          _
      $region24: #{_lambda_.11} parent=5 // pred_fallthru
        _
      %p169 = scmp.le.s32.totalorder 1, %s17
      %p170 = scmp.lt.s32.totalorder %s17, 3
      %p171 = pnand %p169, %p170
      %p172 = pneg %p171
      // Predicated region
      $region29: #{_lambda_.11} parent=5 // pred_check
        _
      $region30: #{_lambda_.11} parent=5 // pred_check_branch
        %174 = sbr.rel (%p171) target = $region32
      $region31: #{_lambda_.11} parent=5 // pred_region
        %s175 = ssub.s32 %s17, 1
        %p176 = scmp.lt.s32.totalorder %s22, 1
        %s177 = scalar_select %p176, %s22, 1
        %s178 = smul.addr %s177, 2
        %s179 = scalar_lea.vmem %s0, %s178
        %p180 = pneg %p43
        %p181 = pneg %p40
        %p182 = pneg %p64
        %p183 = pneg %p61
        %p184 = pneg %p85
        %p185 = pneg %p82
        %p186 = pneg %p111
        %p187 = pneg %p108
        %s188 = sand.u32 %s98, 1
        %s189 = scalar_lea.sflag [#allocation3], %s188
        %s190 = sand.u32 %s98, 1
        %s191 = scalar_lea.vmem [#allocation2], %s190
        %p192 = pneg %p137
        %p193 = pneg %p134
        %s194 = sand.u32 %s124, 1
        %s195 = scalar_lea.sflag [#allocation5], %s194
        %s196 = sand.u32 %s124, 1
        %s197 = scalar_lea.vmem [#allocation4], %s196
        %p198 = scmp.lt.s32.totalorder %s22, 1
        %s199 = scalar_select %p198, %s22, 1
        %s200 = smul.addr %s199, 2
        %s201 = scalar_lea.vmem %s0, %s200
        %v203 = vld [vmem:[%s201] sm:$0x3]
        %v204 = vunpack.c.l.bf16 %v203
        %vm205 = vcmask 519168
        %v206 = vsel %vm205, %v204, 0.0
        %v207 = vrot.slane %v206, 4
        %v208 = vadd.f32 %v206, %v207
        %v209 = vrot.slane %v208, 2
        %v210 = vadd.f32 %v208, %v209
        %v211 = vrot.slane %v210, 1
        %v212 = vadd.f32 %v210, %v211
        %v213 = vrcp.pop 4.0
        %v214 = vmul.f32 %v212, %v213
        %vm215 = vcmask 516096
        %216 = vst.msk [vmem:[%s191] sm:$0x1] %vm215, %v214
        %v217 = vpack.c.bf16 %v214, %v214
        %v218 = vld [vmem:[%s1] sm:$0xf]
        %v219 = vld [vmem:[%s1 + $0x4] sm:$0xf]
        %v220 = vld [vmem:[%s1 + $0x8] sm:$0xf]
        %v221 = vld [vmem:[%s1 + $0xc] sm:$0xf]
        %v222 = vld [vmem:[%s1 + $0x10] sm:$0xf]
        %v223 = vld [vmem:[%s1 + $0x14] sm:$0xf]
        %v224 = vld [vmem:[%s1 + $0x18] sm:$0xf]
        %v225 = vld [vmem:[%s1 + $0x1c] sm:$0xf]
        %v226 = vld [vmem:[%s2] sm:$0x1]
        %v235 = vunpack.c.l.b16 %v218
        %v236 = vunpack.c.l.b16 %v219
        %v237 = vunpack.c.l.b16 %v220
        %v238 = vunpack.c.l.b16 %v221
        %v239 = vunpack.c.l.b16 %v222
        %v240 = vunpack.c.l.b16 %v223
        %v241 = vunpack.c.l.b16 %v224
        %v242 = vunpack.c.l.b16 %v225
        %v243 = vpack.c.b16 %v236, %v235
        %v244 = vpack.c.b16 %v238, %v237
        %v245 = vpack.c.b16 %v240, %v239
        %v246 = vpack.c.b16 %v242, %v241
        %vm251 = vcmask 523264
        %v253 = vsel %vm251, %v217, 0
        %255 = vmatprep.subr.bf16.mxu0 0
        %256 = vmatpush1.bf16.msra.mxu0 0
        %257 = vmatprep.subr.bf16.mxu0 0
        %258 = vmatpush1.bf16.msra.mxu0 0
        %259 = vmatprep.subr.bf16.mxu0 0
        %260 = vmatpush1.bf16.msra.mxu0 0
        %261 = vmatprep.subr.bf16.mxu0 0
        %262 = vmatpush1.bf16.msra.mxu0 0
        %263 = vmatprep.subr.bf16.mxu0 0
        %264 = vmatpush1.bf16.msra.mxu0 %v246
        %265 = vmatprep.subr.bf16.mxu0 0
        %266 = vmatpush1.bf16.msra.mxu0 %v245
        %267 = vmatprep.subr.bf16.mxu0 0
        %268 = vmatpush1.bf16.msra.mxu0 %v244
        %269 = vmatprep.subr.bf16.mxu0 0
        %270 = vmatpush1.bf16.msra.mxu0 %v243
        %271 = vmatprep.subr.bf16.mxu0 0
        %272 = vmatpush2.bf16.msra.mxu0 0
        %273 = vmatprep.subr.bf16.mxu0 0
        %274 = vmatpush2.bf16.msra.mxu0 0
        %275 = vmatprep.subr.bf16.mxu0 0
        %276 = vmatpush2.bf16.msra.mxu0 0
        %277 = vmatprep.subr.bf16.mxu0 0
        %278 = vmatpush2.bf16.msra.mxu0 0
        %279 = vmatprep.subr.bf16.mxu0 0
        %280 = vmatpush2.bf16.msra.mxu0 0
        %281 = vmatprep.subr.bf16.mxu0 0
        %282 = vmatpush2.bf16.msra.mxu0 0
        %283 = vmatprep.subr.bf16.mxu0 0
        %284 = vmatpush2.bf16.msra.mxu0 0
        %285 = vmatprep.subr.bf16.mxu0 0
        %286 = vmatpush2.bf16.msra.mxu0 0
        %287 = vmatprep.mubr.bf16.mxu0 0
        %288 = vmatmul.mubr.bf16.gmra.mxu0 %v253
        %v289 = vpop.f32.mrf.mxu0
        %v290 = vadd.f32 %v226, %v289
        %v291 = vpop.f32.mrf.mxu0
        %v292 = vpop.f32.mrf.mxu0
        %v293 = vpop.f32.mrf.mxu0
        %294 = vdwg.mxu0
        %vm295 = vcmask 73728
        %296 = vst.msk [vmem:[%s197] sm:$0x1] %vm295, %v290
        %s297 = sand.u32 %s98, 1
        %s298 = scalar_lea.sflag [#allocation3], %s297
        %s299 = sand.u32 %s98, 1
        %s300 = scalar_lea.vmem [#allocation2], %s299
        %s301 = sand.u32 %s124, 1
        %s302 = scalar_lea.sflag [#allocation5], %s301
        %s303 = sand.u32 %s124, 1
        %s304 = scalar_lea.vmem [#allocation4], %s303
        // Predicated region
        $region33: #{_lambda_.11} parent=31 // pred_check
          %p305 = pneg %p108
        $region34: #{_lambda_.11} parent=31 // pred_check_branch
          %307 = sbr.rel (%p305) target = $region36
        $region35: #{_lambda_.11} parent=31 // pred_region
          %s309 = ssub.s32 16, 16
          %310 = vsyncadd %s298, %s309
          %s311 = smul.addr %s22, 16
          %s312 = scalar_lea.hbm %s3, %s311
          %s314 = sshll.u32 %s300, 4
          %s315 = int_to_ptr.vmem [resolvable:$true] %s314
          %317 = dma.vmem_to_hbm [thread:$0]  %s315, 16, %s312, %s298
        $region36: #{_lambda_.11} parent=31 // pred_fallthru
          _
        // Predicated region
        $region37: #{_lambda_.11} parent=31 // pred_check
          %p318 = pneg %p134
        $region38: #{_lambda_.11} parent=31 // pred_check_branch
          %320 = sbr.rel (%p318) target = $region40
        $region39: #{_lambda_.11} parent=31 // pred_region
          %s322 = ssub.s32 16, 16
          %323 = vsyncadd %s302, %s322
          %s324 = smul.addr %s22, 16
          %s325 = scalar_lea.hbm %s4, %s324
          %s327 = sshll.u32 %s304, 4
          %s328 = int_to_ptr.vmem [resolvable:$true] %s327
          %330 = dma.vmem_to_hbm [thread:$0]  %s328, 16, %s325, %s302
        $region40: #{_lambda_.11} parent=31 // pred_fallthru
          _
      $region32: #{_lambda_.11} parent=5 // pred_fallthru
        _
      %p331 = scmp.le.s32.totalorder 2, %s17
      // Predicated region
      $region41: #{_lambda_.11} parent=5 // pred_check
        %p332 = pneg %p331
      $region42: #{_lambda_.11} parent=5 // pred_check_branch
        %334 = sbr.rel (%p332) target = $region44
      $region43: #{_lambda_.11} parent=5 // pred_region
        %s335 = ssub.s32 %s17, 2
        // Predicated region
        $region45: #{_lambda_.11} parent=43 // pred_check
          %p336 = pneg %p114
        $region46: #{_lambda_.11} parent=43 // pred_check_branch
          %338 = sbr.rel (%p336) target = $region48
        $region47: #{_lambda_.11} parent=43 // pred_region
          %s339 = sand.u32 %s99, 1
          %s340 = scalar_lea.sflag [#allocation3], %s339
          %s341 = sand.u32 %s99, 1
          %s342 = scalar_lea.vmem [#allocation2], %s341
          %343 = dma.done %s340, 16
        $region48: #{_lambda_.11} parent=43 // pred_fallthru
          _
        // Predicated region
        $region49: #{_lambda_.11} parent=43 // pred_check
          %p344 = pneg %p140
        $region50: #{_lambda_.11} parent=43 // pred_check_branch
          %346 = sbr.rel (%p344) target = $region52
        $region51: #{_lambda_.11} parent=43 // pred_region
          %s347 = sand.u32 %s125, 1
          %s348 = scalar_lea.sflag [#allocation5], %s347
          %s349 = sand.u32 %s125, 1
          %s350 = scalar_lea.vmem [#allocation4], %s349
          %351 = dma.done %s348, 16
        $region52: #{_lambda_.11} parent=43 // pred_fallthru
          _
      $region44: #{_lambda_.11} parent=5 // pred_fallthru
        _
    $region6: #{_lambda_.11} parent=1 // loop_footer
      %s21 = sadd.s32 1, %s17
    $region7: #{_lambda_.11} parent=1 // loop_footer_branch
      %16 = sbr.rel target = $region3
    $region8: #{_lambda_.11} parent=1 // loop_exit
      _
    %352 = vsyncpa [#allocation3], 1
    %s353 = scalar_lea.sflag [#allocation3], 1
    %354 = vsyncpa %s353, 1
    %355 = vsyncpa [#allocation5], 1
    %s356 = scalar_lea.sflag [#allocation5], 1
    %357 = vsyncpa %s356, 1

// kernel: _lambda_.10
$region0: #{_lambda_.10}
  #allocation0 [shape = 'u32[]', space=smem, size = 0x4, offset = 0x4, fixed_abs, tag = 'smem constant byte address 0x4 - core index']
  #allocation1 [shape = 'u32[144,128]{1,0:T(1,128)}', space=vmem, size = 0x12000, scoped, tag = 'internal scratch']
  #allocation2 [shape = 'bf16[4,128]{1,0:T(4,128)(2,1)}', space=vmem, size = 0x400, scoped, tag = 'scratch operand']
  %s0 = inlined_call_operand.vmem [shape: bf16[2,2,3,128], index: 0, kind: input, shape index: {}]
  %s1 = inlined_call_operand.vmem [shape: bf16[3,128,128], index: 1, kind: input, shape index: {}]
  %s2 = inlined_call_operand.vmem [shape: f32[1,128], index: 2, kind: input, shape index: {}]
  %s3 = inlined_call_operand.vmem [shape: bf16[3,128,128], index: 3, kind: input, shape index: {}]
  %s4 = inlined_call_operand.vmem [shape: f32[1,128], index: 4, kind: input, shape index: {}]
  %s5 = inlined_call_operand.vmem [shape: bf16[128,128], index: 5, kind: input, shape index: {}]
  %s6 = inlined_call_operand.vmem [shape: f32[1,128], index: 6, kind: input, shape index: {}]
  %s7 = inlined_call_operand.vmem [shape: bf16[3,128,128], index: 7, kind: input, shape index: {}]
  %s8 = inlined_call_operand.vmem [shape: f32[1,128], index: 8, kind: input, shape index: {}]
  %s9 = inlined_call_operand.vmem [shape: bf16[3,128,128], index: 9, kind: input, shape index: {}]
  %s10 = inlined_call_operand.vmem [shape: f32[1,128], index: 10, kind: input, shape index: {}]
  %s11 = inlined_call_operand.vmem [shape: bf16[2,2,128], index: 11, kind: output, shape index: {}]
  %s12 = sld [smem:[#allocation0]]
  $region77: #{_lambda_.10} parent=0
    _
  %s14 = ssub.s32 1, %s12
  %s15 = scalar_select 0, %s14, %s12
  loop: start=0, step=1, limit=4
  $region2: #{_lambda_.10} parent=0 // loop_pre_header
    _
  $region3: #{_lambda_.10} parent=0 // loop_header
    %s17 = sphi 0, %s21
    %p18 = scmp.ge.s32.totalorder %s17, 4
    %s27 = sphi 0, %s29
    %s30 = sphi 0, %s27
    %s31 = sphi 0, %s30
    %s47 = sphi 0, %s31
    %s51 = sphi 0, %s51
    %s53 = sphi 0, %s51
    %s54 = sphi 0, %s53
    %s68 = sphi 0, %s54
    %s72 = sphi 0, %s72
    %s74 = sphi 0, %s72
    %s75 = sphi 0, %s74
    %s89 = sphi 0, %s75
    %s93 = sphi 0, %s93
    %s95 = sphi 0, %s93
    %s96 = sphi 0, %s95
    %s110 = sphi 0, %s96
    %s114 = sphi 0, %s114
    %s116 = sphi 0, %s114
    %s117 = sphi 0, %s116
    %s131 = sphi 0, %s117
    %s135 = sphi 0, %s135
    %s137 = sphi 0, %s135
    %s138 = sphi 0, %s137
    %s152 = sphi 0, %s138
    %s156 = sphi 0, %s156
    %s158 = sphi 0, %s156
    %s159 = sphi 0, %s158
    %s173 = sphi 0, %s159
    %s177 = sphi 0, %s177
    %s179 = sphi 0, %s177
    %s180 = sphi 0, %s179
    %s194 = sphi 0, %s180
    %s198 = sphi 0, %s198
    %s200 = sphi 0, %s198
    %s201 = sphi 0, %s200
    %s215 = sphi 0, %s201
    %s219 = sphi 0, %s219
    %s221 = sphi 0, %s219
    %s222 = sphi 0, %s221
    %s236 = sphi 0, %s222
    %s240 = sphi 0, %s240
    %s242 = sphi 0, %s240
    %s243 = sphi 0, %s242
    %s257 = sphi 0, %s243
    %s263 = sphi 0, %s265
    %s266 = sphi 0, %s263
    %s267 = sphi 0, %s266
    %s283 = sphi 0, %s267
  $region4: #{_lambda_.10} parent=0 // loop_header_branch
    %20 = sbr.rel (%p18) target = $region8
  $region5: #{_lambda_.10} parent=0 // loop_body
    %s22 = ssub.s32 %s17, 1
    %s23 = ssub.s32 %s17, 2
    %s24 = sadd.s32 %s17, 1
    %s25 = ssub.s32 %s17, %s24
    %p26 = scmp.eq.s32.totalorder %s25, 0
    %s28 = sadd.s32 %s27, 1
    %s29 = scalar_select %p26, %s27, %s28
    %p32 = pneg %p26
    %p33 = scmp.eq.s32.totalorder %s17, 1
    %p34 = por %p32, %p33
    %p35 = scmp.ne.s32.totalorder %s27, %s30
    %p36 = scmp.eq.s32.totalorder %s17, 0
    %p37 = por %p35, %p36
    %p38 = scmp.ne.s32.totalorder %s27, %s30
    %p39 = scmp.eq.s32.totalorder %s22, 1
    %p40 = por %p38, %p39
    %p41 = scmp.ne.s32.totalorder %s30, %s31
    %p42 = scmp.eq.s32.totalorder %s22, 0
    %p43 = por %p41, %p42
    %p44 = scmp.ne.s32.totalorder %s30, %s31
    %p45 = scmp.eq.s32.totalorder %s23, 1
    %p46 = por %p44, %p45
    %p48 = scmp.ne.s32.totalorder %s31, %s47
    %p49 = scmp.eq.s32.totalorder %s23, 0
    %p50 = por %p48, %p49
    %s52 = sadd.s32 %s51, 1
    %p55 = scmp.eq.s32.totalorder %s17, 1
    %p56 = scmp.ne.s32.totalorder %s51, %s53
    %p57 = scmp.eq.s32.totalorder %s17, 0
    %p58 = por %p56, %p57
    %p59 = scmp.ne.s32.totalorder %s51, %s53
    %p60 = scmp.eq.s32.totalorder %s22, 1
    %p61 = por %p59, %p60
    %p62 = scmp.ne.s32.totalorder %s53, %s54
    %p63 = scmp.eq.s32.totalorder %s22, 0
    %p64 = por %p62, %p63
    %p65 = scmp.ne.s32.totalorder %s53, %s54
    %p66 = scmp.eq.s32.totalorder %s23, 1
    %p67 = por %p65, %p66
    %p69 = scmp.ne.s32.totalorder %s54, %s68
    %p70 = scmp.eq.s32.totalorder %s23, 0
    %p71 = por %p69, %p70
    %s73 = sadd.s32 %s72, 1
    %p76 = scmp.eq.s32.totalorder %s17, 1
    %p77 = scmp.ne.s32.totalorder %s72, %s74
    %p78 = scmp.eq.s32.totalorder %s17, 0
    %p79 = por %p77, %p78
    %p80 = scmp.ne.s32.totalorder %s72, %s74
    %p81 = scmp.eq.s32.totalorder %s22, 1
    %p82 = por %p80, %p81
    %p83 = scmp.ne.s32.totalorder %s74, %s75
    %p84 = scmp.eq.s32.totalorder %s22, 0
    %p85 = por %p83, %p84
    %p86 = scmp.ne.s32.totalorder %s74, %s75
    %p87 = scmp.eq.s32.totalorder %s23, 1
    %p88 = por %p86, %p87
    %p90 = scmp.ne.s32.totalorder %s75, %s89
    %p91 = scmp.eq.s32.totalorder %s23, 0
    %p92 = por %p90, %p91
    %s94 = sadd.s32 %s93, 1
    %p97 = scmp.eq.s32.totalorder %s17, 1
    %p98 = scmp.ne.s32.totalorder %s93, %s95
    %p99 = scmp.eq.s32.totalorder %s17, 0
    %p100 = por %p98, %p99
    %p101 = scmp.ne.s32.totalorder %s93, %s95
    %p102 = scmp.eq.s32.totalorder %s22, 1
    %p103 = por %p101, %p102
    %p104 = scmp.ne.s32.totalorder %s95, %s96
    %p105 = scmp.eq.s32.totalorder %s22, 0
    %p106 = por %p104, %p105
    %p107 = scmp.ne.s32.totalorder %s95, %s96
    %p108 = scmp.eq.s32.totalorder %s23, 1
    %p109 = por %p107, %p108
    %p111 = scmp.ne.s32.totalorder %s96, %s110
    %p112 = scmp.eq.s32.totalorder %s23, 0
    %p113 = por %p111, %p112
    %s115 = sadd.s32 %s114, 1
    %p118 = scmp.eq.s32.totalorder %s17, 1
    %p119 = scmp.ne.s32.totalorder %s114, %s116
    %p120 = scmp.eq.s32.totalorder %s17, 0
    %p121 = por %p119, %p120
    %p122 = scmp.ne.s32.totalorder %s114, %s116
    %p123 = scmp.eq.s32.totalorder %s22, 1
    %p124 = por %p122, %p123
    %p125 = scmp.ne.s32.totalorder %s116, %s117
    %p126 = scmp.eq.s32.totalorder %s22, 0
    %p127 = por %p125, %p126
    %p128 = scmp.ne.s32.totalorder %s116, %s117
    %p129 = scmp.eq.s32.totalorder %s23, 1
    %p130 = por %p128, %p129
    %p132 = scmp.ne.s32.totalorder %s117, %s131
    %p133 = scmp.eq.s32.totalorder %s23, 0
    %p134 = por %p132, %p133
    %s136 = sadd.s32 %s135, 1
    %p139 = scmp.eq.s32.totalorder %s17, 1
    %p140 = scmp.ne.s32.totalorder %s135, %s137
    %p141 = scmp.eq.s32.totalorder %s17, 0
    %p142 = por %p140, %p141
    %p143 = scmp.ne.s32.totalorder %s135, %s137
    %p144 = scmp.eq.s32.totalorder %s22, 1
    %p145 = por %p143, %p144
    %p146 = scmp.ne.s32.totalorder %s137, %s138
    %p147 = scmp.eq.s32.totalorder %s22, 0
    %p148 = por %p146, %p147
    %p149 = scmp.ne.s32.totalorder %s137, %s138
    %p150 = scmp.eq.s32.totalorder %s23, 1
    %p151 = por %p149, %p150
    %p153 = scmp.ne.s32.totalorder %s138, %s152
    %p154 = scmp.eq.s32.totalorder %s23, 0
    %p155 = por %p153, %p154
    %s157 = sadd.s32 %s156, 1
    %p160 = scmp.eq.s32.totalorder %s17, 1
    %p161 = scmp.ne.s32.totalorder %s156, %s158
    %p162 = scmp.eq.s32.totalorder %s17, 0
    %p163 = por %p161, %p162
    %p164 = scmp.ne.s32.totalorder %s156, %s158
    %p165 = scmp.eq.s32.totalorder %s22, 1
    %p166 = por %p164, %p165
    %p167 = scmp.ne.s32.totalorder %s158, %s159
    %p168 = scmp.eq.s32.totalorder %s22, 0
    %p169 = por %p167, %p168
    %p170 = scmp.ne.s32.totalorder %s158, %s159
    %p171 = scmp.eq.s32.totalorder %s23, 1
    %p172 = por %p170, %p171
    %p174 = scmp.ne.s32.totalorder %s159, %s173
    %p175 = scmp.eq.s32.totalorder %s23, 0
    %p176 = por %p174, %p175
    %s178 = sadd.s32 %s177, 1
    %p181 = scmp.eq.s32.totalorder %s17, 1
    %p182 = scmp.ne.s32.totalorder %s177, %s179
    %p183 = scmp.eq.s32.totalorder %s17, 0
    %p184 = por %p182, %p183
    %p185 = scmp.ne.s32.totalorder %s177, %s179
    %p186 = scmp.eq.s32.totalorder %s22, 1
    %p187 = por %p185, %p186
    %p188 = scmp.ne.s32.totalorder %s179, %s180
    %p189 = scmp.eq.s32.totalorder %s22, 0
    %p190 = por %p188, %p189
    %p191 = scmp.ne.s32.totalorder %s179, %s180
    %p192 = scmp.eq.s32.totalorder %s23, 1
    %p193 = por %p191, %p192
    %p195 = scmp.ne.s32.totalorder %s180, %s194
    %p196 = scmp.eq.s32.totalorder %s23, 0
    %p197 = por %p195, %p196
    %s199 = sadd.s32 %s198, 1
    %p202 = scmp.eq.s32.totalorder %s17, 1
    %p203 = scmp.ne.s32.totalorder %s198, %s200
    %p204 = scmp.eq.s32.totalorder %s17, 0
    %p205 = por %p203, %p204
    %p206 = scmp.ne.s32.totalorder %s198, %s200
    %p207 = scmp.eq.s32.totalorder %s22, 1
    %p208 = por %p206, %p207
    %p209 = scmp.ne.s32.totalorder %s200, %s201
    %p210 = scmp.eq.s32.totalorder %s22, 0
    %p211 = por %p209, %p210
    %p212 = scmp.ne.s32.totalorder %s200, %s201
    %p213 = scmp.eq.s32.totalorder %s23, 1
    %p214 = por %p212, %p213
    %p216 = scmp.ne.s32.totalorder %s201, %s215
    %p217 = scmp.eq.s32.totalorder %s23, 0
    %p218 = por %p216, %p217
    %s220 = sadd.s32 %s219, 1
    %p223 = scmp.eq.s32.totalorder %s17, 1
    %p224 = scmp.ne.s32.totalorder %s219, %s221
    %p225 = scmp.eq.s32.totalorder %s17, 0
    %p226 = por %p224, %p225
    %p227 = scmp.ne.s32.totalorder %s219, %s221
    %p228 = scmp.eq.s32.totalorder %s22, 1
    %p229 = por %p227, %p228
    %p230 = scmp.ne.s32.totalorder %s221, %s222
    %p231 = scmp.eq.s32.totalorder %s22, 0
    %p232 = por %p230, %p231
    %p233 = scmp.ne.s32.totalorder %s221, %s222
    %p234 = scmp.eq.s32.totalorder %s23, 1
    %p235 = por %p233, %p234
    %p237 = scmp.ne.s32.totalorder %s222, %s236
    %p238 = scmp.eq.s32.totalorder %s23, 0
    %p239 = por %p237, %p238
    %s241 = sadd.s32 %s240, 1
    %p244 = scmp.eq.s32.totalorder %s17, 1
    %p245 = scmp.ne.s32.totalorder %s240, %s242
    %p246 = scmp.eq.s32.totalorder %s17, 0
    %p247 = por %p245, %p246
    %p248 = scmp.ne.s32.totalorder %s240, %s242
    %p249 = scmp.eq.s32.totalorder %s22, 1
    %p250 = por %p248, %p249
    %p251 = scmp.ne.s32.totalorder %s242, %s243
    %p252 = scmp.eq.s32.totalorder %s22, 0
    %p253 = por %p251, %p252
    %p254 = scmp.ne.s32.totalorder %s242, %s243
    %p255 = scmp.eq.s32.totalorder %s23, 1
    %p256 = por %p254, %p255
    %p258 = scmp.ne.s32.totalorder %s243, %s257
    %p259 = scmp.eq.s32.totalorder %s23, 0
    %p260 = por %p258, %p259
    %s261 = ssub.s32 %s17, %s24
    %p262 = scmp.eq.s32.totalorder %s261, 0
    %s264 = sadd.s32 %s263, 1
    %s265 = scalar_select %p262, %s263, %s264
    %p268 = pneg %p262
    %p269 = scmp.eq.s32.totalorder %s17, 1
    %p270 = por %p268, %p269
    %p271 = scmp.ne.s32.totalorder %s263, %s266
    %p272 = scmp.eq.s32.totalorder %s17, 0
    %p273 = por %p271, %p272
    %p274 = scmp.ne.s32.totalorder %s263, %s266
    %p275 = scmp.eq.s32.totalorder %s22, 1
    %p276 = por %p274, %p275
    %p277 = scmp.ne.s32.totalorder %s266, %s267
    %p278 = scmp.eq.s32.totalorder %s22, 0
    %p279 = por %p277, %p278
    %p280 = scmp.ne.s32.totalorder %s266, %s267
    %p281 = scmp.eq.s32.totalorder %s23, 1
    %p282 = por %p280, %p281
    %p284 = scmp.ne.s32.totalorder %s267, %s283
    %p285 = scmp.eq.s32.totalorder %s23, 0
    %p286 = por %p284, %p285
    %p287 = scmp.le.s32.totalorder 1, %s17
    %p288 = scmp.lt.s32.totalorder %s17, 3
    %p289 = pnand %p287, %p288
    %p290 = pneg %p289
    // Predicated region
    $region9: #{_lambda_.10} parent=5 // pred_check
      _
    $region10: #{_lambda_.10} parent=5 // pred_check_branch
      %292 = sbr.rel (%p289) target = $region12
    $region11: #{_lambda_.10} parent=5 // pred_region
      %s293 = ssub.s32 %s17, 1
      // Predicated region
      $region13: #{_lambda_.10} parent=11 // pred_check
        %p294 = pneg %p64
      $region14: #{_lambda_.10} parent=11 // pred_check_branch
        %296 = sbr.rel (%p294) target = $region16
      $region15: #{_lambda_.10} parent=11 // pred_region
        _
      $region16: #{_lambda_.10} parent=11 // pred_fallthru
        _
      // Predicated region
      $region17: #{_lambda_.10} parent=11 // pred_check
        %p297 = pneg %p85
      $region18: #{_lambda_.10} parent=11 // pred_check_branch
        %299 = sbr.rel (%p297) target = $region20
      $region19: #{_lambda_.10} parent=11 // pred_region
        _
      $region20: #{_lambda_.10} parent=11 // pred_fallthru
        _
      // Predicated region
      $region21: #{_lambda_.10} parent=11 // pred_check
        %p300 = pneg %p106
      $region22: #{_lambda_.10} parent=11 // pred_check_branch
        %302 = sbr.rel (%p300) target = $region24
      $region23: #{_lambda_.10} parent=11 // pred_region
        _
      $region24: #{_lambda_.10} parent=11 // pred_fallthru
        _
      // Predicated region
      $region25: #{_lambda_.10} parent=11 // pred_check
        %p303 = pneg %p127
      $region26: #{_lambda_.10} parent=11 // pred_check_branch
        %305 = sbr.rel (%p303) target = $region28
      $region27: #{_lambda_.10} parent=11 // pred_region
        _
      $region28: #{_lambda_.10} parent=11 // pred_fallthru
        _
      // Predicated region
      $region29: #{_lambda_.10} parent=11 // pred_check
        %p306 = pneg %p148
      $region30: #{_lambda_.10} parent=11 // pred_check_branch
        %308 = sbr.rel (%p306) target = $region32
      $region31: #{_lambda_.10} parent=11 // pred_region
        _
      $region32: #{_lambda_.10} parent=11 // pred_fallthru
        _
      // Predicated region
      $region33: #{_lambda_.10} parent=11 // pred_check
        %p309 = pneg %p169
      $region34: #{_lambda_.10} parent=11 // pred_check_branch
        %311 = sbr.rel (%p309) target = $region36
      $region35: #{_lambda_.10} parent=11 // pred_region
        _
      $region36: #{_lambda_.10} parent=11 // pred_fallthru
        _
      // Predicated region
      $region37: #{_lambda_.10} parent=11 // pred_check
        %p312 = pneg %p190
      $region38: #{_lambda_.10} parent=11 // pred_check_branch
        %314 = sbr.rel (%p312) target = $region40
      $region39: #{_lambda_.10} parent=11 // pred_region
        _
      $region40: #{_lambda_.10} parent=11 // pred_fallthru
        _
      // Predicated region
      $region41: #{_lambda_.10} parent=11 // pred_check
        %p315 = pneg %p211
      $region42: #{_lambda_.10} parent=11 // pred_check_branch
        %317 = sbr.rel (%p315) target = $region44
      $region43: #{_lambda_.10} parent=11 // pred_region
        _
      $region44: #{_lambda_.10} parent=11 // pred_fallthru
        _
      // Predicated region
      $region45: #{_lambda_.10} parent=11 // pred_check
        %p318 = pneg %p232
      $region46: #{_lambda_.10} parent=11 // pred_check_branch
        %320 = sbr.rel (%p318) target = $region48
      $region47: #{_lambda_.10} parent=11 // pred_region
        _
      $region48: #{_lambda_.10} parent=11 // pred_fallthru
        _
      // Predicated region
      $region49: #{_lambda_.10} parent=11 // pred_check
        %p321 = pneg %p253
      $region50: #{_lambda_.10} parent=11 // pred_check_branch
        %323 = sbr.rel (%p321) target = $region52
      $region51: #{_lambda_.10} parent=11 // pred_region
        _
      $region52: #{_lambda_.10} parent=11 // pred_fallthru
        _
    $region12: #{_lambda_.10} parent=5 // pred_fallthru
      _
    %p324 = scmp.lt.s32.totalorder %s17, 2
    // Predicated region
    $region53: #{_lambda_.10} parent=5 // pred_check
      %p325 = pneg %p324
    $region54: #{_lambda_.10} parent=5 // pred_check_branch
      %327 = sbr.rel (%p325) target = $region56
    $region55: #{_lambda_.10} parent=5 // pred_region
      // Predicated region
      $region57: #{_lambda_.10} parent=55 // pred_check
        %p328 = pneg %p37
      $region58: #{_lambda_.10} parent=55 // pred_check_branch
        %330 = sbr.rel (%p328) target = $region60
      $region59: #{_lambda_.10} parent=55 // pred_region
        %p331 = scmp.lt.s32.totalorder %s17, 1
        %s332 = scalar_select %p331, %s17, 1
        %s333 = smul.addr %s332, 2
        %s334 = smul.addr %s333, 2
        %s335 = scalar_lea.vmem %s0, %s334
      $region60: #{_lambda_.10} parent=55 // pred_fallthru
        _
    $region56: #{_lambda_.10} parent=5 // pred_fallthru
      _
    %p336 = scmp.le.s32.totalorder 1, %s17
    %p337 = scmp.lt.s32.totalorder %s17, 3
    %p338 = pnand %p336, %p337
    %p339 = pneg %p338
    // Predicated region
    $region61: #{_lambda_.10} parent=5 // pred_check
      _
    $region62: #{_lambda_.10} parent=5 // pred_check_branch
      %341 = sbr.rel (%p338) target = $region64
    $region63: #{_lambda_.10} parent=5 // pred_region
      %s342 = ssub.s32 %s17, 1
      %p343 = scmp.lt.s32.totalorder %s22, 1
      %s344 = scalar_select %p343, %s22, 1
      %s345 = smul.addr %s344, 2
      %s346 = smul.addr %s345, 2
      %s347 = scalar_lea.vmem %s0, %s346
      %p348 = pneg %p43
      %p349 = pneg %p40
      %p350 = pneg %p64
      %p351 = pneg %p61
      %p352 = pneg %p85
      %p353 = pneg %p82
      %p354 = pneg %p106
      %p355 = pneg %p103
      %p356 = pneg %p127
      %p357 = pneg %p124
      %p358 = pneg %p148
      %p359 = pneg %p145
      %p360 = pneg %p169
      %p361 = pneg %p166
      %p362 = pneg %p190
      %p363 = pneg %p187
      %p364 = pneg %p211
      %p365 = pneg %p208
      %p366 = pneg %p232
      %p367 = pneg %p229
      %p368 = pneg %p253
      %p369 = pneg %p250
      %p370 = pneg %p279
      %p371 = pneg %p276
      %p372 = scmp.lt.s32.totalorder %s22, 1
      %s373 = scalar_select %p372, %s22, 1
      %s374 = scalar_lea.vmem %s11, %s373
      %p375 = scmp.lt.s32.totalorder %s22, 1
      %s376 = scalar_select %p375, %s22, 1
      %s377 = smul.addr %s376, 2
      %s378 = smul.addr %s377, 2
      %s379 = scalar_lea.vmem %s0, %s378
      %p380 = scmp.lt.s32.totalorder %s22, 1
      %s381 = scalar_select %p380, %s22, 1
      %s382 = scalar_lea.vmem %s11, %s381
      %vm384 = vcmask 1040384
      %vm385 = vsmask.f32 256
      %vm386 = vmand %vm384, %vm385
      %v387 = vld [vmem:[#allocation2] sm:$0x1]
      %v388 = vsel %vm386, 0, %v387
      %389 = vst [vmem:[#allocation2] sm:$0x1] %v388
      %vm390 = vcmask 1041409
      %vm391 = vsmask.f32 7942
      %vm392 = vmand %vm390, %vm391
      %v393 = vld [vmem:[#allocation2] sm:$0x2]
      %v394 = vsel %vm392, 0, %v393
      %395 = vst [vmem:[#allocation2] sm:$0x2] %v394
      %v396 = vld [vmem:[%s379] sm:$0x1]
      %s397 = scalar_lea.vmem %s379, 2
      %v398 = vld [vmem:[%s397] sm:$0x1]
      %v399 = vld [vmem:[%s379] sm:$0x3]
      %v400 = vld [vmem:[%s1] sm:$0xf]
      %v401 = vld [vmem:[%s1 + $0x4] sm:$0xf]
      %v402 = vld [vmem:[%s1 + $0x8] sm:$0xf]
      %v403 = vld [vmem:[%s1 + $0xc] sm:$0xf]
      %v404 = vld [vmem:[%s1 + $0x10] sm:$0xf]
      %v405 = vld [vmem:[%s1 + $0x14] sm:$0xf]
      %v406 = vld [vmem:[%s1 + $0x18] sm:$0xf]
      %v407 = vld [vmem:[%s1 + $0x1c] sm:$0xf]
      %v408 = vld [vmem:[%s1 + $0x20] sm:$0xf]
      %v409 = vld [vmem:[%s1 + $0x24] sm:$0xf]
      %v410 = vld [vmem:[%s1 + $0x28] sm:$0xf]
      %v411 = vld [vmem:[%s1 + $0x2c] sm:$0xf]
      %v412 = vld [vmem:[%s1 + $0x30] sm:$0xf]
      %v413 = vld [vmem:[%s1 + $0x34] sm:$0xf]
      %v414 = vld [vmem:[%s1 + $0x38] sm:$0xf]
      %v415 = vld [vmem:[%s1 + $0x3c] sm:$0xf]
      %s416 = scalar_lea.vmem %s1, 64
      %v417 = vld [vmem:[%s416] sm:$0xf]
      %v418 = vld [vmem:[%s416 + $0x4] sm:$0xf]
      %v419 = vld [vmem:[%s416 + $0x8] sm:$0xf]
      %v420 = vld [vmem:[%s416 + $0xc] sm:$0xf]
      %v421 = vld [vmem:[%s416 + $0x10] sm:$0xf]
      %v422 = vld [vmem:[%s416 + $0x14] sm:$0xf]
      %v423 = vld [vmem:[%s416 + $0x18] sm:$0xf]
      %v424 = vld [vmem:[%s416 + $0x1c] sm:$0xf]
      %v425 = vld [vmem:[%s416 + $0x20] sm:$0xf]
      %v426 = vld [vmem:[%s416 + $0x24] sm:$0xf]
      %v427 = vld [vmem:[%s416 + $0x28] sm:$0xf]
      %v428 = vld [vmem:[%s416 + $0x2c] sm:$0xf]
      %v429 = vld [vmem:[%s416 + $0x30] sm:$0xf]
      %v430 = vld [vmem:[%s416 + $0x34] sm:$0xf]
      %v431 = vld [vmem:[%s416 + $0x38] sm:$0xf]
      %v432 = vld [vmem:[%s416 + $0x3c] sm:$0xf]
      %v449 = vunpack.c.l.b16 %v417
      %v450 = vunpack.c.l.b16 %v418
      %v451 = vunpack.c.l.b16 %v419
      %v452 = vunpack.c.l.b16 %v420
      %v453 = vunpack.c.l.b16 %v421
      %v454 = vunpack.c.l.b16 %v422
      %v455 = vunpack.c.l.b16 %v423
      %v456 = vunpack.c.l.b16 %v424
      %v457 = vunpack.c.l.b16 %v425
      %v458 = vunpack.c.l.b16 %v426
      %v459 = vunpack.c.l.b16 %v427
      %v460 = vunpack.c.l.b16 %v428
      %v461 = vunpack.c.l.b16 %v429
      %v462 = vunpack.c.l.b16 %v430
      %v463 = vunpack.c.l.b16 %v431
      %v464 = vunpack.c.l.b16 %v432
      %v465 = vpack.c.b16 %v450, %v449
      %v466 = vpack.c.b16 %v452, %v451
      %v467 = vpack.c.b16 %v454, %v453
      %v468 = vpack.c.b16 %v456, %v455
      %v469 = vpack.c.b16 %v458, %v457
      %v470 = vpack.c.b16 %v460, %v459
      %v471 = vpack.c.b16 %v462, %v461
      %v472 = vpack.c.b16 %v464, %v463
      %481 = vmatprep.subr.bf16.mxu0 0
      %482 = vmatpush1.bf16.msra.mxu0 %v472
      %483 = vmatprep.subr.bf16.mxu0 0
      %484 = vmatpush1.bf16.msra.mxu0 %v471
      %485 = vmatprep.subr.bf16.mxu0 0
      %486 = vmatpush1.bf16.msra.mxu0 %v470
      %487 = vmatprep.subr.bf16.mxu0 0
      %488 = vmatpush1.bf16.msra.mxu0 %v469
      %489 = vmatprep.subr.bf16.mxu0 0
      %490 = vmatpush1.bf16.msra.mxu0 %v468
      %491 = vmatprep.subr.bf16.mxu0 0
      %492 = vmatpush1.bf16.msra.mxu0 %v467
      %493 = vmatprep.subr.bf16.mxu0 0
      %494 = vmatpush1.bf16.msra.mxu0 %v466
      %495 = vmatprep.subr.bf16.mxu0 0
      %496 = vmatpush1.bf16.msra.mxu0 %v465
      %497 = vmatprep.subr.bf16.mxu0 0
      %498 = vmatpush2.bf16.msra.mxu0 0
      %499 = vmatprep.subr.bf16.mxu0 0
      %500 = vmatpush2.bf16.msra.mxu0 0
      %501 = vmatprep.subr.bf16.mxu0 0
      %502 = vmatpush2.bf16.msra.mxu0 0
      %503 = vmatprep.subr.bf16.mxu0 0
      %504 = vmatpush2.bf16.msra.mxu0 0
      %505 = vmatprep.subr.bf16.mxu0 0
      %506 = vmatpush2.bf16.msra.mxu0 0
      %507 = vmatprep.subr.bf16.mxu0 0
      %508 = vmatpush2.bf16.msra.mxu0 0
      %509 = vmatprep.subr.bf16.mxu0 0
      %510 = vmatpush2.bf16.msra.mxu0 0
      %511 = vmatprep.subr.bf16.mxu0 0
      %512 = vmatpush2.bf16.msra.mxu0 0
      %513 = vmatprep.mubr.bf16.mxu0 0
      %514 = vmatmul.mubr.bf16.gmra.mxu0 %v398
      %v515 = vpop.f32.mrf.mxu0
      %v516 = vadd.f32 0.0, %v515
      %v517 = vpop.f32.mrf.mxu0
      %v518 = vpop.f32.mrf.mxu0
      %v519 = vpop.f32.mrf.mxu0
      %520 = vdwg.mxu0
      %v537 = vunpack.c.l.b16 %v400
      %v538 = vunpack.c.l.b16 %v401
      %v539 = vunpack.c.l.b16 %v402
      %v540 = vunpack.c.l.b16 %v403
      %v541 = vunpack.c.l.b16 %v404
      %v542 = vunpack.c.l.b16 %v405
      %v543 = vunpack.c.l.b16 %v406
      %v544 = vunpack.c.l.b16 %v407
      %v545 = vunpack.c.l.b16 %v408
      %v546 = vunpack.c.l.b16 %v409
      %v547 = vunpack.c.l.b16 %v410
      %v548 = vunpack.c.l.b16 %v411
      %v549 = vunpack.c.l.b16 %v412
      %v550 = vunpack.c.l.b16 %v413
      %v551 = vunpack.c.l.b16 %v414
      %v552 = vunpack.c.l.b16 %v415
      %v553 = vpack.c.b16 %v538, %v537
      %v554 = vpack.c.b16 %v540, %v539
      %v555 = vpack.c.b16 %v542, %v541
      %v556 = vpack.c.b16 %v544, %v543
      %v557 = vpack.c.b16 %v546, %v545
      %v558 = vpack.c.b16 %v548, %v547
      %v559 = vpack.c.b16 %v550, %v549
      %v560 = vpack.c.b16 %v552, %v551
      %569 = vmatprep.subr.bf16.mxu0 0
      %570 = vmatpush1.bf16.msra.mxu0 %v560
      %571 = vmatprep.subr.bf16.mxu0 0
      %572 = vmatpush1.bf16.msra.mxu0 %v559
      %573 = vmatprep.subr.bf16.mxu0 0
      %574 = vmatpush1.bf16.msra.mxu0 %v558
      %575 = vmatprep.subr.bf16.mxu0 0
      %576 = vmatpush1.bf16.msra.mxu0 %v557
      %577 = vmatprep.subr.bf16.mxu0 0
      %578 = vmatpush1.bf16.msra.mxu0 %v556
      %579 = vmatprep.subr.bf16.mxu0 0
      %580 = vmatpush1.bf16.msra.mxu0 %v555
      %581 = vmatprep.subr.bf16.mxu0 0
      %582 = vmatpush1.bf16.msra.mxu0 %v554
      %583 = vmatprep.subr.bf16.mxu0 0
      %584 = vmatpush1.bf16.msra.mxu0 %v553
      %585 = vmatprep.subr.bf16.mxu0 0
      %586 = vmatpush2.bf16.msra.mxu0 0
      %587 = vmatprep.subr.bf16.mxu0 0
      %588 = vmatpush2.bf16.msra.mxu0 0
      %589 = vmatprep.subr.bf16.mxu0 0
      %590 = vmatpush2.bf16.msra.mxu0 0
      %591 = vmatprep.subr.bf16.mxu0 0
      %592 = vmatpush2.bf16.msra.mxu0 0
      %593 = vmatprep.subr.bf16.mxu0 0
      %594 = vmatpush2.bf16.msra.mxu0 0
      %595 = vmatprep.subr.bf16.mxu0 0
      %596 = vmatpush2.bf16.msra.mxu0 0
      %597 = vmatprep.subr.bf16.mxu0 0
      %598 = vmatpush2.bf16.msra.mxu0 0
      %599 = vmatprep.subr.bf16.mxu0 0
      %600 = vmatpush2.bf16.msra.mxu0 0
      %601 = vmatprep.mubr.bf16.mxu0 0
      %602 = vmatmul.mubr.bf16.gmra.mxu0 %v396
      %v603 = vpop.f32.mrf.mxu0
      %v604 = vadd.f32 %v516, %v603
      %v605 = vpop.f32.mrf.mxu0
      %v606 = vpop.f32.mrf.mxu0
      %v607 = vpop.f32.mrf.mxu0
      %608 = vdwg.mxu0
      %s609 = scalar_lea.vmem %s1, 128
      %v610 = vld [vmem:[%s609] sm:$0xf]
      %v611 = vld [vmem:[%s609 + $0x4] sm:$0xf]
      %v612 = vld [vmem:[%s609 + $0x8] sm:$0xf]
      %v613 = vld [vmem:[%s609 + $0xc] sm:$0xf]
      %v614 = vld [vmem:[%s609 + $0x10] sm:$0xf]
      %v615 = vld [vmem:[%s609 + $0x14] sm:$0xf]
      %v616 = vld [vmem:[%s609 + $0x18] sm:$0xf]
      %v617 = vld [vmem:[%s609 + $0x1c] sm:$0xf]
      %v618 = vld [vmem:[%s609 + $0x20] sm:$0xf]
      %v619 = vld [vmem:[%s609 + $0x24] sm:$0xf]
      %v620 = vld [vmem:[%s609 + $0x28] sm:$0xf]
      %v621 = vld [vmem:[%s609 + $0x2c] sm:$0xf]
      %v622 = vld [vmem:[%s609 + $0x30] sm:$0xf]
      %v623 = vld [vmem:[%s609 + $0x34] sm:$0xf]
      %v624 = vld [vmem:[%s609 + $0x38] sm:$0xf]
      %v625 = vld [vmem:[%s609 + $0x3c] sm:$0xf]
      %v628 = vunpack.c.l.s4 1983009808
      %v629 = vunpack.c.0.s8 %v628
      %v630 = vlaneseq
      %v631 = vshrl.u32 %v630, 7
      %v632 = vsub.s32 %v629, %v631
      %v633 = vrot.slane %v399, %v632
      %v635 = vshrl.u32 %v633, 16
      %v637 = vshll.u32 %v633, 16
      %v639 = vrot.slane %v637, 1
      %v640 = vor.u32 %v635, %v639
      %v658 = vunpack.c.l.b16 %v610
      %v659 = vunpack.c.l.b16 %v611
      %v660 = vunpack.c.l.b16 %v612
      %v661 = vunpack.c.l.b16 %v613
      %v662 = vunpack.c.l.b16 %v614
      %v663 = vunpack.c.l.b16 %v615
      %v664 = vunpack.c.l.b16 %v616
      %v665 = vunpack.c.l.b16 %v617
      %v666 = vunpack.c.l.b16 %v618
      %v667 = vunpack.c.l.b16 %v619
      %v668 = vunpack.c.l.b16 %v620
      %v669 = vunpack.c.l.b16 %v621
      %v670 = vunpack.c.l.b16 %v622
      %v671 = vunpack.c.l.b16 %v623
      %v672 = vunpack.c.l.b16 %v624
      %v673 = vunpack.c.l.b16 %v625
      %v674 = vpack.c.b16 %v659, %v658
      %v675 = vpack.c.b16 %v661, %v660
      %v676 = vpack.c.b16 %v663, %v662
      %v677 = vpack.c.b16 %v665, %v664
      %v678 = vpack.c.b16 %v667, %v666
      %v679 = vpack.c.b16 %v669, %v668
      %v680 = vpack.c.b16 %v671, %v670
      %v681 = vpack.c.b16 %v673, %v672
      %690 = vmatprep.subr.bf16.mxu0 0
      %691 = vmatpush1.bf16.msra.mxu0 %v681
      %692 = vmatprep.subr.bf16.mxu0 0
      %693 = vmatpush1.bf16.msra.mxu0 %v680
      %694 = vmatprep.subr.bf16.mxu0 0
      %695 = vmatpush1.bf16.msra.mxu0 %v679
      %696 = vmatprep.subr.bf16.mxu0 0
      %697 = vmatpush1.bf16.msra.mxu0 %v678
      %698 = vmatprep.subr.bf16.mxu0 0
      %699 = vmatpush1.bf16.msra.mxu0 %v677
      %700 = vmatprep.subr.bf16.mxu0 0
      %701 = vmatpush1.bf16.msra.mxu0 %v676
      %702 = vmatprep.subr.bf16.mxu0 0
      %703 = vmatpush1.bf16.msra.mxu0 %v675
      %704 = vmatprep.subr.bf16.mxu0 0
      %705 = vmatpush1.bf16.msra.mxu0 %v674
      %706 = vmatprep.subr.bf16.mxu0 0
      %707 = vmatpush2.bf16.msra.mxu0 0
      %708 = vmatprep.subr.bf16.mxu0 0
      %709 = vmatpush2.bf16.msra.mxu0 0
      %710 = vmatprep.subr.bf16.mxu0 0
      %711 = vmatpush2.bf16.msra.mxu0 0
      %712 = vmatprep.subr.bf16.mxu0 0
      %713 = vmatpush2.bf16.msra.mxu0 0
      %714 = vmatprep.subr.bf16.mxu0 0
      %715 = vmatpush2.bf16.msra.mxu0 0
      %716 = vmatprep.subr.bf16.mxu0 0
      %717 = vmatpush2.bf16.msra.mxu0 0
      %718 = vmatprep.subr.bf16.mxu0 0
      %719 = vmatpush2.bf16.msra.mxu0 0
      %720 = vmatprep.subr.bf16.mxu0 0
      %721 = vmatpush2.bf16.msra.mxu0 0
      %722 = vmatprep.mubr.bf16.mxu0 0
      %723 = vmatmul.mubr.bf16.gmra.mxu0 %v640
      %v724 = vpop.f32.mrf.mxu0
      %v725 = vadd.f32 0.0, %v724
      %v726 = vpop.f32.mrf.mxu0
      %v727 = vpop.f32.mrf.mxu0
      %v728 = vpop.f32.mrf.mxu0
      %729 = vdwg.mxu0
      %v730 = vadd.f32 %v604, %v725
      %v731 = vld [vmem:[%s2] sm:$0x1]
      %v733 = vlaneseq
      %v734 = vshrl.u32 %v733, 7
      %v735 = vsub.s32 0, %v734
      %v736 = vrot.slane %v731, %v735
      %v738 = vadd.f32 %v730, %v736
      %v739 = vmax.f32 %v738, 0.0
      %v740 = vld [vmem:[%s5] sm:$0xf]
      %v741 = vld [vmem:[%s5 + $0x4] sm:$0xf]
      %v742 = vld [vmem:[%s5 + $0x8] sm:$0xf]
      %v743 = vld [vmem:[%s5 + $0xc] sm:$0xf]
      %v744 = vld [vmem:[%s5 + $0x10] sm:$0xf]
      %v745 = vld [vmem:[%s5 + $0x14] sm:$0xf]
      %v746 = vld [vmem:[%s5 + $0x18] sm:$0xf]
      %v747 = vld [vmem:[%s5 + $0x1c] sm:$0xf]
      %v748 = vld [vmem:[%s5 + $0x20] sm:$0xf]
      %v749 = vld [vmem:[%s5 + $0x24] sm:$0xf]
      %v750 = vld [vmem:[%s5 + $0x28] sm:$0xf]
      %v751 = vld [vmem:[%s5 + $0x2c] sm:$0xf]
      %v752 = vld [vmem:[%s5 + $0x30] sm:$0xf]
      %v753 = vld [vmem:[%s5 + $0x34] sm:$0xf]
      %v754 = vld [vmem:[%s5 + $0x38] sm:$0xf]
      %v755 = vld [vmem:[%s5 + $0x3c] sm:$0xf]
      %v756 = vld [vmem:[%s6] sm:$0x1]
      %v758 = vlaneseq
      %v759 = vshrl.u32 %v758, 7
      %v760 = vsub.s32 0, %v759
      %v761 = vrot.slane %v756, %v760
      %v779 = vunpack.c.l.b16 %v740
      %v780 = vunpack.c.l.b16 %v741
      %v781 = vunpack.c.l.b16 %v742
      %v782 = vunpack.c.l.b16 %v743
      %v783 = vunpack.c.l.b16 %v744
      %v784 = vunpack.c.l.b16 %v745
      %v785 = vunpack.c.l.b16 %v746
      %v786 = vunpack.c.l.b16 %v747
      %v787 = vunpack.c.l.b16 %v748
      %v788 = vunpack.c.l.b16 %v749
      %v789 = vunpack.c.l.b16 %v750
      %v790 = vunpack.c.l.b16 %v751
      %v791 = vunpack.c.l.b16 %v752
      %v792 = vunpack.c.l.b16 %v753
      %v793 = vunpack.c.l.b16 %v754
      %v794 = vunpack.c.l.b16 %v755
      %v795 = vpack.c.b16 %v780, %v779
      %v796 = vpack.c.b16 %v782, %v781
      %v797 = vpack.c.b16 %v784, %v783
      %v798 = vpack.c.b16 %v786, %v785
      %v799 = vpack.c.b16 %v788, %v787
      %v800 = vpack.c.b16 %v790, %v789
      %v801 = vpack.c.b16 %v792, %v791
      %v802 = vpack.c.b16 %v794, %v793
      %811 = vmatprep.subr.bf16.mxu0 0
      %812 = vmatpush1.bf16.msra.mxu0 %v802
      %813 = vmatprep.subr.bf16.mxu0 0
      %814 = vmatpush1.bf16.msra.mxu0 %v801
      %815 = vmatprep.subr.bf16.mxu0 0
      %816 = vmatpush1.bf16.msra.mxu0 %v800
      %817 = vmatprep.subr.bf16.mxu0 0
      %818 = vmatpush1.bf16.msra.mxu0 %v799
      %819 = vmatprep.subr.bf16.mxu0 0
      %820 = vmatpush1.bf16.msra.mxu0 %v798
      %821 = vmatprep.subr.bf16.mxu0 0
      %822 = vmatpush1.bf16.msra.mxu0 %v797
      %823 = vmatprep.subr.bf16.mxu0 0
      %824 = vmatpush1.bf16.msra.mxu0 %v796
      %825 = vmatprep.subr.bf16.mxu0 0
      %826 = vmatpush1.bf16.msra.mxu0 %v795
      %827 = vmatprep.subr.bf16.mxu0 0
      %828 = vmatpush2.bf16.msra.mxu0 0
      %829 = vmatprep.subr.bf16.mxu0 0
      %830 = vmatpush2.bf16.msra.mxu0 0
      %831 = vmatprep.subr.bf16.mxu0 0
      %832 = vmatpush2.bf16.msra.mxu0 0
      %833 = vmatprep.subr.bf16.mxu0 0
      %834 = vmatpush2.bf16.msra.mxu0 0
      %835 = vmatprep.subr.bf16.mxu0 0
      %836 = vmatpush2.bf16.msra.mxu0 0
      %837 = vmatprep.subr.bf16.mxu0 0
      %838 = vmatpush2.bf16.msra.mxu0 0
      %839 = vmatprep.subr.bf16.mxu0 0
      %840 = vmatpush2.bf16.msra.mxu0 0
      %841 = vmatprep.subr.bf16.mxu0 0
      %842 = vmatpush2.bf16.msra.mxu0 0
      %843 = vmatprep.mubr.bf16.mxu0 0
      %844 = vmatmul.mubr.bf16.gmra.mxu0 %v398
      %v845 = vpop.f32.mrf.mxu0
      %v846 = vadd.f32 %v761, %v845
      %v847 = vpop.f32.mrf.mxu0
      %v848 = vpop.f32.mrf.mxu0
      %v849 = vpop.f32.mrf.mxu0
      %850 = vdwg.mxu0
      %v851 = vpack.c.bf16 %v739, %v739
      %v854 = vunpack.c.l.s4 1983009808
      %v855 = vunpack.c.0.s8 %v854
      %v856 = vlaneseq
      %v857 = vshrl.u32 %v856, 7
      %v858 = vsub.s32 %v855, %v857
      %v859 = vrot.slane %v851, %v858
      %v861 = vshrl.u32 %v859, 16
      %v863 = vrot.slane %v861, 7
      %v864 = vshll.u32 %v859, 16
      %v866 = vor.u32 %v863, %v864
      %vm868 = vcmask 1041408
      %vm869 = vsmask.f32 1282
      %vm870 = vmand %vm868, %vm869
      %v871 = vld [vmem:[#allocation2] sm:$0x3]
      %v872 = vsel %vm870, %v866, %v871
      %873 = vst [vmem:[#allocation2] sm:$0x3] %v872
      %v874 = vld [vmem:[#allocation2] sm:$0x1]
      %v875 = vld [vmem:[#allocation2] sm:$0x3]
      %v876 = vld [vmem:[#allocation2] sm:$0x2]
      %v877 = vld [vmem:[%s3] sm:$0xf]
      %v878 = vld [vmem:[%s3 + $0x4] sm:$0xf]
      %v879 = vld [vmem:[%s3 + $0x8] sm:$0xf]
      %v880 = vld [vmem:[%s3 + $0xc] sm:$0xf]
      %v881 = vld [vmem:[%s3 + $0x10] sm:$0xf]
      %v882 = vld [vmem:[%s3 + $0x14] sm:$0xf]
      %v883 = vld [vmem:[%s3 + $0x18] sm:$0xf]
      %v884 = vld [vmem:[%s3 + $0x1c] sm:$0xf]
      %v885 = vld [vmem:[%s3 + $0x20] sm:$0xf]
      %v886 = vld [vmem:[%s3 + $0x24] sm:$0xf]
      %v887 = vld [vmem:[%s3 + $0x28] sm:$0xf]
      %v888 = vld [vmem:[%s3 + $0x2c] sm:$0xf]
      %v889 = vld [vmem:[%s3 + $0x30] sm:$0xf]
      %v890 = vld [vmem:[%s3 + $0x34] sm:$0xf]
      %v891 = vld [vmem:[%s3 + $0x38] sm:$0xf]
      %v892 = vld [vmem:[%s3 + $0x3c] sm:$0xf]
      %s893 = scalar_lea.vmem %s3, 64
      %v894 = vld [vmem:[%s893] sm:$0xf]
      %v895 = vld [vmem:[%s893 + $0x4] sm:$0xf]
      %v896 = vld [vmem:[%s893 + $0x8] sm:$0xf]
      %v897 = vld [vmem:[%s893 + $0xc] sm:$0xf]
      %v898 = vld [vmem:[%s893 + $0x10] sm:$0xf]
      %v899 = vld [vmem:[%s893 + $0x14] sm:$0xf]
      %v900 = vld [vmem:[%s893 + $0x18] sm:$0xf]
      %v901 = vld [vmem:[%s893 + $0x1c] sm:$0xf]
      %v902 = vld [vmem:[%s893 + $0x20] sm:$0xf]
      %v903 = vld [vmem:[%s893 + $0x24] sm:$0xf]
      %v904 = vld [vmem:[%s893 + $0x28] sm:$0xf]
      %v905 = vld [vmem:[%s893 + $0x2c] sm:$0xf]
      %v906 = vld [vmem:[%s893 + $0x30] sm:$0xf]
      %v907 = vld [vmem:[%s893 + $0x34] sm:$0xf]
      %v908 = vld [vmem:[%s893 + $0x38] sm:$0xf]
      %v909 = vld [vmem:[%s893 + $0x3c] sm:$0xf]
      %v912 = vunpack.c.l.s4 1983009808
      %v913 = vunpack.c.0.s8 %v912
      %v914 = vlaneseq
      %v915 = vshrl.u32 %v914, 7
      %v916 = vsub.s32 %v913, %v915
      %v917 = vrot.slane %v875, %v916
      %v919 = vshrl.u32 %v917, 16
      %v921 = vshll.u32 %v917, 16
      %v923 = vrot.slane %v921, 1
      %v924 = vor.u32 %v919, %v923
      %v942 = vunpack.c.l.b16 %v894
      %v943 = vunpack.c.l.b16 %v895
      %v944 = vunpack.c.l.b16 %v896
      %v945 = vunpack.c.l.b16 %v897
      %v946 = vunpack.c.l.b16 %v898
      %v947 = vunpack.c.l.b16 %v899
      %v948 = vunpack.c.l.b16 %v900
      %v949 = vunpack.c.l.b16 %v901
      %v950 = vunpack.c.l.b16 %v902
      %v951 = vunpack.c.l.b16 %v903
      %v952 = vunpack.c.l.b16 %v904
      %v953 = vunpack.c.l.b16 %v905
      %v954 = vunpack.c.l.b16 %v906
      %v955 = vunpack.c.l.b16 %v907
      %v956 = vunpack.c.l.b16 %v908
      %v957 = vunpack.c.l.b16 %v909
      %v958 = vpack.c.b16 %v943, %v942
      %v959 = vpack.c.b16 %v945, %v944
      %v960 = vpack.c.b16 %v947, %v946
      %v961 = vpack.c.b16 %v949, %v948
      %v962 = vpack.c.b16 %v951, %v950
      %v963 = vpack.c.b16 %v953, %v952
      %v964 = vpack.c.b16 %v955, %v954
      %v965 = vpack.c.b16 %v957, %v956
      %974 = vmatprep.subr.bf16.mxu0 0
      %975 = vmatpush1.bf16.msra.mxu0 %v965
      %976 = vmatprep.subr.bf16.mxu0 0
      %977 = vmatpush1.bf16.msra.mxu0 %v964
      %978 = vmatprep.subr.bf16.mxu0 0
      %979 = vmatpush1.bf16.msra.mxu0 %v963
      %980 = vmatprep.subr.bf16.mxu0 0
      %981 = vmatpush1.bf16.msra.mxu0 %v962
      %982 = vmatprep.subr.bf16.mxu0 0
      %983 = vmatpush1.bf16.msra.mxu0 %v961
      %984 = vmatprep.subr.bf16.mxu0 0
      %985 = vmatpush1.bf16.msra.mxu0 %v960
      %986 = vmatprep.subr.bf16.mxu0 0
      %987 = vmatpush1.bf16.msra.mxu0 %v959
      %988 = vmatprep.subr.bf16.mxu0 0
      %989 = vmatpush1.bf16.msra.mxu0 %v958
      %990 = vmatprep.subr.bf16.mxu0 0
      %991 = vmatpush2.bf16.msra.mxu0 0
      %992 = vmatprep.subr.bf16.mxu0 0
      %993 = vmatpush2.bf16.msra.mxu0 0
      %994 = vmatprep.subr.bf16.mxu0 0
      %995 = vmatpush2.bf16.msra.mxu0 0
      %996 = vmatprep.subr.bf16.mxu0 0
      %997 = vmatpush2.bf16.msra.mxu0 0
      %998 = vmatprep.subr.bf16.mxu0 0
      %999 = vmatpush2.bf16.msra.mxu0 0
      %1000 = vmatprep.subr.bf16.mxu0 0
      %1001 = vmatpush2.bf16.msra.mxu0 0
      %1002 = vmatprep.subr.bf16.mxu0 0
      %1003 = vmatpush2.bf16.msra.mxu0 0
      %1004 = vmatprep.subr.bf16.mxu0 0
      %1005 = vmatpush2.bf16.msra.mxu0 0
      %1006 = vmatprep.mubr.bf16.mxu0 0
      %1007 = vmatmul.mubr.bf16.gmra.mxu0 %v924
      %v1008 = vpop.f32.mrf.mxu0
      %v1009 = vadd.f32 0.0, %v1008
      %v1010 = vpop.f32.mrf.mxu0
      %v1011 = vpop.f32.mrf.mxu0
      %v1012 = vpop.f32.mrf.mxu0
      %1013 = vdwg.mxu0
      %v1030 = vunpack.c.l.b16 %v877
      %v1031 = vunpack.c.l.b16 %v878
      %v1032 = vunpack.c.l.b16 %v879
      %v1033 = vunpack.c.l.b16 %v880
      %v1034 = vunpack.c.l.b16 %v881
      %v1035 = vunpack.c.l.b16 %v882
      %v1036 = vunpack.c.l.b16 %v883
      %v1037 = vunpack.c.l.b16 %v884
      %v1038 = vunpack.c.l.b16 %v885
      %v1039 = vunpack.c.l.b16 %v886
      %v1040 = vunpack.c.l.b16 %v887
      %v1041 = vunpack.c.l.b16 %v888
      %v1042 = vunpack.c.l.b16 %v889
      %v1043 = vunpack.c.l.b16 %v890
      %v1044 = vunpack.c.l.b16 %v891
      %v1045 = vunpack.c.l.b16 %v892
      %v1046 = vpack.c.b16 %v1031, %v1030
      %v1047 = vpack.c.b16 %v1033, %v1032
      %v1048 = vpack.c.b16 %v1035, %v1034
      %v1049 = vpack.c.b16 %v1037, %v1036
      %v1050 = vpack.c.b16 %v1039, %v1038
      %v1051 = vpack.c.b16 %v1041, %v1040
      %v1052 = vpack.c.b16 %v1043, %v1042
      %v1053 = vpack.c.b16 %v1045, %v1044
      %1062 = vmatprep.subr.bf16.mxu0 0
      %1063 = vmatpush1.bf16.msra.mxu0 %v1053
      %1064 = vmatprep.subr.bf16.mxu0 0
      %1065 = vmatpush1.bf16.msra.mxu0 %v1052
      %1066 = vmatprep.subr.bf16.mxu0 0
      %1067 = vmatpush1.bf16.msra.mxu0 %v1051
      %1068 = vmatprep.subr.bf16.mxu0 0
      %1069 = vmatpush1.bf16.msra.mxu0 %v1050
      %1070 = vmatprep.subr.bf16.mxu0 0
      %1071 = vmatpush1.bf16.msra.mxu0 %v1049
      %1072 = vmatprep.subr.bf16.mxu0 0
      %1073 = vmatpush1.bf16.msra.mxu0 %v1048
      %1074 = vmatprep.subr.bf16.mxu0 0
      %1075 = vmatpush1.bf16.msra.mxu0 %v1047
      %1076 = vmatprep.subr.bf16.mxu0 0
      %1077 = vmatpush1.bf16.msra.mxu0 %v1046
      %1078 = vmatprep.subr.bf16.mxu0 0
      %1079 = vmatpush2.bf16.msra.mxu0 0
      %1080 = vmatprep.subr.bf16.mxu0 0
      %1081 = vmatpush2.bf16.msra.mxu0 0
      %1082 = vmatprep.subr.bf16.mxu0 0
      %1083 = vmatpush2.bf16.msra.mxu0 0
      %1084 = vmatprep.subr.bf16.mxu0 0
      %1085 = vmatpush2.bf16.msra.mxu0 0
      %1086 = vmatprep.subr.bf16.mxu0 0
      %1087 = vmatpush2.bf16.msra.mxu0 0
      %1088 = vmatprep.subr.bf16.mxu0 0
      %1089 = vmatpush2.bf16.msra.mxu0 0
      %1090 = vmatprep.subr.bf16.mxu0 0
      %1091 = vmatpush2.bf16.msra.mxu0 0
      %1092 = vmatprep.subr.bf16.mxu0 0
      %1093 = vmatpush2.bf16.msra.mxu0 0
      %1094 = vmatprep.mubr.bf16.mxu0 0
      %1095 = vmatmul.mubr.bf16.gmra.mxu0 %v874
      %v1096 = vpop.f32.mrf.mxu0
      %v1097 = vadd.f32 %v1009, %v1096
      %v1098 = vpop.f32.mrf.mxu0
      %v1099 = vpop.f32.mrf.mxu0
      %v1100 = vpop.f32.mrf.mxu0
      %1101 = vdwg.mxu0
      %s1102 = scalar_lea.vmem %s3, 128
      %v1103 = vld [vmem:[%s1102] sm:$0xf]
      %v1104 = vld [vmem:[%s1102 + $0x4] sm:$0xf]
      %v1105 = vld [vmem:[%s1102 + $0x8] sm:$0xf]
      %v1106 = vld [vmem:[%s1102 + $0xc] sm:$0xf]
      %v1107 = vld [vmem:[%s1102 + $0x10] sm:$0xf]
      %v1108 = vld [vmem:[%s1102 + $0x14] sm:$0xf]
      %v1109 = vld [vmem:[%s1102 + $0x18] sm:$0xf]
      %v1110 = vld [vmem:[%s1102 + $0x1c] sm:$0xf]
      %v1111 = vld [vmem:[%s1102 + $0x20] sm:$0xf]
      %v1112 = vld [vmem:[%s1102 + $0x24] sm:$0xf]
      %v1113 = vld [vmem:[%s1102 + $0x28] sm:$0xf]
      %v1114 = vld [vmem:[%s1102 + $0x2c] sm:$0xf]
      %v1115 = vld [vmem:[%s1102 + $0x30] sm:$0xf]
      %v1116 = vld [vmem:[%s1102 + $0x34] sm:$0xf]
      %v1117 = vld [vmem:[%s1102 + $0x38] sm:$0xf]
      %v1118 = vld [vmem:[%s1102 + $0x3c] sm:$0xf]
      %v1121 = vunpack.c.l.s4 1983009808
      %v1122 = vunpack.c.0.s8 %v1121
      %v1123 = vlaneseq
      %v1124 = vshrl.u32 %v1123, 7
      %v1125 = vsub.s32 %v1122, %v1124
      %v1126 = vrot.slane %v876, %v1125
      %v1127 = vrot.slane %v1126, 1
      %v1145 = vunpack.c.l.b16 %v1103
      %v1146 = vunpack.c.l.b16 %v1104
      %v1147 = vunpack.c.l.b16 %v1105
      %v1148 = vunpack.c.l.b16 %v1106
      %v1149 = vunpack.c.l.b16 %v1107
      %v1150 = vunpack.c.l.b16 %v1108
      %v1151 = vunpack.c.l.b16 %v1109
      %v1152 = vunpack.c.l.b16 %v1110
      %v1153 = vunpack.c.l.b16 %v1111
      %v1154 = vunpack.c.l.b16 %v1112
      %v1155 = vunpack.c.l.b16 %v1113
      %v1156 = vunpack.c.l.b16 %v1114
      %v1157 = vunpack.c.l.b16 %v1115
      %v1158 = vunpack.c.l.b16 %v1116
      %v1159 = vunpack.c.l.b16 %v1117
      %v1160 = vunpack.c.l.b16 %v1118
      %v1161 = vpack.c.b16 %v1146, %v1145
      %v1162 = vpack.c.b16 %v1148, %v1147
      %v1163 = vpack.c.b16 %v1150, %v1149
      %v1164 = vpack.c.b16 %v1152, %v1151
      %v1165 = vpack.c.b16 %v1154, %v1153
      %v1166 = vpack.c.b16 %v1156, %v1155
      %v1167 = vpack.c.b16 %v1158, %v1157
      %v1168 = vpack.c.b16 %v1160, %v1159
      %1177 = vmatprep.subr.bf16.mxu0 0
      %1178 = vmatpush1.bf16.msra.mxu0 %v1168
      %1179 = vmatprep.subr.bf16.mxu0 0
      %1180 = vmatpush1.bf16.msra.mxu0 %v1167
      %1181 = vmatprep.subr.bf16.mxu0 0
      %1182 = vmatpush1.bf16.msra.mxu0 %v1166
      %1183 = vmatprep.subr.bf16.mxu0 0
      %1184 = vmatpush1.bf16.msra.mxu0 %v1165
      %1185 = vmatprep.subr.bf16.mxu0 0
      %1186 = vmatpush1.bf16.msra.mxu0 %v1164
      %1187 = vmatprep.subr.bf16.mxu0 0
      %1188 = vmatpush1.bf16.msra.mxu0 %v1163
      %1189 = vmatprep.subr.bf16.mxu0 0
      %1190 = vmatpush1.bf16.msra.mxu0 %v1162
      %1191 = vmatprep.subr.bf16.mxu0 0
      %1192 = vmatpush1.bf16.msra.mxu0 %v1161
      %1193 = vmatprep.subr.bf16.mxu0 0
      %1194 = vmatpush2.bf16.msra.mxu0 0
      %1195 = vmatprep.subr.bf16.mxu0 0
      %1196 = vmatpush2.bf16.msra.mxu0 0
      %1197 = vmatprep.subr.bf16.mxu0 0
      %1198 = vmatpush2.bf16.msra.mxu0 0
      %1199 = vmatprep.subr.bf16.mxu0 0
      %1200 = vmatpush2.bf16.msra.mxu0 0
      %1201 = vmatprep.subr.bf16.mxu0 0
      %1202 = vmatpush2.bf16.msra.mxu0 0
      %1203 = vmatprep.subr.bf16.mxu0 0
      %1204 = vmatpush2.bf16.msra.mxu0 0
      %1205 = vmatprep.subr.bf16.mxu0 0
      %1206 = vmatpush2.bf16.msra.mxu0 0
      %1207 = vmatprep.subr.bf16.mxu0 0
      %1208 = vmatpush2.bf16.msra.mxu0 0
      %1209 = vmatprep.mubr.bf16.mxu0 0
      %1210 = vmatmul.mubr.bf16.gmra.mxu0 %v1127
      %v1211 = vpop.f32.mrf.mxu0
      %v1212 = vadd.f32 0.0, %v1211
      %v1213 = vpop.f32.mrf.mxu0
      %v1214 = vpop.f32.mrf.mxu0
      %v1215 = vpop.f32.mrf.mxu0
      %1216 = vdwg.mxu0
      %v1217 = vadd.f32 %v1097, %v1212
      %v1218 = vld [vmem:[%s4] sm:$0x1]
      %v1220 = vlaneseq
      %v1221 = vshrl.u32 %v1220, 7
      %v1222 = vsub.s32 0, %v1221
      %v1223 = vrot.slane %v1218, %v1222
      %v1225 = vadd.f32 %v1217, %v1223
      %v1226 = vadd.f32 %v1225, %v846
      %v1227 = vmax.f32 %v1226, 0.0
      %v1228 = vpack.c.bf16 %v1227, %v1227
      %v1231 = vunpack.c.l.s4 1983009808
      %v1232 = vunpack.c.0.s8 %v1231
      %v1233 = vlaneseq
      %v1234 = vshrl.u32 %v1233, 7
      %v1235 = vsub.s32 %v1232, %v1234
      %v1236 = vrot.slane %v1228, %v1235
      %v1238 = vshrl.u32 %v1236, 16
      %v1240 = vrot.slane %v1238, 7
      %v1241 = vshll.u32 %v1236, 16
      %v1243 = vor.u32 %v1240, %v1241
      %v1245 = vld [vmem:[#allocation2] sm:$0x3]
      %v1246 = vsel %vm870, %v1243, %v1245
      %1247 = vst [vmem:[#allocation2] sm:$0x3] %v1246
      %v1248 = vld [vmem:[#allocation2] sm:$0x1]
      %v1249 = vld [vmem:[#allocation2] sm:$0x3]
      %v1250 = vld [vmem:[#allocation2] sm:$0x2]
      %v1251 = vld [vmem:[%s7] sm:$0xf]
      %v1252 = vld [vmem:[%s7 + $0x4] sm:$0xf]
      %v1253 = vld [vmem:[%s7 + $0x8] sm:$0xf]
      %v1254 = vld [vmem:[%s7 + $0xc] sm:$0xf]
      %v1255 = vld [vmem:[%s7 + $0x10] sm:$0xf]
      %v1256 = vld [vmem:[%s7 + $0x14] sm:$0xf]
      %v1257 = vld [vmem:[%s7 + $0x18] sm:$0xf]
      %v1258 = vld [vmem:[%s7 + $0x1c] sm:$0xf]
      %v1259 = vld [vmem:[%s7 + $0x20] sm:$0xf]
      %v1260 = vld [vmem:[%s7 + $0x24] sm:$0xf]
      %v1261 = vld [vmem:[%s7 + $0x28] sm:$0xf]
      %v1262 = vld [vmem:[%s7 + $0x2c] sm:$0xf]
      %v1263 = vld [vmem:[%s7 + $0x30] sm:$0xf]
      %v1264 = vld [vmem:[%s7 + $0x34] sm:$0xf]
      %v1265 = vld [vmem:[%s7 + $0x38] sm:$0xf]
      %v1266 = vld [vmem:[%s7 + $0x3c] sm:$0xf]
      %s1267 = scalar_lea.vmem %s7, 64
      %v1268 = vld [vmem:[%s1267] sm:$0xf]
      %v1269 = vld [vmem:[%s1267 + $0x4] sm:$0xf]
      %v1270 = vld [vmem:[%s1267 + $0x8] sm:$0xf]
      %v1271 = vld [vmem:[%s1267 + $0xc] sm:$0xf]
      %v1272 = vld [vmem:[%s1267 + $0x10] sm:$0xf]
      %v1273 = vld [vmem:[%s1267 + $0x14] sm:$0xf]
      %v1274 = vld [vmem:[%s1267 + $0x18] sm:$0xf]
      %v1275 = vld [vmem:[%s1267 + $0x1c] sm:$0xf]
      %v1276 = vld [vmem:[%s1267 + $0x20] sm:$0xf]
      %v1277 = vld [vmem:[%s1267 + $0x24] sm:$0xf]
      %v1278 = vld [vmem:[%s1267 + $0x28] sm:$0xf]
      %v1279 = vld [vmem:[%s1267 + $0x2c] sm:$0xf]
      %v1280 = vld [vmem:[%s1267 + $0x30] sm:$0xf]
      %v1281 = vld [vmem:[%s1267 + $0x34] sm:$0xf]
      %v1282 = vld [vmem:[%s1267 + $0x38] sm:$0xf]
      %v1283 = vld [vmem:[%s1267 + $0x3c] sm:$0xf]
      %v1286 = vunpack.c.l.s4 1983009808
      %v1287 = vunpack.c.0.s8 %v1286
      %v1288 = vlaneseq
      %v1289 = vshrl.u32 %v1288, 7
      %v1290 = vsub.s32 %v1287, %v1289
      %v1291 = vrot.slane %v1249, %v1290
      %v1293 = vshrl.u32 %v1291, 16
      %v1295 = vshll.u32 %v1291, 16
      %v1297 = vrot.slane %v1295, 1
      %v1298 = vor.u32 %v1293, %v1297
      %v1316 = vunpack.c.l.b16 %v1268
      %v1317 = vunpack.c.l.b16 %v1269
      %v1318 = vunpack.c.l.b16 %v1270
      %v1319 = vunpack.c.l.b16 %v1271
      %v1320 = vunpack.c.l.b16 %v1272
      %v1321 = vunpack.c.l.b16 %v1273
      %v1322 = vunpack.c.l.b16 %v1274
      %v1323 = vunpack.c.l.b16 %v1275
      %v1324 = vunpack.c.l.b16 %v1276
      %v1325 = vunpack.c.l.b16 %v1277
      %v1326 = vunpack.c.l.b16 %v1278
      %v1327 = vunpack.c.l.b16 %v1279
      %v1328 = vunpack.c.l.b16 %v1280
      %v1329 = vunpack.c.l.b16 %v1281
      %v1330 = vunpack.c.l.b16 %v1282
      %v1331 = vunpack.c.l.b16 %v1283
      %v1332 = vpack.c.b16 %v1317, %v1316
      %v1333 = vpack.c.b16 %v1319, %v1318
      %v1334 = vpack.c.b16 %v1321, %v1320
      %v1335 = vpack.c.b16 %v1323, %v1322
      %v1336 = vpack.c.b16 %v1325, %v1324
      %v1337 = vpack.c.b16 %v1327, %v1326
      %v1338 = vpack.c.b16 %v1329, %v1328
      %v1339 = vpack.c.b16 %v1331, %v1330
      %1348 = vmatprep.subr.bf16.mxu0 0
      %1349 = vmatpush1.bf16.msra.mxu0 %v1339
      %1350 = vmatprep.subr.bf16.mxu0 0
      %1351 = vmatpush1.bf16.msra.mxu0 %v1338
      %1352 = vmatprep.subr.bf16.mxu0 0
      %1353 = vmatpush1.bf16.msra.mxu0 %v1337
      %1354 = vmatprep.subr.bf16.mxu0 0
      %1355 = vmatpush1.bf16.msra.mxu0 %v1336
      %1356 = vmatprep.subr.bf16.mxu0 0
      %1357 = vmatpush1.bf16.msra.mxu0 %v1335
      %1358 = vmatprep.subr.bf16.mxu0 0
      %1359 = vmatpush1.bf16.msra.mxu0 %v1334
      %1360 = vmatprep.subr.bf16.mxu0 0
      %1361 = vmatpush1.bf16.msra.mxu0 %v1333
      %1362 = vmatprep.subr.bf16.mxu0 0
      %1363 = vmatpush1.bf16.msra.mxu0 %v1332
      %1364 = vmatprep.subr.bf16.mxu0 0
      %1365 = vmatpush2.bf16.msra.mxu0 0
      %1366 = vmatprep.subr.bf16.mxu0 0
      %1367 = vmatpush2.bf16.msra.mxu0 0
      %1368 = vmatprep.subr.bf16.mxu0 0
      %1369 = vmatpush2.bf16.msra.mxu0 0
      %1370 = vmatprep.subr.bf16.mxu0 0
      %1371 = vmatpush2.bf16.msra.mxu0 0
      %1372 = vmatprep.subr.bf16.mxu0 0
      %1373 = vmatpush2.bf16.msra.mxu0 0
      %1374 = vmatprep.subr.bf16.mxu0 0
      %1375 = vmatpush2.bf16.msra.mxu0 0
      %1376 = vmatprep.subr.bf16.mxu0 0
      %1377 = vmatpush2.bf16.msra.mxu0 0
      %1378 = vmatprep.subr.bf16.mxu0 0
      %1379 = vmatpush2.bf16.msra.mxu0 0
      %1380 = vmatprep.mubr.bf16.mxu0 0
      %1381 = vmatmul.mubr.bf16.gmra.mxu0 %v1298
      %v1382 = vpop.f32.mrf.mxu0
      %v1383 = vadd.f32 0.0, %v1382
      %v1384 = vpop.f32.mrf.mxu0
      %v1385 = vpop.f32.mrf.mxu0
      %v1386 = vpop.f32.mrf.mxu0
      %1387 = vdwg.mxu0
      %v1404 = vunpack.c.l.b16 %v1251
      %v1405 = vunpack.c.l.b16 %v1252
      %v1406 = vunpack.c.l.b16 %v1253
      %v1407 = vunpack.c.l.b16 %v1254
      %v1408 = vunpack.c.l.b16 %v1255
      %v1409 = vunpack.c.l.b16 %v1256
      %v1410 = vunpack.c.l.b16 %v1257
      %v1411 = vunpack.c.l.b16 %v1258
      %v1412 = vunpack.c.l.b16 %v1259
      %v1413 = vunpack.c.l.b16 %v1260
      %v1414 = vunpack.c.l.b16 %v1261
      %v1415 = vunpack.c.l.b16 %v1262
      %v1416 = vunpack.c.l.b16 %v1263
      %v1417 = vunpack.c.l.b16 %v1264
      %v1418 = vunpack.c.l.b16 %v1265
      %v1419 = vunpack.c.l.b16 %v1266
      %v1420 = vpack.c.b16 %v1405, %v1404
      %v1421 = vpack.c.b16 %v1407, %v1406
      %v1422 = vpack.c.b16 %v1409, %v1408
      %v1423 = vpack.c.b16 %v1411, %v1410
      %v1424 = vpack.c.b16 %v1413, %v1412
      %v1425 = vpack.c.b16 %v1415, %v1414
      %v1426 = vpack.c.b16 %v1417, %v1416
      %v1427 = vpack.c.b16 %v1419, %v1418
      %1436 = vmatprep.subr.bf16.mxu0 0
      %1437 = vmatpush1.bf16.msra.mxu0 %v1427
      %1438 = vmatprep.subr.bf16.mxu0 0
      %1439 = vmatpush1.bf16.msra.mxu0 %v1426
      %1440 = vmatprep.subr.bf16.mxu0 0
      %1441 = vmatpush1.bf16.msra.mxu0 %v1425
      %1442 = vmatprep.subr.bf16.mxu0 0
      %1443 = vmatpush1.bf16.msra.mxu0 %v1424
      %1444 = vmatprep.subr.bf16.mxu0 0
      %1445 = vmatpush1.bf16.msra.mxu0 %v1423
      %1446 = vmatprep.subr.bf16.mxu0 0
      %1447 = vmatpush1.bf16.msra.mxu0 %v1422
      %1448 = vmatprep.subr.bf16.mxu0 0
      %1449 = vmatpush1.bf16.msra.mxu0 %v1421
      %1450 = vmatprep.subr.bf16.mxu0 0
      %1451 = vmatpush1.bf16.msra.mxu0 %v1420
      %1452 = vmatprep.subr.bf16.mxu0 0
      %1453 = vmatpush2.bf16.msra.mxu0 0
      %1454 = vmatprep.subr.bf16.mxu0 0
      %1455 = vmatpush2.bf16.msra.mxu0 0
      %1456 = vmatprep.subr.bf16.mxu0 0
      %1457 = vmatpush2.bf16.msra.mxu0 0
      %1458 = vmatprep.subr.bf16.mxu0 0
      %1459 = vmatpush2.bf16.msra.mxu0 0
      %1460 = vmatprep.subr.bf16.mxu0 0
      %1461 = vmatpush2.bf16.msra.mxu0 0
      %1462 = vmatprep.subr.bf16.mxu0 0
      %1463 = vmatpush2.bf16.msra.mxu0 0
      %1464 = vmatprep.subr.bf16.mxu0 0
      %1465 = vmatpush2.bf16.msra.mxu0 0
      %1466 = vmatprep.subr.bf16.mxu0 0
      %1467 = vmatpush2.bf16.msra.mxu0 0
      %1468 = vmatprep.mubr.bf16.mxu0 0
      %1469 = vmatmul.mubr.bf16.gmra.mxu0 %v1248
      %v1470 = vpop.f32.mrf.mxu0
      %v1471 = vadd.f32 %v1383, %v1470
      %v1472 = vpop.f32.mrf.mxu0
      %v1473 = vpop.f32.mrf.mxu0
      %v1474 = vpop.f32.mrf.mxu0
      %1475 = vdwg.mxu0
      %s1476 = scalar_lea.vmem %s7, 128
      %v1477 = vld [vmem:[%s1476] sm:$0xf]
      %v1478 = vld [vmem:[%s1476 + $0x4] sm:$0xf]
      %v1479 = vld [vmem:[%s1476 + $0x8] sm:$0xf]
      %v1480 = vld [vmem:[%s1476 + $0xc] sm:$0xf]
      %v1481 = vld [vmem:[%s1476 + $0x10] sm:$0xf]
      %v1482 = vld [vmem:[%s1476 + $0x14] sm:$0xf]
      %v1483 = vld [vmem:[%s1476 + $0x18] sm:$0xf]
      %v1484 = vld [vmem:[%s1476 + $0x1c] sm:$0xf]
      %v1485 = vld [vmem:[%s1476 + $0x20] sm:$0xf]
      %v1486 = vld [vmem:[%s1476 + $0x24] sm:$0xf]
      %v1487 = vld [vmem:[%s1476 + $0x28] sm:$0xf]
      %v1488 = vld [vmem:[%s1476 + $0x2c] sm:$0xf]
      %v1489 = vld [vmem:[%s1476 + $0x30] sm:$0xf]
      %v1490 = vld [vmem:[%s1476 + $0x34] sm:$0xf]
      %v1491 = vld [vmem:[%s1476 + $0x38] sm:$0xf]
      %v1492 = vld [vmem:[%s1476 + $0x3c] sm:$0xf]
      %v1495 = vunpack.c.l.s4 1983009808
      %v1496 = vunpack.c.0.s8 %v1495
      %v1497 = vlaneseq
      %v1498 = vshrl.u32 %v1497, 7
      %v1499 = vsub.s32 %v1496, %v1498
      %v1500 = vrot.slane %v1250, %v1499
      %v1501 = vrot.slane %v1500, 1
      %v1519 = vunpack.c.l.b16 %v1477
      %v1520 = vunpack.c.l.b16 %v1478
      %v1521 = vunpack.c.l.b16 %v1479
      %v1522 = vunpack.c.l.b16 %v1480
      %v1523 = vunpack.c.l.b16 %v1481
      %v1524 = vunpack.c.l.b16 %v1482
      %v1525 = vunpack.c.l.b16 %v1483
      %v1526 = vunpack.c.l.b16 %v1484
      %v1527 = vunpack.c.l.b16 %v1485
      %v1528 = vunpack.c.l.b16 %v1486
      %v1529 = vunpack.c.l.b16 %v1487
      %v1530 = vunpack.c.l.b16 %v1488
      %v1531 = vunpack.c.l.b16 %v1489
      %v1532 = vunpack.c.l.b16 %v1490
      %v1533 = vunpack.c.l.b16 %v1491
      %v1534 = vunpack.c.l.b16 %v1492
      %v1535 = vpack.c.b16 %v1520, %v1519
      %v1536 = vpack.c.b16 %v1522, %v1521
      %v1537 = vpack.c.b16 %v1524, %v1523
      %v1538 = vpack.c.b16 %v1526, %v1525
      %v1539 = vpack.c.b16 %v1528, %v1527
      %v1540 = vpack.c.b16 %v1530, %v1529
      %v1541 = vpack.c.b16 %v1532, %v1531
      %v1542 = vpack.c.b16 %v1534, %v1533
      %1551 = vmatprep.subr.bf16.mxu0 0
      %1552 = vmatpush1.bf16.msra.mxu0 %v1542
      %1553 = vmatprep.subr.bf16.mxu0 0
      %1554 = vmatpush1.bf16.msra.mxu0 %v1541
      %1555 = vmatprep.subr.bf16.mxu0 0
      %1556 = vmatpush1.bf16.msra.mxu0 %v1540
      %1557 = vmatprep.subr.bf16.mxu0 0
      %1558 = vmatpush1.bf16.msra.mxu0 %v1539
      %1559 = vmatprep.subr.bf16.mxu0 0
      %1560 = vmatpush1.bf16.msra.mxu0 %v1538
      %1561 = vmatprep.subr.bf16.mxu0 0
      %1562 = vmatpush1.bf16.msra.mxu0 %v1537
      %1563 = vmatprep.subr.bf16.mxu0 0
      %1564 = vmatpush1.bf16.msra.mxu0 %v1536
      %1565 = vmatprep.subr.bf16.mxu0 0
      %1566 = vmatpush1.bf16.msra.mxu0 %v1535
      %1567 = vmatprep.subr.bf16.mxu0 0
      %1568 = vmatpush2.bf16.msra.mxu0 0
      %1569 = vmatprep.subr.bf16.mxu0 0
      %1570 = vmatpush2.bf16.msra.mxu0 0
      %1571 = vmatprep.subr.bf16.mxu0 0
      %1572 = vmatpush2.bf16.msra.mxu0 0
      %1573 = vmatprep.subr.bf16.mxu0 0
      %1574 = vmatpush2.bf16.msra.mxu0 0
      %1575 = vmatprep.subr.bf16.mxu0 0
      %1576 = vmatpush2.bf16.msra.mxu0 0
      %1577 = vmatprep.subr.bf16.mxu0 0
      %1578 = vmatpush2.bf16.msra.mxu0 0
      %1579 = vmatprep.subr.bf16.mxu0 0
      %1580 = vmatpush2.bf16.msra.mxu0 0
      %1581 = vmatprep.subr.bf16.mxu0 0
      %1582 = vmatpush2.bf16.msra.mxu0 0
      %1583 = vmatprep.mubr.bf16.mxu0 0
      %1584 = vmatmul.mubr.bf16.gmra.mxu0 %v1501
      %v1585 = vpop.f32.mrf.mxu0
      %v1586 = vadd.f32 0.0, %v1585
      %v1587 = vpop.f32.mrf.mxu0
      %v1588 = vpop.f32.mrf.mxu0
      %v1589 = vpop.f32.mrf.mxu0
      %1590 = vdwg.mxu0
      %v1591 = vadd.f32 %v1471, %v1586
      %v1592 = vld [vmem:[%s8] sm:$0x1]
      %v1594 = vlaneseq
      %v1595 = vshrl.u32 %v1594, 7
      %v1596 = vsub.s32 0, %v1595
      %v1597 = vrot.slane %v1592, %v1596
      %v1599 = vadd.f32 %v1591, %v1597
      %v1600 = vmax.f32 %v1599, 0.0
      %v1601 = vpack.c.bf16 %v1600, %v1600
      %v1604 = vunpack.c.l.s4 1983009808
      %v1605 = vunpack.c.0.s8 %v1604
      %v1606 = vlaneseq
      %v1607 = vshrl.u32 %v1606, 7
      %v1608 = vsub.s32 %v1605, %v1607
      %v1609 = vrot.slane %v1601, %v1608
      %v1611 = vshrl.u32 %v1609, 16
      %v1613 = vrot.slane %v1611, 7
      %v1614 = vshll.u32 %v1609, 16
      %v1616 = vor.u32 %v1613, %v1614
      %v1618 = vld [vmem:[#allocation2] sm:$0x3]
      %v1619 = vsel %vm870, %v1616, %v1618
      %1620 = vst [vmem:[#allocation2] sm:$0x3] %v1619
      %v1621 = vld [vmem:[#allocation2] sm:$0x1]
      %v1622 = vld [vmem:[#allocation2] sm:$0x3]
      %v1623 = vld [vmem:[#allocation2] sm:$0x2]
      %v1624 = vld [vmem:[%s9] sm:$0xf]
      %v1625 = vld [vmem:[%s9 + $0x4] sm:$0xf]
      %v1626 = vld [vmem:[%s9 + $0x8] sm:$0xf]
      %v1627 = vld [vmem:[%s9 + $0xc] sm:$0xf]
      %v1628 = vld [vmem:[%s9 + $0x10] sm:$0xf]
      %v1629 = vld [vmem:[%s9 + $0x14] sm:$0xf]
      %v1630 = vld [vmem:[%s9 + $0x18] sm:$0xf]
      %v1631 = vld [vmem:[%s9 + $0x1c] sm:$0xf]
      %v1632 = vld [vmem:[%s9 + $0x20] sm:$0xf]
      %v1633 = vld [vmem:[%s9 + $0x24] sm:$0xf]
      %v1634 = vld [vmem:[%s9 + $0x28] sm:$0xf]
      %v1635 = vld [vmem:[%s9 + $0x2c] sm:$0xf]
      %v1636 = vld [vmem:[%s9 + $0x30] sm:$0xf]
      %v1637 = vld [vmem:[%s9 + $0x34] sm:$0xf]
      %v1638 = vld [vmem:[%s9 + $0x38] sm:$0xf]
      %v1639 = vld [vmem:[%s9 + $0x3c] sm:$0xf]
      %s1640 = scalar_lea.vmem %s9, 64
      %v1641 = vld [vmem:[%s1640] sm:$0xf]
      %v1642 = vld [vmem:[%s1640 + $0x4] sm:$0xf]
      %v1643 = vld [vmem:[%s1640 + $0x8] sm:$0xf]
      %v1644 = vld [vmem:[%s1640 + $0xc] sm:$0xf]
      %v1645 = vld [vmem:[%s1640 + $0x10] sm:$0xf]
      %v1646 = vld [vmem:[%s1640 + $0x14] sm:$0xf]
      %v1647 = vld [vmem:[%s1640 + $0x18] sm:$0xf]
      %v1648 = vld [vmem:[%s1640 + $0x1c] sm:$0xf]
      %v1649 = vld [vmem:[%s1640 + $0x20] sm:$0xf]
      %v1650 = vld [vmem:[%s1640 + $0x24] sm:$0xf]
      %v1651 = vld [vmem:[%s1640 + $0x28] sm:$0xf]
      %v1652 = vld [vmem:[%s1640 + $0x2c] sm:$0xf]
      %v1653 = vld [vmem:[%s1640 + $0x30] sm:$0xf]
      %v1654 = vld [vmem:[%s1640 + $0x34] sm:$0xf]
      %v1655 = vld [vmem:[%s1640 + $0x38] sm:$0xf]
      %v1656 = vld [vmem:[%s1640 + $0x3c] sm:$0xf]
      %v1659 = vunpack.c.l.s4 1983009808
      %v1660 = vunpack.c.0.s8 %v1659
      %v1661 = vlaneseq
      %v1662 = vshrl.u32 %v1661, 7
      %v1663 = vsub.s32 %v1660, %v1662
      %v1664 = vrot.slane %v1622, %v1663
      %v1666 = vshrl.u32 %v1664, 16
      %v1668 = vshll.u32 %v1664, 16
      %v1670 = vrot.slane %v1668, 1
      %v1671 = vor.u32 %v1666, %v1670
      %v1689 = vunpack.c.l.b16 %v1641
      %v1690 = vunpack.c.l.b16 %v1642
      %v1691 = vunpack.c.l.b16 %v1643
      %v1692 = vunpack.c.l.b16 %v1644
      %v1693 = vunpack.c.l.b16 %v1645
      %v1694 = vunpack.c.l.b16 %v1646
      %v1695 = vunpack.c.l.b16 %v1647
      %v1696 = vunpack.c.l.b16 %v1648
      %v1697 = vunpack.c.l.b16 %v1649
      %v1698 = vunpack.c.l.b16 %v1650
      %v1699 = vunpack.c.l.b16 %v1651
      %v1700 = vunpack.c.l.b16 %v1652
      %v1701 = vunpack.c.l.b16 %v1653
      %v1702 = vunpack.c.l.b16 %v1654
      %v1703 = vunpack.c.l.b16 %v1655
      %v1704 = vunpack.c.l.b16 %v1656
      %v1705 = vpack.c.b16 %v1690, %v1689
      %v1706 = vpack.c.b16 %v1692, %v1691
      %v1707 = vpack.c.b16 %v1694, %v1693
      %v1708 = vpack.c.b16 %v1696, %v1695
      %v1709 = vpack.c.b16 %v1698, %v1697
      %v1710 = vpack.c.b16 %v1700, %v1699
      %v1711 = vpack.c.b16 %v1702, %v1701
      %v1712 = vpack.c.b16 %v1704, %v1703
      %1721 = vmatprep.subr.bf16.mxu0 0
      %1722 = vmatpush1.bf16.msra.mxu0 %v1712
      %1723 = vmatprep.subr.bf16.mxu0 0
      %1724 = vmatpush1.bf16.msra.mxu0 %v1711
      %1725 = vmatprep.subr.bf16.mxu0 0
      %1726 = vmatpush1.bf16.msra.mxu0 %v1710
      %1727 = vmatprep.subr.bf16.mxu0 0
      %1728 = vmatpush1.bf16.msra.mxu0 %v1709
      %1729 = vmatprep.subr.bf16.mxu0 0
      %1730 = vmatpush1.bf16.msra.mxu0 %v1708
      %1731 = vmatprep.subr.bf16.mxu0 0
      %1732 = vmatpush1.bf16.msra.mxu0 %v1707
      %1733 = vmatprep.subr.bf16.mxu0 0
      %1734 = vmatpush1.bf16.msra.mxu0 %v1706
      %1735 = vmatprep.subr.bf16.mxu0 0
      %1736 = vmatpush1.bf16.msra.mxu0 %v1705
      %1737 = vmatprep.subr.bf16.mxu0 0
      %1738 = vmatpush2.bf16.msra.mxu0 0
      %1739 = vmatprep.subr.bf16.mxu0 0
      %1740 = vmatpush2.bf16.msra.mxu0 0
      %1741 = vmatprep.subr.bf16.mxu0 0
      %1742 = vmatpush2.bf16.msra.mxu0 0
      %1743 = vmatprep.subr.bf16.mxu0 0
      %1744 = vmatpush2.bf16.msra.mxu0 0
      %1745 = vmatprep.subr.bf16.mxu0 0
      %1746 = vmatpush2.bf16.msra.mxu0 0
      %1747 = vmatprep.subr.bf16.mxu0 0
      %1748 = vmatpush2.bf16.msra.mxu0 0
      %1749 = vmatprep.subr.bf16.mxu0 0
      %1750 = vmatpush2.bf16.msra.mxu0 0
      %1751 = vmatprep.subr.bf16.mxu0 0
      %1752 = vmatpush2.bf16.msra.mxu0 0
      %1753 = vmatprep.mubr.bf16.mxu0 0
      %1754 = vmatmul.mubr.bf16.gmra.mxu0 %v1671
      %v1755 = vpop.f32.mrf.mxu0
      %v1756 = vadd.f32 0.0, %v1755
      %v1757 = vpop.f32.mrf.mxu0
      %v1758 = vpop.f32.mrf.mxu0
      %v1759 = vpop.f32.mrf.mxu0
      %1760 = vdwg.mxu0
      %v1777 = vunpack.c.l.b16 %v1624
      %v1778 = vunpack.c.l.b16 %v1625
      %v1779 = vunpack.c.l.b16 %v1626
      %v1780 = vunpack.c.l.b16 %v1627
      %v1781 = vunpack.c.l.b16 %v1628
      %v1782 = vunpack.c.l.b16 %v1629
      %v1783 = vunpack.c.l.b16 %v1630
      %v1784 = vunpack.c.l.b16 %v1631
      %v1785 = vunpack.c.l.b16 %v1632
      %v1786 = vunpack.c.l.b16 %v1633
      %v1787 = vunpack.c.l.b16 %v1634
      %v1788 = vunpack.c.l.b16 %v1635
      %v1789 = vunpack.c.l.b16 %v1636
      %v1790 = vunpack.c.l.b16 %v1637
      %v1791 = vunpack.c.l.b16 %v1638
      %v1792 = vunpack.c.l.b16 %v1639
      %v1793 = vpack.c.b16 %v1778, %v1777
      %v1794 = vpack.c.b16 %v1780, %v1779
      %v1795 = vpack.c.b16 %v1782, %v1781
      %v1796 = vpack.c.b16 %v1784, %v1783
      %v1797 = vpack.c.b16 %v1786, %v1785
      %v1798 = vpack.c.b16 %v1788, %v1787
      %v1799 = vpack.c.b16 %v1790, %v1789
      %v1800 = vpack.c.b16 %v1792, %v1791
      %1809 = vmatprep.subr.bf16.mxu0 0
      %1810 = vmatpush1.bf16.msra.mxu0 %v1800
      %1811 = vmatprep.subr.bf16.mxu0 0
      %1812 = vmatpush1.bf16.msra.mxu0 %v1799
      %1813 = vmatprep.subr.bf16.mxu0 0
      %1814 = vmatpush1.bf16.msra.mxu0 %v1798
      %1815 = vmatprep.subr.bf16.mxu0 0
      %1816 = vmatpush1.bf16.msra.mxu0 %v1797
      %1817 = vmatprep.subr.bf16.mxu0 0
      %1818 = vmatpush1.bf16.msra.mxu0 %v1796
      %1819 = vmatprep.subr.bf16.mxu0 0
      %1820 = vmatpush1.bf16.msra.mxu0 %v1795
      %1821 = vmatprep.subr.bf16.mxu0 0
      %1822 = vmatpush1.bf16.msra.mxu0 %v1794
      %1823 = vmatprep.subr.bf16.mxu0 0
      %1824 = vmatpush1.bf16.msra.mxu0 %v1793
      %1825 = vmatprep.subr.bf16.mxu0 0
      %1826 = vmatpush2.bf16.msra.mxu0 0
      %1827 = vmatprep.subr.bf16.mxu0 0
      %1828 = vmatpush2.bf16.msra.mxu0 0
      %1829 = vmatprep.subr.bf16.mxu0 0
      %1830 = vmatpush2.bf16.msra.mxu0 0
      %1831 = vmatprep.subr.bf16.mxu0 0
      %1832 = vmatpush2.bf16.msra.mxu0 0
      %1833 = vmatprep.subr.bf16.mxu0 0
      %1834 = vmatpush2.bf16.msra.mxu0 0
      %1835 = vmatprep.subr.bf16.mxu0 0
      %1836 = vmatpush2.bf16.msra.mxu0 0
      %1837 = vmatprep.subr.bf16.mxu0 0
      %1838 = vmatpush2.bf16.msra.mxu0 0
      %1839 = vmatprep.subr.bf16.mxu0 0
      %1840 = vmatpush2.bf16.msra.mxu0 0
      %1841 = vmatprep.mubr.bf16.mxu0 0
      %1842 = vmatmul.mubr.bf16.gmra.mxu0 %v1621
      %v1843 = vpop.f32.mrf.mxu0
      %v1844 = vadd.f32 %v1756, %v1843
      %v1845 = vpop.f32.mrf.mxu0
      %v1846 = vpop.f32.mrf.mxu0
      %v1847 = vpop.f32.mrf.mxu0
      %1848 = vdwg.mxu0
      %s1849 = scalar_lea.vmem %s9, 128
      %v1850 = vld [vmem:[%s1849] sm:$0xf]
      %v1851 = vld [vmem:[%s1849 + $0x4] sm:$0xf]
      %v1852 = vld [vmem:[%s1849 + $0x8] sm:$0xf]
      %v1853 = vld [vmem:[%s1849 + $0xc] sm:$0xf]
      %v1854 = vld [vmem:[%s1849 + $0x10] sm:$0xf]
      %v1855 = vld [vmem:[%s1849 + $0x14] sm:$0xf]
      %v1856 = vld [vmem:[%s1849 + $0x18] sm:$0xf]
      %v1857 = vld [vmem:[%s1849 + $0x1c] sm:$0xf]
      %v1858 = vld [vmem:[%s1849 + $0x20] sm:$0xf]
      %v1859 = vld [vmem:[%s1849 + $0x24] sm:$0xf]
      %v1860 = vld [vmem:[%s1849 + $0x28] sm:$0xf]
      %v1861 = vld [vmem:[%s1849 + $0x2c] sm:$0xf]
      %v1862 = vld [vmem:[%s1849 + $0x30] sm:$0xf]
      %v1863 = vld [vmem:[%s1849 + $0x34] sm:$0xf]
      %v1864 = vld [vmem:[%s1849 + $0x38] sm:$0xf]
      %v1865 = vld [vmem:[%s1849 + $0x3c] sm:$0xf]
      %v1868 = vunpack.c.l.s4 1983009808
      %v1869 = vunpack.c.0.s8 %v1868
      %v1870 = vlaneseq
      %v1871 = vshrl.u32 %v1870, 7
      %v1872 = vsub.s32 %v1869, %v1871
      %v1873 = vrot.slane %v1623, %v1872
      %v1874 = vrot.slane %v1873, 1
      %v1892 = vunpack.c.l.b16 %v1850
      %v1893 = vunpack.c.l.b16 %v1851
      %v1894 = vunpack.c.l.b16 %v1852
      %v1895 = vunpack.c.l.b16 %v1853
      %v1896 = vunpack.c.l.b16 %v1854
      %v1897 = vunpack.c.l.b16 %v1855
      %v1898 = vunpack.c.l.b16 %v1856
      %v1899 = vunpack.c.l.b16 %v1857
      %v1900 = vunpack.c.l.b16 %v1858
      %v1901 = vunpack.c.l.b16 %v1859
      %v1902 = vunpack.c.l.b16 %v1860
      %v1903 = vunpack.c.l.b16 %v1861
      %v1904 = vunpack.c.l.b16 %v1862
      %v1905 = vunpack.c.l.b16 %v1863
      %v1906 = vunpack.c.l.b16 %v1864
      %v1907 = vunpack.c.l.b16 %v1865
      %v1908 = vpack.c.b16 %v1893, %v1892
      %v1909 = vpack.c.b16 %v1895, %v1894
      %v1910 = vpack.c.b16 %v1897, %v1896
      %v1911 = vpack.c.b16 %v1899, %v1898
      %v1912 = vpack.c.b16 %v1901, %v1900
      %v1913 = vpack.c.b16 %v1903, %v1902
      %v1914 = vpack.c.b16 %v1905, %v1904
      %v1915 = vpack.c.b16 %v1907, %v1906
      %1924 = vmatprep.subr.bf16.mxu0 0
      %1925 = vmatpush1.bf16.msra.mxu0 %v1915
      %1926 = vmatprep.subr.bf16.mxu0 0
      %1927 = vmatpush1.bf16.msra.mxu0 %v1914
      %1928 = vmatprep.subr.bf16.mxu0 0
      %1929 = vmatpush1.bf16.msra.mxu0 %v1913
      %1930 = vmatprep.subr.bf16.mxu0 0
      %1931 = vmatpush1.bf16.msra.mxu0 %v1912
      %1932 = vmatprep.subr.bf16.mxu0 0
      %1933 = vmatpush1.bf16.msra.mxu0 %v1911
      %1934 = vmatprep.subr.bf16.mxu0 0
      %1935 = vmatpush1.bf16.msra.mxu0 %v1910
      %1936 = vmatprep.subr.bf16.mxu0 0
      %1937 = vmatpush1.bf16.msra.mxu0 %v1909
      %1938 = vmatprep.subr.bf16.mxu0 0
      %1939 = vmatpush1.bf16.msra.mxu0 %v1908
      %1940 = vmatprep.subr.bf16.mxu0 0
      %1941 = vmatpush2.bf16.msra.mxu0 0
      %1942 = vmatprep.subr.bf16.mxu0 0
      %1943 = vmatpush2.bf16.msra.mxu0 0
      %1944 = vmatprep.subr.bf16.mxu0 0
      %1945 = vmatpush2.bf16.msra.mxu0 0
      %1946 = vmatprep.subr.bf16.mxu0 0
      %1947 = vmatpush2.bf16.msra.mxu0 0
      %1948 = vmatprep.subr.bf16.mxu0 0
      %1949 = vmatpush2.bf16.msra.mxu0 0
      %1950 = vmatprep.subr.bf16.mxu0 0
      %1951 = vmatpush2.bf16.msra.mxu0 0
      %1952 = vmatprep.subr.bf16.mxu0 0
      %1953 = vmatpush2.bf16.msra.mxu0 0
      %1954 = vmatprep.subr.bf16.mxu0 0
      %1955 = vmatpush2.bf16.msra.mxu0 0
      %1956 = vmatprep.mubr.bf16.mxu0 0
      %1957 = vmatmul.mubr.bf16.gmra.mxu0 %v1874
      %v1958 = vpop.f32.mrf.mxu0
      %v1959 = vadd.f32 0.0, %v1958
      %v1960 = vpop.f32.mrf.mxu0
      %v1961 = vpop.f32.mrf.mxu0
      %v1962 = vpop.f32.mrf.mxu0
      %1963 = vdwg.mxu0
      %v1964 = vadd.f32 %v1844, %v1959
      %v1965 = vld [vmem:[%s10] sm:$0x1]
      %v1967 = vlaneseq
      %v1968 = vshrl.u32 %v1967, 7
      %v1969 = vsub.s32 0, %v1968
      %v1970 = vrot.slane %v1965, %v1969
      %v1972 = vadd.f32 %v1964, %v1970
      %v1973 = vunpack.c.l.bf16 %v1228
      %v1974 = vadd.f32 %v1972, %v1973
      %v1975 = vmax.f32 %v1974, 0.0
      %v1976 = vpack.c.bf16 %v1975, %v1975
      %1977 = vst [vmem:[%s382] sm:$0x1] %v1976
      %p1978 = scmp.lt.s32.totalorder %s22, 1
      %s1979 = scalar_select %p1978, %s22, 1
      %s1980 = scalar_lea.vmem %s11, %s1979
      // Predicated region
      $region65: #{_lambda_.10} parent=63 // pred_check
        %p1981 = pneg %p276
      $region66: #{_lambda_.10} parent=63 // pred_check_branch
        %1983 = sbr.rel (%p1981) target = $region68
      $region67: #{_lambda_.10} parent=63 // pred_region
        _
      $region68: #{_lambda_.10} parent=63 // pred_fallthru
        _
    $region64: #{_lambda_.10} parent=5 // pred_fallthru
      _
    %p1984 = scmp.le.s32.totalorder 2, %s17
    // Predicated region
    $region69: #{_lambda_.10} parent=5 // pred_check
      %p1985 = pneg %p1984
    $region70: #{_lambda_.10} parent=5 // pred_check_branch
      %1987 = sbr.rel (%p1985) target = $region72
    $region71: #{_lambda_.10} parent=5 // pred_region
      %s1988 = ssub.s32 %s17, 2
      // Predicated region
      $region73: #{_lambda_.10} parent=71 // pred_check
        %p1989 = pneg %p282
      $region74: #{_lambda_.10} parent=71 // pred_check_branch
        %1991 = sbr.rel (%p1989) target = $region76
      $region75: #{_lambda_.10} parent=71 // pred_region
        %p1992 = scmp.lt.s32.totalorder %s23, 1
        %s1993 = scalar_select %p1992, %s23, 1
        %s1994 = scalar_lea.vmem %s11, %s1993
      $region76: #{_lambda_.10} parent=71 // pred_fallthru
        _
    $region72: #{_lambda_.10} parent=5 // pred_fallthru
      _
  $region6: #{_lambda_.10} parent=0 // loop_footer
    %s21 = sadd.s32 1, %s17
  $region7: #{_lambda_.10} parent=0 // loop_footer_branch
    %16 = sbr.rel target = $region3
  $region8: #{_lambda_.10} parent=0 // loop_exit
    _

</llo_original>
